<compile_context>
chip_gen: v5e
topology: v5e:2x2
jax: 0.10.0
libtpu: 0.0.40
codegen_flags: <defaults>
</compile_context>

<pallas_src>
import jax
import jax.numpy as jnp
from jax import lax
from jax.experimental import pallas as pl
from jax.experimental.pallas import tpu as pltpu


_COMPILER_PARAMS = pltpu.CompilerParams(
    dimension_semantics=("arbitrary",),
    vmem_limit_bytes=32 * 1024 * 1024,
)

_H = 128          # LSTM hidden size
_CONV_LEN = 241   # conv input length
_L2 = 59          # conv2 output length (conv1 gives 120, conv2 gives 59)
_C = 64           # conv channels


# ---------------------------------------------------------------------------
# Kernel A: fused conv1 + conv2 (both stride-2, kernel-3, ReLU)
# ---------------------------------------------------------------------------
def _conv_kernel(pa_ref, pb_ref, pc_ref, w1_ref, b1_ref, w2_ref, b2_ref, o_ref):
    def conv1(p_ref):
        y = jnp.dot(p_ref[...], w1_ref[...], preferred_element_type=jnp.float32)
        return jnp.maximum(y + b1_ref[...], 0.0)

    # conv1 outputs at positions 2t, 2t+1, 2t+2 (the taps conv2 needs at t)
    ya = conv1(pa_ref)
    yb = conv1(pb_ref)
    yc = conv1(pc_ref)

    acc = b2_ref[...]
    for k, y in enumerate((ya, yb, yc)):
        acc = acc + jnp.dot(y, w2_ref[k], preferred_element_type=jnp.float32)
    o_ref[...] = jnp.maximum(acc, 0.0)


def conv_pallas(pa, pb, pc, w1, b1, w2, b2):
    R = pa.shape[0]                         # B * 59
    return pl.pallas_call(
        _conv_kernel,
        out_shape=jax.ShapeDtypeStruct((R, _C), jnp.float32),
        grid=(1,),
        in_specs=[pl.BlockSpec((R, 3), lambda i: (0, 0)),
                  pl.BlockSpec((R, 3), lambda i: (0, 0)),
                  pl.BlockSpec((R, 3), lambda i: (0, 0)),
                  pl.BlockSpec((3, _C), lambda i: (0, 0)),
                  pl.BlockSpec((1, _C), lambda i: (0, 0)),
                  pl.BlockSpec((3, _C, _C), lambda i: (0, 0, 0)),
                  pl.BlockSpec((1, _C), lambda i: (0, 0))],
        out_specs=pl.BlockSpec((R, _C), lambda i: (0, 0)),
        compiler_params=_COMPILER_PARAMS,
    )(pa, pb, pc, w1, b1, w2, b2)


# ---------------------------------------------------------------------------
# Kernel B: fused lin1 -> lin2 -> lin3 -> LSTM -> value head
# ---------------------------------------------------------------------------
def _mlp_lstm_kernel(flat_ref, pa_ref, w1_ref, b1_ref, w2x_ref, w2p_ref, b2_ref,
                     w3_ref, b3_ref, wih_ref, whh_ref, blstm_ref,
                     wout_ref, bout_ref, o_ref,
                     gx_s, h_s, c_s, ho_s):
    H = _H
    # linear1 (bf16 weights, f32 accumulate); NCW flatten folded into w1 layout
    h1 = jnp.dot(flat_ref[...].astype(jnp.bfloat16), w1_ref[...],
                 preferred_element_type=jnp.float32) + b1_ref[...]
    h1 = jnp.maximum(h1, 0.0)
    # linear2: concat(h1, pos, action) @ W2  ==  h1 @ W2x + [pos,action] @ W2p
    h2 = (jnp.dot(h1, w2x_ref[...], preferred_element_type=jnp.float32)
          + jnp.dot(pa_ref[...], w2p_ref[...], preferred_element_type=jnp.float32)
          + b2_ref[...])
    h2 = jnp.maximum(h2, 0.0)
    h3 = jnp.maximum(jnp.dot(h2, w3_ref[...], preferred_element_type=jnp.float32)
                     + b3_ref[...], 0.0)

    # LSTM (seq_len = B, batch = 1, PyTorch gate order i,f,g,o, h0=c0=0).
    # Input projection hoisted out of the recurrence.
    gx_s[...] = (jnp.dot(h3, wih_ref[...], preferred_element_type=jnp.float32)
                 + blstm_ref[...])
    h_s[...] = jnp.zeros_like(h_s)
    c_s[...] = jnp.zeros_like(c_s)
    T = gx_s.shape[0]

    @pl.loop(0, T)
    def _(t):
        g = gx_s[pl.ds(t, 1), :] + jnp.dot(h_s[...], whh_ref[...],
                                           preferred_element_type=jnp.float32)
        i_g = jax.nn.sigmoid(g[:, 0 * H:1 * H])
        f_g = jax.nn.sigmoid(g[:, 1 * H:2 * H])
        g_g = jnp.tanh(g[:, 2 * H:3 * H])
        o_g = jax.nn.sigmoid(g[:, 3 * H:4 * H])
        c_new = f_g * c_s[...] + i_g * g_g
        h_new = o_g * jnp.tanh(c_new)
        c_s[...] = c_new
        h_s[...] = h_new
        ho_s[pl.ds(t, 1), :] = h_new

    # value head: Linear(128, 1) as elementwise multiply + lane reduction
    o_ref[...] = (jnp.sum(ho_s[...] * wout_ref[...], axis=-1, keepdims=True)
                  + bout_ref[...])


def fused_pallas(flat, posact, q):
    B = flat.shape[0]

    def spec(a):
        return pl.BlockSpec(a.shape, lambda i, _nd=a.ndim: (0,) * _nd)

    args = (flat, posact, q['w1'], q['b1'], q['w2x'], q['w2p'], q['b2'],
            q['w3'], q['b3'], q['wih'], q['whh'], q['blstm'],
            q['wout'], q['bout'])
    return pl.pallas_call(
        _mlp_lstm_kernel,
        out_shape=jax.ShapeDtypeStruct((B, 1), jnp.float32),
        grid=(1,),
        in_specs=[spec(a) for a in args],
        out_specs=pl.BlockSpec((B, 1), lambda i: (0, 0)),
        scratch_shapes=[pltpu.VMEM((B, 4 * _H), jnp.float32),   # gx
                        pltpu.VMEM((1, _H), jnp.float32),       # h
                        pltpu.VMEM((1, _H), jnp.float32),       # c
                        pltpu.VMEM((B, _H), jnp.float32)],      # lstm outputs
        compiler_params=_COMPILER_PARAMS,
    )(*args)


# ---------------------------------------------------------------------------
# Parameters (deterministic, PyTorch-default-style uniform init)
# ---------------------------------------------------------------------------
def init_params(key):
    def uni(k, shape, fan_in):
        bound = 1.0 / (fan_in ** 0.5)
        return jax.random.uniform(k, shape, jnp.float32, -bound, bound)

    ks = jax.random.split(key, 16)
    p = {}
    p['conv1_w'] = uni(ks[0], (64, 1, 3), 1 * 3)
    p['conv1_b'] = uni(ks[1], (64,), 1 * 3)
    p['conv2_w'] = uni(ks[2], (64, 64, 3), 64 * 3)
    p['conv2_b'] = uni(ks[3], (64,), 64 * 3)
    p['lin1_w'] = uni(ks[4], (512, 64 * 59), 64 * 59)
    p['lin1_b'] = uni(ks[5], (512,), 64 * 59)
    p['lin2_w'] = uni(ks[6], (256, 512 + 2 + 2), 516)
    p['lin2_b'] = uni(ks[7], (256,), 516)
    p['lin3_w'] = uni(ks[8], (128, 256), 256)
    p['lin3_b'] = uni(ks[9], (128,), 256)
    p['lstm_w_ih'] = uni(ks[10], (4 * 128, 128), 128)
    p['lstm_w_hh'] = uni(ks[11], (4 * 128, 128), 128)
    p['lstm_b_ih'] = uni(ks[12], (4 * 128,), 128)
    p['lstm_b_hh'] = uni(ks[13], (4 * 128,), 128)
    p['out_w'] = uni(ks[14], (1, 128), 128)
    p['out_b'] = uni(ks[15], (1,), 128)
    return p


def pack_params(p):
    """One-time re-layout of weights into kernel-friendly form."""
    q = {}
    # conv1: [out,1,k] -> [k, out]
    q['w1c'] = p['conv1_w'][:, 0, :].T
    q['b1c'] = p['conv1_b'].reshape(1, _C)
    # conv2: [out,in,k] -> [k, in, out]
    q['w2c'] = jnp.transpose(p['conv2_w'], (2, 1, 0))
    q['b2c'] = p['conv2_b'].reshape(1, _C)
    # lin1: transpose + fold PyTorch NCW flatten (col j = c*59 + pos) into the
    # kernel-side row order (row = pos*64 + c); stored bf16 (memory-bound).
    q['w1'] = (p['lin1_w'].reshape(512, _C, _L2)
               .transpose(2, 1, 0).reshape(_L2 * _C, 512).astype(jnp.bfloat16))
    q['b1'] = p['lin1_b'].reshape(1, 512)
    # lin2 split: [256, 516] -> [512,256] (h1 part) + [4,256] ([pos,action] part)
    q['w2x'] = p['lin2_w'][:, :512].T
    q['w2p'] = p['lin2_w'][:, 512:].T
    q['b2'] = p['lin2_b'].reshape(1, 256)
    q['w3'] = p['lin3_w'].T
    q['b3'] = p['lin3_b'].reshape(1, 128)
    # LSTM: PyTorch [4H, D] -> [D, 4H]; biases pre-summed
    q['wih'] = p['lstm_w_ih'].T
    q['whh'] = p['lstm_w_hh'].T
    q['blstm'] = (p['lstm_b_ih'] + p['lstm_b_hh']).reshape(1, 4 * _H)
    q['wout'] = p['out_w'].reshape(1, _H)
    q['bout'] = p['out_b'].reshape(1, 1)
    return q


# ---------------------------------------------------------------------------
# Forward pass: 2 pallas_calls + cheap strided-slice glue
# ---------------------------------------------------------------------------
def critic_forward_pallas(packed, state, action):
    B = state.shape[0]
    x, pos = state[:, :_CONV_LEN], state[:, _CONV_LEN:]   # split(state, 241)

    # conv1 input taps for the three conv1 positions (2t, 2t+1, 2t+2) feeding
    # conv2 output position t — plain strided slices, no gather.
    def slab(off):
        cols = [x[:, off + k: off + k + 4 * (_L2 - 1) + 1: 4] for k in range(3)]
        return jnp.stack(cols, axis=-1).reshape(B * _L2, 3)

    pa, pb, pc = slab(0), slab(2), slab(4)
    y2 = conv_pallas(pa, pb, pc, packed['w1c'], packed['b1c'],
                     packed['w2c'], packed['b2c'])          # [B*59, 64]

    flat = y2.reshape(B, _L2 * _C)      # contiguous (free) reshape; NCW layout
                                        # fix is folded into packed['w1']
    posact = jnp.concatenate([pos, action], axis=-1)        # [B, 4]
    return fused_pallas(flat, posact, packed)               # [B, 1]


# ---------------------------------------------------------------------------
# Pure-JAX reference (full f32, for a sanity check against the Pallas path)
# ---------------------------------------------------------------------------
def critic_forward_ref(params, state, action):
    hp = lax.Precision.HIGHEST
    B = state.shape[0]
    x, pos = state[:, :241], state[:, 241:]
    y = lax.conv_general_dilated(x[:, None, :], params['conv1_w'], (2,), 'VALID',
                                 dimension_numbers=('NCH', 'OIH', 'NCH'),
                                 precision=hp)
    y = jax.nn.relu(y + params['conv1_b'][None, :, None])
    y = lax.conv_general_dilated(y, params['conv2_w'], (2,), 'VALID',
                                 dimension_numbers=('NCH', 'OIH', 'NCH'),
                                 precision=hp)
    y = jax.nn.relu(y + params['conv2_b'][None, :, None])
    flat = y.reshape(B, -1)
    h1 = jax.nn.relu(jnp.dot(flat, params['lin1_w'].T, precision=hp) + params['lin1_b'])
    z = jnp.concatenate([h1, pos, action], axis=-1)
    h2 = jax.nn.relu(jnp.dot(z, params['lin2_w'].T, precision=hp) + params['lin2_b'])
    h3 = jax.nn.relu(jnp.dot(h2, params['lin3_w'].T, precision=hp) + params['lin3_b'])

    H = 128
    h = jnp.zeros((1, H), jnp.float32)
    c = jnp.zeros((1, H), jnp.float32)
    bias = params['lstm_b_ih'] + params['lstm_b_hh']
    outs = []
    for t in range(B):
        g = (jnp.dot(h3[t:t + 1], params['lstm_w_ih'].T, precision=hp)
             + jnp.dot(h, params['lstm_w_hh'].T, precision=hp) + bias)
        i_g = jax.nn.sigmoid(g[:, 0:H])
        f_g = jax.nn.sigmoid(g[:, H:2 * H])
        g_g = jnp.tanh(g[:, 2 * H:3 * H])
        o_g = jax.nn.sigmoid(g[:, 3 * H:4 * H])
        c = f_g * c + i_g * g_g
        h = o_g * jnp.tanh(c)
        outs.append(h)
    lstm_out = jnp.concatenate(outs, axis=0)
    return jnp.dot(lstm_out, params['out_w'].T, precision=hp) + params['out_b']


if __name__ == "__main__":
    key = jax.random.PRNGKey(0)
    kp, ks, ka = jax.random.split(key, 3)
    params = init_params(kp)
    packed = pack_params(params)          # one-time weight re-layout

    B = 2
    state = jax.random.normal(ks, (B, 241 + 2), jnp.float32)     # [B, 243]
    action = jax.random.uniform(ka, (B, 2), jnp.float32, -1.0, 1.0)

    fwd = jax.jit(critic_forward_pallas)
    value = jax.block_until_ready(fwd(packed, state, action))

    ref = critic_forward_ref(params, state, action)
    assert value.shape == (B, 1), value.shape
    max_err = float(jnp.max(jnp.abs(value - ref)))
    assert max_err < 5e-2, f"mismatch vs reference: {max_err}"

    print("KERNEL_OK")
</pallas_src>

<mosaic_0001>
module attributes {stable_mosaic.version = 11 : i64} {
  func.func @_conv_kernel(%arg0: i32, %arg1: memref<118x3xf32, #tpu.memory_space<vmem>>, %arg2: memref<118x3xf32, #tpu.memory_space<vmem>>, %arg3: memref<118x3xf32, #tpu.memory_space<vmem>>, %arg4: memref<3x64xf32, #tpu.memory_space<vmem>>, %arg5: memref<1x64xf32, #tpu.memory_space<vmem>>, %arg6: memref<3x64x64xf32, #tpu.memory_space<vmem>>, %arg7: memref<1x64xf32, #tpu.memory_space<vmem>>, %arg8: memref<118x64xf32, #tpu.memory_space<vmem>>) attributes {dimension_semantics = [#tpu.dimension_semantics<arbitrary>], iteration_bounds = array<i64: 1>, scalar_prefetch = 0 : i64, scratch_operands = 0 : i64, tpu.core_type = #tpu.core_type<tc>, window_params = [{pipeline_mode = #tpu.pipeline_mode<synchronous>, transform_indices = @transform_0, window_bounds = array<i64: 118, 3>}, {pipeline_mode = #tpu.pipeline_mode<synchronous>, transform_indices = @transform_1, window_bounds = array<i64: 118, 3>}, {pipeline_mode = #tpu.pipeline_mode<synchronous>, transform_indices = @transform_2, window_bounds = array<i64: 118, 3>}, {pipeline_mode = #tpu.pipeline_mode<synchronous>, transform_indices = @transform_3, window_bounds = array<i64: 3, 64>}, {pipeline_mode = #tpu.pipeline_mode<synchronous>, transform_indices = @transform_4, window_bounds = array<i64: 1, 64>}, {pipeline_mode = #tpu.pipeline_mode<synchronous>, transform_indices = @transform_5, window_bounds = array<i64: 3, 64, 64>}, {pipeline_mode = #tpu.pipeline_mode<synchronous>, transform_indices = @transform_6, window_bounds = array<i64: 1, 64>}, {pipeline_mode = #tpu.pipeline_mode<synchronous>, transform_indices = @transform_7, window_bounds = array<i64: 118, 64>}]} {
    %c0 = arith.constant 0 : index
    %c0_0 = arith.constant 0 : index
    %0 = vector.load %arg1[%c0, %c0_0] : memref<118x3xf32, #tpu.memory_space<vmem>>, vector<118x3xf32>
    %c0_1 = arith.constant 0 : index
    %c0_2 = arith.constant 0 : index
    %1 = vector.load %arg4[%c0_1, %c0_2] : memref<3x64xf32, #tpu.memory_space<vmem>>, vector<3x64xf32>
    %cst = arith.constant dense<0.000000e+00> : vector<118x64xf32>
    %2 = tpu.matmul %0, %1, %cst {dimension_numbers = #tpu.dot_dimension_numbers<[1], [0], [0], [1], [0, 0, 1, 1], [], []>} : vector<118x3xf32>, vector<3x64xf32>, vector<118x64xf32> -> vector<118x64xf32>
    %c0_3 = arith.constant 0 : index
    %c0_4 = arith.constant 0 : index
    %3 = vector.load %arg5[%c0_3, %c0_4] : memref<1x64xf32, #tpu.memory_space<vmem>>, vector<1x64xf32>
    %4 = vector.broadcast %3 : vector<1x64xf32> to vector<118x64xf32>
    %5 = arith.addf %2, %4 : vector<118x64xf32>
    %cst_5 = arith.constant 0.000000e+00 : f32
    %6 = vector.broadcast %cst_5 : f32 to vector<118x64xf32>
    %7 = arith.maximumf %5, %6 : vector<118x64xf32>
    %c0_6 = arith.constant 0 : index
    %c0_7 = arith.constant 0 : index
    %8 = vector.load %arg2[%c0_6, %c0_7] : memref<118x3xf32, #tpu.memory_space<vmem>>, vector<118x3xf32>
    %c0_8 = arith.constant 0 : index
    %c0_9 = arith.constant 0 : index
    %9 = vector.load %arg4[%c0_8, %c0_9] : memref<3x64xf32, #tpu.memory_space<vmem>>, vector<3x64xf32>
    %cst_10 = arith.constant dense<0.000000e+00> : vector<118x64xf32>
    %10 = tpu.matmul %8, %9, %cst_10 {dimension_numbers = #tpu.dot_dimension_numbers<[1], [0], [0], [1], [0, 0, 1, 1], [], []>} : vector<118x3xf32>, vector<3x64xf32>, vector<118x64xf32> -> vector<118x64xf32>
    %c0_11 = arith.constant 0 : index
    %c0_12 = arith.constant 0 : index
    %11 = vector.load %arg5[%c0_11, %c0_12] : memref<1x64xf32, #tpu.memory_space<vmem>>, vector<1x64xf32>
    %12 = vector.broadcast %11 : vector<1x64xf32> to vector<118x64xf32>
    %13 = arith.addf %10, %12 : vector<118x64xf32>
    %cst_13 = arith.constant 0.000000e+00 : f32
    %14 = vector.broadcast %cst_13 : f32 to vector<118x64xf32>
    %15 = arith.maximumf %13, %14 : vector<118x64xf32>
    %c0_14 = arith.constant 0 : index
    %c0_15 = arith.constant 0 : index
    %16 = vector.load %arg3[%c0_14, %c0_15] : memref<118x3xf32, #tpu.memory_space<vmem>>, vector<118x3xf32>
    %c0_16 = arith.constant 0 : index
    %c0_17 = arith.constant 0 : index
    %17 = vector.load %arg4[%c0_16, %c0_17] : memref<3x64xf32, #tpu.memory_space<vmem>>, vector<3x64xf32>
    %cst_18 = arith.constant dense<0.000000e+00> : vector<118x64xf32>
    %18 = tpu.matmul %16, %17, %cst_18 {dimension_numbers = #tpu.dot_dimension_numbers<[1], [0], [0], [1], [0, 0, 1, 1], [], []>} : vector<118x3xf32>, vector<3x64xf32>, vector<118x64xf32> -> vector<118x64xf32>
    %c0_19 = arith.constant 0 : index
    %c0_20 = arith.constant 0 : index
    %19 = vector.load %arg5[%c0_19, %c0_20] : memref<1x64xf32, #tpu.memory_space<vmem>>, vector<1x64xf32>
    %20 = vector.broadcast %19 : vector<1x64xf32> to vector<118x64xf32>
    %21 = arith.addf %18, %20 : vector<118x64xf32>
    %cst_21 = arith.constant 0.000000e+00 : f32
    %22 = vector.broadcast %cst_21 : f32 to vector<118x64xf32>
    %23 = arith.maximumf %21, %22 : vector<118x64xf32>
    %c0_22 = arith.constant 0 : index
    %c0_23 = arith.constant 0 : index
    %24 = vector.load %arg7[%c0_22, %c0_23] : memref<1x64xf32, #tpu.memory_space<vmem>>, vector<1x64xf32>
    %c0_24 = arith.constant 0 : index
    %c0_25 = arith.constant 0 : index
    %c0_26 = arith.constant 0 : index
    %25 = vector.load %arg6[%c0_24, %c0_25, %c0_26] : memref<3x64x64xf32, #tpu.memory_space<vmem>>, vector<1x64x64xf32>
    %26 = vector.shape_cast %25 : vector<1x64x64xf32> to vector<64x64xf32>
    %cst_27 = arith.constant dense<0.000000e+00> : vector<118x64xf32>
    %27 = tpu.matmul %7, %26, %cst_27 {dimension_numbers = #tpu.dot_dimension_numbers<[1], [0], [0], [1], [0, 0, 1, 1], [], []>} : vector<118x64xf32>, vector<64x64xf32>, vector<118x64xf32> -> vector<118x64xf32>
    %28 = vector.broadcast %24 : vector<1x64xf32> to vector<118x64xf32>
    %29 = arith.addf %28, %27 : vector<118x64xf32>
    %c1 = arith.constant 1 : index
    %c0_28 = arith.constant 0 : index
    %c0_29 = arith.constant 0 : index
    %30 = vector.load %arg6[%c1, %c0_28, %c0_29] : memref<3x64x64xf32, #tpu.memory_space<vmem>>, vector<1x64x64xf32>
    %31 = vector.shape_cast %30 : vector<1x64x64xf32> to vector<64x64xf32>
    %cst_30 = arith.constant dense<0.000000e+00> : vector<118x64xf32>
    %32 = tpu.matmul %15, %31, %cst_30 {dimension_numbers = #tpu.dot_dimension_numbers<[1], [0], [0], [1], [0, 0, 1, 1], [], []>} : vector<118x64xf32>, vector<64x64xf32>, vector<118x64xf32> -> vector<118x64xf32>
    %33 = arith.addf %29, %32 : vector<118x64xf32>
    %c2 = arith.constant 2 : index
    %c0_31 = arith.constant 0 : index
    %c0_32 = arith.constant 0 : index
    %34 = vector.load %arg6[%c2, %c0_31, %c0_32] : memref<3x64x64xf32, #tpu.memory_space<vmem>>, vector<1x64x64xf32>
    %35 = vector.shape_cast %34 : vector<1x64x64xf32> to vector<64x64xf32>
    %cst_33 = arith.constant dense<0.000000e+00> : vector<118x64xf32>
    %36 = tpu.matmul %23, %35, %cst_33 {dimension_numbers = #tpu.dot_dimension_numbers<[1], [0], [0], [1], [0, 0, 1, 1], [], []>} : vector<118x64xf32>, vector<64x64xf32>, vector<118x64xf32> -> vector<118x64xf32>
    %37 = arith.addf %33, %36 : vector<118x64xf32>
    %cst_34 = arith.constant 0.000000e+00 : f32
    %38 = vector.broadcast %cst_34 : f32 to vector<118x64xf32>
    %39 = arith.maximumf %37, %38 : vector<118x64xf32>
    %c0_35 = arith.constant 0 : index
    %c0_36 = arith.constant 0 : index
    %40 = vector.load %arg8[%c0_35, %c0_36] : memref<118x64xf32, #tpu.memory_space<vmem>>, vector<118x64xf32>
    tpu.vector_store %arg8[%c0_35, %c0_36], %39 {strides = array<i32>} : memref<118x64xf32, #tpu.memory_space<vmem>>, vector<118x64xf32>,
    return
  }
  func.func @transform_0(%arg0: i32) -> (i32, i32) {
    %c0_i32 = arith.constant 0 : i32
    %c0_i32_0 = arith.constant 0 : i32
    %c0_i32_1 = arith.constant 0 : i32
    return %c0_i32, %c0_i32_0 : i32, i32
  }
  func.func @transform_1(%arg0: i32) -> (i32, i32) {
    %c0_i32 = arith.constant 0 : i32
    %c0_i32_0 = arith.constant 0 : i32
    %c0_i32_1 = arith.constant 0 : i32
    return %c0_i32, %c0_i32_0 : i32, i32
  }
  func.func @transform_2(%arg0: i32) -> (i32, i32) {
    %c0_i32 = arith.constant 0 : i32
    %c0_i32_0 = arith.constant 0 : i32
    %c0_i32_1 = arith.constant 0 : i32
    return %c0_i32, %c0_i32_0 : i32, i32
  }
  func.func @transform_3(%arg0: i32) -> (i32, i32) {
    %c0_i32 = arith.constant 0 : i32
    %c0_i32_0 = arith.constant 0 : i32
    %c0_i32_1 = arith.constant 0 : i32
    return %c0_i32, %c0_i32_0 : i32, i32
  }
  func.func @transform_4(%arg0: i32) -> (i32, i32) {
    %c0_i32 = arith.constant 0 : i32
    %c0_i32_0 = arith.constant 0 : i32
    %c0_i32_1 = arith.constant 0 : i32
    return %c0_i32, %c0_i32_0 : i32, i32
  }
  func.func @transform_5(%arg0: i32) -> (i32, i32, i32) {
    %c0_i32 = arith.constant 0 : i32
    %c0_i32_0 = arith.constant 0 : i32
    %c0_i32_1 = arith.constant 0 : i32
    %c0_i32_2 = arith.constant 0 : i32
    return %c0_i32, %c0_i32_0, %c0_i32_1 : i32, i32, i32
  }
  func.func @transform_6(%arg0: i32) -> (i32, i32) {
    %c0_i32 = arith.constant 0 : i32
    %c0_i32_0 = arith.constant 0 : i32
    %c0_i32_1 = arith.constant 0 : i32
    return %c0_i32, %c0_i32_0 : i32, i32
  }
  func.func @transform_7(%arg0: i32) -> (i32, i32) {
    %c0_i32 = arith.constant 0 : i32
    %c0_i32_0 = arith.constant 0 : i32
    %c0_i32_1 = arith.constant 0 : i32
    return %c0_i32, %c0_i32_0 : i32, i32
  }
}

module attributes {stable_mosaic.version = 11 : i64} {
  func.func @_mlp_lstm_kernel(%arg0: i32, %arg1: memref<2x3776xf32, #tpu.memory_space<vmem>>, %arg2: memref<2x4xf32, #tpu.memory_space<vmem>>, %arg3: memref<3776x512xbf16, #tpu.memory_space<vmem>>, %arg4: memref<1x512xf32, #tpu.memory_space<vmem>>, %arg5: memref<512x256xf32, #tpu.memory_space<vmem>>, %arg6: memref<4x256xf32, #tpu.memory_space<vmem>>, %arg7: memref<1x256xf32, #tpu.memory_space<vmem>>, %arg8: memref<256x128xf32, #tpu.memory_space<vmem>>, %arg9: memref<1x128xf32, #tpu.memory_space<vmem>>, %arg10: memref<128x512xf32, #tpu.memory_space<vmem>>, %arg11: memref<128x512xf32, #tpu.memory_space<vmem>>, %arg12: memref<1x512xf32, #tpu.memory_space<vmem>>, %arg13: memref<1x128xf32, #tpu.memory_space<vmem>>, %arg14: memref<1x1xf32, #tpu.memory_space<vmem>>, %arg15: memref<2x1xf32, #tpu.memory_space<vmem>>, %arg16: memref<2x512xf32, #tpu.memory_space<vmem>>, %arg17: memref<1x128xf32, #tpu.memory_space<vmem>>, %arg18: memref<1x128xf32, #tpu.memory_space<vmem>>, %arg19: memref<2x128xf32, #tpu.memory_space<vmem>>) attributes {dimension_semantics = [#tpu.dimension_semantics<arbitrary>], iteration_bounds = array<i64: 1>, scalar_prefetch = 0 : i64, scratch_operands = 4 : i64, tpu.core_type = #tpu.core_type<tc>, window_params = [{pipeline_mode = #tpu.pipeline_mode<synchronous>, transform_indices = @transform_0, window_bounds = array<i64: 2, 3776>}, {pipeline_mode = #tpu.pipeline_mode<synchronous>, transform_indices = @transform_1, window_bounds = array<i64: 2, 4>}, {pipeline_mode = #tpu.pipeline_mode<synchronous>, transform_indices = @transform_2, window_bounds = array<i64: 3776, 512>}, {pipeline_mode = #tpu.pipeline_mode<synchronous>, transform_indices = @transform_3, window_bounds = array<i64: 1, 512>}, {pipeline_mode = #tpu.pipeline_mode<synchronous>, transform_indices = @transform_4, window_bounds = array<i64: 512, 256>}, {pipeline_mode = #tpu.pipeline_mode<synchronous>, transform_indices = @transform_5, window_bounds = array<i64: 4, 256>}, {pipeline_mode = #tpu.pipeline_mode<synchronous>, transform_indices = @transform_6, window_bounds = array<i64: 1, 256>}, {pipeline_mode = #tpu.pipeline_mode<synchronous>, transform_indices = @transform_7, window_bounds = array<i64: 256, 128>}, {pipeline_mode = #tpu.pipeline_mode<synchronous>, transform_indices = @transform_8, window_bounds = array<i64: 1, 128>}, {pipeline_mode = #tpu.pipeline_mode<synchronous>, transform_indices = @transform_9, window_bounds = array<i64: 128, 512>}, {pipeline_mode = #tpu.pipeline_mode<synchronous>, transform_indices = @transform_10, window_bounds = array<i64: 128, 512>}, {pipeline_mode = #tpu.pipeline_mode<synchronous>, transform_indices = @transform_11, window_bounds = array<i64: 1, 512>}, {pipeline_mode = #tpu.pipeline_mode<synchronous>, transform_indices = @transform_12, window_bounds = array<i64: 1, 128>}, {pipeline_mode = #tpu.pipeline_mode<synchronous>, transform_indices = @transform_13, window_bounds = array<i64: 1, 1>}, {pipeline_mode = #tpu.pipeline_mode<synchronous>, transform_indices = @transform_14, window_bounds = array<i64: 2, 1>}]} {
    %c0 = arith.constant 0 : index
    %c0_0 = arith.constant 0 : index
    %0 = vector.load %arg1[%c0, %c0_0] : memref<2x3776xf32, #tpu.memory_space<vmem>>, vector<2x3776xf32>
    %1 = arith.truncf %0 : vector<2x3776xf32> to vector<2x3776xbf16>
    %c0_1 = arith.constant 0 : index
    %c0_2 = arith.constant 0 : index
    %2 = vector.load %arg3[%c0_1, %c0_2] : memref<3776x512xbf16, #tpu.memory_space<vmem>>, vector<3776x512xbf16>
    %cst = arith.constant dense<0.000000e+00> : vector<2x512xf32>
    %3 = tpu.matmul %1, %2, %cst {dimension_numbers = #tpu.dot_dimension_numbers<[1], [0], [0], [1], [0, 0, 1, 1], [], []>} : vector<2x3776xbf16>, vector<3776x512xbf16>, vector<2x512xf32> -> vector<2x512xf32>
    %c0_3 = arith.constant 0 : index
    %c0_4 = arith.constant 0 : index
    %4 = vector.load %arg4[%c0_3, %c0_4] : memref<1x512xf32, #tpu.memory_space<vmem>>, vector<1x512xf32>
    %5 = vector.broadcast %4 : vector<1x512xf32> to vector<2x512xf32>
    %6 = arith.addf %3, %5 : vector<2x512xf32>
    %cst_5 = arith.constant 0.000000e+00 : f32
    %7 = vector.broadcast %cst_5 : f32 to vector<2x512xf32>
    %8 = arith.maximumf %6, %7 : vector<2x512xf32>
    %c0_6 = arith.constant 0 : index
    %c0_7 = arith.constant 0 : index
    %9 = vector.load %arg5[%c0_6, %c0_7] : memref<512x256xf32, #tpu.memory_space<vmem>>, vector<512x256xf32>
    %cst_8 = arith.constant dense<0.000000e+00> : vector<2x256xf32>
    %10 = tpu.matmul %8, %9, %cst_8 {dimension_numbers = #tpu.dot_dimension_numbers<[1], [0], [0], [1], [0, 0, 1, 1], [], []>} : vector<2x512xf32>, vector<512x256xf32>, vector<2x256xf32> -> vector<2x256xf32>
    %c0_9 = arith.constant 0 : index
    %c0_10 = arith.constant 0 : index
    %11 = vector.load %arg2[%c0_9, %c0_10] : memref<2x4xf32, #tpu.memory_space<vmem>>, vector<2x4xf32>
    %c0_11 = arith.constant 0 : index
    %c0_12 = arith.constant 0 : index
    %12 = vector.load %arg6[%c0_11, %c0_12] : memref<4x256xf32, #tpu.memory_space<vmem>>, vector<4x256xf32>
    %cst_13 = arith.constant dense<0.000000e+00> : vector<2x256xf32>
    %13 = tpu.matmul %11, %12, %cst_13 {dimension_numbers = #tpu.dot_dimension_numbers<[1], [0], [0], [1], [0, 0, 1, 1], [], []>} : vector<2x4xf32>, vector<4x256xf32>, vector<2x256xf32> -> vector<2x256xf32>
    %14 = arith.addf %10, %13 : vector<2x256xf32>
    %c0_14 = arith.constant 0 : index
    %c0_15 = arith.constant 0 : index
    %15 = vector.load %arg7[%c0_14, %c0_15] : memref<1x256xf32, #tpu.memory_space<vmem>>, vector<1x256xf32>
    %16 = vector.broadcast %15 : vector<1x256xf32> to vector<2x256xf32>
    %17 = arith.addf %14, %16 : vector<2x256xf32>
    %cst_16 = arith.constant 0.000000e+00 : f32
    %18 = vector.broadcast %cst_16 : f32 to vector<2x256xf32>
    %19 = arith.maximumf %17, %18 : vector<2x256xf32>
    %c0_17 = arith.constant 0 : index
    %c0_18 = arith.constant 0 : index
    %20 = vector.load %arg8[%c0_17, %c0_18] : memref<256x128xf32, #tpu.memory_space<vmem>>, vector<256x128xf32>
    %cst_19 = arith.constant dense<0.000000e+00> : vector<2x128xf32>
    %21 = tpu.matmul %19, %20, %cst_19 {dimension_numbers = #tpu.dot_dimension_numbers<[1], [0], [0], [1], [0, 0, 1, 1], [], []>} : vector<2x256xf32>, vector<256x128xf32>, vector<2x128xf32> -> vector<2x128xf32>
    %c0_20 = arith.constant 0 : index
    %c0_21 = arith.constant 0 : index
    %22 = vector.load %arg9[%c0_20, %c0_21] : memref<1x128xf32, #tpu.memory_space<vmem>>, vector<1x128xf32>
    %23 = vector.broadcast %22 : vector<1x128xf32> to vector<2x128xf32>
    %24 = arith.addf %21, %23 : vector<2x128xf32>
    %cst_22 = arith.constant 0.000000e+00 : f32
    %25 = vector.broadcast %cst_22 : f32 to vector<2x128xf32>
    %26 = arith.maximumf %24, %25 : vector<2x128xf32>
    %c0_23 = arith.constant 0 : index
    %c0_24 = arith.constant 0 : index
    %27 = vector.load %arg10[%c0_23, %c0_24] : memref<128x512xf32, #tpu.memory_space<vmem>>, vector<128x512xf32>
    %cst_25 = arith.constant dense<0.000000e+00> : vector<2x512xf32>
    %28 = tpu.matmul %26, %27, %cst_25 {dimension_numbers = #tpu.dot_dimension_numbers<[1], [0], [0], [1], [0, 0, 1, 1], [], []>} : vector<2x128xf32>, vector<128x512xf32>, vector<2x512xf32> -> vector<2x512xf32>
    %c0_26 = arith.constant 0 : index
    %c0_27 = arith.constant 0 : index
    %29 = vector.load %arg12[%c0_26, %c0_27] : memref<1x512xf32, #tpu.memory_space<vmem>>, vector<1x512xf32>
    %30 = vector.broadcast %29 : vector<1x512xf32> to vector<2x512xf32>
    %31 = arith.addf %28, %30 : vector<2x512xf32>
    %c0_28 = arith.constant 0 : index
    %c0_29 = arith.constant 0 : index
    %32 = vector.load %arg16[%c0_28, %c0_29] : memref<2x512xf32, #tpu.memory_space<vmem>>, vector<2x512xf32>
    tpu.vector_store %arg16[%c0_28, %c0_29], %31 {strides = array<i32>} : memref<2x512xf32, #tpu.memory_space<vmem>>, vector<2x512xf32>,
    %cst_30 = arith.constant 0.000000e+00 : f32
    %33 = vector.broadcast %cst_30 : f32 to vector<1x128xf32>
    %c0_31 = arith.constant 0 : index
    %c0_32 = arith.constant 0 : index
    %34 = vector.load %arg17[%c0_31, %c0_32] : memref<1x128xf32, #tpu.memory_space<vmem>>, vector<1x128xf32>
    tpu.vector_store %arg17[%c0_31, %c0_32], %33 {strides = array<i32>} : memref<1x128xf32, #tpu.memory_space<vmem>>, vector<1x128xf32>,
    %cst_33 = arith.constant 0.000000e+00 : f32
    %35 = vector.broadcast %cst_33 : f32 to vector<1x128xf32>
    %c0_34 = arith.constant 0 : index
    %c0_35 = arith.constant 0 : index
    %36 = vector.load %arg18[%c0_34, %c0_35] : memref<1x128xf32, #tpu.memory_space<vmem>>, vector<1x128xf32>
    tpu.vector_store %arg18[%c0_34, %c0_35], %35 {strides = array<i32>} : memref<1x128xf32, #tpu.memory_space<vmem>>, vector<1x128xf32>,
    %c0_i32 = arith.constant 0 : i32
    %c2_i32 = arith.constant 2 : i32
    %37 = arith.addi %c0_i32, %c2_i32 : i32
    %c1_i32 = arith.constant 1 : i32
    scf.for %arg20 = %c0_i32 to %37 step %c1_i32  : i32 {
      %c1_i32_46 = arith.constant 1 : i32
      %48 = arith.muli %arg20, %c1_i32_46 : i32
      %c0_i32_47 = arith.constant 0 : i32
      %49 = arith.addi %c0_i32_47, %48 : i32
      %50 = arith.index_cast %49 : i32 to index
      %c0_48 = arith.constant 0 : index
      %51 = vector.load %arg16[%50, %c0_48] : memref<2x512xf32, #tpu.memory_space<vmem>>, vector<1x512xf32>
      %c0_49 = arith.constant 0 : index
      %c0_50 = arith.constant 0 : index
      %52 = vector.load %arg17[%c0_49, %c0_50] : memref<1x128xf32, #tpu.memory_space<vmem>>, vector<1x128xf32>
      %c0_51 = arith.constant 0 : index
      %c0_52 = arith.constant 0 : index
      %53 = vector.load %arg11[%c0_51, %c0_52] : memref<128x512xf32, #tpu.memory_space<vmem>>, vector<128x512xf32>
      %cst_53 = arith.constant dense<0.000000e+00> : vector<1x512xf32>
      %54 = tpu.matmul %52, %53, %cst_53 {dimension_numbers = #tpu.dot_dimension_numbers<[1], [0], [0], [1], [0, 0, 1, 1], [], []>} : vector<1x128xf32>, vector<128x512xf32>, vector<1x512xf32> -> vector<1x512xf32>
      %55 = arith.addf %51, %54 : vector<1x512xf32>
      %56 = vector.extract_strided_slice %55 {offsets = [0, 0], sizes = [1, 128], strides = [1, 1]} : vector<1x512xf32> to vector<1x128xf32>
      %57 = arith.negf %56 : vector<1x128xf32>
      %58 = math.exp %57 : vector<1x128xf32>
      %cst_54 = arith.constant 1.000000e+00 : f32
      %59 = vector.broadcast %cst_54 : f32 to vector<1x128xf32>
      %60 = arith.addf %59, %58 : vector<1x128xf32>
      %61 = arith.divf %59, %60 : vector<1x128xf32>
      %62 = vector.extract_strided_slice %55 {offsets = [0, 128], sizes = [1, 128], strides = [1, 1]} : vector<1x512xf32> to vector<1x128xf32>
      %63 = arith.negf %62 : vector<1x128xf32>
      %64 = math.exp %63 : vector<1x128xf32>
      %cst_55 = arith.constant 1.000000e+00 : f32
      %65 = vector.broadcast %cst_55 : f32 to vector<1x128xf32>
      %66 = arith.addf %65, %64 : vector<1x128xf32>
      %67 = arith.divf %65, %66 : vector<1x128xf32>
      %68 = vector.extract_strided_slice %55 {offsets = [0, 256], sizes = [1, 128], strides = [1, 1]} : vector<1x512xf32> to vector<1x128xf32>
      %69 = math.tanh %68 : vector<1x128xf32>
      %70 = vector.extract_strided_slice %55 {offsets = [0, 384], sizes = [1, 128], strides = [1, 1]} : vector<1x512xf32> to vector<1x128xf32>
      %71 = arith.negf %70 : vector<1x128xf32>
      %72 = math.exp %71 : vector<1x128xf32>
      %cst_56 = arith.constant 1.000000e+00 : f32
      %73 = vector.broadcast %cst_56 : f32 to vector<1x128xf32>
      %74 = arith.addf %73, %72 : vector<1x128xf32>
      %75 = arith.divf %73, %74 : vector<1x128xf32>
      %c0_57 = arith.constant 0 : index
      %c0_58 = arith.constant 0 : index
      %76 = vector.load %arg18[%c0_57, %c0_58] : memref<1x128xf32, #tpu.memory_space<vmem>>, vector<1x128xf32>
      %77 = arith.mulf %67, %76 : vector<1x128xf32>
      %78 = arith.mulf %61, %69 : vector<1x128xf32>
      %79 = arith.addf %77, %78 : vector<1x128xf32>
      %80 = math.tanh %79 : vector<1x128xf32>
      %81 = arith.mulf %75, %80 : vector<1x128xf32>
      %c0_59 = arith.constant 0 : index
      %c0_60 = arith.constant 0 : index
      %82 = vector.load %arg18[%c0_59, %c0_60] : memref<1x128xf32, #tpu.memory_space<vmem>>, vector<1x128xf32>
      tpu.vector_store %arg18[%c0_59, %c0_60], %79 {strides = array<i32>} : memref<1x128xf32, #tpu.memory_space<vmem>>, vector<1x128xf32>,
      %c0_61 = arith.constant 0 : index
      %c0_62 = arith.constant 0 : index
      %83 = vector.load %arg17[%c0_61, %c0_62] : memref<1x128xf32, #tpu.memory_space<vmem>>, vector<1x128xf32>
      tpu.vector_store %arg17[%c0_61, %c0_62], %81 {strides = array<i32>} : memref<1x128xf32, #tpu.memory_space<vmem>>, vector<1x128xf32>,
      %84 = arith.index_cast %49 : i32 to index
      %c0_63 = arith.constant 0 : index
      %85 = vector.load %arg19[%84, %c0_63] : memref<2x128xf32, #tpu.memory_space<vmem>>, vector<1x128xf32>
      tpu.vector_store %arg19[%84, %c0_63], %81 {strides = array<i32>} : memref<2x128xf32, #tpu.memory_space<vmem>>, vector<1x128xf32>,
    }
    %c2_i32_36 = arith.constant 2 : i32
    %c0_37 = arith.constant 0 : index
    %c0_38 = arith.constant 0 : index
    %38 = vector.load %arg19[%c0_37, %c0_38] : memref<2x128xf32, #tpu.memory_space<vmem>>, vector<2x128xf32>
    %c0_39 = arith.constant 0 : index
    %c0_40 = arith.constant 0 : index
    %39 = vector.load %arg13[%c0_39, %c0_40] : memref<1x128xf32, #tpu.memory_space<vmem>>, vector<1x128xf32>
    %40 = vector.broadcast %39 : vector<1x128xf32> to vector<2x128xf32>
    %41 = arith.mulf %38, %40 : vector<2x128xf32>
    %cst_41 = arith.constant dense<0.000000e+00> : vector<2xf32>
    %42 = vector.multi_reduction <add>, %41, %cst_41 [1] : vector<2x128xf32> to vector<2xf32>
    %43 = vector.shape_cast %42 : vector<2xf32> to vector<2x1xf32>
    %c0_42 = arith.constant 0 : index
    %c0_43 = arith.constant 0 : index
    %44 = vector.load %arg14[%c0_42, %c0_43] : memref<1x1xf32, #tpu.memory_space<vmem>>, vector<1x1xf32>
    %45 = vector.broadcast %44 : vector<1x1xf32> to vector<2x1xf32>
    %46 = arith.addf %43, %45 : vector<2x1xf32>
    %c0_44 = arith.constant 0 : index
    %c0_45 = arith.constant 0 : index
    %47 = vector.load %arg15[%c0_44, %c0_45] : memref<2x1xf32, #tpu.memory_space<vmem>>, vector<2x1xf32>
    tpu.vector_store %arg15[%c0_44, %c0_45], %46 {strides = array<i32>} : memref<2x1xf32, #tpu.memory_space<vmem>>, vector<2x1xf32>,
    return
  }
  func.func @transform_0(%arg0: i32) -> (i32, i32) {
    %c0_i32 = arith.constant 0 : i32
    %c0_i32_0 = arith.constant 0 : i32
    %c0_i32_1 = arith.constant 0 : i32
    return %c0_i32, %c0_i32_0 : i32, i32
  }
  func.func @transform_1(%arg0: i32) -> (i32, i32) {
    %c0_i32 = arith.constant 0 : i32
    %c0_i32_0 = arith.constant 0 : i32
    %c0_i32_1 = arith.constant 0 : i32
    return %c0_i32, %c0_i32_0 : i32, i32
  }
  func.func @transform_2(%arg0: i32) -> (i32, i32) {
    %c0_i32 = arith.constant 0 : i32
    %c0_i32_0 = arith.constant 0 : i32
    %c0_i32_1 = arith.constant 0 : i32
    return %c0_i32, %c0_i32_0 : i32, i32
  }
  func.func @transform_3(%arg0: i32) -> (i32, i32) {
    %c0_i32 = arith.constant 0 : i32
    %c0_i32_0 = arith.constant 0 : i32
    %c0_i32_1 = arith.constant 0 : i32
    return %c0_i32, %c0_i32_0 : i32, i32
  }
  func.func @transform_4(%arg0: i32) -> (i32, i32) {
    %c0_i32 = arith.constant 0 : i32
    %c0_i32_0 = arith.constant 0 : i32
    %c0_i32_1 = arith.constant 0 : i32
    return %c0_i32, %c0_i32_0 : i32, i32
  }
  func.func @transform_5(%arg0: i32) -> (i32, i32) {
    %c0_i32 = arith.constant 0 : i32
    %c0_i32_0 = arith.constant 0 : i32
    %c0_i32_1 = arith.constant 0 : i32
    return %c0_i32, %c0_i32_0 : i32, i32
  }
  func.func @transform_6(%arg0: i32) -> (i32, i32) {
    %c0_i32 = arith.constant 0 : i32
    %c0_i32_0 = arith.constant 0 : i32
    %c0_i32_1 = arith.constant 0 : i32
    return %c0_i32, %c0_i32_0 : i32, i32
  }
  func.func @transform_7(%arg0: i32) -> (i32, i32) {
    %c0_i32 = arith.constant 0 : i32
    %c0_i32_0 = arith.constant 0 : i32
    %c0_i32_1 = arith.constant 0 : i32
    return %c0_i32, %c0_i32_0 : i32, i32
  }
  func.func @transform_8(%arg0: i32) -> (i32, i32) {
    %c0_i32 = arith.constant 0 : i32
    %c0_i32_0 = arith.constant 0 : i32
    %c0_i32_1 = arith.constant 0 : i32
    return %c0_i32, %c0_i32_0 : i32, i32
  }
  func.func @transform_9(%arg0: i32) -> (i32, i32) {
    %c0_i32 = arith.constant 0 : i32
    %c0_i32_0 = arith.constant 0 : i32
    %c0_i32_1 = arith.constant 0 : i32
    return %c0_i32, %c0_i32_0 : i32, i32
  }
  func.func @transform_10(%arg0: i32) -> (i32, i32) {
    %c0_i32 = arith.constant 0 : i32
    %c0_i32_0 = arith.constant 0 : i32
    %c0_i32_1 = arith.constant 0 : i32
    return %c0_i32, %c0_i32_0 : i32, i32
  }
  func.func @transform_11(%arg0: i32) -> (i32, i32) {
    %c0_i32 = arith.constant 0 : i32
    %c0_i32_0 = arith.constant 0 : i32
    %c0_i32_1 = arith.constant 0 : i32
    return %c0_i32, %c0_i32_0 : i32, i32
  }
  func.func @transform_12(%arg0: i32) -> (i32, i32) {
    %c0_i32 = arith.constant 0 : i32
    %c0_i32_0 = arith.constant 0 : i32
    %c0_i32_1 = arith.constant 0 : i32
    return %c0_i32, %c0_i32_0 : i32, i32
  }
  func.func @transform_13(%arg0: i32) -> (i32, i32) {
    %c0_i32 = arith.constant 0 : i32
    %c0_i32_0 = arith.constant 0 : i32
    %c0_i32_1 = arith.constant 0 : i32
    return %c0_i32, %c0_i32_0 : i32, i32
  }
  func.func @transform_14(%arg0: i32) -> (i32, i32) {
    %c0_i32 = arith.constant 0 : i32
    %c0_i32_0 = arith.constant 0 : i32
    %c0_i32_1 = arith.constant 0 : i32
    return %c0_i32, %c0_i32_0 : i32, i32
  }
}

</mosaic_0001>

<llo_original>
// kernel: critic_forward_pallas.2
$region0: #{critic_forward_pallas.2}
  #allocation0 [shape = 'u32[]', space=smem, size = 0x4, offset = 0x4, fixed_abs, tag = 'smem constant byte address 0x4 - core index']
  #allocation1 [shape = 'u32[72,128]{1,0:T(1,128)}', space=vmem, size = 0x9000, scoped, tag = 'internal scratch']
  %s0 = inlined_call_operand.vmem [shape: f32[118,3], index: 0, kind: input, shape index: {}]
  %s1 = inlined_call_operand.vmem [shape: f32[118,3], index: 1, kind: input, shape index: {}]
  %s2 = inlined_call_operand.vmem [shape: f32[118,3], index: 2, kind: input, shape index: {}]
  %s3 = inlined_call_operand.hbm [shape: f32[3,64], index: 3, kind: input, shape index: {}]
  %s4 = inlined_call_operand.hbm [shape: f32[1,64], index: 4, kind: input, shape index: {}]
  %s5 = inlined_call_operand.hbm [shape: f32[3,64,64], index: 5, kind: input, shape index: {}]
  %s6 = inlined_call_operand.hbm [shape: f32[1,64], index: 6, kind: input, shape index: {}]
  %s7 = inlined_call_operand.vmem [shape: f32[118,64], index: 7, kind: output, shape index: {}]
  %s8 = sld [smem:[#allocation0]]
  $region54: #{critic_forward_pallas.2} parent=0
    _
  %s10 = ssub.s32 1, %s8
  %s11 = scalar_select 0, %s10, %s8
  $region1: #{critic_forward_pallas.2} parent=0
    #allocation2 [shape = 'u8[2048]{0}', space=vmem, size = 0x800, scoped, tag = 'input window, operand 3, single buffered']
    #allocation3 [shape = 's32[1]{0}', space=sflag, size = 0x4, scoped, tag = 'scoped memory for critic_forward_pallas.2']
    #allocation4 [shape = 'u8[512]{0}', space=vmem, size = 0x400, scoped, tag = 'input window, operand 4, single buffered']
    #allocation5 [shape = 's32[1]{0}', space=sflag, size = 0x4, scoped, tag = 'scoped memory for critic_forward_pallas.2']
    #allocation6 [shape = 'u8[98304]{0}', space=vmem, size = 0x18000, scoped, tag = 'input window, operand 5, single buffered']
    #allocation7 [shape = 'u8[512]{0}', space=vmem, size = 0x400, scoped, tag = 'input window, operand 6, single buffered']
    #allocation8 [shape = 's32[1]{0}', space=sflag, size = 0x4, scoped, tag = 'scoped memory for critic_forward_pallas.2']
    %12 = vsyncpa [#allocation3], 0
    %13 = vsyncpa [#allocation5], 0
    %14 = vsyncpa [#allocation8], 0
    // Predicated region
    $region2: #{critic_forward_pallas.2} parent=1 // pred_check
      _
    $region3: #{critic_forward_pallas.2} parent=1 // pred_check_branch
      %16 = sbr.rel (0) target = $region5
    $region4: #{critic_forward_pallas.2} parent=1 // pred_region
      _
    $region5: #{critic_forward_pallas.2} parent=1 // pred_fallthru
      _
    // Predicated region
    $region6: #{critic_forward_pallas.2} parent=1 // pred_check
      _
    $region7: #{critic_forward_pallas.2} parent=1 // pred_check_branch
      %18 = sbr.rel (0) target = $region9
    $region8: #{critic_forward_pallas.2} parent=1 // pred_region
      _
    $region9: #{critic_forward_pallas.2} parent=1 // pred_fallthru
      _
    // Predicated region
    $region10: #{critic_forward_pallas.2} parent=1 // pred_check
      _
    $region11: #{critic_forward_pallas.2} parent=1 // pred_check_branch
      %20 = sbr.rel (0) target = $region13
    $region12: #{critic_forward_pallas.2} parent=1 // pred_region
      _
    $region13: #{critic_forward_pallas.2} parent=1 // pred_fallthru
      _
    // Predicated region
    $region14: #{critic_forward_pallas.2} parent=1 // pred_check
      _
    $region15: #{critic_forward_pallas.2} parent=1 // pred_check_branch
      %22 = sbr.rel (0) target = $region17
    $region16: #{critic_forward_pallas.2} parent=1 // pred_region
      %24 = vsyncadd [#allocation3], 0
      %s26 = sshll.u32 %s3, 4
      %s27 = int_to_ptr.hbm [resolvable:$true] %s26
      %s28 = sshll.u32 [#allocation2], 4
      %s29 = int_to_ptr.vmem [resolvable:$true] %s28
      %31 = dma.hbm_to_vmem [thread:$0]  %s27, 64, %s29, [#allocation3]
    $region17: #{critic_forward_pallas.2} parent=1 // pred_fallthru
      _
    // Predicated region
    $region18: #{critic_forward_pallas.2} parent=1 // pred_check
      _
    $region19: #{critic_forward_pallas.2} parent=1 // pred_check_branch
      %33 = sbr.rel (0) target = $region21
    $region20: #{critic_forward_pallas.2} parent=1 // pred_region
      %35 = vsyncadd [#allocation5], 0
      %s37 = sshll.u32 %s4, 4
      %s38 = int_to_ptr.hbm [resolvable:$true] %s37
      %s39 = sshll.u32 [#allocation4], 4
      %s40 = int_to_ptr.vmem [resolvable:$true] %s39
      %42 = dma.hbm_to_vmem [thread:$0]  %s38, 16, %s40, [#allocation5]
    $region21: #{critic_forward_pallas.2} parent=1 // pred_fallthru
      _
    // Predicated region
    $region22: #{critic_forward_pallas.2} parent=1 // pred_check
      _
    $region23: #{critic_forward_pallas.2} parent=1 // pred_check_branch
      %44 = sbr.rel (0) target = $region25
    $region24: #{critic_forward_pallas.2} parent=1 // pred_region
      %46 = vsyncadd [#allocation5], 0
      %s47 = sshll.u32 %s5, 4
      %s48 = int_to_ptr.hbm [resolvable:$true] %s47
      %s49 = sshll.u32 [#allocation6], 4
      %s50 = int_to_ptr.vmem [resolvable:$true] %s49
      %55 = dma.hbm_to_vmem [thread:$0]  %s48, 3072, %s50, [#allocation5], 128, 128, 8
    $region25: #{critic_forward_pallas.2} parent=1 // pred_fallthru
      _
    // Predicated region
    $region26: #{critic_forward_pallas.2} parent=1 // pred_check
      _
    $region27: #{critic_forward_pallas.2} parent=1 // pred_check_branch
      %57 = sbr.rel (0) target = $region29
    $region28: #{critic_forward_pallas.2} parent=1 // pred_region
      %59 = vsyncadd [#allocation8], 0
      %s61 = sshll.u32 %s6, 4
      %s62 = int_to_ptr.hbm [resolvable:$true] %s61
      %s63 = sshll.u32 [#allocation7], 4
      %s64 = int_to_ptr.vmem [resolvable:$true] %s63
      %66 = dma.hbm_to_vmem [thread:$0]  %s62, 16, %s64, [#allocation8]
    $region29: #{critic_forward_pallas.2} parent=1 // pred_fallthru
      _
    // Predicated region
    $region30: #{critic_forward_pallas.2} parent=1 // pred_check
      _
    $region31: #{critic_forward_pallas.2} parent=1 // pred_check_branch
      %68 = sbr.rel (0) target = $region33
    $region32: #{critic_forward_pallas.2} parent=1 // pred_region
      %70 = dma.done [#allocation3], 64
    $region33: #{critic_forward_pallas.2} parent=1 // pred_fallthru
      _
    // Predicated region
    $region34: #{critic_forward_pallas.2} parent=1 // pred_check
      _
    $region35: #{critic_forward_pallas.2} parent=1 // pred_check_branch
      %72 = sbr.rel (0) target = $region37
    $region36: #{critic_forward_pallas.2} parent=1 // pred_region
      %74 = dma.done [#allocation5], 16
    $region37: #{critic_forward_pallas.2} parent=1 // pred_fallthru
      _
    // Predicated region
    $region38: #{critic_forward_pallas.2} parent=1 // pred_check
      _
    $region39: #{critic_forward_pallas.2} parent=1 // pred_check_branch
      %76 = sbr.rel (0) target = $region41
    $region40: #{critic_forward_pallas.2} parent=1 // pred_region
      %78 = dma.done [#allocation5], 3072
    $region41: #{critic_forward_pallas.2} parent=1 // pred_fallthru
      _
    // Predicated region
    $region42: #{critic_forward_pallas.2} parent=1 // pred_check
      _
    $region43: #{critic_forward_pallas.2} parent=1 // pred_check_branch
      %80 = sbr.rel (0) target = $region45
    $region44: #{critic_forward_pallas.2} parent=1 // pred_region
      %82 = dma.done [#allocation8], 16
    $region45: #{critic_forward_pallas.2} parent=1 // pred_fallthru
      _
    %v83 = vld [vmem:[%s0] sm:$0xff]
    %v84 = vld [vmem:[%s0 + $0x8] sm:$0xff]
    %v85 = vld [vmem:[%s0 + $0x10] sm:$0xff]
    %v86 = vld [vmem:[%s0 + $0x18] sm:$0xff]
    %v87 = vld [vmem:[%s0 + $0x20] sm:$0xff]
    %v88 = vld [vmem:[%s0 + $0x28] sm:$0xff]
    %v89 = vld [vmem:[%s0 + $0x30] sm:$0xff]
    %v90 = vld [vmem:[%s0 + $0x38] sm:$0xff]
    %v91 = vld [vmem:[%s0 + $0x40] sm:$0xff]
    %v92 = vld [vmem:[%s0 + $0x48] sm:$0xff]
    %v93 = vld [vmem:[%s0 + $0x50] sm:$0xff]
    %v94 = vld [vmem:[%s0 + $0x58] sm:$0xff]
    %v95 = vld [vmem:[%s0 + $0x60] sm:$0xff]
    %v96 = vld [vmem:[%s0 + $0x68] sm:$0xff]
    %v97 = vld [vmem:[%s0 + $0x70] sm:$0x3f]
    %v98 = vld [vmem:[#allocation2] sm:$0x7]
    %v99 = vld [vmem:[#allocation4] sm:$0x1]
    %v101 = vperm.slane %v99, 0
    %vm103 = vcmask 23552
    %v105 = vsel %vm103, %v83, 0
    %v108 = vsel %vm103, %v84, 0
    %v111 = vsel %vm103, %v85, 0
    %v114 = vsel %vm103, %v86, 0
    %v117 = vsel %vm103, %v87, 0
    %v120 = vsel %vm103, %v88, 0
    %v123 = vsel %vm103, %v89, 0
    %v126 = vsel %vm103, %v90, 0
    %v129 = vsel %vm103, %v91, 0
    %v132 = vsel %vm103, %v92, 0
    %v135 = vsel %vm103, %v93, 0
    %v138 = vsel %vm103, %v94, 0
    %v141 = vsel %vm103, %v95, 0
    %v144 = vsel %vm103, %v96, 0
    %v147 = vsel %vm103, %v97, 0
    %vm149 = vcmask 1042432
    %v151 = vsel %vm149, %v98, 0
    %153 = vmatpush.msra.mxu0 0.0
    %154 = vmatpush.msra.mxu0 0.0
    %155 = vmatpush.msra.mxu0 0.0
    %156 = vmatpush.msra.mxu0 0.0
    %157 = vmatpush.msra.mxu0 0.0
    %158 = vmatpush.msra.mxu0 0.0
    %159 = vmatpush.msra.mxu0 0.0
    %160 = vmatpush.msra.mxu0 0.0
    %161 = vmatpush.msra.mxu0 0.0
    %162 = vmatpush.msra.mxu0 0.0
    %163 = vmatpush.msra.mxu0 0.0
    %164 = vmatpush.msra.mxu0 0.0
    %165 = vmatpush.msra.mxu0 0.0
    %166 = vmatpush.msra.mxu0 0.0
    %167 = vmatpush.msra.mxu0 0.0
    %168 = vmatpush.msra.mxu0 %v151
    %169 = vmatmul.f32.gmra.mxu0 %v105
    %v170 = vpop.f32.mrf.mxu0
    %v171 = vadd.f32 %v101, %v170
    %172 = vmatmul.f32.gmra.mxu0 %v108
    %v173 = vpop.f32.mrf.mxu0
    %v174 = vadd.f32 %v101, %v173
    %175 = vmatmul.f32.gmra.mxu0 %v111
    %v176 = vpop.f32.mrf.mxu0
    %v177 = vadd.f32 %v101, %v176
    %178 = vmatmul.f32.gmra.mxu0 %v114
    %v179 = vpop.f32.mrf.mxu0
    %v180 = vadd.f32 %v101, %v179
    %181 = vmatmul.f32.gmra.mxu0 %v117
    %v182 = vpop.f32.mrf.mxu0
    %v183 = vadd.f32 %v101, %v182
    %184 = vmatmul.f32.gmra.mxu0 %v120
    %v185 = vpop.f32.mrf.mxu0
    %v186 = vadd.f32 %v101, %v185
    %187 = vmatmul.f32.gmra.mxu0 %v123
    %v188 = vpop.f32.mrf.mxu0
    %v189 = vadd.f32 %v101, %v188
    %190 = vmatmul.f32.gmra.mxu0 %v126
    %v191 = vpop.f32.mrf.mxu0
    %v192 = vadd.f32 %v101, %v191
    %193 = vmatmul.f32.gmra.mxu0 %v129
    %v194 = vpop.f32.mrf.mxu0
    %v195 = vadd.f32 %v101, %v194
    %196 = vmatmul.f32.gmra.mxu0 %v132
    %v197 = vpop.f32.mrf.mxu0
    %v198 = vadd.f32 %v101, %v197
    %199 = vmatmul.f32.gmra.mxu0 %v135
    %v200 = vpop.f32.mrf.mxu0
    %v201 = vadd.f32 %v101, %v200
    %202 = vmatmul.f32.gmra.mxu0 %v138
    %v203 = vpop.f32.mrf.mxu0
    %v204 = vadd.f32 %v101, %v203
    %205 = vmatmul.f32.gmra.mxu0 %v141
    %v206 = vpop.f32.mrf.mxu0
    %v207 = vadd.f32 %v101, %v206
    %208 = vmatmul.f32.gmra.mxu0 %v144
    %v209 = vpop.f32.mrf.mxu0
    %v210 = vadd.f32 %v101, %v209
    %211 = vmatmul.f32.gmra.mxu0 %v147
    %v212 = vpop.f32.mrf.mxu0
    %v213 = vadd.f32 %v101, %v212
    %214 = vdwg.mxu0
    %v215 = vmax.f32 %v171, 0.0
    %v216 = vmax.f32 %v174, 0.0
    %v217 = vmax.f32 %v177, 0.0
    %v218 = vmax.f32 %v180, 0.0
    %v219 = vmax.f32 %v183, 0.0
    %v220 = vmax.f32 %v186, 0.0
    %v221 = vmax.f32 %v189, 0.0
    %v222 = vmax.f32 %v192, 0.0
    %v223 = vmax.f32 %v195, 0.0
    %v224 = vmax.f32 %v198, 0.0
    %v225 = vmax.f32 %v201, 0.0
    %v226 = vmax.f32 %v204, 0.0
    %v227 = vmax.f32 %v207, 0.0
    %v228 = vmax.f32 %v210, 0.0
    %v229 = vmax.f32 %v213, 0.0
    %v230 = vld [vmem:[%s1] sm:$0xff]
    %v231 = vld [vmem:[%s1 + $0x8] sm:$0xff]
    %v232 = vld [vmem:[%s1 + $0x10] sm:$0xff]
    %v233 = vld [vmem:[%s1 + $0x18] sm:$0xff]
    %v234 = vld [vmem:[%s1 + $0x20] sm:$0xff]
    %v235 = vld [vmem:[%s1 + $0x28] sm:$0xff]
    %v236 = vld [vmem:[%s1 + $0x30] sm:$0xff]
    %v237 = vld [vmem:[%s1 + $0x38] sm:$0xff]
    %v238 = vld [vmem:[%s1 + $0x40] sm:$0xff]
    %v239 = vld [vmem:[%s1 + $0x48] sm:$0xff]
    %v240 = vld [vmem:[%s1 + $0x50] sm:$0xff]
    %v241 = vld [vmem:[%s1 + $0x58] sm:$0xff]
    %v242 = vld [vmem:[%s1 + $0x60] sm:$0xff]
    %v243 = vld [vmem:[%s1 + $0x68] sm:$0xff]
    %v244 = vld [vmem:[%s1 + $0x70] sm:$0x3f]
    %v246 = vsel %vm103, %v230, 0
    %v249 = vsel %vm103, %v231, 0
    %v252 = vsel %vm103, %v232, 0
    %v255 = vsel %vm103, %v233, 0
    %v258 = vsel %vm103, %v234, 0
    %v261 = vsel %vm103, %v235, 0
    %v264 = vsel %vm103, %v236, 0
    %v267 = vsel %vm103, %v237, 0
    %v270 = vsel %vm103, %v238, 0
    %v273 = vsel %vm103, %v239, 0
    %v276 = vsel %vm103, %v240, 0
    %v279 = vsel %vm103, %v241, 0
    %v282 = vsel %vm103, %v242, 0
    %v285 = vsel %vm103, %v243, 0
    %v288 = vsel %vm103, %v244, 0
    %290 = vmatpush.msra.mxu0 0.0
    %291 = vmatpush.msra.mxu0 0.0
    %292 = vmatpush.msra.mxu0 0.0
    %293 = vmatpush.msra.mxu0 0.0
    %294 = vmatpush.msra.mxu0 0.0
    %295 = vmatpush.msra.mxu0 0.0
    %296 = vmatpush.msra.mxu0 0.0
    %297 = vmatpush.msra.mxu0 0.0
    %298 = vmatpush.msra.mxu0 0.0
    %299 = vmatpush.msra.mxu0 0.0
    %300 = vmatpush.msra.mxu0 0.0
    %301 = vmatpush.msra.mxu0 0.0
    %302 = vmatpush.msra.mxu0 0.0
    %303 = vmatpush.msra.mxu0 0.0
    %304 = vmatpush.msra.mxu0 0.0
    %305 = vmatpush.msra.mxu0 %v151
    %306 = vmatmul.f32.gmra.mxu0 %v246
    %v307 = vpop.f32.mrf.mxu0
    %v308 = vadd.f32 %v101, %v307
    %309 = vmatmul.f32.gmra.mxu0 %v249
    %v310 = vpop.f32.mrf.mxu0
    %v311 = vadd.f32 %v101, %v310
    %312 = vmatmul.f32.gmra.mxu0 %v252
    %v313 = vpop.f32.mrf.mxu0
    %v314 = vadd.f32 %v101, %v313
    %315 = vmatmul.f32.gmra.mxu0 %v255
    %v316 = vpop.f32.mrf.mxu0
    %v317 = vadd.f32 %v101, %v316
    %318 = vmatmul.f32.gmra.mxu0 %v258
    %v319 = vpop.f32.mrf.mxu0
    %v320 = vadd.f32 %v101, %v319
    %321 = vmatmul.f32.gmra.mxu0 %v261
    %v322 = vpop.f32.mrf.mxu0
    %v323 = vadd.f32 %v101, %v322
    %324 = vmatmul.f32.gmra.mxu0 %v264
    %v325 = vpop.f32.mrf.mxu0
    %v326 = vadd.f32 %v101, %v325
    %327 = vmatmul.f32.gmra.mxu0 %v267
    %v328 = vpop.f32.mrf.mxu0
    %v329 = vadd.f32 %v101, %v328
    %330 = vmatmul.f32.gmra.mxu0 %v270
    %v331 = vpop.f32.mrf.mxu0
    %v332 = vadd.f32 %v101, %v331
    %333 = vmatmul.f32.gmra.mxu0 %v273
    %v334 = vpop.f32.mrf.mxu0
    %v335 = vadd.f32 %v101, %v334
    %336 = vmatmul.f32.gmra.mxu0 %v276
    %v337 = vpop.f32.mrf.mxu0
    %v338 = vadd.f32 %v101, %v337
    %339 = vmatmul.f32.gmra.mxu0 %v279
    %v340 = vpop.f32.mrf.mxu0
    %v341 = vadd.f32 %v101, %v340
    %342 = vmatmul.f32.gmra.mxu0 %v282
    %v343 = vpop.f32.mrf.mxu0
    %v344 = vadd.f32 %v101, %v343
    %345 = vmatmul.f32.gmra.mxu0 %v285
    %v346 = vpop.f32.mrf.mxu0
    %v347 = vadd.f32 %v101, %v346
    %348 = vmatmul.f32.gmra.mxu0 %v288
    %v349 = vpop.f32.mrf.mxu0
    %v350 = vadd.f32 %v101, %v349
    %351 = vdwg.mxu0
    %v352 = vmax.f32 %v308, 0.0
    %v353 = vmax.f32 %v311, 0.0
    %v354 = vmax.f32 %v314, 0.0
    %v355 = vmax.f32 %v317, 0.0
    %v356 = vmax.f32 %v320, 0.0
    %v357 = vmax.f32 %v323, 0.0
    %v358 = vmax.f32 %v326, 0.0
    %v359 = vmax.f32 %v329, 0.0
    %v360 = vmax.f32 %v332, 0.0
    %v361 = vmax.f32 %v335, 0.0
    %v362 = vmax.f32 %v338, 0.0
    %v363 = vmax.f32 %v341, 0.0
    %v364 = vmax.f32 %v344, 0.0
    %v365 = vmax.f32 %v347, 0.0
    %v366 = vmax.f32 %v350, 0.0
    %v367 = vld [vmem:[%s2] sm:$0xff]
    %v368 = vld [vmem:[%s2 + $0x8] sm:$0xff]
    %v369 = vld [vmem:[%s2 + $0x10] sm:$0xff]
    %v370 = vld [vmem:[%s2 + $0x18] sm:$0xff]
    %v371 = vld [vmem:[%s2 + $0x20] sm:$0xff]
    %v372 = vld [vmem:[%s2 + $0x28] sm:$0xff]
    %v373 = vld [vmem:[%s2 + $0x30] sm:$0xff]
    %v374 = vld [vmem:[%s2 + $0x38] sm:$0xff]
    %v375 = vld [vmem:[%s2 + $0x40] sm:$0xff]
    %v376 = vld [vmem:[%s2 + $0x48] sm:$0xff]
    %v377 = vld [vmem:[%s2 + $0x50] sm:$0xff]
    %v378 = vld [vmem:[%s2 + $0x58] sm:$0xff]
    %v379 = vld [vmem:[%s2 + $0x60] sm:$0xff]
    %v380 = vld [vmem:[%s2 + $0x68] sm:$0xff]
    %v381 = vld [vmem:[%s2 + $0x70] sm:$0x3f]
    %v383 = vsel %vm103, %v367, 0
    %v386 = vsel %vm103, %v368, 0
    %v389 = vsel %vm103, %v369, 0
    %v392 = vsel %vm103, %v370, 0
    %v395 = vsel %vm103, %v371, 0
    %v398 = vsel %vm103, %v372, 0
    %v401 = vsel %vm103, %v373, 0
    %v404 = vsel %vm103, %v374, 0
    %v407 = vsel %vm103, %v375, 0
    %v410 = vsel %vm103, %v376, 0
    %v413 = vsel %vm103, %v377, 0
    %v416 = vsel %vm103, %v378, 0
    %v419 = vsel %vm103, %v379, 0
    %v422 = vsel %vm103, %v380, 0
    %v425 = vsel %vm103, %v381, 0
    %427 = vmatpush.msra.mxu0 0.0
    %428 = vmatpush.msra.mxu0 0.0
    %429 = vmatpush.msra.mxu0 0.0
    %430 = vmatpush.msra.mxu0 0.0
    %431 = vmatpush.msra.mxu0 0.0
    %432 = vmatpush.msra.mxu0 0.0
    %433 = vmatpush.msra.mxu0 0.0
    %434 = vmatpush.msra.mxu0 0.0
    %435 = vmatpush.msra.mxu0 0.0
    %436 = vmatpush.msra.mxu0 0.0
    %437 = vmatpush.msra.mxu0 0.0
    %438 = vmatpush.msra.mxu0 0.0
    %439 = vmatpush.msra.mxu0 0.0
    %440 = vmatpush.msra.mxu0 0.0
    %441 = vmatpush.msra.mxu0 0.0
    %442 = vmatpush.msra.mxu0 %v151
    %443 = vmatmul.f32.gmra.mxu0 %v383
    %v444 = vpop.f32.mrf.mxu0
    %v445 = vadd.f32 %v101, %v444
    %446 = vmatmul.f32.gmra.mxu0 %v386
    %v447 = vpop.f32.mrf.mxu0
    %v448 = vadd.f32 %v101, %v447
    %449 = vmatmul.f32.gmra.mxu0 %v389
    %v450 = vpop.f32.mrf.mxu0
    %v451 = vadd.f32 %v101, %v450
    %452 = vmatmul.f32.gmra.mxu0 %v392
    %v453 = vpop.f32.mrf.mxu0
    %v454 = vadd.f32 %v101, %v453
    %455 = vmatmul.f32.gmra.mxu0 %v395
    %v456 = vpop.f32.mrf.mxu0
    %v457 = vadd.f32 %v101, %v456
    %458 = vmatmul.f32.gmra.mxu0 %v398
    %v459 = vpop.f32.mrf.mxu0
    %v460 = vadd.f32 %v101, %v459
    %461 = vmatmul.f32.gmra.mxu0 %v401
    %v462 = vpop.f32.mrf.mxu0
    %v463 = vadd.f32 %v101, %v462
    %464 = vmatmul.f32.gmra.mxu0 %v404
    %v465 = vpop.f32.mrf.mxu0
    %v466 = vadd.f32 %v101, %v465
    %467 = vmatmul.f32.gmra.mxu0 %v407
    %v468 = vpop.f32.mrf.mxu0
    %v469 = vadd.f32 %v101, %v468
    %470 = vmatmul.f32.gmra.mxu0 %v410
    %v471 = vpop.f32.mrf.mxu0
    %v472 = vadd.f32 %v101, %v471
    %473 = vmatmul.f32.gmra.mxu0 %v413
    %v474 = vpop.f32.mrf.mxu0
    %v475 = vadd.f32 %v101, %v474
    %476 = vmatmul.f32.gmra.mxu0 %v416
    %v477 = vpop.f32.mrf.mxu0
    %v478 = vadd.f32 %v101, %v477
    %479 = vmatmul.f32.gmra.mxu0 %v419
    %v480 = vpop.f32.mrf.mxu0
    %v481 = vadd.f32 %v101, %v480
    %482 = vmatmul.f32.gmra.mxu0 %v422
    %v483 = vpop.f32.mrf.mxu0
    %v484 = vadd.f32 %v101, %v483
    %485 = vmatmul.f32.gmra.mxu0 %v425
    %v486 = vpop.f32.mrf.mxu0
    %v487 = vadd.f32 %v101, %v486
    %488 = vdwg.mxu0
    %v489 = vmax.f32 %v445, 0.0
    %v490 = vmax.f32 %v448, 0.0
    %v491 = vmax.f32 %v451, 0.0
    %v492 = vmax.f32 %v454, 0.0
    %v493 = vmax.f32 %v457, 0.0
    %v494 = vmax.f32 %v460, 0.0
    %v495 = vmax.f32 %v463, 0.0
    %v496 = vmax.f32 %v466, 0.0
    %v497 = vmax.f32 %v469, 0.0
    %v498 = vmax.f32 %v472, 0.0
    %v499 = vmax.f32 %v475, 0.0
    %v500 = vmax.f32 %v478, 0.0
    %v501 = vmax.f32 %v481, 0.0
    %v502 = vmax.f32 %v484, 0.0
    %v503 = vmax.f32 %v487, 0.0
    %v504 = vld [vmem:[#allocation7] sm:$0x1]
    %v505 = vld [vmem:[#allocation6] sm:$0xff]
    %v506 = vld [vmem:[#allocation6 + $0x8] sm:$0xff]
    %v507 = vld [vmem:[#allocation6 + $0x10] sm:$0xff]
    %v508 = vld [vmem:[#allocation6 + $0x18] sm:$0xff]
    %v509 = vld [vmem:[#allocation6 + $0x20] sm:$0xff]
    %v510 = vld [vmem:[#allocation6 + $0x28] sm:$0xff]
    %v511 = vld [vmem:[#allocation6 + $0x30] sm:$0xff]
    %v512 = vld [vmem:[#allocation6 + $0x38] sm:$0xff]
    %vm513 = vcmask 523264
    %v515 = vsel %vm513, %v215, 0
    %v518 = vsel %vm513, %v216, 0
    %v521 = vsel %vm513, %v217, 0
    %v524 = vsel %vm513, %v218, 0
    %v527 = vsel %vm513, %v219, 0
    %v530 = vsel %vm513, %v220, 0
    %v533 = vsel %vm513, %v221, 0
    %v536 = vsel %vm513, %v222, 0
    %v539 = vsel %vm513, %v223, 0
    %v542 = vsel %vm513, %v224, 0
    %v545 = vsel %vm513, %v225, 0
    %v548 = vsel %vm513, %v226, 0
    %v551 = vsel %vm513, %v227, 0
    %v554 = vsel %vm513, %v228, 0
    %v557 = vsel %vm513, %v229, 0
    %559 = vmatpush.msra.mxu0 0.0
    %560 = vmatpush.msra.mxu0 0.0
    %561 = vmatpush.msra.mxu0 0.0
    %562 = vmatpush.msra.mxu0 0.0
    %563 = vmatpush.msra.mxu0 0.0
    %564 = vmatpush.msra.mxu0 0.0
    %565 = vmatpush.msra.mxu0 0.0
    %566 = vmatpush.msra.mxu0 0.0
    %567 = vmatpush.msra.mxu0 %v512
    %568 = vmatpush.msra.mxu0 %v511
    %569 = vmatpush.msra.mxu0 %v510
    %570 = vmatpush.msra.mxu0 %v509
    %571 = vmatpush.msra.mxu0 %v508
    %572 = vmatpush.msra.mxu0 %v507
    %573 = vmatpush.msra.mxu0 %v506
    %574 = vmatpush.msra.mxu0 %v505
    %575 = vmatmul.f32.gmra.mxu0 %v515
    %v576 = vpop.f32.mrf.mxu0
    %v577 = vadd.f32 0.0, %v576
    %578 = vmatmul.f32.gmra.mxu0 %v518
    %v579 = vpop.f32.mrf.mxu0
    %v580 = vadd.f32 0.0, %v579
    %581 = vmatmul.f32.gmra.mxu0 %v521
    %v582 = vpop.f32.mrf.mxu0
    %v583 = vadd.f32 0.0, %v582
    %584 = vmatmul.f32.gmra.mxu0 %v524
    %v585 = vpop.f32.mrf.mxu0
    %v586 = vadd.f32 0.0, %v585
    %587 = vmatmul.f32.gmra.mxu0 %v527
    %v588 = vpop.f32.mrf.mxu0
    %v589 = vadd.f32 0.0, %v588
    %590 = vmatmul.f32.gmra.mxu0 %v530
    %v591 = vpop.f32.mrf.mxu0
    %v592 = vadd.f32 0.0, %v591
    %593 = vmatmul.f32.gmra.mxu0 %v533
    %v594 = vpop.f32.mrf.mxu0
    %v595 = vadd.f32 0.0, %v594
    %596 = vmatmul.f32.gmra.mxu0 %v536
    %v597 = vpop.f32.mrf.mxu0
    %v598 = vadd.f32 0.0, %v597
    %599 = vmatmul.f32.gmra.mxu0 %v539
    %v600 = vpop.f32.mrf.mxu0
    %v601 = vadd.f32 0.0, %v600
    %602 = vmatmul.f32.gmra.mxu0 %v542
    %v603 = vpop.f32.mrf.mxu0
    %v604 = vadd.f32 0.0, %v603
    %605 = vmatmul.f32.gmra.mxu0 %v545
    %v606 = vpop.f32.mrf.mxu0
    %v607 = vadd.f32 0.0, %v606
    %608 = vmatmul.f32.gmra.mxu0 %v548
    %v609 = vpop.f32.mrf.mxu0
    %v610 = vadd.f32 0.0, %v609
    %611 = vmatmul.f32.gmra.mxu0 %v551
    %v612 = vpop.f32.mrf.mxu0
    %v613 = vadd.f32 0.0, %v612
    %614 = vmatmul.f32.gmra.mxu0 %v554
    %v615 = vpop.f32.mrf.mxu0
    %v616 = vadd.f32 0.0, %v615
    %617 = vmatmul.f32.gmra.mxu0 %v557
    %v618 = vpop.f32.mrf.mxu0
    %v619 = vadd.f32 0.0, %v618
    %620 = vdwg.mxu0
    %v622 = vperm.slane %v504, 0
    %v624 = vadd.f32 %v622, %v577
    %v625 = vadd.f32 %v622, %v580
    %v626 = vadd.f32 %v622, %v583
    %v627 = vadd.f32 %v622, %v586
    %v628 = vadd.f32 %v622, %v589
    %v629 = vadd.f32 %v622, %v592
    %v630 = vadd.f32 %v622, %v595
    %v631 = vadd.f32 %v622, %v598
    %v632 = vadd.f32 %v622, %v601
    %v633 = vadd.f32 %v622, %v604
    %v634 = vadd.f32 %v622, %v607
    %v635 = vadd.f32 %v622, %v610
    %v636 = vadd.f32 %v622, %v613
    %v637 = vadd.f32 %v622, %v616
    %v638 = vadd.f32 %v622, %v619
    %s639 = scalar_lea.vmem [#allocation6], 64
    %v640 = vld [vmem:[%s639] sm:$0xff]
    %v641 = vld [vmem:[%s639 + $0x8] sm:$0xff]
    %v642 = vld [vmem:[%s639 + $0x10] sm:$0xff]
    %v643 = vld [vmem:[%s639 + $0x18] sm:$0xff]
    %v644 = vld [vmem:[%s639 + $0x20] sm:$0xff]
    %v645 = vld [vmem:[%s639 + $0x28] sm:$0xff]
    %v646 = vld [vmem:[%s639 + $0x30] sm:$0xff]
    %v647 = vld [vmem:[%s639 + $0x38] sm:$0xff]
    %v649 = vsel %vm513, %v352, 0
    %v652 = vsel %vm513, %v353, 0
    %v655 = vsel %vm513, %v354, 0
    %v658 = vsel %vm513, %v355, 0
    %v661 = vsel %vm513, %v356, 0
    %v664 = vsel %vm513, %v357, 0
    %v667 = vsel %vm513, %v358, 0
    %v670 = vsel %vm513, %v359, 0
    %v673 = vsel %vm513, %v360, 0
    %v676 = vsel %vm513, %v361, 0
    %v679 = vsel %vm513, %v362, 0
    %v682 = vsel %vm513, %v363, 0
    %v685 = vsel %vm513, %v364, 0
    %v688 = vsel %vm513, %v365, 0
    %v691 = vsel %vm513, %v366, 0
    %693 = vmatpush.msra.mxu0 0.0
    %694 = vmatpush.msra.mxu0 0.0
    %695 = vmatpush.msra.mxu0 0.0
    %696 = vmatpush.msra.mxu0 0.0
    %697 = vmatpush.msra.mxu0 0.0
    %698 = vmatpush.msra.mxu0 0.0
    %699 = vmatpush.msra.mxu0 0.0
    %700 = vmatpush.msra.mxu0 0.0
    %701 = vmatpush.msra.mxu0 %v647
    %702 = vmatpush.msra.mxu0 %v646
    %703 = vmatpush.msra.mxu0 %v645
    %704 = vmatpush.msra.mxu0 %v644
    %705 = vmatpush.msra.mxu0 %v643
    %706 = vmatpush.msra.mxu0 %v642
    %707 = vmatpush.msra.mxu0 %v641
    %708 = vmatpush.msra.mxu0 %v640
    %709 = vmatmul.f32.gmra.mxu0 %v649
    %v710 = vpop.f32.mrf.mxu0
    %v711 = vadd.f32 0.0, %v710
    %712 = vmatmul.f32.gmra.mxu0 %v652
    %v713 = vpop.f32.mrf.mxu0
    %v714 = vadd.f32 0.0, %v713
    %715 = vmatmul.f32.gmra.mxu0 %v655
    %v716 = vpop.f32.mrf.mxu0
    %v717 = vadd.f32 0.0, %v716
    %718 = vmatmul.f32.gmra.mxu0 %v658
    %v719 = vpop.f32.mrf.mxu0
    %v720 = vadd.f32 0.0, %v719
    %721 = vmatmul.f32.gmra.mxu0 %v661
    %v722 = vpop.f32.mrf.mxu0
    %v723 = vadd.f32 0.0, %v722
    %724 = vmatmul.f32.gmra.mxu0 %v664
    %v725 = vpop.f32.mrf.mxu0
    %v726 = vadd.f32 0.0, %v725
    %727 = vmatmul.f32.gmra.mxu0 %v667
    %v728 = vpop.f32.mrf.mxu0
    %v729 = vadd.f32 0.0, %v728
    %730 = vmatmul.f32.gmra.mxu0 %v670
    %v731 = vpop.f32.mrf.mxu0
    %v732 = vadd.f32 0.0, %v731
    %733 = vmatmul.f32.gmra.mxu0 %v673
    %v734 = vpop.f32.mrf.mxu0
    %v735 = vadd.f32 0.0, %v734
    %736 = vmatmul.f32.gmra.mxu0 %v676
    %v737 = vpop.f32.mrf.mxu0
    %v738 = vadd.f32 0.0, %v737
    %739 = vmatmul.f32.gmra.mxu0 %v679
    %v740 = vpop.f32.mrf.mxu0
    %v741 = vadd.f32 0.0, %v740
    %742 = vmatmul.f32.gmra.mxu0 %v682
    %v743 = vpop.f32.mrf.mxu0
    %v744 = vadd.f32 0.0, %v743
    %745 = vmatmul.f32.gmra.mxu0 %v685
    %v746 = vpop.f32.mrf.mxu0
    %v747 = vadd.f32 0.0, %v746
    %748 = vmatmul.f32.gmra.mxu0 %v688
    %v749 = vpop.f32.mrf.mxu0
    %v750 = vadd.f32 0.0, %v749
    %751 = vmatmul.f32.gmra.mxu0 %v691
    %v752 = vpop.f32.mrf.mxu0
    %v753 = vadd.f32 0.0, %v752
    %754 = vdwg.mxu0
    %v755 = vadd.f32 %v624, %v711
    %v756 = vadd.f32 %v625, %v714
    %v757 = vadd.f32 %v626, %v717
    %v758 = vadd.f32 %v627, %v720
    %v759 = vadd.f32 %v628, %v723
    %v760 = vadd.f32 %v629, %v726
    %v761 = vadd.f32 %v630, %v729
    %v762 = vadd.f32 %v631, %v732
    %v763 = vadd.f32 %v632, %v735
    %v764 = vadd.f32 %v633, %v738
    %v765 = vadd.f32 %v634, %v741
    %v766 = vadd.f32 %v635, %v744
    %v767 = vadd.f32 %v636, %v747
    %v768 = vadd.f32 %v637, %v750
    %v769 = vadd.f32 %v638, %v753
    %s770 = scalar_lea.vmem [#allocation6], 128
    %v771 = vld [vmem:[%s770] sm:$0xff]
    %v772 = vld [vmem:[%s770 + $0x8] sm:$0xff]
    %v773 = vld [vmem:[%s770 + $0x10] sm:$0xff]
    %v774 = vld [vmem:[%s770 + $0x18] sm:$0xff]
    %v775 = vld [vmem:[%s770 + $0x20] sm:$0xff]
    %v776 = vld [vmem:[%s770 + $0x28] sm:$0xff]
    %v777 = vld [vmem:[%s770 + $0x30] sm:$0xff]
    %v778 = vld [vmem:[%s770 + $0x38] sm:$0xff]
    %v780 = vsel %vm513, %v489, 0
    %v783 = vsel %vm513, %v490, 0
    %v786 = vsel %vm513, %v491, 0
    %v789 = vsel %vm513, %v492, 0
    %v792 = vsel %vm513, %v493, 0
    %v795 = vsel %vm513, %v494, 0
    %v798 = vsel %vm513, %v495, 0
    %v801 = vsel %vm513, %v496, 0
    %v804 = vsel %vm513, %v497, 0
    %v807 = vsel %vm513, %v498, 0
    %v810 = vsel %vm513, %v499, 0
    %v813 = vsel %vm513, %v500, 0
    %v816 = vsel %vm513, %v501, 0
    %v819 = vsel %vm513, %v502, 0
    %v822 = vsel %vm513, %v503, 0
    %824 = vmatpush.msra.mxu0 0.0
    %825 = vmatpush.msra.mxu0 0.0
    %826 = vmatpush.msra.mxu0 0.0
    %827 = vmatpush.msra.mxu0 0.0
    %828 = vmatpush.msra.mxu0 0.0
    %829 = vmatpush.msra.mxu0 0.0
    %830 = vmatpush.msra.mxu0 0.0
    %831 = vmatpush.msra.mxu0 0.0
    %832 = vmatpush.msra.mxu0 %v778
    %833 = vmatpush.msra.mxu0 %v777
    %834 = vmatpush.msra.mxu0 %v776
    %835 = vmatpush.msra.mxu0 %v775
    %836 = vmatpush.msra.mxu0 %v774
    %837 = vmatpush.msra.mxu0 %v773
    %838 = vmatpush.msra.mxu0 %v772
    %839 = vmatpush.msra.mxu0 %v771
    %840 = vmatmul.f32.gmra.mxu0 %v780
    %v841 = vpop.f32.mrf.mxu0
    %v842 = vadd.f32 0.0, %v841
    %843 = vmatmul.f32.gmra.mxu0 %v783
    %v844 = vpop.f32.mrf.mxu0
    %v845 = vadd.f32 0.0, %v844
    %846 = vmatmul.f32.gmra.mxu0 %v786
    %v847 = vpop.f32.mrf.mxu0
    %v848 = vadd.f32 0.0, %v847
    %849 = vmatmul.f32.gmra.mxu0 %v789
    %v850 = vpop.f32.mrf.mxu0
    %v851 = vadd.f32 0.0, %v850
    %852 = vmatmul.f32.gmra.mxu0 %v792
    %v853 = vpop.f32.mrf.mxu0
    %v854 = vadd.f32 0.0, %v853
    %855 = vmatmul.f32.gmra.mxu0 %v795
    %v856 = vpop.f32.mrf.mxu0
    %v857 = vadd.f32 0.0, %v856
    %858 = vmatmul.f32.gmra.mxu0 %v798
    %v859 = vpop.f32.mrf.mxu0
    %v860 = vadd.f32 0.0, %v859
    %861 = vmatmul.f32.gmra.mxu0 %v801
    %v862 = vpop.f32.mrf.mxu0
    %v863 = vadd.f32 0.0, %v862
    %864 = vmatmul.f32.gmra.mxu0 %v804
    %v865 = vpop.f32.mrf.mxu0
    %v866 = vadd.f32 0.0, %v865
    %867 = vmatmul.f32.gmra.mxu0 %v807
    %v868 = vpop.f32.mrf.mxu0
    %v869 = vadd.f32 0.0, %v868
    %870 = vmatmul.f32.gmra.mxu0 %v810
    %v871 = vpop.f32.mrf.mxu0
    %v872 = vadd.f32 0.0, %v871
    %873 = vmatmul.f32.gmra.mxu0 %v813
    %v874 = vpop.f32.mrf.mxu0
    %v875 = vadd.f32 0.0, %v874
    %876 = vmatmul.f32.gmra.mxu0 %v816
    %v877 = vpop.f32.mrf.mxu0
    %v878 = vadd.f32 0.0, %v877
    %879 = vmatmul.f32.gmra.mxu0 %v819
    %v880 = vpop.f32.mrf.mxu0
    %v881 = vadd.f32 0.0, %v880
    %882 = vmatmul.f32.gmra.mxu0 %v822
    %v883 = vpop.f32.mrf.mxu0
    %v884 = vadd.f32 0.0, %v883
    %885 = vdwg.mxu0
    %v886 = vadd.f32 %v755, %v842
    %v887 = vadd.f32 %v756, %v845
    %v888 = vadd.f32 %v757, %v848
    %v889 = vadd.f32 %v758, %v851
    %v890 = vadd.f32 %v759, %v854
    %v891 = vadd.f32 %v760, %v857
    %v892 = vadd.f32 %v761, %v860
    %v893 = vadd.f32 %v762, %v863
    %v894 = vadd.f32 %v763, %v866
    %v895 = vadd.f32 %v764, %v869
    %v896 = vadd.f32 %v765, %v872
    %v897 = vadd.f32 %v766, %v875
    %v898 = vadd.f32 %v767, %v878
    %v899 = vadd.f32 %v768, %v881
    %v900 = vadd.f32 %v769, %v884
    %v901 = vmax.f32 %v886, 0.0
    %v902 = vmax.f32 %v887, 0.0
    %v903 = vmax.f32 %v888, 0.0
    %v904 = vmax.f32 %v889, 0.0
    %v905 = vmax.f32 %v890, 0.0
    %v906 = vmax.f32 %v891, 0.0
    %v907 = vmax.f32 %v892, 0.0
    %v908 = vmax.f32 %v893, 0.0
    %v909 = vmax.f32 %v894, 0.0
    %v910 = vmax.f32 %v895, 0.0
    %v911 = vmax.f32 %v896, 0.0
    %v912 = vmax.f32 %v897, 0.0
    %v913 = vmax.f32 %v898, 0.0
    %v914 = vmax.f32 %v899, 0.0
    %v915 = vmax.f32 %v900, 0.0
    %916 = vst.msk [vmem:[%s7] sm:$0xff] %vm513, %v901
    %917 = vst.msk [vmem:[%s7 + $0x8] sm:$0xff] %vm513, %v902
    %918 = vst.msk [vmem:[%s7 + $0x10] sm:$0xff] %vm513, %v903
    %919 = vst.msk [vmem:[%s7 + $0x18] sm:$0xff] %vm513, %v904
    %920 = vst.msk [vmem:[%s7 + $0x20] sm:$0xff] %vm513, %v905
    %921 = vst.msk [vmem:[%s7 + $0x28] sm:$0xff] %vm513, %v906
    %922 = vst.msk [vmem:[%s7 + $0x30] sm:$0xff] %vm513, %v907
    %923 = vst.msk [vmem:[%s7 + $0x38] sm:$0xff] %vm513, %v908
    %924 = vst.msk [vmem:[%s7 + $0x40] sm:$0xff] %vm513, %v909
    %925 = vst.msk [vmem:[%s7 + $0x48] sm:$0xff] %vm513, %v910
    %926 = vst.msk [vmem:[%s7 + $0x50] sm:$0xff] %vm513, %v911
    %927 = vst.msk [vmem:[%s7 + $0x58] sm:$0xff] %vm513, %v912
    %928 = vst.msk [vmem:[%s7 + $0x60] sm:$0xff] %vm513, %v913
    %929 = vst.msk [vmem:[%s7 + $0x68] sm:$0xff] %vm513, %v914
    %vm930 = vcmask 521216
    %931 = vst.msk [vmem:[%s7 + $0x70] sm:$0x3f] %vm930, %v915
    // Predicated region
    $region46: #{critic_forward_pallas.2} parent=1 // pred_check
      _
    $region47: #{critic_forward_pallas.2} parent=1 // pred_check_branch
      %933 = sbr.rel (0) target = $region49
    $region48: #{critic_forward_pallas.2} parent=1 // pred_region
      _
    $region49: #{critic_forward_pallas.2} parent=1 // pred_fallthru
      _
    // Predicated region
    $region50: #{critic_forward_pallas.2} parent=1 // pred_check
      _
    $region51: #{critic_forward_pallas.2} parent=1 // pred_check_branch
      %935 = sbr.rel (0) target = $region53
    $region52: #{critic_forward_pallas.2} parent=1 // pred_region
      _
    $region53: #{critic_forward_pallas.2} parent=1 // pred_fallthru
      _
    %936 = vsyncpa [#allocation3], 1
    %937 = vsyncpa [#allocation5], 1
    %938 = vsyncpa [#allocation8], 1

// kernel: critic_forward_pallas.3
$region0: #{critic_forward_pallas.3}
  #allocation0 [shape = 'u32[]', space=smem, size = 0x4, offset = 0x4, fixed_abs, tag = 'smem constant byte address 0x4 - core index']
  #allocation1 [shape = 'u32[72,128]{1,0:T(1,128)}', space=vmem, size = 0x9000, scoped, tag = 'internal scratch']
  #allocation2 [shape = 'f32[2,512]{1,0:T(2,128)}', space=vmem, size = 0x1000, scoped, tag = 'scratch operand']
  #allocation3 [shape = 'f32[1,128]{1,0:T(1,128)}', space=vmem, size = 0x200, scoped, tag = 'scratch operand']
  #allocation4 [shape = 'f32[1,128]{1,0:T(1,128)}', space=vmem, size = 0x200, scoped, tag = 'scratch operand']
  #allocation5 [shape = 'f32[2,128]{1,0:T(2,128)}', space=vmem, size = 0x400, scoped, tag = 'scratch operand']
  #allocation6 [shape = 'f32[1,1]{1,0:T(1,128)S(1)}', space=vmem, size = 0x200, scoped, tag = 'scoped memory for critic_forward_pallas.3']
  %s0 = inlined_call_operand.vmem [shape: f32[2,3776], index: 0, kind: input, shape index: {}]
  %s1 = inlined_call_operand.vmem [shape: f32[2,4], index: 1, kind: input, shape index: {}]
  %s2 = inlined_call_operand.hbm [shape: bf16[3776,512], index: 2, kind: input, shape index: {}]
  %s3 = inlined_call_operand.hbm [shape: f32[1,512], index: 3, kind: input, shape index: {}]
  %s4 = inlined_call_operand.hbm [shape: f32[512,256], index: 4, kind: input, shape index: {}]
  %s5 = inlined_call_operand.hbm [shape: f32[4,256], index: 5, kind: input, shape index: {}]
  %s6 = inlined_call_operand.hbm [shape: f32[1,256], index: 6, kind: input, shape index: {}]
  %s7 = inlined_call_operand.hbm [shape: f32[256,128], index: 7, kind: input, shape index: {}]
  %s8 = inlined_call_operand.hbm [shape: f32[1,128], index: 8, kind: input, shape index: {}]
  %s9 = inlined_call_operand.hbm [shape: f32[128,512], index: 9, kind: input, shape index: {}]
  %s10 = inlined_call_operand.hbm [shape: f32[128,512], index: 10, kind: input, shape index: {}]
  %s11 = inlined_call_operand.hbm [shape: f32[1,512], index: 11, kind: input, shape index: {}]
  %s12 = inlined_call_operand.hbm [shape: f32[1,128], index: 12, kind: input, shape index: {}]
  %s13 = inlined_call_operand.<no memory space> [shape: f32[1,1], index: 13, kind: input, shape index: {}]
  %s14 = inlined_call_operand.vmem [shape: f32[2,1], index: 14, kind: output, shape index: {}]
  %s15 = sld [smem:[#allocation0]]
  $region117: #{critic_forward_pallas.3} parent=0
    _
  %s17 = ssub.s32 1, %s15
  %s18 = scalar_select 0, %s17, %s15
  %v19 = vstv %s13
  %20 = vst [vmem:[#allocation6] sm:$0x1] %v19
  $region1: #{critic_forward_pallas.3} parent=0
    #allocation7 [shape = 'u8[3866624]{0}', space=vmem, size = 0x3b0000, scoped, tag = 'input window, operand 2, single buffered']
    #allocation8 [shape = 's32[1]{0}', space=sflag, size = 0x4, scoped, tag = 'scoped memory for critic_forward_pallas.3']
    #allocation9 [shape = 'u8[2048]{0}', space=vmem, size = 0x800, scoped, tag = 'input window, operand 3, single buffered']
    #allocation10 [shape = 's32[1]{0}', space=sflag, size = 0x4, scoped, tag = 'scoped memory for critic_forward_pallas.3']
    #allocation11 [shape = 'u8[524288]{0}', space=vmem, size = 0x80000, scoped, tag = 'input window, operand 4, single buffered']
    #allocation12 [shape = 'u8[4096]{0}', space=vmem, size = 0x1000, scoped, tag = 'input window, operand 5, single buffered']
    #allocation13 [shape = 's32[1]{0}', space=sflag, size = 0x4, scoped, tag = 'scoped memory for critic_forward_pallas.3']
    #allocation14 [shape = 'u8[1024]{0}', space=vmem, size = 0x400, scoped, tag = 'input window, operand 6, single buffered']
    #allocation15 [shape = 'u8[131072]{0}', space=vmem, size = 0x20000, scoped, tag = 'input window, operand 7, single buffered']
    #allocation16 [shape = 's32[1]{0}', space=sflag, size = 0x4, scoped, tag = 'scoped memory for critic_forward_pallas.3']
    #allocation17 [shape = 'u8[512]{0}', space=vmem, size = 0x400, scoped, tag = 'input window, operand 8, single buffered']
    #allocation18 [shape = 'u8[262144]{0}', space=vmem, size = 0x40000, scoped, tag = 'input window, operand 9, single buffered']
    #allocation19 [shape = 's32[1]{0}', space=sflag, size = 0x4, scoped, tag = 'scoped memory for critic_forward_pallas.3']
    #allocation20 [shape = 'u8[262144]{0}', space=vmem, size = 0x40000, scoped, tag = 'input window, operand 10, single buffered']
    #allocation21 [shape = 'u8[2048]{0}', space=vmem, size = 0x800, scoped, tag = 'input window, operand 11, single buffered']
    #allocation22 [shape = 's32[1]{0}', space=sflag, size = 0x4, scoped, tag = 'scoped memory for critic_forward_pallas.3']
    #allocation23 [shape = 'u8[512]{0}', space=vmem, size = 0x400, scoped, tag = 'input window, operand 12, single buffered']
    %21 = vsyncpa [#allocation8], 0
    %22 = vsyncpa [#allocation10], 0
    %23 = vsyncpa [#allocation13], 0
    %24 = vsyncpa [#allocation16], 0
    %25 = vsyncpa [#allocation19], 0
    %26 = vsyncpa [#allocation22], 0
    // Predicated region
    $region2: #{critic_forward_pallas.3} parent=1 // pred_check
      _
    $region3: #{critic_forward_pallas.3} parent=1 // pred_check_branch
      %28 = sbr.rel (0) target = $region5
    $region4: #{critic_forward_pallas.3} parent=1 // pred_region
      _
    $region5: #{critic_forward_pallas.3} parent=1 // pred_fallthru
      _
    // Predicated region
    $region6: #{critic_forward_pallas.3} parent=1 // pred_check
      _
    $region7: #{critic_forward_pallas.3} parent=1 // pred_check_branch
      %30 = sbr.rel (0) target = $region9
    $region8: #{critic_forward_pallas.3} parent=1 // pred_region
      _
    $region9: #{critic_forward_pallas.3} parent=1 // pred_fallthru
      _
    // Predicated region
    $region10: #{critic_forward_pallas.3} parent=1 // pred_check
      _
    $region11: #{critic_forward_pallas.3} parent=1 // pred_check_branch
      %32 = sbr.rel (0) target = $region13
    $region12: #{critic_forward_pallas.3} parent=1 // pred_region
      %34 = vsyncadd [#allocation8], 0
      %s35 = sshll.u32 %s2, 4
      %s36 = int_to_ptr.hbm [resolvable:$true] %s35
      %s37 = sshll.u32 [#allocation7], 4
      %s38 = int_to_ptr.vmem [resolvable:$true] %s37
      %43 = dma.hbm_to_vmem [thread:$0]  %s36, 120832, %s38, [#allocation8], 256, 256, 16
    $region13: #{critic_forward_pallas.3} parent=1 // pred_fallthru
      _
    // Predicated region
    $region14: #{critic_forward_pallas.3} parent=1 // pred_check
      _
    $region15: #{critic_forward_pallas.3} parent=1 // pred_check_branch
      %45 = sbr.rel (0) target = $region17
    $region16: #{critic_forward_pallas.3} parent=1 // pred_region
      %47 = vsyncadd [#allocation10], 0
      %s49 = sshll.u32 %s3, 4
      %s50 = int_to_ptr.hbm [resolvable:$true] %s49
      %s51 = sshll.u32 [#allocation9], 4
      %s52 = int_to_ptr.vmem [resolvable:$true] %s51
      %54 = dma.hbm_to_vmem [thread:$0]  %s50, 64, %s52, [#allocation10]
    $region17: #{critic_forward_pallas.3} parent=1 // pred_fallthru
      _
    // Predicated region
    $region18: #{critic_forward_pallas.3} parent=1 // pred_check
      _
    $region19: #{critic_forward_pallas.3} parent=1 // pred_check_branch
      %56 = sbr.rel (0) target = $region21
    $region20: #{critic_forward_pallas.3} parent=1 // pred_region
      %58 = vsyncadd [#allocation10], 0
      %s59 = sshll.u32 %s4, 4
      %s60 = int_to_ptr.hbm [resolvable:$true] %s59
      %s61 = sshll.u32 [#allocation11], 4
      %s62 = int_to_ptr.vmem [resolvable:$true] %s61
      %67 = dma.hbm_to_vmem [thread:$0]  %s60, 16384, %s62, [#allocation10], 256, 256, 16
    $region21: #{critic_forward_pallas.3} parent=1 // pred_fallthru
      _
    // Predicated region
    $region22: #{critic_forward_pallas.3} parent=1 // pred_check
      _
    $region23: #{critic_forward_pallas.3} parent=1 // pred_check_branch
      %69 = sbr.rel (0) target = $region25
    $region24: #{critic_forward_pallas.3} parent=1 // pred_region
      %71 = vsyncadd [#allocation13], 0
      %s73 = sshll.u32 %s5, 4
      %s74 = int_to_ptr.hbm [resolvable:$true] %s73
      %s75 = sshll.u32 [#allocation12], 4
      %s76 = int_to_ptr.vmem [resolvable:$true] %s75
      %78 = dma.hbm_to_vmem [thread:$0]  %s74, 128, %s76, [#allocation13]
    $region25: #{critic_forward_pallas.3} parent=1 // pred_fallthru
      _
    // Predicated region
    $region26: #{critic_forward_pallas.3} parent=1 // pred_check
      _
    $region27: #{critic_forward_pallas.3} parent=1 // pred_check_branch
      %80 = sbr.rel (0) target = $region29
    $region28: #{critic_forward_pallas.3} parent=1 // pred_region
      %82 = vsyncadd [#allocation13], 0
      %s84 = sshll.u32 %s6, 4
      %s85 = int_to_ptr.hbm [resolvable:$true] %s84
      %s86 = sshll.u32 [#allocation14], 4
      %s87 = int_to_ptr.vmem [resolvable:$true] %s86
      %89 = dma.hbm_to_vmem [thread:$0]  %s85, 32, %s87, [#allocation13]
    $region29: #{critic_forward_pallas.3} parent=1 // pred_fallthru
      _
    // Predicated region
    $region30: #{critic_forward_pallas.3} parent=1 // pred_check
      _
    $region31: #{critic_forward_pallas.3} parent=1 // pred_check_branch
      %91 = sbr.rel (0) target = $region33
    $region32: #{critic_forward_pallas.3} parent=1 // pred_region
      %93 = vsyncadd [#allocation16], 0
      %s94 = sshll.u32 %s7, 4
      %s95 = int_to_ptr.hbm [resolvable:$true] %s94
      %s96 = sshll.u32 [#allocation15], 4
      %s97 = int_to_ptr.vmem [resolvable:$true] %s96
      %102 = dma.hbm_to_vmem [thread:$0]  %s95, 4096, %s97, [#allocation16], 128, 128, 8
    $region33: #{critic_forward_pallas.3} parent=1 // pred_fallthru
      _
    // Predicated region
    $region34: #{critic_forward_pallas.3} parent=1 // pred_check
      _
    $region35: #{critic_forward_pallas.3} parent=1 // pred_check_branch
      %104 = sbr.rel (0) target = $region37
    $region36: #{critic_forward_pallas.3} parent=1 // pred_region
      %106 = vsyncadd [#allocation16], 0
      %s108 = sshll.u32 %s8, 4
      %s109 = int_to_ptr.hbm [resolvable:$true] %s108
      %s110 = sshll.u32 [#allocation17], 4
      %s111 = int_to_ptr.vmem [resolvable:$true] %s110
      %113 = dma.hbm_to_vmem [thread:$0]  %s109, 16, %s111, [#allocation16]
    $region37: #{critic_forward_pallas.3} parent=1 // pred_fallthru
      _
    // Predicated region
    $region38: #{critic_forward_pallas.3} parent=1 // pred_check
      _
    $region39: #{critic_forward_pallas.3} parent=1 // pred_check_branch
      %115 = sbr.rel (0) target = $region41
    $region40: #{critic_forward_pallas.3} parent=1 // pred_region
      %117 = vsyncadd [#allocation19], 0
      %s118 = sshll.u32 %s9, 4
      %s119 = int_to_ptr.hbm [resolvable:$true] %s118
      %s120 = sshll.u32 [#allocation18], 4
      %s121 = int_to_ptr.vmem [resolvable:$true] %s120
      %126 = dma.hbm_to_vmem [thread:$0]  %s119, 8192, %s121, [#allocation19], 512, 512, 32
    $region41: #{critic_forward_pallas.3} parent=1 // pred_fallthru
      _
    // Predicated region
    $region42: #{critic_forward_pallas.3} parent=1 // pred_check
      _
    $region43: #{critic_forward_pallas.3} parent=1 // pred_check_branch
      %128 = sbr.rel (0) target = $region45
    $region44: #{critic_forward_pallas.3} parent=1 // pred_region
      %130 = vsyncadd [#allocation19], 0
      %s131 = sshll.u32 %s10, 4
      %s132 = int_to_ptr.hbm [resolvable:$true] %s131
      %s133 = sshll.u32 [#allocation20], 4
      %s134 = int_to_ptr.vmem [resolvable:$true] %s133
      %139 = dma.hbm_to_vmem [thread:$0]  %s132, 8192, %s134, [#allocation19], 512, 512, 32
    $region45: #{critic_forward_pallas.3} parent=1 // pred_fallthru
      _
    // Predicated region
    $region46: #{critic_forward_pallas.3} parent=1 // pred_check
      _
    $region47: #{critic_forward_pallas.3} parent=1 // pred_check_branch
      %141 = sbr.rel (0) target = $region49
    $region48: #{critic_forward_pallas.3} parent=1 // pred_region
      %143 = vsyncadd [#allocation22], 0
      %s145 = sshll.u32 %s11, 4
      %s146 = int_to_ptr.hbm [resolvable:$true] %s145
      %s147 = sshll.u32 [#allocation21], 4
      %s148 = int_to_ptr.vmem [resolvable:$true] %s147
      %150 = dma.hbm_to_vmem [thread:$0]  %s146, 64, %s148, [#allocation22]
    $region49: #{critic_forward_pallas.3} parent=1 // pred_fallthru
      _
    // Predicated region
    $region50: #{critic_forward_pallas.3} parent=1 // pred_check
      _
    $region51: #{critic_forward_pallas.3} parent=1 // pred_check_branch
      %152 = sbr.rel (0) target = $region53
    $region52: #{critic_forward_pallas.3} parent=1 // pred_region
      %154 = vsyncadd [#allocation22], 0
      %s156 = sshll.u32 %s12, 4
      %s157 = int_to_ptr.hbm [resolvable:$true] %s156
      %s158 = sshll.u32 [#allocation23], 4
      %s159 = int_to_ptr.vmem [resolvable:$true] %s158
      %161 = dma.hbm_to_vmem [thread:$0]  %s157, 16, %s159, [#allocation22]
    $region53: #{critic_forward_pallas.3} parent=1 // pred_fallthru
      _
    // Predicated region
    $region54: #{critic_forward_pallas.3} parent=1 // pred_check
      _
    $region55: #{critic_forward_pallas.3} parent=1 // pred_check_branch
      %163 = sbr.rel (0) target = $region57
    $region56: #{critic_forward_pallas.3} parent=1 // pred_region
      _
    $region57: #{critic_forward_pallas.3} parent=1 // pred_fallthru
      _
    // Predicated region
    $region58: #{critic_forward_pallas.3} parent=1 // pred_check
      _
    $region59: #{critic_forward_pallas.3} parent=1 // pred_check_branch
      %165 = sbr.rel (0) target = $region61
    $region60: #{critic_forward_pallas.3} parent=1 // pred_region
      %167 = dma.done [#allocation8], 120832
    $region61: #{critic_forward_pallas.3} parent=1 // pred_fallthru
      _
    // Predicated region
    $region62: #{critic_forward_pallas.3} parent=1 // pred_check
      _
    $region63: #{critic_forward_pallas.3} parent=1 // pred_check_branch
      %169 = sbr.rel (0) target = $region65
    $region64: #{critic_forward_pallas.3} parent=1 // pred_region
      %171 = dma.done [#allocation10], 64
    $region65: #{critic_forward_pallas.3} parent=1 // pred_fallthru
      _
    // Predicated region
    $region66: #{critic_forward_pallas.3} parent=1 // pred_check
      _
    $region67: #{critic_forward_pallas.3} parent=1 // pred_check_branch
      %173 = sbr.rel (0) target = $region69
    $region68: #{critic_forward_pallas.3} parent=1 // pred_region
      %175 = dma.done [#allocation10], 16384
    $region69: #{critic_forward_pallas.3} parent=1 // pred_fallthru
      _
    // Predicated region
    $region70: #{critic_forward_pallas.3} parent=1 // pred_check
      _
    $region71: #{critic_forward_pallas.3} parent=1 // pred_check_branch
      %177 = sbr.rel (0) target = $region73
    $region72: #{critic_forward_pallas.3} parent=1 // pred_region
      %179 = dma.done [#allocation13], 128
    $region73: #{critic_forward_pallas.3} parent=1 // pred_fallthru
      _
    // Predicated region
    $region74: #{critic_forward_pallas.3} parent=1 // pred_check
      _
    $region75: #{critic_forward_pallas.3} parent=1 // pred_check_branch
      %181 = sbr.rel (0) target = $region77
    $region76: #{critic_forward_pallas.3} parent=1 // pred_region
      %183 = dma.done [#allocation13], 32
    $region77: #{critic_forward_pallas.3} parent=1 // pred_fallthru
      _
    // Predicated region
    $region78: #{critic_forward_pallas.3} parent=1 // pred_check
      _
    $region79: #{critic_forward_pallas.3} parent=1 // pred_check_branch
      %185 = sbr.rel (0) target = $region81
    $region80: #{critic_forward_pallas.3} parent=1 // pred_region
      %187 = dma.done [#allocation16], 4096
    $region81: #{critic_forward_pallas.3} parent=1 // pred_fallthru
      _
    // Predicated region
    $region82: #{critic_forward_pallas.3} parent=1 // pred_check
      _
    $region83: #{critic_forward_pallas.3} parent=1 // pred_check_branch
      %189 = sbr.rel (0) target = $region85
    $region84: #{critic_forward_pallas.3} parent=1 // pred_region
      %191 = dma.done [#allocation16], 16
    $region85: #{critic_forward_pallas.3} parent=1 // pred_fallthru
      _
    // Predicated region
    $region86: #{critic_forward_pallas.3} parent=1 // pred_check
      _
    $region87: #{critic_forward_pallas.3} parent=1 // pred_check_branch
      %193 = sbr.rel (0) target = $region89
    $region88: #{critic_forward_pallas.3} parent=1 // pred_region
      %195 = dma.done [#allocation19], 8192
    $region89: #{critic_forward_pallas.3} parent=1 // pred_fallthru
      _
    // Predicated region
    $region90: #{critic_forward_pallas.3} parent=1 // pred_check
      _
    $region91: #{critic_forward_pallas.3} parent=1 // pred_check_branch
      %197 = sbr.rel (0) target = $region93
    $region92: #{critic_forward_pallas.3} parent=1 // pred_region
      %199 = dma.done [#allocation19], 8192
    $region93: #{critic_forward_pallas.3} parent=1 // pred_fallthru
      _
    // Predicated region
    $region94: #{critic_forward_pallas.3} parent=1 // pred_check
      _
    $region95: #{critic_forward_pallas.3} parent=1 // pred_check_branch
      %201 = sbr.rel (0) target = $region97
    $region96: #{critic_forward_pallas.3} parent=1 // pred_region
      %203 = dma.done [#allocation22], 64
    $region97: #{critic_forward_pallas.3} parent=1 // pred_fallthru
      _
    // Predicated region
    $region98: #{critic_forward_pallas.3} parent=1 // pred_check
      _
    $region99: #{critic_forward_pallas.3} parent=1 // pred_check_branch
      %205 = sbr.rel (0) target = $region101
    $region100: #{critic_forward_pallas.3} parent=1 // pred_region
      %207 = dma.done [#allocation22], 16
    $region101: #{critic_forward_pallas.3} parent=1 // pred_fallthru
      _
    %v209 = vld [vmem:[%s0] sm:$0xff]
    %v210 = vld [vmem:[%s0 + $0x8] sm:$0xff]
    %v211 = vld [vmem:[%s0 + $0x10] sm:$0xff]
    %v212 = vld [vmem:[%s0 + $0x18] sm:$0xff]
    %v213 = vld [vmem:[%s0 + $0x20] sm:$0xff]
    %v214 = vld [vmem:[%s0 + $0x28] sm:$0xff]
    %v215 = vld [vmem:[%s0 + $0x30] sm:$0xff]
    %v216 = vld [vmem:[%s0 + $0x38] sm:$0xf]
    %225 = vst [vmem:[#allocation1] ss:$4 sm:$0xff] %v209
    %s226 = scalar_lea.vmem [#allocation1], 32
    %227 = vst [vmem:[%s226] ss:$4 sm:$0xff] %v210
    %v228 = vld.sshfl [vmem:[#allocation1] sm:$0xff pattern:$0x73625140]
    %v229 = vld.sshfl [vmem:[#allocation1 + $0x8] sm:$0xff pattern:$0x73625140]
    %v230 = vld.sshfl [vmem:[#allocation1 + $0x10] sm:$0xff pattern:$0x73625140]
    %v231 = vld.sshfl [vmem:[#allocation1 + $0x18] sm:$0xff pattern:$0x73625140]
    %v232 = vld.sshfl [vmem:[#allocation1 + $0x20] sm:$0xff pattern:$0x73625140]
    %v233 = vld.sshfl [vmem:[#allocation1 + $0x28] sm:$0xff pattern:$0x73625140]
    %v234 = vld.sshfl [vmem:[#allocation1 + $0x30] sm:$0xff pattern:$0x73625140]
    %v235 = vld.sshfl [vmem:[#allocation1 + $0x38] sm:$0xff pattern:$0x73625140]
    %236 = vst [vmem:[#allocation1] ss:$4 sm:$0xff] %v211
    %237 = vst [vmem:[%s226] ss:$4 sm:$0xff] %v212
    %v238 = vld.sshfl [vmem:[#allocation1] sm:$0xff pattern:$0x73625140]
    %v239 = vld.sshfl [vmem:[#allocation1 + $0x8] sm:$0xff pattern:$0x73625140]
    %v240 = vld.sshfl [vmem:[#allocation1 + $0x10] sm:$0xff pattern:$0x73625140]
    %v241 = vld.sshfl [vmem:[#allocation1 + $0x18] sm:$0xff pattern:$0x73625140]
    %v242 = vld.sshfl [vmem:[#allocation1 + $0x20] sm:$0xff pattern:$0x73625140]
    %v243 = vld.sshfl [vmem:[#allocation1 + $0x28] sm:$0xff pattern:$0x73625140]
    %v244 = vld.sshfl [vmem:[#allocation1 + $0x30] sm:$0xff pattern:$0x73625140]
    %v245 = vld.sshfl [vmem:[#allocation1 + $0x38] sm:$0xff pattern:$0x73625140]
    %246 = vst [vmem:[#allocation1] ss:$4 sm:$0xff] %v213
    %247 = vst [vmem:[%s226] ss:$4 sm:$0xff] %v214
    %v248 = vld.sshfl [vmem:[#allocation1] sm:$0xff pattern:$0x73625140]
    %v249 = vld.sshfl [vmem:[#allocation1 + $0x8] sm:$0xff pattern:$0x73625140]
    %v250 = vld.sshfl [vmem:[#allocation1 + $0x10] sm:$0xff pattern:$0x73625140]
    %v251 = vld.sshfl [vmem:[#allocation1 + $0x18] sm:$0xff pattern:$0x73625140]
    %v252 = vld.sshfl [vmem:[#allocation1 + $0x20] sm:$0xff pattern:$0x73625140]
    %v253 = vld.sshfl [vmem:[#allocation1 + $0x28] sm:$0xff pattern:$0x73625140]
    %v254 = vld.sshfl [vmem:[#allocation1 + $0x30] sm:$0xff pattern:$0x73625140]
    %v255 = vld.sshfl [vmem:[#allocation1 + $0x38] sm:$0xff pattern:$0x73625140]
    %256 = vst [vmem:[#allocation1] ss:$4 sm:$0xff] %v215
    %257 = vst [vmem:[%s226] ss:$4 sm:$0xff] %v216
    %v258 = vld.sshfl [vmem:[#allocation1] sm:$0xff pattern:$0x73625140]
    %v259 = vld.sshfl [vmem:[#allocation1 + $0x8] sm:$0xff pattern:$0x73625140]
    %v260 = vld.sshfl [vmem:[#allocation1 + $0x10] sm:$0xff pattern:$0x73625140]
    %v261 = vld.sshfl [vmem:[#allocation1 + $0x18] sm:$0xff pattern:$0x73625140]
    %v262 = vld.sshfl [vmem:[#allocation1 + $0x20] sm:$0xff pattern:$0x73625140]
    %v263 = vld.sshfl [vmem:[#allocation1 + $0x28] sm:$0xff pattern:$0x73625140]
    %v294 = vpack.c.bf16 %v228, %v228
    %v295 = vpack.c.bf16 %v229, %v229
    %v296 = vpack.c.bf16 %v230, %v230
    %v297 = vpack.c.bf16 %v231, %v231
    %v298 = vpack.c.bf16 %v232, %v232
    %v299 = vpack.c.bf16 %v233, %v233
    %v300 = vpack.c.bf16 %v234, %v234
    %v301 = vpack.c.bf16 %v235, %v235
    %v302 = vpack.c.bf16 %v238, %v238
    %v303 = vpack.c.bf16 %v239, %v239
    %v304 = vpack.c.bf16 %v240, %v240
    %v305 = vpack.c.bf16 %v241, %v241
    %v306 = vpack.c.bf16 %v242, %v242
    %v307 = vpack.c.bf16 %v243, %v243
    %v308 = vpack.c.bf16 %v244, %v244
    %v309 = vpack.c.bf16 %v245, %v245
    %v310 = vpack.c.bf16 %v248, %v248
    %v311 = vpack.c.bf16 %v249, %v249
    %v312 = vpack.c.bf16 %v250, %v250
    %v313 = vpack.c.bf16 %v251, %v251
    %v314 = vpack.c.bf16 %v252, %v252
    %v315 = vpack.c.bf16 %v253, %v253
    %v316 = vpack.c.bf16 %v254, %v254
    %v317 = vpack.c.bf16 %v255, %v255
    %v318 = vpack.c.bf16 %v258, %v258
    %v319 = vpack.c.bf16 %v259, %v259
    %v320 = vpack.c.bf16 %v260, %v260
    %v321 = vpack.c.bf16 %v261, %v261
    %v322 = vpack.c.bf16 %v262, %v262
    %v323 = vpack.c.bf16 %v263, %v263
    %v324 = vld [vmem:[#allocation7] sm:$0xff]
    %v325 = vld [vmem:[#allocation7 + $0x8] sm:$0xff]
    %v326 = vld [vmem:[#allocation7 + $0x10] sm:$0xff]
    %v327 = vld [vmem:[#allocation7 + $0x18] sm:$0xff]
    %v328 = vld [vmem:[#allocation7 + $0x20] sm:$0xff]
    %v329 = vld [vmem:[#allocation7 + $0x28] sm:$0xff]
    %v330 = vld [vmem:[#allocation7 + $0x30] sm:$0xff]
    %v331 = vld [vmem:[#allocation7 + $0x38] sm:$0xff]
    %v332 = vld [vmem:[#allocation7 + $0x40] sm:$0xff]
    %v333 = vld [vmem:[#allocation7 + $0x48] sm:$0xff]
    %v334 = vld [vmem:[#allocation7 + $0x50] sm:$0xff]
    %v335 = vld [vmem:[#allocation7 + $0x58] sm:$0xff]
    %v336 = vld [vmem:[#allocation7 + $0x60] sm:$0xff]
    %v337 = vld [vmem:[#allocation7 + $0x68] sm:$0xff]
    %v338 = vld [vmem:[#allocation7 + $0x70] sm:$0xff]
    %v339 = vld [vmem:[#allocation7 + $0x78] sm:$0xff]
    %v340 = vld [vmem:[#allocation7 + $0x80] sm:$0xff]
    %v341 = vld [vmem:[#allocation7 + $0x88] sm:$0xff]
    %v342 = vld [vmem:[#allocation7 + $0x90] sm:$0xff]
    %v343 = vld [vmem:[#allocation7 + $0x98] sm:$0xff]
    %v344 = vld [vmem:[#allocation7 + $0xa0] sm:$0xff]
    %v345 = vld [vmem:[#allocation7 + $0xa8] sm:$0xff]
    %v346 = vld [vmem:[#allocation7 + $0xb0] sm:$0xff]
    %v347 = vld [vmem:[#allocation7 + $0xb8] sm:$0xff]
    %v348 = vld [vmem:[#allocation7 + $0xc0] sm:$0xff]
    %v349 = vld [vmem:[#allocation7 + $0xc8] sm:$0xff]
    %v350 = vld [vmem:[#allocation7 + $0xd0] sm:$0xff]
    %v351 = vld [vmem:[#allocation7 + $0xd8] sm:$0xff]
    %v352 = vld [vmem:[#allocation7 + $0xe0] sm:$0xff]
    %v353 = vld [vmem:[#allocation7 + $0xe8] sm:$0xff]
    %v354 = vld [vmem:[#allocation7 + $0xf0] sm:$0xff]
    %v355 = vld [vmem:[#allocation7 + $0xf8] sm:$0xff]
    %v356 = vld [vmem:[#allocation7 + $0x100] sm:$0xff]
    %v357 = vld [vmem:[#allocation7 + $0x108] sm:$0xff]
    %v358 = vld [vmem:[#allocation7 + $0x110] sm:$0xff]
    %v359 = vld [vmem:[#allocation7 + $0x118] sm:$0xff]
    %v360 = vld [vmem:[#allocation7 + $0x120] sm:$0xff]
    %v361 = vld [vmem:[#allocation7 + $0x128] sm:$0xff]
    %v362 = vld [vmem:[#allocation7 + $0x130] sm:$0xff]
    %v363 = vld [vmem:[#allocation7 + $0x138] sm:$0xff]
    %v364 = vld [vmem:[#allocation7 + $0x140] sm:$0xff]
    %v365 = vld [vmem:[#allocation7 + $0x148] sm:$0xff]
    %v366 = vld [vmem:[#allocation7 + $0x150] sm:$0xff]
    %v367 = vld [vmem:[#allocation7 + $0x158] sm:$0xff]
    %v368 = vld [vmem:[#allocation7 + $0x160] sm:$0xff]
    %v369 = vld [vmem:[#allocation7 + $0x168] sm:$0xff]
    %v370 = vld [vmem:[#allocation7 + $0x170] sm:$0xff]
    %v371 = vld [vmem:[#allocation7 + $0x178] sm:$0xff]
    %v372 = vld [vmem:[#allocation7 + $0x180] sm:$0xff]
    %v373 = vld [vmem:[#allocation7 + $0x188] sm:$0xff]
    %v374 = vld [vmem:[#allocation7 + $0x190] sm:$0xff]
    %v375 = vld [vmem:[#allocation7 + $0x198] sm:$0xff]
    %v376 = vld [vmem:[#allocation7 + $0x1a0] sm:$0xff]
    %v377 = vld [vmem:[#allocation7 + $0x1a8] sm:$0xff]
    %v378 = vld [vmem:[#allocation7 + $0x1b0] sm:$0xff]
    %v379 = vld [vmem:[#allocation7 + $0x1b8] sm:$0xff]
    %v380 = vld [vmem:[#allocation7 + $0x1c0] sm:$0xff]
    %v381 = vld [vmem:[#allocation7 + $0x1c8] sm:$0xff]
    %v382 = vld [vmem:[#allocation7 + $0x1d0] sm:$0xff]
    %v383 = vld [vmem:[#allocation7 + $0x1d8] sm:$0xff]
    %v384 = vld [vmem:[#allocation7 + $0x1e0] sm:$0xff]
    %v385 = vld [vmem:[#allocation7 + $0x1e8] sm:$0xff]
    %v386 = vld [vmem:[#allocation7 + $0x1f0] sm:$0xff]
    %v387 = vld [vmem:[#allocation7 + $0x1f8] sm:$0xff]
    %v388 = vld [vmem:[#allocation7 + $0x200] sm:$0xff]
    %v389 = vld [vmem:[#allocation7 + $0x208] sm:$0xff]
    %v390 = vld [vmem:[#allocation7 + $0x210] sm:$0xff]
    %v391 = vld [vmem:[#allocation7 + $0x218] sm:$0xff]
    %v392 = vld [vmem:[#allocation7 + $0x220] sm:$0xff]
    %v393 = vld [vmem:[#allocation7 + $0x228] sm:$0xff]
    %v394 = vld [vmem:[#allocation7 + $0x230] sm:$0xff]
    %v395 = vld [vmem:[#allocation7 + $0x238] sm:$0xff]
    %v396 = vld [vmem:[#allocation7 + $0x240] sm:$0xff]
    %v397 = vld [vmem:[#allocation7 + $0x248] sm:$0xff]
    %v398 = vld [vmem:[#allocation7 + $0x250] sm:$0xff]
    %v399 = vld [vmem:[#allocation7 + $0x258] sm:$0xff]
    %v400 = vld [vmem:[#allocation7 + $0x260] sm:$0xff]
    %v401 = vld [vmem:[#allocation7 + $0x268] sm:$0xff]
    %v402 = vld [vmem:[#allocation7 + $0x270] sm:$0xff]
    %v403 = vld [vmem:[#allocation7 + $0x278] sm:$0xff]
    %v404 = vld [vmem:[#allocation7 + $0x280] sm:$0xff]
    %v405 = vld [vmem:[#allocation7 + $0x288] sm:$0xff]
    %v406 = vld [vmem:[#allocation7 + $0x290] sm:$0xff]
    %v407 = vld [vmem:[#allocation7 + $0x298] sm:$0xff]
    %v408 = vld [vmem:[#allocation7 + $0x2a0] sm:$0xff]
    %v409 = vld [vmem:[#allocation7 + $0x2a8] sm:$0xff]
    %v410 = vld [vmem:[#allocation7 + $0x2b0] sm:$0xff]
    %v411 = vld [vmem:[#allocation7 + $0x2b8] sm:$0xff]
    %v412 = vld [vmem:[#allocation7 + $0x2c0] sm:$0xff]
    %v413 = vld [vmem:[#allocation7 + $0x2c8] sm:$0xff]
    %v414 = vld [vmem:[#allocation7 + $0x2d0] sm:$0xff]
    %v415 = vld [vmem:[#allocation7 + $0x2d8] sm:$0xff]
    %v416 = vld [vmem:[#allocation7 + $0x2e0] sm:$0xff]
    %v417 = vld [vmem:[#allocation7 + $0x2e8] sm:$0xff]
    %v418 = vld [vmem:[#allocation7 + $0x2f0] sm:$0xff]
    %v419 = vld [vmem:[#allocation7 + $0x2f8] sm:$0xff]
    %v420 = vld [vmem:[#allocation7 + $0x300] sm:$0xff]
    %v421 = vld [vmem:[#allocation7 + $0x308] sm:$0xff]
    %v422 = vld [vmem:[#allocation7 + $0x310] sm:$0xff]
    %v423 = vld [vmem:[#allocation7 + $0x318] sm:$0xff]
    %v424 = vld [vmem:[#allocation7 + $0x320] sm:$0xff]
    %v425 = vld [vmem:[#allocation7 + $0x328] sm:$0xff]
    %v426 = vld [vmem:[#allocation7 + $0x330] sm:$0xff]
    %v427 = vld [vmem:[#allocation7 + $0x338] sm:$0xff]
    %v428 = vld [vmem:[#allocation7 + $0x340] sm:$0xff]
    %v429 = vld [vmem:[#allocation7 + $0x348] sm:$0xff]
    %v430 = vld [vmem:[#allocation7 + $0x350] sm:$0xff]
    %v431 = vld [vmem:[#allocation7 + $0x358] sm:$0xff]
    %v432 = vld [vmem:[#allocation7 + $0x360] sm:$0xff]
    %v433 = vld [vmem:[#allocation7 + $0x368] sm:$0xff]
    %v434 = vld [vmem:[#allocation7 + $0x370] sm:$0xff]
    %v435 = vld [vmem:[#allocation7 + $0x378] sm:$0xff]
    %v436 = vld [vmem:[#allocation7 + $0x380] sm:$0xff]
    %v437 = vld [vmem:[#allocation7 + $0x388] sm:$0xff]
    %v438 = vld [vmem:[#allocation7 + $0x390] sm:$0xff]
    %v439 = vld [vmem:[#allocation7 + $0x398] sm:$0xff]
    %v440 = vld [vmem:[#allocation7 + $0x3a0] sm:$0xff]
    %v441 = vld [vmem:[#allocation7 + $0x3a8] sm:$0xff]
    %v442 = vld [vmem:[#allocation7 + $0x3b0] sm:$0xff]
    %v443 = vld [vmem:[#allocation7 + $0x3b8] sm:$0xff]
    %v444 = vld [vmem:[#allocation7 + $0x3c0] sm:$0xff]
    %v445 = vld [vmem:[#allocation7 + $0x3c8] sm:$0xff]
    %v446 = vld [vmem:[#allocation7 + $0x3d0] sm:$0xff]
    %v447 = vld [vmem:[#allocation7 + $0x3d8] sm:$0xff]
    %v448 = vld [vmem:[#allocation7 + $0x3e0] sm:$0xff]
    %v449 = vld [vmem:[#allocation7 + $0x3e8] sm:$0xff]
    %v450 = vld [vmem:[#allocation7 + $0x3f0] sm:$0xff]
    %v451 = vld [vmem:[#allocation7 + $0x3f8] sm:$0xff]
    %v452 = vld [vmem:[#allocation7 + $0x400] sm:$0xff]
    %v453 = vld [vmem:[#allocation7 + $0x408] sm:$0xff]
    %v454 = vld [vmem:[#allocation7 + $0x410] sm:$0xff]
    %v455 = vld [vmem:[#allocation7 + $0x418] sm:$0xff]
    %v456 = vld [vmem:[#allocation7 + $0x420] sm:$0xff]
    %v457 = vld [vmem:[#allocation7 + $0x428] sm:$0xff]
    %v458 = vld [vmem:[#allocation7 + $0x430] sm:$0xff]
    %v459 = vld [vmem:[#allocation7 + $0x438] sm:$0xff]
    %v460 = vld [vmem:[#allocation7 + $0x440] sm:$0xff]
    %v461 = vld [vmem:[#allocation7 + $0x448] sm:$0xff]
    %v462 = vld [vmem:[#allocation7 + $0x450] sm:$0xff]
    %v463 = vld [vmem:[#allocation7 + $0x458] sm:$0xff]
    %v464 = vld [vmem:[#allocation7 + $0x460] sm:$0xff]
    %v465 = vld [vmem:[#allocation7 + $0x468] sm:$0xff]
    %v466 = vld [vmem:[#allocation7 + $0x470] sm:$0xff]
    %v467 = vld [vmem:[#allocation7 + $0x478] sm:$0xff]
    %v468 = vld [vmem:[#allocation7 + $0x480] sm:$0xff]
    %v469 = vld [vmem:[#allocation7 + $0x488] sm:$0xff]
    %v470 = vld [vmem:[#allocation7 + $0x490] sm:$0xff]
    %v471 = vld [vmem:[#allocation7 + $0x498] sm:$0xff]
    %v472 = vld [vmem:[#allocation7 + $0x4a0] sm:$0xff]
    %v473 = vld [vmem:[#allocation7 + $0x4a8] sm:$0xff]
    %v474 = vld [vmem:[#allocation7 + $0x4b0] sm:$0xff]
    %v475 = vld [vmem:[#allocation7 + $0x4b8] sm:$0xff]
    %v476 = vld [vmem:[#allocation7 + $0x4c0] sm:$0xff]
    %v477 = vld [vmem:[#allocation7 + $0x4c8] sm:$0xff]
    %v478 = vld [vmem:[#allocation7 + $0x4d0] sm:$0xff]
    %v479 = vld [vmem:[#allocation7 + $0x4d8] sm:$0xff]
    %v480 = vld [vmem:[#allocation7 + $0x4e0] sm:$0xff]
    %v481 = vld [vmem:[#allocation7 + $0x4e8] sm:$0xff]
    %v482 = vld [vmem:[#allocation7 + $0x4f0] sm:$0xff]
    %v483 = vld [vmem:[#allocation7 + $0x4f8] sm:$0xff]
    %v484 = vld [vmem:[#allocation7 + $0x500] sm:$0xff]
    %v485 = vld [vmem:[#allocation7 + $0x508] sm:$0xff]
    %v486 = vld [vmem:[#allocation7 + $0x510] sm:$0xff]
    %v487 = vld [vmem:[#allocation7 + $0x518] sm:$0xff]
    %v488 = vld [vmem:[#allocation7 + $0x520] sm:$0xff]
    %v489 = vld [vmem:[#allocation7 + $0x528] sm:$0xff]
    %v490 = vld [vmem:[#allocation7 + $0x530] sm:$0xff]
    %v491 = vld [vmem:[#allocation7 + $0x538] sm:$0xff]
    %v492 = vld [vmem:[#allocation7 + $0x540] sm:$0xff]
    %v493 = vld [vmem:[#allocation7 + $0x548] sm:$0xff]
    %v494 = vld [vmem:[#allocation7 + $0x550] sm:$0xff]
    %v495 = vld [vmem:[#allocation7 + $0x558] sm:$0xff]
    %v496 = vld [vmem:[#allocation7 + $0x560] sm:$0xff]
    %v497 = vld [vmem:[#allocation7 + $0x568] sm:$0xff]
    %v498 = vld [vmem:[#allocation7 + $0x570] sm:$0xff]
    %v499 = vld [vmem:[#allocation7 + $0x578] sm:$0xff]
    %v500 = vld [vmem:[#allocation7 + $0x580] sm:$0xff]
    %v501 = vld [vmem:[#allocation7 + $0x588] sm:$0xff]
    %v502 = vld [vmem:[#allocation7 + $0x590] sm:$0xff]
    %v503 = vld [vmem:[#allocation7 + $0x598] sm:$0xff]
    %v504 = vld [vmem:[#allocation7 + $0x5a0] sm:$0xff]
    %v505 = vld [vmem:[#allocation7 + $0x5a8] sm:$0xff]
    %v506 = vld [vmem:[#allocation7 + $0x5b0] sm:$0xff]
    %v507 = vld [vmem:[#allocation7 + $0x5b8] sm:$0xff]
    %v508 = vld [vmem:[#allocation7 + $0x5c0] sm:$0xff]
    %v509 = vld [vmem:[#allocation7 + $0x5c8] sm:$0xff]
    %v510 = vld [vmem:[#allocation7 + $0x5d0] sm:$0xff]
    %v511 = vld [vmem:[#allocation7 + $0x5d8] sm:$0xff]
    %v512 = vld [vmem:[#allocation7 + $0x5e0] sm:$0xff]
    %v513 = vld [vmem:[#allocation7 + $0x5e8] sm:$0xff]
    %v514 = vld [vmem:[#allocation7 + $0x5f0] sm:$0xff]
    %v515 = vld [vmem:[#allocation7 + $0x5f8] sm:$0xff]
    %v516 = vld [vmem:[#allocation7 + $0x600] sm:$0xff]
    %v517 = vld [vmem:[#allocation7 + $0x608] sm:$0xff]
    %v518 = vld [vmem:[#allocation7 + $0x610] sm:$0xff]
    %v519 = vld [vmem:[#allocation7 + $0x618] sm:$0xff]
    %v520 = vld [vmem:[#allocation7 + $0x620] sm:$0xff]
    %v521 = vld [vmem:[#allocation7 + $0x628] sm:$0xff]
    %v522 = vld [vmem:[#allocation7 + $0x630] sm:$0xff]
    %v523 = vld [vmem:[#allocation7 + $0x638] sm:$0xff]
    %v524 = vld [vmem:[#allocation7 + $0x640] sm:$0xff]
    %v525 = vld [vmem:[#allocation7 + $0x648] sm:$0xff]
    %v526 = vld [vmem:[#allocation7 + $0x650] sm:$0xff]
    %v527 = vld [vmem:[#allocation7 + $0x658] sm:$0xff]
    %v528 = vld [vmem:[#allocation7 + $0x660] sm:$0xff]
    %v529 = vld [vmem:[#allocation7 + $0x668] sm:$0xff]
    %v530 = vld [vmem:[#allocation7 + $0x670] sm:$0xff]
    %v531 = vld [vmem:[#allocation7 + $0x678] sm:$0xff]
    %v532 = vld [vmem:[#allocation7 + $0x680] sm:$0xff]
    %v533 = vld [vmem:[#allocation7 + $0x688] sm:$0xff]
    %v534 = vld [vmem:[#allocation7 + $0x690] sm:$0xff]
    %v535 = vld [vmem:[#allocation7 + $0x698] sm:$0xff]
    %v536 = vld [vmem:[#allocation7 + $0x6a0] sm:$0xff]
    %v537 = vld [vmem:[#allocation7 + $0x6a8] sm:$0xff]
    %v538 = vld [vmem:[#allocation7 + $0x6b0] sm:$0xff]
    %v539 = vld [vmem:[#allocation7 + $0x6b8] sm:$0xff]
    %v540 = vld [vmem:[#allocation7 + $0x6c0] sm:$0xff]
    %v541 = vld [vmem:[#allocation7 + $0x6c8] sm:$0xff]
    %v542 = vld [vmem:[#allocation7 + $0x6d0] sm:$0xff]
    %v543 = vld [vmem:[#allocation7 + $0x6d8] sm:$0xff]
    %v544 = vld [vmem:[#allocation7 + $0x6e0] sm:$0xff]
    %v545 = vld [vmem:[#allocation7 + $0x6e8] sm:$0xff]
    %v546 = vld [vmem:[#allocation7 + $0x6f0] sm:$0xff]
    %v547 = vld [vmem:[#allocation7 + $0x6f8] sm:$0xff]
    %v548 = vld [vmem:[#allocation7 + $0x700] sm:$0xff]
    %v549 = vld [vmem:[#allocation7 + $0x708] sm:$0xff]
    %v550 = vld [vmem:[#allocation7 + $0x710] sm:$0xff]
    %v551 = vld [vmem:[#allocation7 + $0x718] sm:$0xff]
    %v552 = vld [vmem:[#allocation7 + $0x720] sm:$0xff]
    %v553 = vld [vmem:[#allocation7 + $0x728] sm:$0xff]
    %v554 = vld [vmem:[#allocation7 + $0x730] sm:$0xff]
    %v555 = vld [vmem:[#allocation7 + $0x738] sm:$0xff]
    %v556 = vld [vmem:[#allocation7 + $0x740] sm:$0xff]
    %v557 = vld [vmem:[#allocation7 + $0x748] sm:$0xff]
    %v558 = vld [vmem:[#allocation7 + $0x750] sm:$0xff]
    %v559 = vld [vmem:[#allocation7 + $0x758] sm:$0xff]
    %v560 = vld [vmem:[#allocation7 + $0x760] sm:$0xff]
    %v561 = vld [vmem:[#allocation7 + $0x768] sm:$0xff]
    %v562 = vld [vmem:[#allocation7 + $0x770] sm:$0xff]
    %v563 = vld [vmem:[#allocation7 + $0x778] sm:$0xff]
    %v564 = vld [vmem:[#allocation7 + $0x780] sm:$0xff]
    %v565 = vld [vmem:[#allocation7 + $0x788] sm:$0xff]
    %v566 = vld [vmem:[#allocation7 + $0x790] sm:$0xff]
    %v567 = vld [vmem:[#allocation7 + $0x798] sm:$0xff]
    %v568 = vld [vmem:[#allocation7 + $0x7a0] sm:$0xff]
    %v569 = vld [vmem:[#allocation7 + $0x7a8] sm:$0xff]
    %v570 = vld [vmem:[#allocation7 + $0x7b0] sm:$0xff]
    %v571 = vld [vmem:[#allocation7 + $0x7b8] sm:$0xff]
    %v572 = vld [vmem:[#allocation7 + $0x7c0] sm:$0xff]
    %v573 = vld [vmem:[#allocation7 + $0x7c8] sm:$0xff]
    %v574 = vld [vmem:[#allocation7 + $0x7d0] sm:$0xff]
    %v575 = vld [vmem:[#allocation7 + $0x7d8] sm:$0xff]
    %v576 = vld [vmem:[#allocation7 + $0x7e0] sm:$0xff]
    %v577 = vld [vmem:[#allocation7 + $0x7e8] sm:$0xff]
    %v578 = vld [vmem:[#allocation7 + $0x7f0] sm:$0xff]
    %v579 = vld [vmem:[#allocation7 + $0x7f8] sm:$0xff]
    %v580 = vld [vmem:[#allocation7 + $0x800] sm:$0xff]
    %v581 = vld [vmem:[#allocation7 + $0x808] sm:$0xff]
    %v582 = vld [vmem:[#allocation7 + $0x810] sm:$0xff]
    %v583 = vld [vmem:[#allocation7 + $0x818] sm:$0xff]
    %v584 = vld [vmem:[#allocation7 + $0x820] sm:$0xff]
    %v585 = vld [vmem:[#allocation7 + $0x828] sm:$0xff]
    %v586 = vld [vmem:[#allocation7 + $0x830] sm:$0xff]
    %v587 = vld [vmem:[#allocation7 + $0x838] sm:$0xff]
    %v588 = vld [vmem:[#allocation7 + $0x840] sm:$0xff]
    %v589 = vld [vmem:[#allocation7 + $0x848] sm:$0xff]
    %v590 = vld [vmem:[#allocation7 + $0x850] sm:$0xff]
    %v591 = vld [vmem:[#allocation7 + $0x858] sm:$0xff]
    %v592 = vld [vmem:[#allocation7 + $0x860] sm:$0xff]
    %v593 = vld [vmem:[#allocation7 + $0x868] sm:$0xff]
    %v594 = vld [vmem:[#allocation7 + $0x870] sm:$0xff]
    %v595 = vld [vmem:[#allocation7 + $0x878] sm:$0xff]
    %v596 = vld [vmem:[#allocation7 + $0x880] sm:$0xff]
    %v597 = vld [vmem:[#allocation7 + $0x888] sm:$0xff]
    %v598 = vld [vmem:[#allocation7 + $0x890] sm:$0xff]
    %v599 = vld [vmem:[#allocation7 + $0x898] sm:$0xff]
    %v600 = vld [vmem:[#allocation7 + $0x8a0] sm:$0xff]
    %v601 = vld [vmem:[#allocation7 + $0x8a8] sm:$0xff]
    %v602 = vld [vmem:[#allocation7 + $0x8b0] sm:$0xff]
    %v603 = vld [vmem:[#allocation7 + $0x8b8] sm:$0xff]
    %v604 = vld [vmem:[#allocation7 + $0x8c0] sm:$0xff]
    %v605 = vld [vmem:[#allocation7 + $0x8c8] sm:$0xff]
    %v606 = vld [vmem:[#allocation7 + $0x8d0] sm:$0xff]
    %v607 = vld [vmem:[#allocation7 + $0x8d8] sm:$0xff]
    %v608 = vld [vmem:[#allocation7 + $0x8e0] sm:$0xff]
    %v609 = vld [vmem:[#allocation7 + $0x8e8] sm:$0xff]
    %v610 = vld [vmem:[#allocation7 + $0x8f0] sm:$0xff]
    %v611 = vld [vmem:[#allocation7 + $0x8f8] sm:$0xff]
    %v612 = vld [vmem:[#allocation7 + $0x900] sm:$0xff]
    %v613 = vld [vmem:[#allocation7 + $0x908] sm:$0xff]
    %v614 = vld [vmem:[#allocation7 + $0x910] sm:$0xff]
    %v615 = vld [vmem:[#allocation7 + $0x918] sm:$0xff]
    %v616 = vld [vmem:[#allocation7 + $0x920] sm:$0xff]
    %v617 = vld [vmem:[#allocation7 + $0x928] sm:$0xff]
    %v618 = vld [vmem:[#allocation7 + $0x930] sm:$0xff]
    %v619 = vld [vmem:[#allocation7 + $0x938] sm:$0xff]
    %v620 = vld [vmem:[#allocation7 + $0x940] sm:$0xff]
    %v621 = vld [vmem:[#allocation7 + $0x948] sm:$0xff]
    %v622 = vld [vmem:[#allocation7 + $0x950] sm:$0xff]
    %v623 = vld [vmem:[#allocation7 + $0x958] sm:$0xff]
    %v624 = vld [vmem:[#allocation7 + $0x960] sm:$0xff]
    %v625 = vld [vmem:[#allocation7 + $0x968] sm:$0xff]
    %v626 = vld [vmem:[#allocation7 + $0x970] sm:$0xff]
    %v627 = vld [vmem:[#allocation7 + $0x978] sm:$0xff]
    %v628 = vld [vmem:[#allocation7 + $0x980] sm:$0xff]
    %v629 = vld [vmem:[#allocation7 + $0x988] sm:$0xff]
    %v630 = vld [vmem:[#allocation7 + $0x990] sm:$0xff]
    %v631 = vld [vmem:[#allocation7 + $0x998] sm:$0xff]
    %v632 = vld [vmem:[#allocation7 + $0x9a0] sm:$0xff]
    %v633 = vld [vmem:[#allocation7 + $0x9a8] sm:$0xff]
    %v634 = vld [vmem:[#allocation7 + $0x9b0] sm:$0xff]
    %v635 = vld [vmem:[#allocation7 + $0x9b8] sm:$0xff]
    %v636 = vld [vmem:[#allocation7 + $0x9c0] sm:$0xff]
    %v637 = vld [vmem:[#allocation7 + $0x9c8] sm:$0xff]
    %v638 = vld [vmem:[#allocation7 + $0x9d0] sm:$0xff]
    %v639 = vld [vmem:[#allocation7 + $0x9d8] sm:$0xff]
    %v640 = vld [vmem:[#allocation7 + $0x9e0] sm:$0xff]
    %v641 = vld [vmem:[#allocation7 + $0x9e8] sm:$0xff]
    %v642 = vld [vmem:[#allocation7 + $0x9f0] sm:$0xff]
    %v643 = vld [vmem:[#allocation7 + $0x9f8] sm:$0xff]
    %v644 = vld [vmem:[#allocation7 + $0xa00] sm:$0xff]
    %v645 = vld [vmem:[#allocation7 + $0xa08] sm:$0xff]
    %v646 = vld [vmem:[#allocation7 + $0xa10] sm:$0xff]
    %v647 = vld [vmem:[#allocation7 + $0xa18] sm:$0xff]
    %v648 = vld [vmem:[#allocation7 + $0xa20] sm:$0xff]
    %v649 = vld [vmem:[#allocation7 + $0xa28] sm:$0xff]
    %v650 = vld [vmem:[#allocation7 + $0xa30] sm:$0xff]
    %v651 = vld [vmem:[#allocation7 + $0xa38] sm:$0xff]
    %v652 = vld [vmem:[#allocation7 + $0xa40] sm:$0xff]
    %v653 = vld [vmem:[#allocation7 + $0xa48] sm:$0xff]
    %v654 = vld [vmem:[#allocation7 + $0xa50] sm:$0xff]
    %v655 = vld [vmem:[#allocation7 + $0xa58] sm:$0xff]
    %v656 = vld [vmem:[#allocation7 + $0xa60] sm:$0xff]
    %v657 = vld [vmem:[#allocation7 + $0xa68] sm:$0xff]
    %v658 = vld [vmem:[#allocation7 + $0xa70] sm:$0xff]
    %v659 = vld [vmem:[#allocation7 + $0xa78] sm:$0xff]
    %v660 = vld [vmem:[#allocation7 + $0xa80] sm:$0xff]
    %v661 = vld [vmem:[#allocation7 + $0xa88] sm:$0xff]
    %v662 = vld [vmem:[#allocation7 + $0xa90] sm:$0xff]
    %v663 = vld [vmem:[#allocation7 + $0xa98] sm:$0xff]
    %v664 = vld [vmem:[#allocation7 + $0xaa0] sm:$0xff]
    %v665 = vld [vmem:[#allocation7 + $0xaa8] sm:$0xff]
    %v666 = vld [vmem:[#allocation7 + $0xab0] sm:$0xff]
    %v667 = vld [vmem:[#allocation7 + $0xab8] sm:$0xff]
    %v668 = vld [vmem:[#allocation7 + $0xac0] sm:$0xff]
    %v669 = vld [vmem:[#allocation7 + $0xac8] sm:$0xff]
    %v670 = vld [vmem:[#allocation7 + $0xad0] sm:$0xff]
    %v671 = vld [vmem:[#allocation7 + $0xad8] sm:$0xff]
    %v672 = vld [vmem:[#allocation7 + $0xae0] sm:$0xff]
    %v673 = vld [vmem:[#allocation7 + $0xae8] sm:$0xff]
    %v674 = vld [vmem:[#allocation7 + $0xaf0] sm:$0xff]
    %v675 = vld [vmem:[#allocation7 + $0xaf8] sm:$0xff]
    %v676 = vld [vmem:[#allocation7 + $0xb00] sm:$0xff]
    %v677 = vld [vmem:[#allocation7 + $0xb08] sm:$0xff]
    %v678 = vld [vmem:[#allocation7 + $0xb10] sm:$0xff]
    %v679 = vld [vmem:[#allocation7 + $0xb18] sm:$0xff]
    %v680 = vld [vmem:[#allocation7 + $0xb20] sm:$0xff]
    %v681 = vld [vmem:[#allocation7 + $0xb28] sm:$0xff]
    %v682 = vld [vmem:[#allocation7 + $0xb30] sm:$0xff]
    %v683 = vld [vmem:[#allocation7 + $0xb38] sm:$0xff]
    %v684 = vld [vmem:[#allocation7 + $0xb40] sm:$0xff]
    %v685 = vld [vmem:[#allocation7 + $0xb48] sm:$0xff]
    %v686 = vld [vmem:[#allocation7 + $0xb50] sm:$0xff]
    %v687 = vld [vmem:[#allocation7 + $0xb58] sm:$0xff]
    %v688 = vld [vmem:[#allocation7 + $0xb60] sm:$0xff]
    %v689 = vld [vmem:[#allocation7 + $0xb68] sm:$0xff]
    %v690 = vld [vmem:[#allocation7 + $0xb70] sm:$0xff]
    %v691 = vld [vmem:[#allocation7 + $0xb78] sm:$0xff]
    %v692 = vld [vmem:[#allocation7 + $0xb80] sm:$0xff]
    %v693 = vld [vmem:[#allocation7 + $0xb88] sm:$0xff]
    %v694 = vld [vmem:[#allocation7 + $0xb90] sm:$0xff]
    %v695 = vld [vmem:[#allocation7 + $0xb98] sm:$0xff]
    %v696 = vld [vmem:[#allocation7 + $0xba0] sm:$0xff]
    %v697 = vld [vmem:[#allocation7 + $0xba8] sm:$0xff]
    %v698 = vld [vmem:[#allocation7 + $0xbb0] sm:$0xff]
    %v699 = vld [vmem:[#allocation7 + $0xbb8] sm:$0xff]
    %v700 = vld [vmem:[#allocation7 + $0xbc0] sm:$0xff]
    %v701 = vld [vmem:[#allocation7 + $0xbc8] sm:$0xff]
    %v702 = vld [vmem:[#allocation7 + $0xbd0] sm:$0xff]
    %v703 = vld [vmem:[#allocation7 + $0xbd8] sm:$0xff]
    %v704 = vld [vmem:[#allocation7 + $0xbe0] sm:$0xff]
    %v705 = vld [vmem:[#allocation7 + $0xbe8] sm:$0xff]
    %v706 = vld [vmem:[#allocation7 + $0xbf0] sm:$0xff]
    %v707 = vld [vmem:[#allocation7 + $0xbf8] sm:$0xff]
    %v708 = vld [vmem:[#allocation7 + $0xc00] sm:$0xff]
    %v709 = vld [vmem:[#allocation7 + $0xc08] sm:$0xff]
    %v710 = vld [vmem:[#allocation7 + $0xc10] sm:$0xff]
    %v711 = vld [vmem:[#allocation7 + $0xc18] sm:$0xff]
    %v712 = vld [vmem:[#allocation7 + $0xc20] sm:$0xff]
    %v713 = vld [vmem:[#allocation7 + $0xc28] sm:$0xff]
    %v714 = vld [vmem:[#allocation7 + $0xc30] sm:$0xff]
    %v715 = vld [vmem:[#allocation7 + $0xc38] sm:$0xff]
    %v716 = vld [vmem:[#allocation7 + $0xc40] sm:$0xff]
    %v717 = vld [vmem:[#allocation7 + $0xc48] sm:$0xff]
    %v718 = vld [vmem:[#allocation7 + $0xc50] sm:$0xff]
    %v719 = vld [vmem:[#allocation7 + $0xc58] sm:$0xff]
    %v720 = vld [vmem:[#allocation7 + $0xc60] sm:$0xff]
    %v721 = vld [vmem:[#allocation7 + $0xc68] sm:$0xff]
    %v722 = vld [vmem:[#allocation7 + $0xc70] sm:$0xff]
    %v723 = vld [vmem:[#allocation7 + $0xc78] sm:$0xff]
    %v724 = vld [vmem:[#allocation7 + $0xc80] sm:$0xff]
    %v725 = vld [vmem:[#allocation7 + $0xc88] sm:$0xff]
    %v726 = vld [vmem:[#allocation7 + $0xc90] sm:$0xff]
    %v727 = vld [vmem:[#allocation7 + $0xc98] sm:$0xff]
    %v728 = vld [vmem:[#allocation7 + $0xca0] sm:$0xff]
    %v729 = vld [vmem:[#allocation7 + $0xca8] sm:$0xff]
    %v730 = vld [vmem:[#allocation7 + $0xcb0] sm:$0xff]
    %v731 = vld [vmem:[#allocation7 + $0xcb8] sm:$0xff]
    %v732 = vld [vmem:[#allocation7 + $0xcc0] sm:$0xff]
    %v733 = vld [vmem:[#allocation7 + $0xcc8] sm:$0xff]
    %v734 = vld [vmem:[#allocation7 + $0xcd0] sm:$0xff]
    %v735 = vld [vmem:[#allocation7 + $0xcd8] sm:$0xff]
    %v736 = vld [vmem:[#allocation7 + $0xce0] sm:$0xff]
    %v737 = vld [vmem:[#allocation7 + $0xce8] sm:$0xff]
    %v738 = vld [vmem:[#allocation7 + $0xcf0] sm:$0xff]
    %v739 = vld [vmem:[#allocation7 + $0xcf8] sm:$0xff]
    %v740 = vld [vmem:[#allocation7 + $0xd00] sm:$0xff]
    %v741 = vld [vmem:[#allocation7 + $0xd08] sm:$0xff]
    %v742 = vld [vmem:[#allocation7 + $0xd10] sm:$0xff]
    %v743 = vld [vmem:[#allocation7 + $0xd18] sm:$0xff]
    %v744 = vld [vmem:[#allocation7 + $0xd20] sm:$0xff]
    %v745 = vld [vmem:[#allocation7 + $0xd28] sm:$0xff]
    %v746 = vld [vmem:[#allocation7 + $0xd30] sm:$0xff]
    %v747 = vld [vmem:[#allocation7 + $0xd38] sm:$0xff]
    %v748 = vld [vmem:[#allocation7 + $0xd40] sm:$0xff]
    %v749 = vld [vmem:[#allocation7 + $0xd48] sm:$0xff]
    %v750 = vld [vmem:[#allocation7 + $0xd50] sm:$0xff]
    %v751 = vld [vmem:[#allocation7 + $0xd58] sm:$0xff]
    %v752 = vld [vmem:[#allocation7 + $0xd60] sm:$0xff]
    %v753 = vld [vmem:[#allocation7 + $0xd68] sm:$0xff]
    %v754 = vld [vmem:[#allocation7 + $0xd70] sm:$0xff]
    %v755 = vld [vmem:[#allocation7 + $0xd78] sm:$0xff]
    %v756 = vld [vmem:[#allocation7 + $0xd80] sm:$0xff]
    %v757 = vld [vmem:[#allocation7 + $0xd88] sm:$0xff]
    %v758 = vld [vmem:[#allocation7 + $0xd90] sm:$0xff]
    %v759 = vld [vmem:[#allocation7 + $0xd98] sm:$0xff]
    %v760 = vld [vmem:[#allocation7 + $0xda0] sm:$0xff]
    %v761 = vld [vmem:[#allocation7 + $0xda8] sm:$0xff]
    %v762 = vld [vmem:[#allocation7 + $0xdb0] sm:$0xff]
    %v763 = vld [vmem:[#allocation7 + $0xdb8] sm:$0xff]
    %v764 = vld [vmem:[#allocation7 + $0xdc0] sm:$0xff]
    %v765 = vld [vmem:[#allocation7 + $0xdc8] sm:$0xff]
    %v766 = vld [vmem:[#allocation7 + $0xdd0] sm:$0xff]
    %v767 = vld [vmem:[#allocation7 + $0xdd8] sm:$0xff]
    %v768 = vld [vmem:[#allocation7 + $0xde0] sm:$0xff]
    %v769 = vld [vmem:[#allocation7 + $0xde8] sm:$0xff]
    %v770 = vld [vmem:[#allocation7 + $0xdf0] sm:$0xff]
    %v771 = vld [vmem:[#allocation7 + $0xdf8] sm:$0xff]
    %v772 = vld [vmem:[#allocation7 + $0xe00] sm:$0xff]
    %v773 = vld [vmem:[#allocation7 + $0xe08] sm:$0xff]
    %v774 = vld [vmem:[#allocation7 + $0xe10] sm:$0xff]
    %v775 = vld [vmem:[#allocation7 + $0xe18] sm:$0xff]
    %v776 = vld [vmem:[#allocation7 + $0xe20] sm:$0xff]
    %v777 = vld [vmem:[#allocation7 + $0xe28] sm:$0xff]
    %v778 = vld [vmem:[#allocation7 + $0xe30] sm:$0xff]
    %v779 = vld [vmem:[#allocation7 + $0xe38] sm:$0xff]
    %v780 = vld [vmem:[#allocation7 + $0xe40] sm:$0xff]
    %v781 = vld [vmem:[#allocation7 + $0xe48] sm:$0xff]
    %v782 = vld [vmem:[#allocation7 + $0xe50] sm:$0xff]
    %v783 = vld [vmem:[#allocation7 + $0xe58] sm:$0xff]
    %v784 = vld [vmem:[#allocation7 + $0xe60] sm:$0xff]
    %v785 = vld [vmem:[#allocation7 + $0xe68] sm:$0xff]
    %v786 = vld [vmem:[#allocation7 + $0xe70] sm:$0xff]
    %v787 = vld [vmem:[#allocation7 + $0xe78] sm:$0xff]
    %v788 = vld [vmem:[#allocation7 + $0xe80] sm:$0xff]
    %v789 = vld [vmem:[#allocation7 + $0xe88] sm:$0xff]
    %v790 = vld [vmem:[#allocation7 + $0xe90] sm:$0xff]
    %v791 = vld [vmem:[#allocation7 + $0xe98] sm:$0xff]
    %v792 = vld [vmem:[#allocation7 + $0xea0] sm:$0xff]
    %v793 = vld [vmem:[#allocation7 + $0xea8] sm:$0xff]
    %v794 = vld [vmem:[#allocation7 + $0xeb0] sm:$0xff]
    %v795 = vld [vmem:[#allocation7 + $0xeb8] sm:$0xff]
    %v796 = vld [vmem:[#allocation7 + $0xec0] sm:$0xff]
    %v797 = vld [vmem:[#allocation7 + $0xec8] sm:$0xff]
    %v798 = vld [vmem:[#allocation7 + $0xed0] sm:$0xff]
    %v799 = vld [vmem:[#allocation7 + $0xed8] sm:$0xff]
    %v800 = vld [vmem:[#allocation7 + $0xee0] sm:$0xff]
    %v801 = vld [vmem:[#allocation7 + $0xee8] sm:$0xff]
    %v802 = vld [vmem:[#allocation7 + $0xef0] sm:$0xff]
    %v803 = vld [vmem:[#allocation7 + $0xef8] sm:$0xff]
    %v804 = vld [vmem:[#allocation7 + $0xf00] sm:$0xff]
    %v805 = vld [vmem:[#allocation7 + $0xf08] sm:$0xff]
    %v806 = vld [vmem:[#allocation7 + $0xf10] sm:$0xff]
    %v807 = vld [vmem:[#allocation7 + $0xf18] sm:$0xff]
    %v808 = vld [vmem:[#allocation7 + $0xf20] sm:$0xff]
    %v809 = vld [vmem:[#allocation7 + $0xf28] sm:$0xff]
    %v810 = vld [vmem:[#allocation7 + $0xf30] sm:$0xff]
    %v811 = vld [vmem:[#allocation7 + $0xf38] sm:$0xff]
    %v812 = vld [vmem:[#allocation7 + $0xf40] sm:$0xff]
    %v813 = vld [vmem:[#allocation7 + $0xf48] sm:$0xff]
    %v814 = vld [vmem:[#allocation7 + $0xf50] sm:$0xff]
    %v815 = vld [vmem:[#allocation7 + $0xf58] sm:$0xff]
    %v816 = vld [vmem:[#allocation7 + $0xf60] sm:$0xff]
    %v817 = vld [vmem:[#allocation7 + $0xf68] sm:$0xff]
    %v818 = vld [vmem:[#allocation7 + $0xf70] sm:$0xff]
    %v819 = vld [vmem:[#allocation7 + $0xf78] sm:$0xff]
    %v820 = vld [vmem:[#allocation7 + $0xf80] sm:$0xff]
    %v821 = vld [vmem:[#allocation7 + $0xf88] sm:$0xff]
    %v822 = vld [vmem:[#allocation7 + $0xf90] sm:$0xff]
    %v823 = vld [vmem:[#allocation7 + $0xf98] sm:$0xff]
    %v824 = vld [vmem:[#allocation7 + $0xfa0] sm:$0xff]
    %v825 = vld [vmem:[#allocation7 + $0xfa8] sm:$0xff]
    %v826 = vld [vmem:[#allocation7 + $0xfb0] sm:$0xff]
    %v827 = vld [vmem:[#allocation7 + $0xfb8] sm:$0xff]
    %v828 = vld [vmem:[#allocation7 + $0xfc0] sm:$0xff]
    %v829 = vld [vmem:[#allocation7 + $0xfc8] sm:$0xff]
    %v830 = vld [vmem:[#allocation7 + $0xfd0] sm:$0xff]
    %v831 = vld [vmem:[#allocation7 + $0xfd8] sm:$0xff]
    %v832 = vld [vmem:[#allocation7 + $0xfe0] sm:$0xff]
    %v833 = vld [vmem:[#allocation7 + $0xfe8] sm:$0xff]
    %v834 = vld [vmem:[#allocation7 + $0xff0] sm:$0xff]
    %v835 = vld [vmem:[#allocation7 + $0xff8] sm:$0xff]
    %v836 = vld [vmem:[#allocation7 + $0x1000] sm:$0xff]
    %v837 = vld [vmem:[#allocation7 + $0x1008] sm:$0xff]
    %v838 = vld [vmem:[#allocation7 + $0x1010] sm:$0xff]
    %v839 = vld [vmem:[#allocation7 + $0x1018] sm:$0xff]
    %v840 = vld [vmem:[#allocation7 + $0x1020] sm:$0xff]
    %v841 = vld [vmem:[#allocation7 + $0x1028] sm:$0xff]
    %v842 = vld [vmem:[#allocation7 + $0x1030] sm:$0xff]
    %v843 = vld [vmem:[#allocation7 + $0x1038] sm:$0xff]
    %v844 = vld [vmem:[#allocation7 + $0x1040] sm:$0xff]
    %v845 = vld [vmem:[#allocation7 + $0x1048] sm:$0xff]
    %v846 = vld [vmem:[#allocation7 + $0x1050] sm:$0xff]
    %v847 = vld [vmem:[#allocation7 + $0x1058] sm:$0xff]
    %v848 = vld [vmem:[#allocation7 + $0x1060] sm:$0xff]
    %v849 = vld [vmem:[#allocation7 + $0x1068] sm:$0xff]
    %v850 = vld [vmem:[#allocation7 + $0x1070] sm:$0xff]
    %v851 = vld [vmem:[#allocation7 + $0x1078] sm:$0xff]
    %v852 = vld [vmem:[#allocation7 + $0x1080] sm:$0xff]
    %v853 = vld [vmem:[#allocation7 + $0x1088] sm:$0xff]
    %v854 = vld [vmem:[#allocation7 + $0x1090] sm:$0xff]
    %v855 = vld [vmem:[#allocation7 + $0x1098] sm:$0xff]
    %v856 = vld [vmem:[#allocation7 + $0x10a0] sm:$0xff]
    %v857 = vld [vmem:[#allocation7 + $0x10a8] sm:$0xff]
    %v858 = vld [vmem:[#allocation7 + $0x10b0] sm:$0xff]
    %v859 = vld [vmem:[#allocation7 + $0x10b8] sm:$0xff]
    %v860 = vld [vmem:[#allocation7 + $0x10c0] sm:$0xff]
    %v861 = vld [vmem:[#allocation7 + $0x10c8] sm:$0xff]
    %v862 = vld [vmem:[#allocation7 + $0x10d0] sm:$0xff]
    %v863 = vld [vmem:[#allocation7 + $0x10d8] sm:$0xff]
    %v864 = vld [vmem:[#allocation7 + $0x10e0] sm:$0xff]
    %v865 = vld [vmem:[#allocation7 + $0x10e8] sm:$0xff]
    %v866 = vld [vmem:[#allocation7 + $0x10f0] sm:$0xff]
    %v867 = vld [vmem:[#allocation7 + $0x10f8] sm:$0xff]
    %v868 = vld [vmem:[#allocation7 + $0x1100] sm:$0xff]
    %v869 = vld [vmem:[#allocation7 + $0x1108] sm:$0xff]
    %v870 = vld [vmem:[#allocation7 + $0x1110] sm:$0xff]
    %v871 = vld [vmem:[#allocation7 + $0x1118] sm:$0xff]
    %v872 = vld [vmem:[#allocation7 + $0x1120] sm:$0xff]
    %v873 = vld [vmem:[#allocation7 + $0x1128] sm:$0xff]
    %v874 = vld [vmem:[#allocation7 + $0x1130] sm:$0xff]
    %v875 = vld [vmem:[#allocation7 + $0x1138] sm:$0xff]
    %v876 = vld [vmem:[#allocation7 + $0x1140] sm:$0xff]
    %v877 = vld [vmem:[#allocation7 + $0x1148] sm:$0xff]
    %v878 = vld [vmem:[#allocation7 + $0x1150] sm:$0xff]
    %v879 = vld [vmem:[#allocation7 + $0x1158] sm:$0xff]
    %v880 = vld [vmem:[#allocation7 + $0x1160] sm:$0xff]
    %v881 = vld [vmem:[#allocation7 + $0x1168] sm:$0xff]
    %v882 = vld [vmem:[#allocation7 + $0x1170] sm:$0xff]
    %v883 = vld [vmem:[#allocation7 + $0x1178] sm:$0xff]
    %v884 = vld [vmem:[#allocation7 + $0x1180] sm:$0xff]
    %v885 = vld [vmem:[#allocation7 + $0x1188] sm:$0xff]
    %v886 = vld [vmem:[#allocation7 + $0x1190] sm:$0xff]
    %v887 = vld [vmem:[#allocation7 + $0x1198] sm:$0xff]
    %v888 = vld [vmem:[#allocation7 + $0x11a0] sm:$0xff]
    %v889 = vld [vmem:[#allocation7 + $0x11a8] sm:$0xff]
    %v890 = vld [vmem:[#allocation7 + $0x11b0] sm:$0xff]
    %v891 = vld [vmem:[#allocation7 + $0x11b8] sm:$0xff]
    %v892 = vld [vmem:[#allocation7 + $0x11c0] sm:$0xff]
    %v893 = vld [vmem:[#allocation7 + $0x11c8] sm:$0xff]
    %v894 = vld [vmem:[#allocation7 + $0x11d0] sm:$0xff]
    %v895 = vld [vmem:[#allocation7 + $0x11d8] sm:$0xff]
    %v896 = vld [vmem:[#allocation7 + $0x11e0] sm:$0xff]
    %v897 = vld [vmem:[#allocation7 + $0x11e8] sm:$0xff]
    %v898 = vld [vmem:[#allocation7 + $0x11f0] sm:$0xff]
    %v899 = vld [vmem:[#allocation7 + $0x11f8] sm:$0xff]
    %v900 = vld [vmem:[#allocation7 + $0x1200] sm:$0xff]
    %v901 = vld [vmem:[#allocation7 + $0x1208] sm:$0xff]
    %v902 = vld [vmem:[#allocation7 + $0x1210] sm:$0xff]
    %v903 = vld [vmem:[#allocation7 + $0x1218] sm:$0xff]
    %v904 = vld [vmem:[#allocation7 + $0x1220] sm:$0xff]
    %v905 = vld [vmem:[#allocation7 + $0x1228] sm:$0xff]
    %v906 = vld [vmem:[#allocation7 + $0x1230] sm:$0xff]
    %v907 = vld [vmem:[#allocation7 + $0x1238] sm:$0xff]
    %v908 = vld [vmem:[#allocation7 + $0x1240] sm:$0xff]
    %v909 = vld [vmem:[#allocation7 + $0x1248] sm:$0xff]
    %v910 = vld [vmem:[#allocation7 + $0x1250] sm:$0xff]
    %v911 = vld [vmem:[#allocation7 + $0x1258] sm:$0xff]
    %v912 = vld [vmem:[#allocation7 + $0x1260] sm:$0xff]
    %v913 = vld [vmem:[#allocation7 + $0x1268] sm:$0xff]
    %v914 = vld [vmem:[#allocation7 + $0x1270] sm:$0xff]
    %v915 = vld [vmem:[#allocation7 + $0x1278] sm:$0xff]
    %v916 = vld [vmem:[#allocation7 + $0x1280] sm:$0xff]
    %v917 = vld [vmem:[#allocation7 + $0x1288] sm:$0xff]
    %v918 = vld [vmem:[#allocation7 + $0x1290] sm:$0xff]
    %v919 = vld [vmem:[#allocation7 + $0x1298] sm:$0xff]
    %v920 = vld [vmem:[#allocation7 + $0x12a0] sm:$0xff]
    %v921 = vld [vmem:[#allocation7 + $0x12a8] sm:$0xff]
    %v922 = vld [vmem:[#allocation7 + $0x12b0] sm:$0xff]
    %v923 = vld [vmem:[#allocation7 + $0x12b8] sm:$0xff]
    %v924 = vld [vmem:[#allocation7 + $0x12c0] sm:$0xff]
    %v925 = vld [vmem:[#allocation7 + $0x12c8] sm:$0xff]
    %v926 = vld [vmem:[#allocation7 + $0x12d0] sm:$0xff]
    %v927 = vld [vmem:[#allocation7 + $0x12d8] sm:$0xff]
    %v928 = vld [vmem:[#allocation7 + $0x12e0] sm:$0xff]
    %v929 = vld [vmem:[#allocation7 + $0x12e8] sm:$0xff]
    %v930 = vld [vmem:[#allocation7 + $0x12f0] sm:$0xff]
    %v931 = vld [vmem:[#allocation7 + $0x12f8] sm:$0xff]
    %v932 = vld [vmem:[#allocation7 + $0x1300] sm:$0xff]
    %v933 = vld [vmem:[#allocation7 + $0x1308] sm:$0xff]
    %v934 = vld [vmem:[#allocation7 + $0x1310] sm:$0xff]
    %v935 = vld [vmem:[#allocation7 + $0x1318] sm:$0xff]
    %v936 = vld [vmem:[#allocation7 + $0x1320] sm:$0xff]
    %v937 = vld [vmem:[#allocation7 + $0x1328] sm:$0xff]
    %v938 = vld [vmem:[#allocation7 + $0x1330] sm:$0xff]
    %v939 = vld [vmem:[#allocation7 + $0x1338] sm:$0xff]
    %v940 = vld [vmem:[#allocation7 + $0x1340] sm:$0xff]
    %v941 = vld [vmem:[#allocation7 + $0x1348] sm:$0xff]
    %v942 = vld [vmem:[#allocation7 + $0x1350] sm:$0xff]
    %v943 = vld [vmem:[#allocation7 + $0x1358] sm:$0xff]
    %v944 = vld [vmem:[#allocation7 + $0x1360] sm:$0xff]
    %v945 = vld [vmem:[#allocation7 + $0x1368] sm:$0xff]
    %v946 = vld [vmem:[#allocation7 + $0x1370] sm:$0xff]
    %v947 = vld [vmem:[#allocation7 + $0x1378] sm:$0xff]
    %v948 = vld [vmem:[#allocation7 + $0x1380] sm:$0xff]
    %v949 = vld [vmem:[#allocation7 + $0x1388] sm:$0xff]
    %v950 = vld [vmem:[#allocation7 + $0x1390] sm:$0xff]
    %v951 = vld [vmem:[#allocation7 + $0x1398] sm:$0xff]
    %v952 = vld [vmem:[#allocation7 + $0x13a0] sm:$0xff]
    %v953 = vld [vmem:[#allocation7 + $0x13a8] sm:$0xff]
    %v954 = vld [vmem:[#allocation7 + $0x13b0] sm:$0xff]
    %v955 = vld [vmem:[#allocation7 + $0x13b8] sm:$0xff]
    %v956 = vld [vmem:[#allocation7 + $0x13c0] sm:$0xff]
    %v957 = vld [vmem:[#allocation7 + $0x13c8] sm:$0xff]
    %v958 = vld [vmem:[#allocation7 + $0x13d0] sm:$0xff]
    %v959 = vld [vmem:[#allocation7 + $0x13d8] sm:$0xff]
    %v960 = vld [vmem:[#allocation7 + $0x13e0] sm:$0xff]
    %v961 = vld [vmem:[#allocation7 + $0x13e8] sm:$0xff]
    %v962 = vld [vmem:[#allocation7 + $0x13f0] sm:$0xff]
    %v963 = vld [vmem:[#allocation7 + $0x13f8] sm:$0xff]
    %v964 = vld [vmem:[#allocation7 + $0x1400] sm:$0xff]
    %v965 = vld [vmem:[#allocation7 + $0x1408] sm:$0xff]
    %v966 = vld [vmem:[#allocation7 + $0x1410] sm:$0xff]
    %v967 = vld [vmem:[#allocation7 + $0x1418] sm:$0xff]
    %v968 = vld [vmem:[#allocation7 + $0x1420] sm:$0xff]
    %v969 = vld [vmem:[#allocation7 + $0x1428] sm:$0xff]
    %v970 = vld [vmem:[#allocation7 + $0x1430] sm:$0xff]
    %v971 = vld [vmem:[#allocation7 + $0x1438] sm:$0xff]
    %v972 = vld [vmem:[#allocation7 + $0x1440] sm:$0xff]
    %v973 = vld [vmem:[#allocation7 + $0x1448] sm:$0xff]
    %v974 = vld [vmem:[#allocation7 + $0x1450] sm:$0xff]
    %v975 = vld [vmem:[#allocation7 + $0x1458] sm:$0xff]
    %v976 = vld [vmem:[#allocation7 + $0x1460] sm:$0xff]
    %v977 = vld [vmem:[#allocation7 + $0x1468] sm:$0xff]
    %v978 = vld [vmem:[#allocation7 + $0x1470] sm:$0xff]
    %v979 = vld [vmem:[#allocation7 + $0x1478] sm:$0xff]
    %v980 = vld [vmem:[#allocation7 + $0x1480] sm:$0xff]
    %v981 = vld [vmem:[#allocation7 + $0x1488] sm:$0xff]
    %v982 = vld [vmem:[#allocation7 + $0x1490] sm:$0xff]
    %v983 = vld [vmem:[#allocation7 + $0x1498] sm:$0xff]
    %v984 = vld [vmem:[#allocation7 + $0x14a0] sm:$0xff]
    %v985 = vld [vmem:[#allocation7 + $0x14a8] sm:$0xff]
    %v986 = vld [vmem:[#allocation7 + $0x14b0] sm:$0xff]
    %v987 = vld [vmem:[#allocation7 + $0x14b8] sm:$0xff]
    %v988 = vld [vmem:[#allocation7 + $0x14c0] sm:$0xff]
    %v989 = vld [vmem:[#allocation7 + $0x14c8] sm:$0xff]
    %v990 = vld [vmem:[#allocation7 + $0x14d0] sm:$0xff]
    %v991 = vld [vmem:[#allocation7 + $0x14d8] sm:$0xff]
    %v992 = vld [vmem:[#allocation7 + $0x14e0] sm:$0xff]
    %v993 = vld [vmem:[#allocation7 + $0x14e8] sm:$0xff]
    %v994 = vld [vmem:[#allocation7 + $0x14f0] sm:$0xff]
    %v995 = vld [vmem:[#allocation7 + $0x14f8] sm:$0xff]
    %v996 = vld [vmem:[#allocation7 + $0x1500] sm:$0xff]
    %v997 = vld [vmem:[#allocation7 + $0x1508] sm:$0xff]
    %v998 = vld [vmem:[#allocation7 + $0x1510] sm:$0xff]
    %v999 = vld [vmem:[#allocation7 + $0x1518] sm:$0xff]
    %v1000 = vld [vmem:[#allocation7 + $0x1520] sm:$0xff]
    %v1001 = vld [vmem:[#allocation7 + $0x1528] sm:$0xff]
    %v1002 = vld [vmem:[#allocation7 + $0x1530] sm:$0xff]
    %v1003 = vld [vmem:[#allocation7 + $0x1538] sm:$0xff]
    %v1004 = vld [vmem:[#allocation7 + $0x1540] sm:$0xff]
    %v1005 = vld [vmem:[#allocation7 + $0x1548] sm:$0xff]
    %v1006 = vld [vmem:[#allocation7 + $0x1550] sm:$0xff]
    %v1007 = vld [vmem:[#allocation7 + $0x1558] sm:$0xff]
    %v1008 = vld [vmem:[#allocation7 + $0x1560] sm:$0xff]
    %v1009 = vld [vmem:[#allocation7 + $0x1568] sm:$0xff]
    %v1010 = vld [vmem:[#allocation7 + $0x1570] sm:$0xff]
    %v1011 = vld [vmem:[#allocation7 + $0x1578] sm:$0xff]
    %v1012 = vld [vmem:[#allocation7 + $0x1580] sm:$0xff]
    %v1013 = vld [vmem:[#allocation7 + $0x1588] sm:$0xff]
    %v1014 = vld [vmem:[#allocation7 + $0x1590] sm:$0xff]
    %v1015 = vld [vmem:[#allocation7 + $0x1598] sm:$0xff]
    %v1016 = vld [vmem:[#allocation7 + $0x15a0] sm:$0xff]
    %v1017 = vld [vmem:[#allocation7 + $0x15a8] sm:$0xff]
    %v1018 = vld [vmem:[#allocation7 + $0x15b0] sm:$0xff]
    %v1019 = vld [vmem:[#allocation7 + $0x15b8] sm:$0xff]
    %v1020 = vld [vmem:[#allocation7 + $0x15c0] sm:$0xff]
    %v1021 = vld [vmem:[#allocation7 + $0x15c8] sm:$0xff]
    %v1022 = vld [vmem:[#allocation7 + $0x15d0] sm:$0xff]
    %v1023 = vld [vmem:[#allocation7 + $0x15d8] sm:$0xff]
    %v1024 = vld [vmem:[#allocation7 + $0x15e0] sm:$0xff]
    %v1025 = vld [vmem:[#allocation7 + $0x15e8] sm:$0xff]
    %v1026 = vld [vmem:[#allocation7 + $0x15f0] sm:$0xff]
    %v1027 = vld [vmem:[#allocation7 + $0x15f8] sm:$0xff]
    %v1028 = vld [vmem:[#allocation7 + $0x1600] sm:$0xff]
    %v1029 = vld [vmem:[#allocation7 + $0x1608] sm:$0xff]
    %v1030 = vld [vmem:[#allocation7 + $0x1610] sm:$0xff]
    %v1031 = vld [vmem:[#allocation7 + $0x1618] sm:$0xff]
    %v1032 = vld [vmem:[#allocation7 + $0x1620] sm:$0xff]
    %v1033 = vld [vmem:[#allocation7 + $0x1628] sm:$0xff]
    %v1034 = vld [vmem:[#allocation7 + $0x1630] sm:$0xff]
    %v1035 = vld [vmem:[#allocation7 + $0x1638] sm:$0xff]
    %v1036 = vld [vmem:[#allocation7 + $0x1640] sm:$0xff]
    %v1037 = vld [vmem:[#allocation7 + $0x1648] sm:$0xff]
    %v1038 = vld [vmem:[#allocation7 + $0x1650] sm:$0xff]
    %v1039 = vld [vmem:[#allocation7 + $0x1658] sm:$0xff]
    %v1040 = vld [vmem:[#allocation7 + $0x1660] sm:$0xff]
    %v1041 = vld [vmem:[#allocation7 + $0x1668] sm:$0xff]
    %v1042 = vld [vmem:[#allocation7 + $0x1670] sm:$0xff]
    %v1043 = vld [vmem:[#allocation7 + $0x1678] sm:$0xff]
    %v1044 = vld [vmem:[#allocation7 + $0x1680] sm:$0xff]
    %v1045 = vld [vmem:[#allocation7 + $0x1688] sm:$0xff]
    %v1046 = vld [vmem:[#allocation7 + $0x1690] sm:$0xff]
    %v1047 = vld [vmem:[#allocation7 + $0x1698] sm:$0xff]
    %v1048 = vld [vmem:[#allocation7 + $0x16a0] sm:$0xff]
    %v1049 = vld [vmem:[#allocation7 + $0x16a8] sm:$0xff]
    %v1050 = vld [vmem:[#allocation7 + $0x16b0] sm:$0xff]
    %v1051 = vld [vmem:[#allocation7 + $0x16b8] sm:$0xff]
    %v1052 = vld [vmem:[#allocation7 + $0x16c0] sm:$0xff]
    %v1053 = vld [vmem:[#allocation7 + $0x16c8] sm:$0xff]
    %v1054 = vld [vmem:[#allocation7 + $0x16d0] sm:$0xff]
    %v1055 = vld [vmem:[#allocation7 + $0x16d8] sm:$0xff]
    %v1056 = vld [vmem:[#allocation7 + $0x16e0] sm:$0xff]
    %v1057 = vld [vmem:[#allocation7 + $0x16e8] sm:$0xff]
    %v1058 = vld [vmem:[#allocation7 + $0x16f0] sm:$0xff]
    %v1059 = vld [vmem:[#allocation7 + $0x16f8] sm:$0xff]
    %v1060 = vld [vmem:[#allocation7 + $0x1700] sm:$0xff]
    %v1061 = vld [vmem:[#allocation7 + $0x1708] sm:$0xff]
    %v1062 = vld [vmem:[#allocation7 + $0x1710] sm:$0xff]
    %v1063 = vld [vmem:[#allocation7 + $0x1718] sm:$0xff]
    %v1064 = vld [vmem:[#allocation7 + $0x1720] sm:$0xff]
    %v1065 = vld [vmem:[#allocation7 + $0x1728] sm:$0xff]
    %v1066 = vld [vmem:[#allocation7 + $0x1730] sm:$0xff]
    %v1067 = vld [vmem:[#allocation7 + $0x1738] sm:$0xff]
    %v1068 = vld [vmem:[#allocation7 + $0x1740] sm:$0xff]
    %v1069 = vld [vmem:[#allocation7 + $0x1748] sm:$0xff]
    %v1070 = vld [vmem:[#allocation7 + $0x1750] sm:$0xff]
    %v1071 = vld [vmem:[#allocation7 + $0x1758] sm:$0xff]
    %v1072 = vld [vmem:[#allocation7 + $0x1760] sm:$0xff]
    %v1073 = vld [vmem:[#allocation7 + $0x1768] sm:$0xff]
    %v1074 = vld [vmem:[#allocation7 + $0x1770] sm:$0xff]
    %v1075 = vld [vmem:[#allocation7 + $0x1778] sm:$0xff]
    %v1076 = vld [vmem:[#allocation7 + $0x1780] sm:$0xff]
    %v1077 = vld [vmem:[#allocation7 + $0x1788] sm:$0xff]
    %v1078 = vld [vmem:[#allocation7 + $0x1790] sm:$0xff]
    %v1079 = vld [vmem:[#allocation7 + $0x1798] sm:$0xff]
    %v1080 = vld [vmem:[#allocation7 + $0x17a0] sm:$0xff]
    %v1081 = vld [vmem:[#allocation7 + $0x17a8] sm:$0xff]
    %v1082 = vld [vmem:[#allocation7 + $0x17b0] sm:$0xff]
    %v1083 = vld [vmem:[#allocation7 + $0x17b8] sm:$0xff]
    %v1084 = vld [vmem:[#allocation7 + $0x17c0] sm:$0xff]
    %v1085 = vld [vmem:[#allocation7 + $0x17c8] sm:$0xff]
    %v1086 = vld [vmem:[#allocation7 + $0x17d0] sm:$0xff]
    %v1087 = vld [vmem:[#allocation7 + $0x17d8] sm:$0xff]
    %v1088 = vld [vmem:[#allocation7 + $0x17e0] sm:$0xff]
    %v1089 = vld [vmem:[#allocation7 + $0x17e8] sm:$0xff]
    %v1090 = vld [vmem:[#allocation7 + $0x17f0] sm:$0xff]
    %v1091 = vld [vmem:[#allocation7 + $0x17f8] sm:$0xff]
    %v1092 = vld [vmem:[#allocation7 + $0x1800] sm:$0xff]
    %v1093 = vld [vmem:[#allocation7 + $0x1808] sm:$0xff]
    %v1094 = vld [vmem:[#allocation7 + $0x1810] sm:$0xff]
    %v1095 = vld [vmem:[#allocation7 + $0x1818] sm:$0xff]
    %v1096 = vld [vmem:[#allocation7 + $0x1820] sm:$0xff]
    %v1097 = vld [vmem:[#allocation7 + $0x1828] sm:$0xff]
    %v1098 = vld [vmem:[#allocation7 + $0x1830] sm:$0xff]
    %v1099 = vld [vmem:[#allocation7 + $0x1838] sm:$0xff]
    %v1100 = vld [vmem:[#allocation7 + $0x1840] sm:$0xff]
    %v1101 = vld [vmem:[#allocation7 + $0x1848] sm:$0xff]
    %v1102 = vld [vmem:[#allocation7 + $0x1850] sm:$0xff]
    %v1103 = vld [vmem:[#allocation7 + $0x1858] sm:$0xff]
    %v1104 = vld [vmem:[#allocation7 + $0x1860] sm:$0xff]
    %v1105 = vld [vmem:[#allocation7 + $0x1868] sm:$0xff]
    %v1106 = vld [vmem:[#allocation7 + $0x1870] sm:$0xff]
    %v1107 = vld [vmem:[#allocation7 + $0x1878] sm:$0xff]
    %v1108 = vld [vmem:[#allocation7 + $0x1880] sm:$0xff]
    %v1109 = vld [vmem:[#allocation7 + $0x1888] sm:$0xff]
    %v1110 = vld [vmem:[#allocation7 + $0x1890] sm:$0xff]
    %v1111 = vld [vmem:[#allocation7 + $0x1898] sm:$0xff]
    %v1112 = vld [vmem:[#allocation7 + $0x18a0] sm:$0xff]
    %v1113 = vld [vmem:[#allocation7 + $0x18a8] sm:$0xff]
    %v1114 = vld [vmem:[#allocation7 + $0x18b0] sm:$0xff]
    %v1115 = vld [vmem:[#allocation7 + $0x18b8] sm:$0xff]
    %v1116 = vld [vmem:[#allocation7 + $0x18c0] sm:$0xff]
    %v1117 = vld [vmem:[#allocation7 + $0x18c8] sm:$0xff]
    %v1118 = vld [vmem:[#allocation7 + $0x18d0] sm:$0xff]
    %v1119 = vld [vmem:[#allocation7 + $0x18d8] sm:$0xff]
    %v1120 = vld [vmem:[#allocation7 + $0x18e0] sm:$0xff]
    %v1121 = vld [vmem:[#allocation7 + $0x18e8] sm:$0xff]
    %v1122 = vld [vmem:[#allocation7 + $0x18f0] sm:$0xff]
    %v1123 = vld [vmem:[#allocation7 + $0x18f8] sm:$0xff]
    %v1124 = vld [vmem:[#allocation7 + $0x1900] sm:$0xff]
    %v1125 = vld [vmem:[#allocation7 + $0x1908] sm:$0xff]
    %v1126 = vld [vmem:[#allocation7 + $0x1910] sm:$0xff]
    %v1127 = vld [vmem:[#allocation7 + $0x1918] sm:$0xff]
    %v1128 = vld [vmem:[#allocation7 + $0x1920] sm:$0xff]
    %v1129 = vld [vmem:[#allocation7 + $0x1928] sm:$0xff]
    %v1130 = vld [vmem:[#allocation7 + $0x1930] sm:$0xff]
    %v1131 = vld [vmem:[#allocation7 + $0x1938] sm:$0xff]
    %v1132 = vld [vmem:[#allocation7 + $0x1940] sm:$0xff]
    %v1133 = vld [vmem:[#allocation7 + $0x1948] sm:$0xff]
    %v1134 = vld [vmem:[#allocation7 + $0x1950] sm:$0xff]
    %v1135 = vld [vmem:[#allocation7 + $0x1958] sm:$0xff]
    %v1136 = vld [vmem:[#allocation7 + $0x1960] sm:$0xff]
    %v1137 = vld [vmem:[#allocation7 + $0x1968] sm:$0xff]
    %v1138 = vld [vmem:[#allocation7 + $0x1970] sm:$0xff]
    %v1139 = vld [vmem:[#allocation7 + $0x1978] sm:$0xff]
    %v1140 = vld [vmem:[#allocation7 + $0x1980] sm:$0xff]
    %v1141 = vld [vmem:[#allocation7 + $0x1988] sm:$0xff]
    %v1142 = vld [vmem:[#allocation7 + $0x1990] sm:$0xff]
    %v1143 = vld [vmem:[#allocation7 + $0x1998] sm:$0xff]
    %v1144 = vld [vmem:[#allocation7 + $0x19a0] sm:$0xff]
    %v1145 = vld [vmem:[#allocation7 + $0x19a8] sm:$0xff]
    %v1146 = vld [vmem:[#allocation7 + $0x19b0] sm:$0xff]
    %v1147 = vld [vmem:[#allocation7 + $0x19b8] sm:$0xff]
    %v1148 = vld [vmem:[#allocation7 + $0x19c0] sm:$0xff]
    %v1149 = vld [vmem:[#allocation7 + $0x19c8] sm:$0xff]
    %v1150 = vld [vmem:[#allocation7 + $0x19d0] sm:$0xff]
    %v1151 = vld [vmem:[#allocation7 + $0x19d8] sm:$0xff]
    %v1152 = vld [vmem:[#allocation7 + $0x19e0] sm:$0xff]
    %v1153 = vld [vmem:[#allocation7 + $0x19e8] sm:$0xff]
    %v1154 = vld [vmem:[#allocation7 + $0x19f0] sm:$0xff]
    %v1155 = vld [vmem:[#allocation7 + $0x19f8] sm:$0xff]
    %v1156 = vld [vmem:[#allocation7 + $0x1a00] sm:$0xff]
    %v1157 = vld [vmem:[#allocation7 + $0x1a08] sm:$0xff]
    %v1158 = vld [vmem:[#allocation7 + $0x1a10] sm:$0xff]
    %v1159 = vld [vmem:[#allocation7 + $0x1a18] sm:$0xff]
    %v1160 = vld [vmem:[#allocation7 + $0x1a20] sm:$0xff]
    %v1161 = vld [vmem:[#allocation7 + $0x1a28] sm:$0xff]
    %v1162 = vld [vmem:[#allocation7 + $0x1a30] sm:$0xff]
    %v1163 = vld [vmem:[#allocation7 + $0x1a38] sm:$0xff]
    %v1164 = vld [vmem:[#allocation7 + $0x1a40] sm:$0xff]
    %v1165 = vld [vmem:[#allocation7 + $0x1a48] sm:$0xff]
    %v1166 = vld [vmem:[#allocation7 + $0x1a50] sm:$0xff]
    %v1167 = vld [vmem:[#allocation7 + $0x1a58] sm:$0xff]
    %v1168 = vld [vmem:[#allocation7 + $0x1a60] sm:$0xff]
    %v1169 = vld [vmem:[#allocation7 + $0x1a68] sm:$0xff]
    %v1170 = vld [vmem:[#allocation7 + $0x1a70] sm:$0xff]
    %v1171 = vld [vmem:[#allocation7 + $0x1a78] sm:$0xff]
    %v1172 = vld [vmem:[#allocation7 + $0x1a80] sm:$0xff]
    %v1173 = vld [vmem:[#allocation7 + $0x1a88] sm:$0xff]
    %v1174 = vld [vmem:[#allocation7 + $0x1a90] sm:$0xff]
    %v1175 = vld [vmem:[#allocation7 + $0x1a98] sm:$0xff]
    %v1176 = vld [vmem:[#allocation7 + $0x1aa0] sm:$0xff]
    %v1177 = vld [vmem:[#allocation7 + $0x1aa8] sm:$0xff]
    %v1178 = vld [vmem:[#allocation7 + $0x1ab0] sm:$0xff]
    %v1179 = vld [vmem:[#allocation7 + $0x1ab8] sm:$0xff]
    %v1180 = vld [vmem:[#allocation7 + $0x1ac0] sm:$0xff]
    %v1181 = vld [vmem:[#allocation7 + $0x1ac8] sm:$0xff]
    %v1182 = vld [vmem:[#allocation7 + $0x1ad0] sm:$0xff]
    %v1183 = vld [vmem:[#allocation7 + $0x1ad8] sm:$0xff]
    %v1184 = vld [vmem:[#allocation7 + $0x1ae0] sm:$0xff]
    %v1185 = vld [vmem:[#allocation7 + $0x1ae8] sm:$0xff]
    %v1186 = vld [vmem:[#allocation7 + $0x1af0] sm:$0xff]
    %v1187 = vld [vmem:[#allocation7 + $0x1af8] sm:$0xff]
    %v1188 = vld [vmem:[#allocation7 + $0x1b00] sm:$0xff]
    %v1189 = vld [vmem:[#allocation7 + $0x1b08] sm:$0xff]
    %v1190 = vld [vmem:[#allocation7 + $0x1b10] sm:$0xff]
    %v1191 = vld [vmem:[#allocation7 + $0x1b18] sm:$0xff]
    %v1192 = vld [vmem:[#allocation7 + $0x1b20] sm:$0xff]
    %v1193 = vld [vmem:[#allocation7 + $0x1b28] sm:$0xff]
    %v1194 = vld [vmem:[#allocation7 + $0x1b30] sm:$0xff]
    %v1195 = vld [vmem:[#allocation7 + $0x1b38] sm:$0xff]
    %v1196 = vld [vmem:[#allocation7 + $0x1b40] sm:$0xff]
    %v1197 = vld [vmem:[#allocation7 + $0x1b48] sm:$0xff]
    %v1198 = vld [vmem:[#allocation7 + $0x1b50] sm:$0xff]
    %v1199 = vld [vmem:[#allocation7 + $0x1b58] sm:$0xff]
    %v1200 = vld [vmem:[#allocation7 + $0x1b60] sm:$0xff]
    %v1201 = vld [vmem:[#allocation7 + $0x1b68] sm:$0xff]
    %v1202 = vld [vmem:[#allocation7 + $0x1b70] sm:$0xff]
    %v1203 = vld [vmem:[#allocation7 + $0x1b78] sm:$0xff]
    %v1204 = vld [vmem:[#allocation7 + $0x1b80] sm:$0xff]
    %v1205 = vld [vmem:[#allocation7 + $0x1b88] sm:$0xff]
    %v1206 = vld [vmem:[#allocation7 + $0x1b90] sm:$0xff]
    %v1207 = vld [vmem:[#allocation7 + $0x1b98] sm:$0xff]
    %v1208 = vld [vmem:[#allocation7 + $0x1ba0] sm:$0xff]
    %v1209 = vld [vmem:[#allocation7 + $0x1ba8] sm:$0xff]
    %v1210 = vld [vmem:[#allocation7 + $0x1bb0] sm:$0xff]
    %v1211 = vld [vmem:[#allocation7 + $0x1bb8] sm:$0xff]
    %v1212 = vld [vmem:[#allocation7 + $0x1bc0] sm:$0xff]
    %v1213 = vld [vmem:[#allocation7 + $0x1bc8] sm:$0xff]
    %v1214 = vld [vmem:[#allocation7 + $0x1bd0] sm:$0xff]
    %v1215 = vld [vmem:[#allocation7 + $0x1bd8] sm:$0xff]
    %v1216 = vld [vmem:[#allocation7 + $0x1be0] sm:$0xff]
    %v1217 = vld [vmem:[#allocation7 + $0x1be8] sm:$0xff]
    %v1218 = vld [vmem:[#allocation7 + $0x1bf0] sm:$0xff]
    %v1219 = vld [vmem:[#allocation7 + $0x1bf8] sm:$0xff]
    %v1220 = vld [vmem:[#allocation7 + $0x1c00] sm:$0xff]
    %v1221 = vld [vmem:[#allocation7 + $0x1c08] sm:$0xff]
    %v1222 = vld [vmem:[#allocation7 + $0x1c10] sm:$0xff]
    %v1223 = vld [vmem:[#allocation7 + $0x1c18] sm:$0xff]
    %v1224 = vld [vmem:[#allocation7 + $0x1c20] sm:$0xff]
    %v1225 = vld [vmem:[#allocation7 + $0x1c28] sm:$0xff]
    %v1226 = vld [vmem:[#allocation7 + $0x1c30] sm:$0xff]
    %v1227 = vld [vmem:[#allocation7 + $0x1c38] sm:$0xff]
    %v1228 = vld [vmem:[#allocation7 + $0x1c40] sm:$0xff]
    %v1229 = vld [vmem:[#allocation7 + $0x1c48] sm:$0xff]
    %v1230 = vld [vmem:[#allocation7 + $0x1c50] sm:$0xff]
    %v1231 = vld [vmem:[#allocation7 + $0x1c58] sm:$0xff]
    %v1232 = vld [vmem:[#allocation7 + $0x1c60] sm:$0xff]
    %v1233 = vld [vmem:[#allocation7 + $0x1c68] sm:$0xff]
    %v1234 = vld [vmem:[#allocation7 + $0x1c70] sm:$0xff]
    %v1235 = vld [vmem:[#allocation7 + $0x1c78] sm:$0xff]
    %v1236 = vld [vmem:[#allocation7 + $0x1c80] sm:$0xff]
    %v1237 = vld [vmem:[#allocation7 + $0x1c88] sm:$0xff]
    %v1238 = vld [vmem:[#allocation7 + $0x1c90] sm:$0xff]
    %v1239 = vld [vmem:[#allocation7 + $0x1c98] sm:$0xff]
    %v1240 = vld [vmem:[#allocation7 + $0x1ca0] sm:$0xff]
    %v1241 = vld [vmem:[#allocation7 + $0x1ca8] sm:$0xff]
    %v1242 = vld [vmem:[#allocation7 + $0x1cb0] sm:$0xff]
    %v1243 = vld [vmem:[#allocation7 + $0x1cb8] sm:$0xff]
    %v1244 = vld [vmem:[#allocation7 + $0x1cc0] sm:$0xff]
    %v1245 = vld [vmem:[#allocation7 + $0x1cc8] sm:$0xff]
    %v1246 = vld [vmem:[#allocation7 + $0x1cd0] sm:$0xff]
    %v1247 = vld [vmem:[#allocation7 + $0x1cd8] sm:$0xff]
    %v1248 = vld [vmem:[#allocation7 + $0x1ce0] sm:$0xff]
    %v1249 = vld [vmem:[#allocation7 + $0x1ce8] sm:$0xff]
    %v1250 = vld [vmem:[#allocation7 + $0x1cf0] sm:$0xff]
    %v1251 = vld [vmem:[#allocation7 + $0x1cf8] sm:$0xff]
    %v1252 = vld [vmem:[#allocation7 + $0x1d00] sm:$0xff]
    %v1253 = vld [vmem:[#allocation7 + $0x1d08] sm:$0xff]
    %v1254 = vld [vmem:[#allocation7 + $0x1d10] sm:$0xff]
    %v1255 = vld [vmem:[#allocation7 + $0x1d18] sm:$0xff]
    %v1256 = vld [vmem:[#allocation7 + $0x1d20] sm:$0xff]
    %v1257 = vld [vmem:[#allocation7 + $0x1d28] sm:$0xff]
    %v1258 = vld [vmem:[#allocation7 + $0x1d30] sm:$0xff]
    %v1259 = vld [vmem:[#allocation7 + $0x1d38] sm:$0xff]
    %v1260 = vld [vmem:[#allocation7 + $0x1d40] sm:$0xff]
    %v1261 = vld [vmem:[#allocation7 + $0x1d48] sm:$0xff]
    %v1262 = vld [vmem:[#allocation7 + $0x1d50] sm:$0xff]
    %v1263 = vld [vmem:[#allocation7 + $0x1d58] sm:$0xff]
    %v1264 = vld [vmem:[#allocation7 + $0x1d60] sm:$0xff]
    %v1265 = vld [vmem:[#allocation7 + $0x1d68] sm:$0xff]
    %v1266 = vld [vmem:[#allocation7 + $0x1d70] sm:$0xff]
    %v1267 = vld [vmem:[#allocation7 + $0x1d78] sm:$0xff]
    %v1268 = vld [vmem:[#allocation9] sm:$0xf]
    %v1270 = vperm.slane %v1268, 0
    %v1271 = vperm.slane %v1268, 1
    %v1272 = vperm.slane %v1268, 2
    %v1273 = vperm.slane %v1268, 3
    %v2222 = vunpack.c.l.b16 %v324
    %v2223 = vunpack.c.h.b16 %v324
    %v2224 = vunpack.c.l.b16 %v325
    %v2225 = vunpack.c.h.b16 %v325
    %v2226 = vunpack.c.l.b16 %v326
    %v2227 = vunpack.c.h.b16 %v326
    %v2228 = vunpack.c.l.b16 %v327
    %v2229 = vunpack.c.h.b16 %v327
    %v2230 = vunpack.c.l.b16 %v328
    %v2231 = vunpack.c.h.b16 %v328
    %v2232 = vunpack.c.l.b16 %v329
    %v2233 = vunpack.c.h.b16 %v329
    %v2234 = vunpack.c.l.b16 %v330
    %v2235 = vunpack.c.h.b16 %v330
    %v2236 = vunpack.c.l.b16 %v331
    %v2237 = vunpack.c.h.b16 %v331
    %v2238 = vunpack.c.l.b16 %v332
    %v2239 = vunpack.c.h.b16 %v332
    %v2240 = vunpack.c.l.b16 %v333
    %v2241 = vunpack.c.h.b16 %v333
    %v2242 = vunpack.c.l.b16 %v334
    %v2243 = vunpack.c.h.b16 %v334
    %v2244 = vunpack.c.l.b16 %v335
    %v2245 = vunpack.c.h.b16 %v335
    %v2246 = vunpack.c.l.b16 %v336
    %v2247 = vunpack.c.h.b16 %v336
    %v2248 = vunpack.c.l.b16 %v337
    %v2249 = vunpack.c.h.b16 %v337
    %v2250 = vunpack.c.l.b16 %v338
    %v2251 = vunpack.c.h.b16 %v338
    %v2252 = vunpack.c.l.b16 %v339
    %v2253 = vunpack.c.h.b16 %v339
    %v2254 = vunpack.c.l.b16 %v340
    %v2255 = vunpack.c.h.b16 %v340
    %v2256 = vunpack.c.l.b16 %v341
    %v2257 = vunpack.c.h.b16 %v341
    %v2258 = vunpack.c.l.b16 %v342
    %v2259 = vunpack.c.h.b16 %v342
    %v2260 = vunpack.c.l.b16 %v343
    %v2261 = vunpack.c.h.b16 %v343
    %v2262 = vunpack.c.l.b16 %v344
    %v2263 = vunpack.c.h.b16 %v344
    %v2264 = vunpack.c.l.b16 %v345
    %v2265 = vunpack.c.h.b16 %v345
    %v2266 = vunpack.c.l.b16 %v346
    %v2267 = vunpack.c.h.b16 %v346
    %v2268 = vunpack.c.l.b16 %v347
    %v2269 = vunpack.c.h.b16 %v347
    %v2270 = vunpack.c.l.b16 %v348
    %v2271 = vunpack.c.h.b16 %v348
    %v2272 = vunpack.c.l.b16 %v349
    %v2273 = vunpack.c.h.b16 %v349
    %v2274 = vunpack.c.l.b16 %v350
    %v2275 = vunpack.c.h.b16 %v350
    %v2276 = vunpack.c.l.b16 %v351
    %v2277 = vunpack.c.h.b16 %v351
    %v2278 = vunpack.c.l.b16 %v352
    %v2279 = vunpack.c.h.b16 %v352
    %v2280 = vunpack.c.l.b16 %v353
    %v2281 = vunpack.c.h.b16 %v353
    %v2282 = vunpack.c.l.b16 %v354
    %v2283 = vunpack.c.h.b16 %v354
    %v2284 = vunpack.c.l.b16 %v355
    %v2285 = vunpack.c.h.b16 %v355
    %v2286 = vunpack.c.l.b16 %v356
    %v2287 = vunpack.c.h.b16 %v356
    %v2288 = vunpack.c.l.b16 %v357
    %v2289 = vunpack.c.h.b16 %v357
    %v2290 = vunpack.c.l.b16 %v358
    %v2291 = vunpack.c.h.b16 %v358
    %v2292 = vunpack.c.l.b16 %v359
    %v2293 = vunpack.c.h.b16 %v359
    %v2294 = vunpack.c.l.b16 %v360
    %v2295 = vunpack.c.h.b16 %v360
    %v2296 = vunpack.c.l.b16 %v361
    %v2297 = vunpack.c.h.b16 %v361
    %v2298 = vunpack.c.l.b16 %v362
    %v2299 = vunpack.c.h.b16 %v362
    %v2300 = vunpack.c.l.b16 %v363
    %v2301 = vunpack.c.h.b16 %v363
    %v2302 = vunpack.c.l.b16 %v364
    %v2303 = vunpack.c.h.b16 %v364
    %v2304 = vunpack.c.l.b16 %v365
    %v2305 = vunpack.c.h.b16 %v365
    %v2306 = vunpack.c.l.b16 %v366
    %v2307 = vunpack.c.h.b16 %v366
    %v2308 = vunpack.c.l.b16 %v367
    %v2309 = vunpack.c.h.b16 %v367
    %v2310 = vunpack.c.l.b16 %v368
    %v2311 = vunpack.c.h.b16 %v368
    %v2312 = vunpack.c.l.b16 %v369
    %v2313 = vunpack.c.h.b16 %v369
    %v2314 = vunpack.c.l.b16 %v370
    %v2315 = vunpack.c.h.b16 %v370
    %v2316 = vunpack.c.l.b16 %v371
    %v2317 = vunpack.c.h.b16 %v371
    %v2318 = vunpack.c.l.b16 %v372
    %v2319 = vunpack.c.h.b16 %v372
    %v2320 = vunpack.c.l.b16 %v373
    %v2321 = vunpack.c.h.b16 %v373
    %v2322 = vunpack.c.l.b16 %v374
    %v2323 = vunpack.c.h.b16 %v374
    %v2324 = vunpack.c.l.b16 %v375
    %v2325 = vunpack.c.h.b16 %v375
    %v2326 = vunpack.c.l.b16 %v376
    %v2327 = vunpack.c.h.b16 %v376
    %v2328 = vunpack.c.l.b16 %v377
    %v2329 = vunpack.c.h.b16 %v377
    %v2330 = vunpack.c.l.b16 %v378
    %v2331 = vunpack.c.h.b16 %v378
    %v2332 = vunpack.c.l.b16 %v379
    %v2333 = vunpack.c.h.b16 %v379
    %v2334 = vunpack.c.l.b16 %v380
    %v2335 = vunpack.c.h.b16 %v380
    %v2336 = vunpack.c.l.b16 %v381
    %v2337 = vunpack.c.h.b16 %v381
    %v2338 = vunpack.c.l.b16 %v382
    %v2339 = vunpack.c.h.b16 %v382
    %v2340 = vunpack.c.l.b16 %v383
    %v2341 = vunpack.c.h.b16 %v383
    %v2342 = vunpack.c.l.b16 %v384
    %v2343 = vunpack.c.h.b16 %v384
    %v2344 = vunpack.c.l.b16 %v385
    %v2345 = vunpack.c.h.b16 %v385
    %v2346 = vunpack.c.l.b16 %v386
    %v2347 = vunpack.c.h.b16 %v386
    %v2348 = vunpack.c.l.b16 %v387
    %v2349 = vunpack.c.h.b16 %v387
    %v2350 = vunpack.c.l.b16 %v388
    %v2351 = vunpack.c.h.b16 %v388
    %v2352 = vunpack.c.l.b16 %v389
    %v2353 = vunpack.c.h.b16 %v389
    %v2354 = vunpack.c.l.b16 %v390
    %v2355 = vunpack.c.h.b16 %v390
    %v2356 = vunpack.c.l.b16 %v391
    %v2357 = vunpack.c.h.b16 %v391
    %v2358 = vunpack.c.l.b16 %v392
    %v2359 = vunpack.c.h.b16 %v392
    %v2360 = vunpack.c.l.b16 %v393
    %v2361 = vunpack.c.h.b16 %v393
    %v2362 = vunpack.c.l.b16 %v394
    %v2363 = vunpack.c.h.b16 %v394
    %v2364 = vunpack.c.l.b16 %v395
    %v2365 = vunpack.c.h.b16 %v395
    %v2366 = vunpack.c.l.b16 %v396
    %v2367 = vunpack.c.h.b16 %v396
    %v2368 = vunpack.c.l.b16 %v397
    %v2369 = vunpack.c.h.b16 %v397
    %v2370 = vunpack.c.l.b16 %v398
    %v2371 = vunpack.c.h.b16 %v398
    %v2372 = vunpack.c.l.b16 %v399
    %v2373 = vunpack.c.h.b16 %v399
    %v2374 = vunpack.c.l.b16 %v400
    %v2375 = vunpack.c.h.b16 %v400
    %v2376 = vunpack.c.l.b16 %v401
    %v2377 = vunpack.c.h.b16 %v401
    %v2378 = vunpack.c.l.b16 %v402
    %v2379 = vunpack.c.h.b16 %v402
    %v2380 = vunpack.c.l.b16 %v403
    %v2381 = vunpack.c.h.b16 %v403
    %v2382 = vunpack.c.l.b16 %v404
    %v2383 = vunpack.c.h.b16 %v404
    %v2384 = vunpack.c.l.b16 %v405
    %v2385 = vunpack.c.h.b16 %v405
    %v2386 = vunpack.c.l.b16 %v406
    %v2387 = vunpack.c.h.b16 %v406
    %v2388 = vunpack.c.l.b16 %v407
    %v2389 = vunpack.c.h.b16 %v407
    %v2390 = vunpack.c.l.b16 %v408
    %v2391 = vunpack.c.h.b16 %v408
    %v2392 = vunpack.c.l.b16 %v409
    %v2393 = vunpack.c.h.b16 %v409
    %v2394 = vunpack.c.l.b16 %v410
    %v2395 = vunpack.c.h.b16 %v410
    %v2396 = vunpack.c.l.b16 %v411
    %v2397 = vunpack.c.h.b16 %v411
    %v2398 = vunpack.c.l.b16 %v412
    %v2399 = vunpack.c.h.b16 %v412
    %v2400 = vunpack.c.l.b16 %v413
    %v2401 = vunpack.c.h.b16 %v413
    %v2402 = vunpack.c.l.b16 %v414
    %v2403 = vunpack.c.h.b16 %v414
    %v2404 = vunpack.c.l.b16 %v415
    %v2405 = vunpack.c.h.b16 %v415
    %v2406 = vunpack.c.l.b16 %v416
    %v2407 = vunpack.c.h.b16 %v416
    %v2408 = vunpack.c.l.b16 %v417
    %v2409 = vunpack.c.h.b16 %v417
    %v2410 = vunpack.c.l.b16 %v418
    %v2411 = vunpack.c.h.b16 %v418
    %v2412 = vunpack.c.l.b16 %v419
    %v2413 = vunpack.c.h.b16 %v419
    %v2414 = vunpack.c.l.b16 %v420
    %v2415 = vunpack.c.h.b16 %v420
    %v2416 = vunpack.c.l.b16 %v421
    %v2417 = vunpack.c.h.b16 %v421
    %v2418 = vunpack.c.l.b16 %v422
    %v2419 = vunpack.c.h.b16 %v422
    %v2420 = vunpack.c.l.b16 %v423
    %v2421 = vunpack.c.h.b16 %v423
    %v2422 = vunpack.c.l.b16 %v424
    %v2423 = vunpack.c.h.b16 %v424
    %v2424 = vunpack.c.l.b16 %v425
    %v2425 = vunpack.c.h.b16 %v425
    %v2426 = vunpack.c.l.b16 %v426
    %v2427 = vunpack.c.h.b16 %v426
    %v2428 = vunpack.c.l.b16 %v427
    %v2429 = vunpack.c.h.b16 %v427
    %v2430 = vunpack.c.l.b16 %v428
    %v2431 = vunpack.c.h.b16 %v428
    %v2432 = vunpack.c.l.b16 %v429
    %v2433 = vunpack.c.h.b16 %v429
    %v2434 = vunpack.c.l.b16 %v430
    %v2435 = vunpack.c.h.b16 %v430
    %v2436 = vunpack.c.l.b16 %v431
    %v2437 = vunpack.c.h.b16 %v431
    %v2438 = vunpack.c.l.b16 %v432
    %v2439 = vunpack.c.h.b16 %v432
    %v2440 = vunpack.c.l.b16 %v433
    %v2441 = vunpack.c.h.b16 %v433
    %v2442 = vunpack.c.l.b16 %v434
    %v2443 = vunpack.c.h.b16 %v434
    %v2444 = vunpack.c.l.b16 %v435
    %v2445 = vunpack.c.h.b16 %v435
    %v2446 = vunpack.c.l.b16 %v436
    %v2447 = vunpack.c.h.b16 %v436
    %v2448 = vunpack.c.l.b16 %v437
    %v2449 = vunpack.c.h.b16 %v437
    %v2450 = vunpack.c.l.b16 %v438
    %v2451 = vunpack.c.h.b16 %v438
    %v2452 = vunpack.c.l.b16 %v439
    %v2453 = vunpack.c.h.b16 %v439
    %v2454 = vunpack.c.l.b16 %v440
    %v2455 = vunpack.c.h.b16 %v440
    %v2456 = vunpack.c.l.b16 %v441
    %v2457 = vunpack.c.h.b16 %v441
    %v2458 = vunpack.c.l.b16 %v442
    %v2459 = vunpack.c.h.b16 %v442
    %v2460 = vunpack.c.l.b16 %v443
    %v2461 = vunpack.c.h.b16 %v443
    %v2462 = vunpack.c.l.b16 %v444
    %v2463 = vunpack.c.h.b16 %v444
    %v2464 = vunpack.c.l.b16 %v445
    %v2465 = vunpack.c.h.b16 %v445
    %v2466 = vunpack.c.l.b16 %v446
    %v2467 = vunpack.c.h.b16 %v446
    %v2468 = vunpack.c.l.b16 %v447
    %v2469 = vunpack.c.h.b16 %v447
    %v2470 = vunpack.c.l.b16 %v448
    %v2471 = vunpack.c.h.b16 %v448
    %v2472 = vunpack.c.l.b16 %v449
    %v2473 = vunpack.c.h.b16 %v449
    %v2474 = vunpack.c.l.b16 %v450
    %v2475 = vunpack.c.h.b16 %v450
    %v2476 = vunpack.c.l.b16 %v451
    %v2477 = vunpack.c.h.b16 %v451
    %v2478 = vunpack.c.l.b16 %v452
    %v2479 = vunpack.c.h.b16 %v452
    %v2480 = vunpack.c.l.b16 %v453
    %v2481 = vunpack.c.h.b16 %v453
    %v2482 = vunpack.c.l.b16 %v454
    %v2483 = vunpack.c.h.b16 %v454
    %v2484 = vunpack.c.l.b16 %v455
    %v2485 = vunpack.c.h.b16 %v455
    %v2486 = vunpack.c.l.b16 %v456
    %v2487 = vunpack.c.h.b16 %v456
    %v2488 = vunpack.c.l.b16 %v457
    %v2489 = vunpack.c.h.b16 %v457
    %v2490 = vunpack.c.l.b16 %v458
    %v2491 = vunpack.c.h.b16 %v458
    %v2492 = vunpack.c.l.b16 %v459
    %v2493 = vunpack.c.h.b16 %v459
    %v2494 = vunpack.c.l.b16 %v460
    %v2495 = vunpack.c.h.b16 %v460
    %v2496 = vunpack.c.l.b16 %v461
    %v2497 = vunpack.c.h.b16 %v461
    %v2498 = vunpack.c.l.b16 %v462
    %v2499 = vunpack.c.h.b16 %v462
    %v2500 = vunpack.c.l.b16 %v463
    %v2501 = vunpack.c.h.b16 %v463
    %v2502 = vunpack.c.l.b16 %v464
    %v2503 = vunpack.c.h.b16 %v464
    %v2504 = vunpack.c.l.b16 %v465
    %v2505 = vunpack.c.h.b16 %v465
    %v2506 = vunpack.c.l.b16 %v466
    %v2507 = vunpack.c.h.b16 %v466
    %v2508 = vunpack.c.l.b16 %v467
    %v2509 = vunpack.c.h.b16 %v467
    %v2510 = vunpack.c.l.b16 %v468
    %v2511 = vunpack.c.h.b16 %v468
    %v2512 = vunpack.c.l.b16 %v469
    %v2513 = vunpack.c.h.b16 %v469
    %v2514 = vunpack.c.l.b16 %v470
    %v2515 = vunpack.c.h.b16 %v470
    %v2516 = vunpack.c.l.b16 %v471
    %v2517 = vunpack.c.h.b16 %v471
    %v2518 = vunpack.c.l.b16 %v472
    %v2519 = vunpack.c.h.b16 %v472
    %v2520 = vunpack.c.l.b16 %v473
    %v2521 = vunpack.c.h.b16 %v473
    %v2522 = vunpack.c.l.b16 %v474
    %v2523 = vunpack.c.h.b16 %v474
    %v2524 = vunpack.c.l.b16 %v475
    %v2525 = vunpack.c.h.b16 %v475
    %v2526 = vunpack.c.l.b16 %v476
    %v2527 = vunpack.c.h.b16 %v476
    %v2528 = vunpack.c.l.b16 %v477
    %v2529 = vunpack.c.h.b16 %v477
    %v2530 = vunpack.c.l.b16 %v478
    %v2531 = vunpack.c.h.b16 %v478
    %v2532 = vunpack.c.l.b16 %v479
    %v2533 = vunpack.c.h.b16 %v479
    %v2534 = vunpack.c.l.b16 %v480
    %v2535 = vunpack.c.h.b16 %v480
    %v2536 = vunpack.c.l.b16 %v481
    %v2537 = vunpack.c.h.b16 %v481
    %v2538 = vunpack.c.l.b16 %v482
    %v2539 = vunpack.c.h.b16 %v482
    %v2540 = vunpack.c.l.b16 %v483
    %v2541 = vunpack.c.h.b16 %v483
    %v2542 = vunpack.c.l.b16 %v484
    %v2543 = vunpack.c.h.b16 %v484
    %v2544 = vunpack.c.l.b16 %v485
    %v2545 = vunpack.c.h.b16 %v485
    %v2546 = vunpack.c.l.b16 %v486
    %v2547 = vunpack.c.h.b16 %v486
    %v2548 = vunpack.c.l.b16 %v487
    %v2549 = vunpack.c.h.b16 %v487
    %v2550 = vunpack.c.l.b16 %v488
    %v2551 = vunpack.c.h.b16 %v488
    %v2552 = vunpack.c.l.b16 %v489
    %v2553 = vunpack.c.h.b16 %v489
    %v2554 = vunpack.c.l.b16 %v490
    %v2555 = vunpack.c.h.b16 %v490
    %v2556 = vunpack.c.l.b16 %v491
    %v2557 = vunpack.c.h.b16 %v491
    %v2558 = vunpack.c.l.b16 %v492
    %v2559 = vunpack.c.h.b16 %v492
    %v2560 = vunpack.c.l.b16 %v493
    %v2561 = vunpack.c.h.b16 %v493
    %v2562 = vunpack.c.l.b16 %v494
    %v2563 = vunpack.c.h.b16 %v494
    %v2564 = vunpack.c.l.b16 %v495
    %v2565 = vunpack.c.h.b16 %v495
    %v2566 = vunpack.c.l.b16 %v496
    %v2567 = vunpack.c.h.b16 %v496
    %v2568 = vunpack.c.l.b16 %v497
    %v2569 = vunpack.c.h.b16 %v497
    %v2570 = vunpack.c.l.b16 %v498
    %v2571 = vunpack.c.h.b16 %v498
    %v2572 = vunpack.c.l.b16 %v499
    %v2573 = vunpack.c.h.b16 %v499
    %v2574 = vunpack.c.l.b16 %v500
    %v2575 = vunpack.c.h.b16 %v500
    %v2576 = vunpack.c.l.b16 %v501
    %v2577 = vunpack.c.h.b16 %v501
    %v2578 = vunpack.c.l.b16 %v502
    %v2579 = vunpack.c.h.b16 %v502
    %v2580 = vunpack.c.l.b16 %v503
    %v2581 = vunpack.c.h.b16 %v503
    %v2582 = vunpack.c.l.b16 %v504
    %v2583 = vunpack.c.h.b16 %v504
    %v2584 = vunpack.c.l.b16 %v505
    %v2585 = vunpack.c.h.b16 %v505
    %v2586 = vunpack.c.l.b16 %v506
    %v2587 = vunpack.c.h.b16 %v506
    %v2588 = vunpack.c.l.b16 %v507
    %v2589 = vunpack.c.h.b16 %v507
    %v2590 = vunpack.c.l.b16 %v508
    %v2591 = vunpack.c.h.b16 %v508
    %v2592 = vunpack.c.l.b16 %v509
    %v2593 = vunpack.c.h.b16 %v509
    %v2594 = vunpack.c.l.b16 %v510
    %v2595 = vunpack.c.h.b16 %v510
    %v2596 = vunpack.c.l.b16 %v511
    %v2597 = vunpack.c.h.b16 %v511
    %v2598 = vunpack.c.l.b16 %v512
    %v2599 = vunpack.c.h.b16 %v512
    %v2600 = vunpack.c.l.b16 %v513
    %v2601 = vunpack.c.h.b16 %v513
    %v2602 = vunpack.c.l.b16 %v514
    %v2603 = vunpack.c.h.b16 %v514
    %v2604 = vunpack.c.l.b16 %v515
    %v2605 = vunpack.c.h.b16 %v515
    %v2606 = vunpack.c.l.b16 %v516
    %v2607 = vunpack.c.h.b16 %v516
    %v2608 = vunpack.c.l.b16 %v517
    %v2609 = vunpack.c.h.b16 %v517
    %v2610 = vunpack.c.l.b16 %v518
    %v2611 = vunpack.c.h.b16 %v518
    %v2612 = vunpack.c.l.b16 %v519
    %v2613 = vunpack.c.h.b16 %v519
    %v2614 = vunpack.c.l.b16 %v520
    %v2615 = vunpack.c.h.b16 %v520
    %v2616 = vunpack.c.l.b16 %v521
    %v2617 = vunpack.c.h.b16 %v521
    %v2618 = vunpack.c.l.b16 %v522
    %v2619 = vunpack.c.h.b16 %v522
    %v2620 = vunpack.c.l.b16 %v523
    %v2621 = vunpack.c.h.b16 %v523
    %v2622 = vunpack.c.l.b16 %v524
    %v2623 = vunpack.c.h.b16 %v524
    %v2624 = vunpack.c.l.b16 %v525
    %v2625 = vunpack.c.h.b16 %v525
    %v2626 = vunpack.c.l.b16 %v526
    %v2627 = vunpack.c.h.b16 %v526
    %v2628 = vunpack.c.l.b16 %v527
    %v2629 = vunpack.c.h.b16 %v527
    %v2630 = vunpack.c.l.b16 %v528
    %v2631 = vunpack.c.h.b16 %v528
    %v2632 = vunpack.c.l.b16 %v529
    %v2633 = vunpack.c.h.b16 %v529
    %v2634 = vunpack.c.l.b16 %v530
    %v2635 = vunpack.c.h.b16 %v530
    %v2636 = vunpack.c.l.b16 %v531
    %v2637 = vunpack.c.h.b16 %v531
    %v2638 = vunpack.c.l.b16 %v532
    %v2639 = vunpack.c.h.b16 %v532
    %v2640 = vunpack.c.l.b16 %v533
    %v2641 = vunpack.c.h.b16 %v533
    %v2642 = vunpack.c.l.b16 %v534
    %v2643 = vunpack.c.h.b16 %v534
    %v2644 = vunpack.c.l.b16 %v535
    %v2645 = vunpack.c.h.b16 %v535
    %v2646 = vunpack.c.l.b16 %v536
    %v2647 = vunpack.c.h.b16 %v536
    %v2648 = vunpack.c.l.b16 %v537
    %v2649 = vunpack.c.h.b16 %v537
    %v2650 = vunpack.c.l.b16 %v538
    %v2651 = vunpack.c.h.b16 %v538
    %v2652 = vunpack.c.l.b16 %v539
    %v2653 = vunpack.c.h.b16 %v539
    %v2654 = vunpack.c.l.b16 %v540
    %v2655 = vunpack.c.h.b16 %v540
    %v2656 = vunpack.c.l.b16 %v541
    %v2657 = vunpack.c.h.b16 %v541
    %v2658 = vunpack.c.l.b16 %v542
    %v2659 = vunpack.c.h.b16 %v542
    %v2660 = vunpack.c.l.b16 %v543
    %v2661 = vunpack.c.h.b16 %v543
    %v2662 = vunpack.c.l.b16 %v544
    %v2663 = vunpack.c.h.b16 %v544
    %v2664 = vunpack.c.l.b16 %v545
    %v2665 = vunpack.c.h.b16 %v545
    %v2666 = vunpack.c.l.b16 %v546
    %v2667 = vunpack.c.h.b16 %v546
    %v2668 = vunpack.c.l.b16 %v547
    %v2669 = vunpack.c.h.b16 %v547
    %v2670 = vunpack.c.l.b16 %v548
    %v2671 = vunpack.c.h.b16 %v548
    %v2672 = vunpack.c.l.b16 %v549
    %v2673 = vunpack.c.h.b16 %v549
    %v2674 = vunpack.c.l.b16 %v550
    %v2675 = vunpack.c.h.b16 %v550
    %v2676 = vunpack.c.l.b16 %v551
    %v2677 = vunpack.c.h.b16 %v551
    %v2678 = vunpack.c.l.b16 %v552
    %v2679 = vunpack.c.h.b16 %v552
    %v2680 = vunpack.c.l.b16 %v553
    %v2681 = vunpack.c.h.b16 %v553
    %v2682 = vunpack.c.l.b16 %v554
    %v2683 = vunpack.c.h.b16 %v554
    %v2684 = vunpack.c.l.b16 %v555
    %v2685 = vunpack.c.h.b16 %v555
    %v2686 = vunpack.c.l.b16 %v556
    %v2687 = vunpack.c.h.b16 %v556
    %v2688 = vunpack.c.l.b16 %v557
    %v2689 = vunpack.c.h.b16 %v557
    %v2690 = vunpack.c.l.b16 %v558
    %v2691 = vunpack.c.h.b16 %v558
    %v2692 = vunpack.c.l.b16 %v559
    %v2693 = vunpack.c.h.b16 %v559
    %v2694 = vunpack.c.l.b16 %v560
    %v2695 = vunpack.c.h.b16 %v560
    %v2696 = vunpack.c.l.b16 %v561
    %v2697 = vunpack.c.h.b16 %v561
    %v2698 = vunpack.c.l.b16 %v562
    %v2699 = vunpack.c.h.b16 %v562
    %v2700 = vunpack.c.l.b16 %v563
    %v2701 = vunpack.c.h.b16 %v563
    %v2702 = vunpack.c.l.b16 %v564
    %v2703 = vunpack.c.h.b16 %v564
    %v2704 = vunpack.c.l.b16 %v565
    %v2705 = vunpack.c.h.b16 %v565
    %v2706 = vunpack.c.l.b16 %v566
    %v2707 = vunpack.c.h.b16 %v566
    %v2708 = vunpack.c.l.b16 %v567
    %v2709 = vunpack.c.h.b16 %v567
    %v2710 = vunpack.c.l.b16 %v568
    %v2711 = vunpack.c.h.b16 %v568
    %v2712 = vunpack.c.l.b16 %v569
    %v2713 = vunpack.c.h.b16 %v569
    %v2714 = vunpack.c.l.b16 %v570
    %v2715 = vunpack.c.h.b16 %v570
    %v2716 = vunpack.c.l.b16 %v571
    %v2717 = vunpack.c.h.b16 %v571
    %v2718 = vunpack.c.l.b16 %v572
    %v2719 = vunpack.c.h.b16 %v572
    %v2720 = vunpack.c.l.b16 %v573
    %v2721 = vunpack.c.h.b16 %v573
    %v2722 = vunpack.c.l.b16 %v574
    %v2723 = vunpack.c.h.b16 %v574
    %v2724 = vunpack.c.l.b16 %v575
    %v2725 = vunpack.c.h.b16 %v575
    %v2726 = vunpack.c.l.b16 %v576
    %v2727 = vunpack.c.h.b16 %v576
    %v2728 = vunpack.c.l.b16 %v577
    %v2729 = vunpack.c.h.b16 %v577
    %v2730 = vunpack.c.l.b16 %v578
    %v2731 = vunpack.c.h.b16 %v578
    %v2732 = vunpack.c.l.b16 %v579
    %v2733 = vunpack.c.h.b16 %v579
    %v2734 = vunpack.c.l.b16 %v580
    %v2735 = vunpack.c.h.b16 %v580
    %v2736 = vunpack.c.l.b16 %v581
    %v2737 = vunpack.c.h.b16 %v581
    %v2738 = vunpack.c.l.b16 %v582
    %v2739 = vunpack.c.h.b16 %v582
    %v2740 = vunpack.c.l.b16 %v583
    %v2741 = vunpack.c.h.b16 %v583
    %v2742 = vunpack.c.l.b16 %v584
    %v2743 = vunpack.c.h.b16 %v584
    %v2744 = vunpack.c.l.b16 %v585
    %v2745 = vunpack.c.h.b16 %v585
    %v2746 = vunpack.c.l.b16 %v586
    %v2747 = vunpack.c.h.b16 %v586
    %v2748 = vunpack.c.l.b16 %v587
    %v2749 = vunpack.c.h.b16 %v587
    %v2750 = vunpack.c.l.b16 %v588
    %v2751 = vunpack.c.h.b16 %v588
    %v2752 = vunpack.c.l.b16 %v589
    %v2753 = vunpack.c.h.b16 %v589
    %v2754 = vunpack.c.l.b16 %v590
    %v2755 = vunpack.c.h.b16 %v590
    %v2756 = vunpack.c.l.b16 %v591
    %v2757 = vunpack.c.h.b16 %v591
    %v2758 = vunpack.c.l.b16 %v592
    %v2759 = vunpack.c.h.b16 %v592
    %v2760 = vunpack.c.l.b16 %v593
    %v2761 = vunpack.c.h.b16 %v593
    %v2762 = vunpack.c.l.b16 %v594
    %v2763 = vunpack.c.h.b16 %v594
    %v2764 = vunpack.c.l.b16 %v595
    %v2765 = vunpack.c.h.b16 %v595
    %v2766 = vunpack.c.l.b16 %v596
    %v2767 = vunpack.c.h.b16 %v596
    %v2768 = vunpack.c.l.b16 %v597
    %v2769 = vunpack.c.h.b16 %v597
    %v2770 = vunpack.c.l.b16 %v598
    %v2771 = vunpack.c.h.b16 %v598
    %v2772 = vunpack.c.l.b16 %v599
    %v2773 = vunpack.c.h.b16 %v599
    %v2774 = vunpack.c.l.b16 %v600
    %v2775 = vunpack.c.h.b16 %v600
    %v2776 = vunpack.c.l.b16 %v601
    %v2777 = vunpack.c.h.b16 %v601
    %v2778 = vunpack.c.l.b16 %v602
    %v2779 = vunpack.c.h.b16 %v602
    %v2780 = vunpack.c.l.b16 %v603
    %v2781 = vunpack.c.h.b16 %v603
    %v2782 = vunpack.c.l.b16 %v604
    %v2783 = vunpack.c.h.b16 %v604
    %v2784 = vunpack.c.l.b16 %v605
    %v2785 = vunpack.c.h.b16 %v605
    %v2786 = vunpack.c.l.b16 %v606
    %v2787 = vunpack.c.h.b16 %v606
    %v2788 = vunpack.c.l.b16 %v607
    %v2789 = vunpack.c.h.b16 %v607
    %v2790 = vunpack.c.l.b16 %v608
    %v2791 = vunpack.c.h.b16 %v608
    %v2792 = vunpack.c.l.b16 %v609
    %v2793 = vunpack.c.h.b16 %v609
    %v2794 = vunpack.c.l.b16 %v610
    %v2795 = vunpack.c.h.b16 %v610
    %v2796 = vunpack.c.l.b16 %v611
    %v2797 = vunpack.c.h.b16 %v611
    %v2798 = vunpack.c.l.b16 %v612
    %v2799 = vunpack.c.h.b16 %v612
    %v2800 = vunpack.c.l.b16 %v613
    %v2801 = vunpack.c.h.b16 %v613
    %v2802 = vunpack.c.l.b16 %v614
    %v2803 = vunpack.c.h.b16 %v614
    %v2804 = vunpack.c.l.b16 %v615
    %v2805 = vunpack.c.h.b16 %v615
    %v2806 = vunpack.c.l.b16 %v616
    %v2807 = vunpack.c.h.b16 %v616
    %v2808 = vunpack.c.l.b16 %v617
    %v2809 = vunpack.c.h.b16 %v617
    %v2810 = vunpack.c.l.b16 %v618
    %v2811 = vunpack.c.h.b16 %v618
    %v2812 = vunpack.c.l.b16 %v619
    %v2813 = vunpack.c.h.b16 %v619
    %v2814 = vunpack.c.l.b16 %v620
    %v2815 = vunpack.c.h.b16 %v620
    %v2816 = vunpack.c.l.b16 %v621
    %v2817 = vunpack.c.h.b16 %v621
    %v2818 = vunpack.c.l.b16 %v622
    %v2819 = vunpack.c.h.b16 %v622
    %v2820 = vunpack.c.l.b16 %v623
    %v2821 = vunpack.c.h.b16 %v623
    %v2822 = vunpack.c.l.b16 %v624
    %v2823 = vunpack.c.h.b16 %v624
    %v2824 = vunpack.c.l.b16 %v625
    %v2825 = vunpack.c.h.b16 %v625
    %v2826 = vunpack.c.l.b16 %v626
    %v2827 = vunpack.c.h.b16 %v626
    %v2828 = vunpack.c.l.b16 %v627
    %v2829 = vunpack.c.h.b16 %v627
    %v2830 = vunpack.c.l.b16 %v628
    %v2831 = vunpack.c.h.b16 %v628
    %v2832 = vunpack.c.l.b16 %v629
    %v2833 = vunpack.c.h.b16 %v629
    %v2834 = vunpack.c.l.b16 %v630
    %v2835 = vunpack.c.h.b16 %v630
    %v2836 = vunpack.c.l.b16 %v631
    %v2837 = vunpack.c.h.b16 %v631
    %v2838 = vunpack.c.l.b16 %v632
    %v2839 = vunpack.c.h.b16 %v632
    %v2840 = vunpack.c.l.b16 %v633
    %v2841 = vunpack.c.h.b16 %v633
    %v2842 = vunpack.c.l.b16 %v634
    %v2843 = vunpack.c.h.b16 %v634
    %v2844 = vunpack.c.l.b16 %v635
    %v2845 = vunpack.c.h.b16 %v635
    %v2846 = vunpack.c.l.b16 %v636
    %v2847 = vunpack.c.h.b16 %v636
    %v2848 = vunpack.c.l.b16 %v637
    %v2849 = vunpack.c.h.b16 %v637
    %v2850 = vunpack.c.l.b16 %v638
    %v2851 = vunpack.c.h.b16 %v638
    %v2852 = vunpack.c.l.b16 %v639
    %v2853 = vunpack.c.h.b16 %v639
    %v2854 = vunpack.c.l.b16 %v640
    %v2855 = vunpack.c.h.b16 %v640
    %v2856 = vunpack.c.l.b16 %v641
    %v2857 = vunpack.c.h.b16 %v641
    %v2858 = vunpack.c.l.b16 %v642
    %v2859 = vunpack.c.h.b16 %v642
    %v2860 = vunpack.c.l.b16 %v643
    %v2861 = vunpack.c.h.b16 %v643
    %v2862 = vunpack.c.l.b16 %v644
    %v2863 = vunpack.c.h.b16 %v644
    %v2864 = vunpack.c.l.b16 %v645
    %v2865 = vunpack.c.h.b16 %v645
    %v2866 = vunpack.c.l.b16 %v646
    %v2867 = vunpack.c.h.b16 %v646
    %v2868 = vunpack.c.l.b16 %v647
    %v2869 = vunpack.c.h.b16 %v647
    %v2870 = vunpack.c.l.b16 %v648
    %v2871 = vunpack.c.h.b16 %v648
    %v2872 = vunpack.c.l.b16 %v649
    %v2873 = vunpack.c.h.b16 %v649
    %v2874 = vunpack.c.l.b16 %v650
    %v2875 = vunpack.c.h.b16 %v650
    %v2876 = vunpack.c.l.b16 %v651
    %v2877 = vunpack.c.h.b16 %v651
    %v2878 = vunpack.c.l.b16 %v652
    %v2879 = vunpack.c.h.b16 %v652
    %v2880 = vunpack.c.l.b16 %v653
    %v2881 = vunpack.c.h.b16 %v653
    %v2882 = vunpack.c.l.b16 %v654
    %v2883 = vunpack.c.h.b16 %v654
    %v2884 = vunpack.c.l.b16 %v655
    %v2885 = vunpack.c.h.b16 %v655
    %v2886 = vunpack.c.l.b16 %v656
    %v2887 = vunpack.c.h.b16 %v656
    %v2888 = vunpack.c.l.b16 %v657
    %v2889 = vunpack.c.h.b16 %v657
    %v2890 = vunpack.c.l.b16 %v658
    %v2891 = vunpack.c.h.b16 %v658
    %v2892 = vunpack.c.l.b16 %v659
    %v2893 = vunpack.c.h.b16 %v659
    %v2894 = vunpack.c.l.b16 %v660
    %v2895 = vunpack.c.h.b16 %v660
    %v2896 = vunpack.c.l.b16 %v661
    %v2897 = vunpack.c.h.b16 %v661
    %v2898 = vunpack.c.l.b16 %v662
    %v2899 = vunpack.c.h.b16 %v662
    %v2900 = vunpack.c.l.b16 %v663
    %v2901 = vunpack.c.h.b16 %v663
    %v2902 = vunpack.c.l.b16 %v664
    %v2903 = vunpack.c.h.b16 %v664
    %v2904 = vunpack.c.l.b16 %v665
    %v2905 = vunpack.c.h.b16 %v665
    %v2906 = vunpack.c.l.b16 %v666
    %v2907 = vunpack.c.h.b16 %v666
    %v2908 = vunpack.c.l.b16 %v667
    %v2909 = vunpack.c.h.b16 %v667
    %v2910 = vunpack.c.l.b16 %v668
    %v2911 = vunpack.c.h.b16 %v668
    %v2912 = vunpack.c.l.b16 %v669
    %v2913 = vunpack.c.h.b16 %v669
    %v2914 = vunpack.c.l.b16 %v670
    %v2915 = vunpack.c.h.b16 %v670
    %v2916 = vunpack.c.l.b16 %v671
    %v2917 = vunpack.c.h.b16 %v671
    %v2918 = vunpack.c.l.b16 %v672
    %v2919 = vunpack.c.h.b16 %v672
    %v2920 = vunpack.c.l.b16 %v673
    %v2921 = vunpack.c.h.b16 %v673
    %v2922 = vunpack.c.l.b16 %v674
    %v2923 = vunpack.c.h.b16 %v674
    %v2924 = vunpack.c.l.b16 %v675
    %v2925 = vunpack.c.h.b16 %v675
    %v2926 = vunpack.c.l.b16 %v676
    %v2927 = vunpack.c.h.b16 %v676
    %v2928 = vunpack.c.l.b16 %v677
    %v2929 = vunpack.c.h.b16 %v677
    %v2930 = vunpack.c.l.b16 %v678
    %v2931 = vunpack.c.h.b16 %v678
    %v2932 = vunpack.c.l.b16 %v679
    %v2933 = vunpack.c.h.b16 %v679
    %v2934 = vunpack.c.l.b16 %v680
    %v2935 = vunpack.c.h.b16 %v680
    %v2936 = vunpack.c.l.b16 %v681
    %v2937 = vunpack.c.h.b16 %v681
    %v2938 = vunpack.c.l.b16 %v682
    %v2939 = vunpack.c.h.b16 %v682
    %v2940 = vunpack.c.l.b16 %v683
    %v2941 = vunpack.c.h.b16 %v683
    %v2942 = vunpack.c.l.b16 %v684
    %v2943 = vunpack.c.h.b16 %v684
    %v2944 = vunpack.c.l.b16 %v685
    %v2945 = vunpack.c.h.b16 %v685
    %v2946 = vunpack.c.l.b16 %v686
    %v2947 = vunpack.c.h.b16 %v686
    %v2948 = vunpack.c.l.b16 %v687
    %v2949 = vunpack.c.h.b16 %v687
    %v2950 = vunpack.c.l.b16 %v688
    %v2951 = vunpack.c.h.b16 %v688
    %v2952 = vunpack.c.l.b16 %v689
    %v2953 = vunpack.c.h.b16 %v689
    %v2954 = vunpack.c.l.b16 %v690
    %v2955 = vunpack.c.h.b16 %v690
    %v2956 = vunpack.c.l.b16 %v691
    %v2957 = vunpack.c.h.b16 %v691
    %v2958 = vunpack.c.l.b16 %v692
    %v2959 = vunpack.c.h.b16 %v692
    %v2960 = vunpack.c.l.b16 %v693
    %v2961 = vunpack.c.h.b16 %v693
    %v2962 = vunpack.c.l.b16 %v694
    %v2963 = vunpack.c.h.b16 %v694
    %v2964 = vunpack.c.l.b16 %v695
    %v2965 = vunpack.c.h.b16 %v695
    %v2966 = vunpack.c.l.b16 %v696
    %v2967 = vunpack.c.h.b16 %v696
    %v2968 = vunpack.c.l.b16 %v697
    %v2969 = vunpack.c.h.b16 %v697
    %v2970 = vunpack.c.l.b16 %v698
    %v2971 = vunpack.c.h.b16 %v698
    %v2972 = vunpack.c.l.b16 %v699
    %v2973 = vunpack.c.h.b16 %v699
    %v2974 = vunpack.c.l.b16 %v700
    %v2975 = vunpack.c.h.b16 %v700
    %v2976 = vunpack.c.l.b16 %v701
    %v2977 = vunpack.c.h.b16 %v701
    %v2978 = vunpack.c.l.b16 %v702
    %v2979 = vunpack.c.h.b16 %v702
    %v2980 = vunpack.c.l.b16 %v703
    %v2981 = vunpack.c.h.b16 %v703
    %v2982 = vunpack.c.l.b16 %v704
    %v2983 = vunpack.c.h.b16 %v704
    %v2984 = vunpack.c.l.b16 %v705
    %v2985 = vunpack.c.h.b16 %v705
    %v2986 = vunpack.c.l.b16 %v706
    %v2987 = vunpack.c.h.b16 %v706
    %v2988 = vunpack.c.l.b16 %v707
    %v2989 = vunpack.c.h.b16 %v707
    %v2990 = vunpack.c.l.b16 %v708
    %v2991 = vunpack.c.h.b16 %v708
    %v2992 = vunpack.c.l.b16 %v709
    %v2993 = vunpack.c.h.b16 %v709
    %v2994 = vunpack.c.l.b16 %v710
    %v2995 = vunpack.c.h.b16 %v710
    %v2996 = vunpack.c.l.b16 %v711
    %v2997 = vunpack.c.h.b16 %v711
    %v2998 = vunpack.c.l.b16 %v712
    %v2999 = vunpack.c.h.b16 %v712
    %v3000 = vunpack.c.l.b16 %v713
    %v3001 = vunpack.c.h.b16 %v713
    %v3002 = vunpack.c.l.b16 %v714
    %v3003 = vunpack.c.h.b16 %v714
    %v3004 = vunpack.c.l.b16 %v715
    %v3005 = vunpack.c.h.b16 %v715
    %v3006 = vunpack.c.l.b16 %v716
    %v3007 = vunpack.c.h.b16 %v716
    %v3008 = vunpack.c.l.b16 %v717
    %v3009 = vunpack.c.h.b16 %v717
    %v3010 = vunpack.c.l.b16 %v718
    %v3011 = vunpack.c.h.b16 %v718
    %v3012 = vunpack.c.l.b16 %v719
    %v3013 = vunpack.c.h.b16 %v719
    %v3014 = vunpack.c.l.b16 %v720
    %v3015 = vunpack.c.h.b16 %v720
    %v3016 = vunpack.c.l.b16 %v721
    %v3017 = vunpack.c.h.b16 %v721
    %v3018 = vunpack.c.l.b16 %v722
    %v3019 = vunpack.c.h.b16 %v722
    %v3020 = vunpack.c.l.b16 %v723
    %v3021 = vunpack.c.h.b16 %v723
    %v3022 = vunpack.c.l.b16 %v724
    %v3023 = vunpack.c.h.b16 %v724
    %v3024 = vunpack.c.l.b16 %v725
    %v3025 = vunpack.c.h.b16 %v725
    %v3026 = vunpack.c.l.b16 %v726
    %v3027 = vunpack.c.h.b16 %v726
    %v3028 = vunpack.c.l.b16 %v727
    %v3029 = vunpack.c.h.b16 %v727
    %v3030 = vunpack.c.l.b16 %v728
    %v3031 = vunpack.c.h.b16 %v728
    %v3032 = vunpack.c.l.b16 %v729
    %v3033 = vunpack.c.h.b16 %v729
    %v3034 = vunpack.c.l.b16 %v730
    %v3035 = vunpack.c.h.b16 %v730
    %v3036 = vunpack.c.l.b16 %v731
    %v3037 = vunpack.c.h.b16 %v731
    %v3038 = vunpack.c.l.b16 %v732
    %v3039 = vunpack.c.h.b16 %v732
    %v3040 = vunpack.c.l.b16 %v733
    %v3041 = vunpack.c.h.b16 %v733
    %v3042 = vunpack.c.l.b16 %v734
    %v3043 = vunpack.c.h.b16 %v734
    %v3044 = vunpack.c.l.b16 %v735
    %v3045 = vunpack.c.h.b16 %v735
    %v3046 = vunpack.c.l.b16 %v736
    %v3047 = vunpack.c.h.b16 %v736
    %v3048 = vunpack.c.l.b16 %v737
    %v3049 = vunpack.c.h.b16 %v737
    %v3050 = vunpack.c.l.b16 %v738
    %v3051 = vunpack.c.h.b16 %v738
    %v3052 = vunpack.c.l.b16 %v739
    %v3053 = vunpack.c.h.b16 %v739
    %v3054 = vunpack.c.l.b16 %v740
    %v3055 = vunpack.c.h.b16 %v740
    %v3056 = vunpack.c.l.b16 %v741
    %v3057 = vunpack.c.h.b16 %v741
    %v3058 = vunpack.c.l.b16 %v742
    %v3059 = vunpack.c.h.b16 %v742
    %v3060 = vunpack.c.l.b16 %v743
    %v3061 = vunpack.c.h.b16 %v743
    %v3062 = vunpack.c.l.b16 %v744
    %v3063 = vunpack.c.h.b16 %v744
    %v3064 = vunpack.c.l.b16 %v745
    %v3065 = vunpack.c.h.b16 %v745
    %v3066 = vunpack.c.l.b16 %v746
    %v3067 = vunpack.c.h.b16 %v746
    %v3068 = vunpack.c.l.b16 %v747
    %v3069 = vunpack.c.h.b16 %v747
    %v3070 = vunpack.c.l.b16 %v748
    %v3071 = vunpack.c.h.b16 %v748
    %v3072 = vunpack.c.l.b16 %v749
    %v3073 = vunpack.c.h.b16 %v749
    %v3074 = vunpack.c.l.b16 %v750
    %v3075 = vunpack.c.h.b16 %v750
    %v3076 = vunpack.c.l.b16 %v751
    %v3077 = vunpack.c.h.b16 %v751
    %v3078 = vunpack.c.l.b16 %v752
    %v3079 = vunpack.c.h.b16 %v752
    %v3080 = vunpack.c.l.b16 %v753
    %v3081 = vunpack.c.h.b16 %v753
    %v3082 = vunpack.c.l.b16 %v754
    %v3083 = vunpack.c.h.b16 %v754
    %v3084 = vunpack.c.l.b16 %v755
    %v3085 = vunpack.c.h.b16 %v755
    %v3086 = vunpack.c.l.b16 %v756
    %v3087 = vunpack.c.h.b16 %v756
    %v3088 = vunpack.c.l.b16 %v757
    %v3089 = vunpack.c.h.b16 %v757
    %v3090 = vunpack.c.l.b16 %v758
    %v3091 = vunpack.c.h.b16 %v758
    %v3092 = vunpack.c.l.b16 %v759
    %v3093 = vunpack.c.h.b16 %v759
    %v3094 = vunpack.c.l.b16 %v760
    %v3095 = vunpack.c.h.b16 %v760
    %v3096 = vunpack.c.l.b16 %v761
    %v3097 = vunpack.c.h.b16 %v761
    %v3098 = vunpack.c.l.b16 %v762
    %v3099 = vunpack.c.h.b16 %v762
    %v3100 = vunpack.c.l.b16 %v763
    %v3101 = vunpack.c.h.b16 %v763
    %v3102 = vunpack.c.l.b16 %v764
    %v3103 = vunpack.c.h.b16 %v764
    %v3104 = vunpack.c.l.b16 %v765
    %v3105 = vunpack.c.h.b16 %v765
    %v3106 = vunpack.c.l.b16 %v766
    %v3107 = vunpack.c.h.b16 %v766
    %v3108 = vunpack.c.l.b16 %v767
    %v3109 = vunpack.c.h.b16 %v767
    %v3110 = vunpack.c.l.b16 %v768
    %v3111 = vunpack.c.h.b16 %v768
    %v3112 = vunpack.c.l.b16 %v769
    %v3113 = vunpack.c.h.b16 %v769
    %v3114 = vunpack.c.l.b16 %v770
    %v3115 = vunpack.c.h.b16 %v770
    %v3116 = vunpack.c.l.b16 %v771
    %v3117 = vunpack.c.h.b16 %v771
    %v3118 = vunpack.c.l.b16 %v772
    %v3119 = vunpack.c.h.b16 %v772
    %v3120 = vunpack.c.l.b16 %v773
    %v3121 = vunpack.c.h.b16 %v773
    %v3122 = vunpack.c.l.b16 %v774
    %v3123 = vunpack.c.h.b16 %v774
    %v3124 = vunpack.c.l.b16 %v775
    %v3125 = vunpack.c.h.b16 %v775
    %v3126 = vunpack.c.l.b16 %v776
    %v3127 = vunpack.c.h.b16 %v776
    %v3128 = vunpack.c.l.b16 %v777
    %v3129 = vunpack.c.h.b16 %v777
    %v3130 = vunpack.c.l.b16 %v778
    %v3131 = vunpack.c.h.b16 %v778
    %v3132 = vunpack.c.l.b16 %v779
    %v3133 = vunpack.c.h.b16 %v779
    %v3134 = vunpack.c.l.b16 %v780
    %v3135 = vunpack.c.h.b16 %v780
    %v3136 = vunpack.c.l.b16 %v781
    %v3137 = vunpack.c.h.b16 %v781
    %v3138 = vunpack.c.l.b16 %v782
    %v3139 = vunpack.c.h.b16 %v782
    %v3140 = vunpack.c.l.b16 %v783
    %v3141 = vunpack.c.h.b16 %v783
    %v3142 = vunpack.c.l.b16 %v784
    %v3143 = vunpack.c.h.b16 %v784
    %v3144 = vunpack.c.l.b16 %v785
    %v3145 = vunpack.c.h.b16 %v785
    %v3146 = vunpack.c.l.b16 %v786
    %v3147 = vunpack.c.h.b16 %v786
    %v3148 = vunpack.c.l.b16 %v787
    %v3149 = vunpack.c.h.b16 %v787
    %v3150 = vunpack.c.l.b16 %v788
    %v3151 = vunpack.c.h.b16 %v788
    %v3152 = vunpack.c.l.b16 %v789
    %v3153 = vunpack.c.h.b16 %v789
    %v3154 = vunpack.c.l.b16 %v790
    %v3155 = vunpack.c.h.b16 %v790
    %v3156 = vunpack.c.l.b16 %v791
    %v3157 = vunpack.c.h.b16 %v791
    %v3158 = vunpack.c.l.b16 %v792
    %v3159 = vunpack.c.h.b16 %v792
    %v3160 = vunpack.c.l.b16 %v793
    %v3161 = vunpack.c.h.b16 %v793
    %v3162 = vunpack.c.l.b16 %v794
    %v3163 = vunpack.c.h.b16 %v794
    %v3164 = vunpack.c.l.b16 %v795
    %v3165 = vunpack.c.h.b16 %v795
    %v3166 = vunpack.c.l.b16 %v796
    %v3167 = vunpack.c.h.b16 %v796
    %v3168 = vunpack.c.l.b16 %v797
    %v3169 = vunpack.c.h.b16 %v797
    %v3170 = vunpack.c.l.b16 %v798
    %v3171 = vunpack.c.h.b16 %v798
    %v3172 = vunpack.c.l.b16 %v799
    %v3173 = vunpack.c.h.b16 %v799
    %v3174 = vunpack.c.l.b16 %v800
    %v3175 = vunpack.c.h.b16 %v800
    %v3176 = vunpack.c.l.b16 %v801
    %v3177 = vunpack.c.h.b16 %v801
    %v3178 = vunpack.c.l.b16 %v802
    %v3179 = vunpack.c.h.b16 %v802
    %v3180 = vunpack.c.l.b16 %v803
    %v3181 = vunpack.c.h.b16 %v803
    %v3182 = vunpack.c.l.b16 %v804
    %v3183 = vunpack.c.h.b16 %v804
    %v3184 = vunpack.c.l.b16 %v805
    %v3185 = vunpack.c.h.b16 %v805
    %v3186 = vunpack.c.l.b16 %v806
    %v3187 = vunpack.c.h.b16 %v806
    %v3188 = vunpack.c.l.b16 %v807
    %v3189 = vunpack.c.h.b16 %v807
    %v3190 = vunpack.c.l.b16 %v808
    %v3191 = vunpack.c.h.b16 %v808
    %v3192 = vunpack.c.l.b16 %v809
    %v3193 = vunpack.c.h.b16 %v809
    %v3194 = vunpack.c.l.b16 %v810
    %v3195 = vunpack.c.h.b16 %v810
    %v3196 = vunpack.c.l.b16 %v811
    %v3197 = vunpack.c.h.b16 %v811
    %v3198 = vunpack.c.l.b16 %v812
    %v3199 = vunpack.c.h.b16 %v812
    %v3200 = vunpack.c.l.b16 %v813
    %v3201 = vunpack.c.h.b16 %v813
    %v3202 = vunpack.c.l.b16 %v814
    %v3203 = vunpack.c.h.b16 %v814
    %v3204 = vunpack.c.l.b16 %v815
    %v3205 = vunpack.c.h.b16 %v815
    %v3206 = vunpack.c.l.b16 %v816
    %v3207 = vunpack.c.h.b16 %v816
    %v3208 = vunpack.c.l.b16 %v817
    %v3209 = vunpack.c.h.b16 %v817
    %v3210 = vunpack.c.l.b16 %v818
    %v3211 = vunpack.c.h.b16 %v818
    %v3212 = vunpack.c.l.b16 %v819
    %v3213 = vunpack.c.h.b16 %v819
    %v3214 = vunpack.c.l.b16 %v820
    %v3215 = vunpack.c.h.b16 %v820
    %v3216 = vunpack.c.l.b16 %v821
    %v3217 = vunpack.c.h.b16 %v821
    %v3218 = vunpack.c.l.b16 %v822
    %v3219 = vunpack.c.h.b16 %v822
    %v3220 = vunpack.c.l.b16 %v823
    %v3221 = vunpack.c.h.b16 %v823
    %v3222 = vunpack.c.l.b16 %v824
    %v3223 = vunpack.c.h.b16 %v824
    %v3224 = vunpack.c.l.b16 %v825
    %v3225 = vunpack.c.h.b16 %v825
    %v3226 = vunpack.c.l.b16 %v826
    %v3227 = vunpack.c.h.b16 %v826
    %v3228 = vunpack.c.l.b16 %v827
    %v3229 = vunpack.c.h.b16 %v827
    %v3230 = vunpack.c.l.b16 %v828
    %v3231 = vunpack.c.h.b16 %v828
    %v3232 = vunpack.c.l.b16 %v829
    %v3233 = vunpack.c.h.b16 %v829
    %v3234 = vunpack.c.l.b16 %v830
    %v3235 = vunpack.c.h.b16 %v830
    %v3236 = vunpack.c.l.b16 %v831
    %v3237 = vunpack.c.h.b16 %v831
    %v3238 = vunpack.c.l.b16 %v832
    %v3239 = vunpack.c.h.b16 %v832
    %v3240 = vunpack.c.l.b16 %v833
    %v3241 = vunpack.c.h.b16 %v833
    %v3242 = vunpack.c.l.b16 %v834
    %v3243 = vunpack.c.h.b16 %v834
    %v3244 = vunpack.c.l.b16 %v835
    %v3245 = vunpack.c.h.b16 %v835
    %v3246 = vunpack.c.l.b16 %v836
    %v3247 = vunpack.c.h.b16 %v836
    %v3248 = vunpack.c.l.b16 %v837
    %v3249 = vunpack.c.h.b16 %v837
    %v3250 = vunpack.c.l.b16 %v838
    %v3251 = vunpack.c.h.b16 %v838
    %v3252 = vunpack.c.l.b16 %v839
    %v3253 = vunpack.c.h.b16 %v839
    %v3254 = vunpack.c.l.b16 %v840
    %v3255 = vunpack.c.h.b16 %v840
    %v3256 = vunpack.c.l.b16 %v841
    %v3257 = vunpack.c.h.b16 %v841
    %v3258 = vunpack.c.l.b16 %v842
    %v3259 = vunpack.c.h.b16 %v842
    %v3260 = vunpack.c.l.b16 %v843
    %v3261 = vunpack.c.h.b16 %v843
    %v3262 = vunpack.c.l.b16 %v844
    %v3263 = vunpack.c.h.b16 %v844
    %v3264 = vunpack.c.l.b16 %v845
    %v3265 = vunpack.c.h.b16 %v845
    %v3266 = vunpack.c.l.b16 %v846
    %v3267 = vunpack.c.h.b16 %v846
    %v3268 = vunpack.c.l.b16 %v847
    %v3269 = vunpack.c.h.b16 %v847
    %v3270 = vunpack.c.l.b16 %v848
    %v3271 = vunpack.c.h.b16 %v848
    %v3272 = vunpack.c.l.b16 %v849
    %v3273 = vunpack.c.h.b16 %v849
    %v3274 = vunpack.c.l.b16 %v850
    %v3275 = vunpack.c.h.b16 %v850
    %v3276 = vunpack.c.l.b16 %v851
    %v3277 = vunpack.c.h.b16 %v851
    %v3278 = vunpack.c.l.b16 %v852
    %v3279 = vunpack.c.h.b16 %v852
    %v3280 = vunpack.c.l.b16 %v853
    %v3281 = vunpack.c.h.b16 %v853
    %v3282 = vunpack.c.l.b16 %v854
    %v3283 = vunpack.c.h.b16 %v854
    %v3284 = vunpack.c.l.b16 %v855
    %v3285 = vunpack.c.h.b16 %v855
    %v3286 = vunpack.c.l.b16 %v856
    %v3287 = vunpack.c.h.b16 %v856
    %v3288 = vunpack.c.l.b16 %v857
    %v3289 = vunpack.c.h.b16 %v857
    %v3290 = vunpack.c.l.b16 %v858
    %v3291 = vunpack.c.h.b16 %v858
    %v3292 = vunpack.c.l.b16 %v859
    %v3293 = vunpack.c.h.b16 %v859
    %v3294 = vunpack.c.l.b16 %v860
    %v3295 = vunpack.c.h.b16 %v860
    %v3296 = vunpack.c.l.b16 %v861
    %v3297 = vunpack.c.h.b16 %v861
    %v3298 = vunpack.c.l.b16 %v862
    %v3299 = vunpack.c.h.b16 %v862
    %v3300 = vunpack.c.l.b16 %v863
    %v3301 = vunpack.c.h.b16 %v863
    %v3302 = vunpack.c.l.b16 %v864
    %v3303 = vunpack.c.h.b16 %v864
    %v3304 = vunpack.c.l.b16 %v865
    %v3305 = vunpack.c.h.b16 %v865
    %v3306 = vunpack.c.l.b16 %v866
    %v3307 = vunpack.c.h.b16 %v866
    %v3308 = vunpack.c.l.b16 %v867
    %v3309 = vunpack.c.h.b16 %v867
    %v3310 = vunpack.c.l.b16 %v868
    %v3311 = vunpack.c.h.b16 %v868
    %v3312 = vunpack.c.l.b16 %v869
    %v3313 = vunpack.c.h.b16 %v869
    %v3314 = vunpack.c.l.b16 %v870
    %v3315 = vunpack.c.h.b16 %v870
    %v3316 = vunpack.c.l.b16 %v871
    %v3317 = vunpack.c.h.b16 %v871
    %v3318 = vunpack.c.l.b16 %v872
    %v3319 = vunpack.c.h.b16 %v872
    %v3320 = vunpack.c.l.b16 %v873
    %v3321 = vunpack.c.h.b16 %v873
    %v3322 = vunpack.c.l.b16 %v874
    %v3323 = vunpack.c.h.b16 %v874
    %v3324 = vunpack.c.l.b16 %v875
    %v3325 = vunpack.c.h.b16 %v875
    %v3326 = vunpack.c.l.b16 %v876
    %v3327 = vunpack.c.h.b16 %v876
    %v3328 = vunpack.c.l.b16 %v877
    %v3329 = vunpack.c.h.b16 %v877
    %v3330 = vunpack.c.l.b16 %v878
    %v3331 = vunpack.c.h.b16 %v878
    %v3332 = vunpack.c.l.b16 %v879
    %v3333 = vunpack.c.h.b16 %v879
    %v3334 = vunpack.c.l.b16 %v880
    %v3335 = vunpack.c.h.b16 %v880
    %v3336 = vunpack.c.l.b16 %v881
    %v3337 = vunpack.c.h.b16 %v881
    %v3338 = vunpack.c.l.b16 %v882
    %v3339 = vunpack.c.h.b16 %v882
    %v3340 = vunpack.c.l.b16 %v883
    %v3341 = vunpack.c.h.b16 %v883
    %v3342 = vunpack.c.l.b16 %v884
    %v3343 = vunpack.c.h.b16 %v884
    %v3344 = vunpack.c.l.b16 %v885
    %v3345 = vunpack.c.h.b16 %v885
    %v3346 = vunpack.c.l.b16 %v886
    %v3347 = vunpack.c.h.b16 %v886
    %v3348 = vunpack.c.l.b16 %v887
    %v3349 = vunpack.c.h.b16 %v887
    %v3350 = vunpack.c.l.b16 %v888
    %v3351 = vunpack.c.h.b16 %v888
    %v3352 = vunpack.c.l.b16 %v889
    %v3353 = vunpack.c.h.b16 %v889
    %v3354 = vunpack.c.l.b16 %v890
    %v3355 = vunpack.c.h.b16 %v890
    %v3356 = vunpack.c.l.b16 %v891
    %v3357 = vunpack.c.h.b16 %v891
    %v3358 = vunpack.c.l.b16 %v892
    %v3359 = vunpack.c.h.b16 %v892
    %v3360 = vunpack.c.l.b16 %v893
    %v3361 = vunpack.c.h.b16 %v893
    %v3362 = vunpack.c.l.b16 %v894
    %v3363 = vunpack.c.h.b16 %v894
    %v3364 = vunpack.c.l.b16 %v895
    %v3365 = vunpack.c.h.b16 %v895
    %v3366 = vunpack.c.l.b16 %v896
    %v3367 = vunpack.c.h.b16 %v896
    %v3368 = vunpack.c.l.b16 %v897
    %v3369 = vunpack.c.h.b16 %v897
    %v3370 = vunpack.c.l.b16 %v898
    %v3371 = vunpack.c.h.b16 %v898
    %v3372 = vunpack.c.l.b16 %v899
    %v3373 = vunpack.c.h.b16 %v899
    %v3374 = vunpack.c.l.b16 %v900
    %v3375 = vunpack.c.h.b16 %v900
    %v3376 = vunpack.c.l.b16 %v901
    %v3377 = vunpack.c.h.b16 %v901
    %v3378 = vunpack.c.l.b16 %v902
    %v3379 = vunpack.c.h.b16 %v902
    %v3380 = vunpack.c.l.b16 %v903
    %v3381 = vunpack.c.h.b16 %v903
    %v3382 = vunpack.c.l.b16 %v904
    %v3383 = vunpack.c.h.b16 %v904
    %v3384 = vunpack.c.l.b16 %v905
    %v3385 = vunpack.c.h.b16 %v905
    %v3386 = vunpack.c.l.b16 %v906
    %v3387 = vunpack.c.h.b16 %v906
    %v3388 = vunpack.c.l.b16 %v907
    %v3389 = vunpack.c.h.b16 %v907
    %v3390 = vunpack.c.l.b16 %v908
    %v3391 = vunpack.c.h.b16 %v908
    %v3392 = vunpack.c.l.b16 %v909
    %v3393 = vunpack.c.h.b16 %v909
    %v3394 = vunpack.c.l.b16 %v910
    %v3395 = vunpack.c.h.b16 %v910
    %v3396 = vunpack.c.l.b16 %v911
    %v3397 = vunpack.c.h.b16 %v911
    %v3398 = vunpack.c.l.b16 %v912
    %v3399 = vunpack.c.h.b16 %v912
    %v3400 = vunpack.c.l.b16 %v913
    %v3401 = vunpack.c.h.b16 %v913
    %v3402 = vunpack.c.l.b16 %v914
    %v3403 = vunpack.c.h.b16 %v914
    %v3404 = vunpack.c.l.b16 %v915
    %v3405 = vunpack.c.h.b16 %v915
    %v3406 = vunpack.c.l.b16 %v916
    %v3407 = vunpack.c.h.b16 %v916
    %v3408 = vunpack.c.l.b16 %v917
    %v3409 = vunpack.c.h.b16 %v917
    %v3410 = vunpack.c.l.b16 %v918
    %v3411 = vunpack.c.h.b16 %v918
    %v3412 = vunpack.c.l.b16 %v919
    %v3413 = vunpack.c.h.b16 %v919
    %v3414 = vunpack.c.l.b16 %v920
    %v3415 = vunpack.c.h.b16 %v920
    %v3416 = vunpack.c.l.b16 %v921
    %v3417 = vunpack.c.h.b16 %v921
    %v3418 = vunpack.c.l.b16 %v922
    %v3419 = vunpack.c.h.b16 %v922
    %v3420 = vunpack.c.l.b16 %v923
    %v3421 = vunpack.c.h.b16 %v923
    %v3422 = vunpack.c.l.b16 %v924
    %v3423 = vunpack.c.h.b16 %v924
    %v3424 = vunpack.c.l.b16 %v925
    %v3425 = vunpack.c.h.b16 %v925
    %v3426 = vunpack.c.l.b16 %v926
    %v3427 = vunpack.c.h.b16 %v926
    %v3428 = vunpack.c.l.b16 %v927
    %v3429 = vunpack.c.h.b16 %v927
    %v3430 = vunpack.c.l.b16 %v928
    %v3431 = vunpack.c.h.b16 %v928
    %v3432 = vunpack.c.l.b16 %v929
    %v3433 = vunpack.c.h.b16 %v929
    %v3434 = vunpack.c.l.b16 %v930
    %v3435 = vunpack.c.h.b16 %v930
    %v3436 = vunpack.c.l.b16 %v931
    %v3437 = vunpack.c.h.b16 %v931
    %v3438 = vunpack.c.l.b16 %v932
    %v3439 = vunpack.c.h.b16 %v932
    %v3440 = vunpack.c.l.b16 %v933
    %v3441 = vunpack.c.h.b16 %v933
    %v3442 = vunpack.c.l.b16 %v934
    %v3443 = vunpack.c.h.b16 %v934
    %v3444 = vunpack.c.l.b16 %v935
    %v3445 = vunpack.c.h.b16 %v935
    %v3446 = vunpack.c.l.b16 %v936
    %v3447 = vunpack.c.h.b16 %v936
    %v3448 = vunpack.c.l.b16 %v937
    %v3449 = vunpack.c.h.b16 %v937
    %v3450 = vunpack.c.l.b16 %v938
    %v3451 = vunpack.c.h.b16 %v938
    %v3452 = vunpack.c.l.b16 %v939
    %v3453 = vunpack.c.h.b16 %v939
    %v3454 = vunpack.c.l.b16 %v940
    %v3455 = vunpack.c.h.b16 %v940
    %v3456 = vunpack.c.l.b16 %v941
    %v3457 = vunpack.c.h.b16 %v941
    %v3458 = vunpack.c.l.b16 %v942
    %v3459 = vunpack.c.h.b16 %v942
    %v3460 = vunpack.c.l.b16 %v943
    %v3461 = vunpack.c.h.b16 %v943
    %v3462 = vunpack.c.l.b16 %v944
    %v3463 = vunpack.c.h.b16 %v944
    %v3464 = vunpack.c.l.b16 %v945
    %v3465 = vunpack.c.h.b16 %v945
    %v3466 = vunpack.c.l.b16 %v946
    %v3467 = vunpack.c.h.b16 %v946
    %v3468 = vunpack.c.l.b16 %v947
    %v3469 = vunpack.c.h.b16 %v947
    %v3470 = vunpack.c.l.b16 %v948
    %v3471 = vunpack.c.h.b16 %v948
    %v3472 = vunpack.c.l.b16 %v949
    %v3473 = vunpack.c.h.b16 %v949
    %v3474 = vunpack.c.l.b16 %v950
    %v3475 = vunpack.c.h.b16 %v950
    %v3476 = vunpack.c.l.b16 %v951
    %v3477 = vunpack.c.h.b16 %v951
    %v3478 = vunpack.c.l.b16 %v952
    %v3479 = vunpack.c.h.b16 %v952
    %v3480 = vunpack.c.l.b16 %v953
    %v3481 = vunpack.c.h.b16 %v953
    %v3482 = vunpack.c.l.b16 %v954
    %v3483 = vunpack.c.h.b16 %v954
    %v3484 = vunpack.c.l.b16 %v955
    %v3485 = vunpack.c.h.b16 %v955
    %v3486 = vunpack.c.l.b16 %v956
    %v3487 = vunpack.c.h.b16 %v956
    %v3488 = vunpack.c.l.b16 %v957
    %v3489 = vunpack.c.h.b16 %v957
    %v3490 = vunpack.c.l.b16 %v958
    %v3491 = vunpack.c.h.b16 %v958
    %v3492 = vunpack.c.l.b16 %v959
    %v3493 = vunpack.c.h.b16 %v959
    %v3494 = vunpack.c.l.b16 %v960
    %v3495 = vunpack.c.h.b16 %v960
    %v3496 = vunpack.c.l.b16 %v961
    %v3497 = vunpack.c.h.b16 %v961
    %v3498 = vunpack.c.l.b16 %v962
    %v3499 = vunpack.c.h.b16 %v962
    %v3500 = vunpack.c.l.b16 %v963
    %v3501 = vunpack.c.h.b16 %v963
    %v3502 = vunpack.c.l.b16 %v964
    %v3503 = vunpack.c.h.b16 %v964
    %v3504 = vunpack.c.l.b16 %v965
    %v3505 = vunpack.c.h.b16 %v965
    %v3506 = vunpack.c.l.b16 %v966
    %v3507 = vunpack.c.h.b16 %v966
    %v3508 = vunpack.c.l.b16 %v967
    %v3509 = vunpack.c.h.b16 %v967
    %v3510 = vunpack.c.l.b16 %v968
    %v3511 = vunpack.c.h.b16 %v968
    %v3512 = vunpack.c.l.b16 %v969
    %v3513 = vunpack.c.h.b16 %v969
    %v3514 = vunpack.c.l.b16 %v970
    %v3515 = vunpack.c.h.b16 %v970
    %v3516 = vunpack.c.l.b16 %v971
    %v3517 = vunpack.c.h.b16 %v971
    %v3518 = vunpack.c.l.b16 %v972
    %v3519 = vunpack.c.h.b16 %v972
    %v3520 = vunpack.c.l.b16 %v973
    %v3521 = vunpack.c.h.b16 %v973
    %v3522 = vunpack.c.l.b16 %v974
    %v3523 = vunpack.c.h.b16 %v974
    %v3524 = vunpack.c.l.b16 %v975
    %v3525 = vunpack.c.h.b16 %v975
    %v3526 = vunpack.c.l.b16 %v976
    %v3527 = vunpack.c.h.b16 %v976
    %v3528 = vunpack.c.l.b16 %v977
    %v3529 = vunpack.c.h.b16 %v977
    %v3530 = vunpack.c.l.b16 %v978
    %v3531 = vunpack.c.h.b16 %v978
    %v3532 = vunpack.c.l.b16 %v979
    %v3533 = vunpack.c.h.b16 %v979
    %v3534 = vunpack.c.l.b16 %v980
    %v3535 = vunpack.c.h.b16 %v980
    %v3536 = vunpack.c.l.b16 %v981
    %v3537 = vunpack.c.h.b16 %v981
    %v3538 = vunpack.c.l.b16 %v982
    %v3539 = vunpack.c.h.b16 %v982
    %v3540 = vunpack.c.l.b16 %v983
    %v3541 = vunpack.c.h.b16 %v983
    %v3542 = vunpack.c.l.b16 %v984
    %v3543 = vunpack.c.h.b16 %v984
    %v3544 = vunpack.c.l.b16 %v985
    %v3545 = vunpack.c.h.b16 %v985
    %v3546 = vunpack.c.l.b16 %v986
    %v3547 = vunpack.c.h.b16 %v986
    %v3548 = vunpack.c.l.b16 %v987
    %v3549 = vunpack.c.h.b16 %v987
    %v3550 = vunpack.c.l.b16 %v988
    %v3551 = vunpack.c.h.b16 %v988
    %v3552 = vunpack.c.l.b16 %v989
    %v3553 = vunpack.c.h.b16 %v989
    %v3554 = vunpack.c.l.b16 %v990
    %v3555 = vunpack.c.h.b16 %v990
    %v3556 = vunpack.c.l.b16 %v991
    %v3557 = vunpack.c.h.b16 %v991
    %v3558 = vunpack.c.l.b16 %v992
    %v3559 = vunpack.c.h.b16 %v992
    %v3560 = vunpack.c.l.b16 %v993
    %v3561 = vunpack.c.h.b16 %v993
    %v3562 = vunpack.c.l.b16 %v994
    %v3563 = vunpack.c.h.b16 %v994
    %v3564 = vunpack.c.l.b16 %v995
    %v3565 = vunpack.c.h.b16 %v995
    %v3566 = vunpack.c.l.b16 %v996
    %v3567 = vunpack.c.h.b16 %v996
    %v3568 = vunpack.c.l.b16 %v997
    %v3569 = vunpack.c.h.b16 %v997
    %v3570 = vunpack.c.l.b16 %v998
    %v3571 = vunpack.c.h.b16 %v998
    %v3572 = vunpack.c.l.b16 %v999
    %v3573 = vunpack.c.h.b16 %v999
    %v3574 = vunpack.c.l.b16 %v1000
    %v3575 = vunpack.c.h.b16 %v1000
    %v3576 = vunpack.c.l.b16 %v1001
    %v3577 = vunpack.c.h.b16 %v1001
    %v3578 = vunpack.c.l.b16 %v1002
    %v3579 = vunpack.c.h.b16 %v1002
    %v3580 = vunpack.c.l.b16 %v1003
    %v3581 = vunpack.c.h.b16 %v1003
    %v3582 = vunpack.c.l.b16 %v1004
    %v3583 = vunpack.c.h.b16 %v1004
    %v3584 = vunpack.c.l.b16 %v1005
    %v3585 = vunpack.c.h.b16 %v1005
    %v3586 = vunpack.c.l.b16 %v1006
    %v3587 = vunpack.c.h.b16 %v1006
    %v3588 = vunpack.c.l.b16 %v1007
    %v3589 = vunpack.c.h.b16 %v1007
    %v3590 = vunpack.c.l.b16 %v1008
    %v3591 = vunpack.c.h.b16 %v1008
    %v3592 = vunpack.c.l.b16 %v1009
    %v3593 = vunpack.c.h.b16 %v1009
    %v3594 = vunpack.c.l.b16 %v1010
    %v3595 = vunpack.c.h.b16 %v1010
    %v3596 = vunpack.c.l.b16 %v1011
    %v3597 = vunpack.c.h.b16 %v1011
    %v3598 = vunpack.c.l.b16 %v1012
    %v3599 = vunpack.c.h.b16 %v1012
    %v3600 = vunpack.c.l.b16 %v1013
    %v3601 = vunpack.c.h.b16 %v1013
    %v3602 = vunpack.c.l.b16 %v1014
    %v3603 = vunpack.c.h.b16 %v1014
    %v3604 = vunpack.c.l.b16 %v1015
    %v3605 = vunpack.c.h.b16 %v1015
    %v3606 = vunpack.c.l.b16 %v1016
    %v3607 = vunpack.c.h.b16 %v1016
    %v3608 = vunpack.c.l.b16 %v1017
    %v3609 = vunpack.c.h.b16 %v1017
    %v3610 = vunpack.c.l.b16 %v1018
    %v3611 = vunpack.c.h.b16 %v1018
    %v3612 = vunpack.c.l.b16 %v1019
    %v3613 = vunpack.c.h.b16 %v1019
    %v3614 = vunpack.c.l.b16 %v1020
    %v3615 = vunpack.c.h.b16 %v1020
    %v3616 = vunpack.c.l.b16 %v1021
    %v3617 = vunpack.c.h.b16 %v1021
    %v3618 = vunpack.c.l.b16 %v1022
    %v3619 = vunpack.c.h.b16 %v1022
    %v3620 = vunpack.c.l.b16 %v1023
    %v3621 = vunpack.c.h.b16 %v1023
    %v3622 = vunpack.c.l.b16 %v1024
    %v3623 = vunpack.c.h.b16 %v1024
    %v3624 = vunpack.c.l.b16 %v1025
    %v3625 = vunpack.c.h.b16 %v1025
    %v3626 = vunpack.c.l.b16 %v1026
    %v3627 = vunpack.c.h.b16 %v1026
    %v3628 = vunpack.c.l.b16 %v1027
    %v3629 = vunpack.c.h.b16 %v1027
    %v3630 = vunpack.c.l.b16 %v1028
    %v3631 = vunpack.c.h.b16 %v1028
    %v3632 = vunpack.c.l.b16 %v1029
    %v3633 = vunpack.c.h.b16 %v1029
    %v3634 = vunpack.c.l.b16 %v1030
    %v3635 = vunpack.c.h.b16 %v1030
    %v3636 = vunpack.c.l.b16 %v1031
    %v3637 = vunpack.c.h.b16 %v1031
    %v3638 = vunpack.c.l.b16 %v1032
    %v3639 = vunpack.c.h.b16 %v1032
    %v3640 = vunpack.c.l.b16 %v1033
    %v3641 = vunpack.c.h.b16 %v1033
    %v3642 = vunpack.c.l.b16 %v1034
    %v3643 = vunpack.c.h.b16 %v1034
    %v3644 = vunpack.c.l.b16 %v1035
    %v3645 = vunpack.c.h.b16 %v1035
    %v3646 = vunpack.c.l.b16 %v1036
    %v3647 = vunpack.c.h.b16 %v1036
    %v3648 = vunpack.c.l.b16 %v1037
    %v3649 = vunpack.c.h.b16 %v1037
    %v3650 = vunpack.c.l.b16 %v1038
    %v3651 = vunpack.c.h.b16 %v1038
    %v3652 = vunpack.c.l.b16 %v1039
    %v3653 = vunpack.c.h.b16 %v1039
    %v3654 = vunpack.c.l.b16 %v1040
    %v3655 = vunpack.c.h.b16 %v1040
    %v3656 = vunpack.c.l.b16 %v1041
    %v3657 = vunpack.c.h.b16 %v1041
    %v3658 = vunpack.c.l.b16 %v1042
    %v3659 = vunpack.c.h.b16 %v1042
    %v3660 = vunpack.c.l.b16 %v1043
    %v3661 = vunpack.c.h.b16 %v1043
    %v3662 = vunpack.c.l.b16 %v1044
    %v3663 = vunpack.c.h.b16 %v1044
    %v3664 = vunpack.c.l.b16 %v1045
    %v3665 = vunpack.c.h.b16 %v1045
    %v3666 = vunpack.c.l.b16 %v1046
    %v3667 = vunpack.c.h.b16 %v1046
    %v3668 = vunpack.c.l.b16 %v1047
    %v3669 = vunpack.c.h.b16 %v1047
    %v3670 = vunpack.c.l.b16 %v1048
    %v3671 = vunpack.c.h.b16 %v1048
    %v3672 = vunpack.c.l.b16 %v1049
    %v3673 = vunpack.c.h.b16 %v1049
    %v3674 = vunpack.c.l.b16 %v1050
    %v3675 = vunpack.c.h.b16 %v1050
    %v3676 = vunpack.c.l.b16 %v1051
    %v3677 = vunpack.c.h.b16 %v1051
    %v3678 = vunpack.c.l.b16 %v1052
    %v3679 = vunpack.c.h.b16 %v1052
    %v3680 = vunpack.c.l.b16 %v1053
    %v3681 = vunpack.c.h.b16 %v1053
    %v3682 = vunpack.c.l.b16 %v1054
    %v3683 = vunpack.c.h.b16 %v1054
    %v3684 = vunpack.c.l.b16 %v1055
    %v3685 = vunpack.c.h.b16 %v1055
    %v3686 = vunpack.c.l.b16 %v1056
    %v3687 = vunpack.c.h.b16 %v1056
    %v3688 = vunpack.c.l.b16 %v1057
    %v3689 = vunpack.c.h.b16 %v1057
    %v3690 = vunpack.c.l.b16 %v1058
    %v3691 = vunpack.c.h.b16 %v1058
    %v3692 = vunpack.c.l.b16 %v1059
    %v3693 = vunpack.c.h.b16 %v1059
    %v3694 = vunpack.c.l.b16 %v1060
    %v3695 = vunpack.c.h.b16 %v1060
    %v3696 = vunpack.c.l.b16 %v1061
    %v3697 = vunpack.c.h.b16 %v1061
    %v3698 = vunpack.c.l.b16 %v1062
    %v3699 = vunpack.c.h.b16 %v1062
    %v3700 = vunpack.c.l.b16 %v1063
    %v3701 = vunpack.c.h.b16 %v1063
    %v3702 = vunpack.c.l.b16 %v1064
    %v3703 = vunpack.c.h.b16 %v1064
    %v3704 = vunpack.c.l.b16 %v1065
    %v3705 = vunpack.c.h.b16 %v1065
    %v3706 = vunpack.c.l.b16 %v1066
    %v3707 = vunpack.c.h.b16 %v1066
    %v3708 = vunpack.c.l.b16 %v1067
    %v3709 = vunpack.c.h.b16 %v1067
    %v3710 = vunpack.c.l.b16 %v1068
    %v3711 = vunpack.c.h.b16 %v1068
    %v3712 = vunpack.c.l.b16 %v1069
    %v3713 = vunpack.c.h.b16 %v1069
    %v3714 = vunpack.c.l.b16 %v1070
    %v3715 = vunpack.c.h.b16 %v1070
    %v3716 = vunpack.c.l.b16 %v1071
    %v3717 = vunpack.c.h.b16 %v1071
    %v3718 = vunpack.c.l.b16 %v1072
    %v3719 = vunpack.c.h.b16 %v1072
    %v3720 = vunpack.c.l.b16 %v1073
    %v3721 = vunpack.c.h.b16 %v1073
    %v3722 = vunpack.c.l.b16 %v1074
    %v3723 = vunpack.c.h.b16 %v1074
    %v3724 = vunpack.c.l.b16 %v1075
    %v3725 = vunpack.c.h.b16 %v1075
    %v3726 = vunpack.c.l.b16 %v1076
    %v3727 = vunpack.c.h.b16 %v1076
    %v3728 = vunpack.c.l.b16 %v1077
    %v3729 = vunpack.c.h.b16 %v1077
    %v3730 = vunpack.c.l.b16 %v1078
    %v3731 = vunpack.c.h.b16 %v1078
    %v3732 = vunpack.c.l.b16 %v1079
    %v3733 = vunpack.c.h.b16 %v1079
    %v3734 = vunpack.c.l.b16 %v1080
    %v3735 = vunpack.c.h.b16 %v1080
    %v3736 = vunpack.c.l.b16 %v1081
    %v3737 = vunpack.c.h.b16 %v1081
    %v3738 = vunpack.c.l.b16 %v1082
    %v3739 = vunpack.c.h.b16 %v1082
    %v3740 = vunpack.c.l.b16 %v1083
    %v3741 = vunpack.c.h.b16 %v1083
    %v3742 = vunpack.c.l.b16 %v1084
    %v3743 = vunpack.c.h.b16 %v1084
    %v3744 = vunpack.c.l.b16 %v1085
    %v3745 = vunpack.c.h.b16 %v1085
    %v3746 = vunpack.c.l.b16 %v1086
    %v3747 = vunpack.c.h.b16 %v1086
    %v3748 = vunpack.c.l.b16 %v1087
    %v3749 = vunpack.c.h.b16 %v1087
    %v3750 = vunpack.c.l.b16 %v1088
    %v3751 = vunpack.c.h.b16 %v1088
    %v3752 = vunpack.c.l.b16 %v1089
    %v3753 = vunpack.c.h.b16 %v1089
    %v3754 = vunpack.c.l.b16 %v1090
    %v3755 = vunpack.c.h.b16 %v1090
    %v3756 = vunpack.c.l.b16 %v1091
    %v3757 = vunpack.c.h.b16 %v1091
    %v3758 = vunpack.c.l.b16 %v1092
    %v3759 = vunpack.c.h.b16 %v1092
    %v3760 = vunpack.c.l.b16 %v1093
    %v3761 = vunpack.c.h.b16 %v1093
    %v3762 = vunpack.c.l.b16 %v1094
    %v3763 = vunpack.c.h.b16 %v1094
    %v3764 = vunpack.c.l.b16 %v1095
    %v3765 = vunpack.c.h.b16 %v1095
    %v3766 = vunpack.c.l.b16 %v1096
    %v3767 = vunpack.c.h.b16 %v1096
    %v3768 = vunpack.c.l.b16 %v1097
    %v3769 = vunpack.c.h.b16 %v1097
    %v3770 = vunpack.c.l.b16 %v1098
    %v3771 = vunpack.c.h.b16 %v1098
    %v3772 = vunpack.c.l.b16 %v1099
    %v3773 = vunpack.c.h.b16 %v1099
    %v3774 = vunpack.c.l.b16 %v1100
    %v3775 = vunpack.c.h.b16 %v1100
    %v3776 = vunpack.c.l.b16 %v1101
    %v3777 = vunpack.c.h.b16 %v1101
    %v3778 = vunpack.c.l.b16 %v1102
    %v3779 = vunpack.c.h.b16 %v1102
    %v3780 = vunpack.c.l.b16 %v1103
    %v3781 = vunpack.c.h.b16 %v1103
    %v3782 = vunpack.c.l.b16 %v1104
    %v3783 = vunpack.c.h.b16 %v1104
    %v3784 = vunpack.c.l.b16 %v1105
    %v3785 = vunpack.c.h.b16 %v1105
    %v3786 = vunpack.c.l.b16 %v1106
    %v3787 = vunpack.c.h.b16 %v1106
    %v3788 = vunpack.c.l.b16 %v1107
    %v3789 = vunpack.c.h.b16 %v1107
    %v3790 = vunpack.c.l.b16 %v1108
    %v3791 = vunpack.c.h.b16 %v1108
    %v3792 = vunpack.c.l.b16 %v1109
    %v3793 = vunpack.c.h.b16 %v1109
    %v3794 = vunpack.c.l.b16 %v1110
    %v3795 = vunpack.c.h.b16 %v1110
    %v3796 = vunpack.c.l.b16 %v1111
    %v3797 = vunpack.c.h.b16 %v1111
    %v3798 = vunpack.c.l.b16 %v1112
    %v3799 = vunpack.c.h.b16 %v1112
    %v3800 = vunpack.c.l.b16 %v1113
    %v3801 = vunpack.c.h.b16 %v1113
    %v3802 = vunpack.c.l.b16 %v1114
    %v3803 = vunpack.c.h.b16 %v1114
    %v3804 = vunpack.c.l.b16 %v1115
    %v3805 = vunpack.c.h.b16 %v1115
    %v3806 = vunpack.c.l.b16 %v1116
    %v3807 = vunpack.c.h.b16 %v1116
    %v3808 = vunpack.c.l.b16 %v1117
    %v3809 = vunpack.c.h.b16 %v1117
    %v3810 = vunpack.c.l.b16 %v1118
    %v3811 = vunpack.c.h.b16 %v1118
    %v3812 = vunpack.c.l.b16 %v1119
    %v3813 = vunpack.c.h.b16 %v1119
    %v3814 = vunpack.c.l.b16 %v1120
    %v3815 = vunpack.c.h.b16 %v1120
    %v3816 = vunpack.c.l.b16 %v1121
    %v3817 = vunpack.c.h.b16 %v1121
    %v3818 = vunpack.c.l.b16 %v1122
    %v3819 = vunpack.c.h.b16 %v1122
    %v3820 = vunpack.c.l.b16 %v1123
    %v3821 = vunpack.c.h.b16 %v1123
    %v3822 = vunpack.c.l.b16 %v1124
    %v3823 = vunpack.c.h.b16 %v1124
    %v3824 = vunpack.c.l.b16 %v1125
    %v3825 = vunpack.c.h.b16 %v1125
    %v3826 = vunpack.c.l.b16 %v1126
    %v3827 = vunpack.c.h.b16 %v1126
    %v3828 = vunpack.c.l.b16 %v1127
    %v3829 = vunpack.c.h.b16 %v1127
    %v3830 = vunpack.c.l.b16 %v1128
    %v3831 = vunpack.c.h.b16 %v1128
    %v3832 = vunpack.c.l.b16 %v1129
    %v3833 = vunpack.c.h.b16 %v1129
    %v3834 = vunpack.c.l.b16 %v1130
    %v3835 = vunpack.c.h.b16 %v1130
    %v3836 = vunpack.c.l.b16 %v1131
    %v3837 = vunpack.c.h.b16 %v1131
    %v3838 = vunpack.c.l.b16 %v1132
    %v3839 = vunpack.c.h.b16 %v1132
    %v3840 = vunpack.c.l.b16 %v1133
    %v3841 = vunpack.c.h.b16 %v1133
    %v3842 = vunpack.c.l.b16 %v1134
    %v3843 = vunpack.c.h.b16 %v1134
    %v3844 = vunpack.c.l.b16 %v1135
    %v3845 = vunpack.c.h.b16 %v1135
    %v3846 = vunpack.c.l.b16 %v1136
    %v3847 = vunpack.c.h.b16 %v1136
    %v3848 = vunpack.c.l.b16 %v1137
    %v3849 = vunpack.c.h.b16 %v1137
    %v3850 = vunpack.c.l.b16 %v1138
    %v3851 = vunpack.c.h.b16 %v1138
    %v3852 = vunpack.c.l.b16 %v1139
    %v3853 = vunpack.c.h.b16 %v1139
    %v3854 = vunpack.c.l.b16 %v1140
    %v3855 = vunpack.c.h.b16 %v1140
    %v3856 = vunpack.c.l.b16 %v1141
    %v3857 = vunpack.c.h.b16 %v1141
    %v3858 = vunpack.c.l.b16 %v1142
    %v3859 = vunpack.c.h.b16 %v1142
    %v3860 = vunpack.c.l.b16 %v1143
    %v3861 = vunpack.c.h.b16 %v1143
    %v3862 = vunpack.c.l.b16 %v1144
    %v3863 = vunpack.c.h.b16 %v1144
    %v3864 = vunpack.c.l.b16 %v1145
    %v3865 = vunpack.c.h.b16 %v1145
    %v3866 = vunpack.c.l.b16 %v1146
    %v3867 = vunpack.c.h.b16 %v1146
    %v3868 = vunpack.c.l.b16 %v1147
    %v3869 = vunpack.c.h.b16 %v1147
    %v3870 = vunpack.c.l.b16 %v1148
    %v3871 = vunpack.c.h.b16 %v1148
    %v3872 = vunpack.c.l.b16 %v1149
    %v3873 = vunpack.c.h.b16 %v1149
    %v3874 = vunpack.c.l.b16 %v1150
    %v3875 = vunpack.c.h.b16 %v1150
    %v3876 = vunpack.c.l.b16 %v1151
    %v3877 = vunpack.c.h.b16 %v1151
    %v3878 = vunpack.c.l.b16 %v1152
    %v3879 = vunpack.c.h.b16 %v1152
    %v3880 = vunpack.c.l.b16 %v1153
    %v3881 = vunpack.c.h.b16 %v1153
    %v3882 = vunpack.c.l.b16 %v1154
    %v3883 = vunpack.c.h.b16 %v1154
    %v3884 = vunpack.c.l.b16 %v1155
    %v3885 = vunpack.c.h.b16 %v1155
    %v3886 = vunpack.c.l.b16 %v1156
    %v3887 = vunpack.c.h.b16 %v1156
    %v3888 = vunpack.c.l.b16 %v1157
    %v3889 = vunpack.c.h.b16 %v1157
    %v3890 = vunpack.c.l.b16 %v1158
    %v3891 = vunpack.c.h.b16 %v1158
    %v3892 = vunpack.c.l.b16 %v1159
    %v3893 = vunpack.c.h.b16 %v1159
    %v3894 = vunpack.c.l.b16 %v1160
    %v3895 = vunpack.c.h.b16 %v1160
    %v3896 = vunpack.c.l.b16 %v1161
    %v3897 = vunpack.c.h.b16 %v1161
    %v3898 = vunpack.c.l.b16 %v1162
    %v3899 = vunpack.c.h.b16 %v1162
    %v3900 = vunpack.c.l.b16 %v1163
    %v3901 = vunpack.c.h.b16 %v1163
    %v3902 = vunpack.c.l.b16 %v1164
    %v3903 = vunpack.c.h.b16 %v1164
    %v3904 = vunpack.c.l.b16 %v1165
    %v3905 = vunpack.c.h.b16 %v1165
    %v3906 = vunpack.c.l.b16 %v1166
    %v3907 = vunpack.c.h.b16 %v1166
    %v3908 = vunpack.c.l.b16 %v1167
    %v3909 = vunpack.c.h.b16 %v1167
    %v3910 = vunpack.c.l.b16 %v1168
    %v3911 = vunpack.c.h.b16 %v1168
    %v3912 = vunpack.c.l.b16 %v1169
    %v3913 = vunpack.c.h.b16 %v1169
    %v3914 = vunpack.c.l.b16 %v1170
    %v3915 = vunpack.c.h.b16 %v1170
    %v3916 = vunpack.c.l.b16 %v1171
    %v3917 = vunpack.c.h.b16 %v1171
    %v3918 = vunpack.c.l.b16 %v1172
    %v3919 = vunpack.c.h.b16 %v1172
    %v3920 = vunpack.c.l.b16 %v1173
    %v3921 = vunpack.c.h.b16 %v1173
    %v3922 = vunpack.c.l.b16 %v1174
    %v3923 = vunpack.c.h.b16 %v1174
    %v3924 = vunpack.c.l.b16 %v1175
    %v3925 = vunpack.c.h.b16 %v1175
    %v3926 = vunpack.c.l.b16 %v1176
    %v3927 = vunpack.c.h.b16 %v1176
    %v3928 = vunpack.c.l.b16 %v1177
    %v3929 = vunpack.c.h.b16 %v1177
    %v3930 = vunpack.c.l.b16 %v1178
    %v3931 = vunpack.c.h.b16 %v1178
    %v3932 = vunpack.c.l.b16 %v1179
    %v3933 = vunpack.c.h.b16 %v1179
    %v3934 = vunpack.c.l.b16 %v1180
    %v3935 = vunpack.c.h.b16 %v1180
    %v3936 = vunpack.c.l.b16 %v1181
    %v3937 = vunpack.c.h.b16 %v1181
    %v3938 = vunpack.c.l.b16 %v1182
    %v3939 = vunpack.c.h.b16 %v1182
    %v3940 = vunpack.c.l.b16 %v1183
    %v3941 = vunpack.c.h.b16 %v1183
    %v3942 = vunpack.c.l.b16 %v1184
    %v3943 = vunpack.c.h.b16 %v1184
    %v3944 = vunpack.c.l.b16 %v1185
    %v3945 = vunpack.c.h.b16 %v1185
    %v3946 = vunpack.c.l.b16 %v1186
    %v3947 = vunpack.c.h.b16 %v1186
    %v3948 = vunpack.c.l.b16 %v1187
    %v3949 = vunpack.c.h.b16 %v1187
    %v3950 = vunpack.c.l.b16 %v1188
    %v3951 = vunpack.c.h.b16 %v1188
    %v3952 = vunpack.c.l.b16 %v1189
    %v3953 = vunpack.c.h.b16 %v1189
    %v3954 = vunpack.c.l.b16 %v1190
    %v3955 = vunpack.c.h.b16 %v1190
    %v3956 = vunpack.c.l.b16 %v1191
    %v3957 = vunpack.c.h.b16 %v1191
    %v3958 = vunpack.c.l.b16 %v1192
    %v3959 = vunpack.c.h.b16 %v1192
    %v3960 = vunpack.c.l.b16 %v1193
    %v3961 = vunpack.c.h.b16 %v1193
    %v3962 = vunpack.c.l.b16 %v1194
    %v3963 = vunpack.c.h.b16 %v1194
    %v3964 = vunpack.c.l.b16 %v1195
    %v3965 = vunpack.c.h.b16 %v1195
    %v3966 = vunpack.c.l.b16 %v1196
    %v3967 = vunpack.c.h.b16 %v1196
    %v3968 = vunpack.c.l.b16 %v1197
    %v3969 = vunpack.c.h.b16 %v1197
    %v3970 = vunpack.c.l.b16 %v1198
    %v3971 = vunpack.c.h.b16 %v1198
    %v3972 = vunpack.c.l.b16 %v1199
    %v3973 = vunpack.c.h.b16 %v1199
    %v3974 = vunpack.c.l.b16 %v1200
    %v3975 = vunpack.c.h.b16 %v1200
    %v3976 = vunpack.c.l.b16 %v1201
    %v3977 = vunpack.c.h.b16 %v1201
    %v3978 = vunpack.c.l.b16 %v1202
    %v3979 = vunpack.c.h.b16 %v1202
    %v3980 = vunpack.c.l.b16 %v1203
    %v3981 = vunpack.c.h.b16 %v1203
    %v3982 = vunpack.c.l.b16 %v1204
    %v3983 = vunpack.c.h.b16 %v1204
    %v3984 = vunpack.c.l.b16 %v1205
    %v3985 = vunpack.c.h.b16 %v1205
    %v3986 = vunpack.c.l.b16 %v1206
    %v3987 = vunpack.c.h.b16 %v1206
    %v3988 = vunpack.c.l.b16 %v1207
    %v3989 = vunpack.c.h.b16 %v1207
    %v3990 = vunpack.c.l.b16 %v1208
    %v3991 = vunpack.c.h.b16 %v1208
    %v3992 = vunpack.c.l.b16 %v1209
    %v3993 = vunpack.c.h.b16 %v1209
    %v3994 = vunpack.c.l.b16 %v1210
    %v3995 = vunpack.c.h.b16 %v1210
    %v3996 = vunpack.c.l.b16 %v1211
    %v3997 = vunpack.c.h.b16 %v1211
    %v3998 = vunpack.c.l.b16 %v1212
    %v3999 = vunpack.c.h.b16 %v1212
    %v4000 = vunpack.c.l.b16 %v1213
    %v4001 = vunpack.c.h.b16 %v1213
    %v4002 = vunpack.c.l.b16 %v1214
    %v4003 = vunpack.c.h.b16 %v1214
    %v4004 = vunpack.c.l.b16 %v1215
    %v4005 = vunpack.c.h.b16 %v1215
    %v4006 = vunpack.c.l.b16 %v1216
    %v4007 = vunpack.c.h.b16 %v1216
    %v4008 = vunpack.c.l.b16 %v1217
    %v4009 = vunpack.c.h.b16 %v1217
    %v4010 = vunpack.c.l.b16 %v1218
    %v4011 = vunpack.c.h.b16 %v1218
    %v4012 = vunpack.c.l.b16 %v1219
    %v4013 = vunpack.c.h.b16 %v1219
    %v4014 = vunpack.c.l.b16 %v1220
    %v4015 = vunpack.c.h.b16 %v1220
    %v4016 = vunpack.c.l.b16 %v1221
    %v4017 = vunpack.c.h.b16 %v1221
    %v4018 = vunpack.c.l.b16 %v1222
    %v4019 = vunpack.c.h.b16 %v1222
    %v4020 = vunpack.c.l.b16 %v1223
    %v4021 = vunpack.c.h.b16 %v1223
    %v4022 = vunpack.c.l.b16 %v1224
    %v4023 = vunpack.c.h.b16 %v1224
    %v4024 = vunpack.c.l.b16 %v1225
    %v4025 = vunpack.c.h.b16 %v1225
    %v4026 = vunpack.c.l.b16 %v1226
    %v4027 = vunpack.c.h.b16 %v1226
    %v4028 = vunpack.c.l.b16 %v1227
    %v4029 = vunpack.c.h.b16 %v1227
    %v4030 = vunpack.c.l.b16 %v1228
    %v4031 = vunpack.c.h.b16 %v1228
    %v4032 = vunpack.c.l.b16 %v1229
    %v4033 = vunpack.c.h.b16 %v1229
    %v4034 = vunpack.c.l.b16 %v1230
    %v4035 = vunpack.c.h.b16 %v1230
    %v4036 = vunpack.c.l.b16 %v1231
    %v4037 = vunpack.c.h.b16 %v1231
    %v4038 = vunpack.c.l.b16 %v1232
    %v4039 = vunpack.c.h.b16 %v1232
    %v4040 = vunpack.c.l.b16 %v1233
    %v4041 = vunpack.c.h.b16 %v1233
    %v4042 = vunpack.c.l.b16 %v1234
    %v4043 = vunpack.c.h.b16 %v1234
    %v4044 = vunpack.c.l.b16 %v1235
    %v4045 = vunpack.c.h.b16 %v1235
    %v4046 = vunpack.c.l.b16 %v1236
    %v4047 = vunpack.c.h.b16 %v1236
    %v4048 = vunpack.c.l.b16 %v1237
    %v4049 = vunpack.c.h.b16 %v1237
    %v4050 = vunpack.c.l.b16 %v1238
    %v4051 = vunpack.c.h.b16 %v1238
    %v4052 = vunpack.c.l.b16 %v1239
    %v4053 = vunpack.c.h.b16 %v1239
    %v4054 = vunpack.c.l.b16 %v1240
    %v4055 = vunpack.c.h.b16 %v1240
    %v4056 = vunpack.c.l.b16 %v1241
    %v4057 = vunpack.c.h.b16 %v1241
    %v4058 = vunpack.c.l.b16 %v1242
    %v4059 = vunpack.c.h.b16 %v1242
    %v4060 = vunpack.c.l.b16 %v1243
    %v4061 = vunpack.c.h.b16 %v1243
    %v4062 = vunpack.c.l.b16 %v1244
    %v4063 = vunpack.c.h.b16 %v1244
    %v4064 = vunpack.c.l.b16 %v1245
    %v4065 = vunpack.c.h.b16 %v1245
    %v4066 = vunpack.c.l.b16 %v1246
    %v4067 = vunpack.c.h.b16 %v1246
    %v4068 = vunpack.c.l.b16 %v1247
    %v4069 = vunpack.c.h.b16 %v1247
    %v4070 = vunpack.c.l.b16 %v1248
    %v4071 = vunpack.c.h.b16 %v1248
    %v4072 = vunpack.c.l.b16 %v1249
    %v4073 = vunpack.c.h.b16 %v1249
    %v4074 = vunpack.c.l.b16 %v1250
    %v4075 = vunpack.c.h.b16 %v1250
    %v4076 = vunpack.c.l.b16 %v1251
    %v4077 = vunpack.c.h.b16 %v1251
    %v4078 = vunpack.c.l.b16 %v1252
    %v4079 = vunpack.c.h.b16 %v1252
    %v4080 = vunpack.c.l.b16 %v1253
    %v4081 = vunpack.c.h.b16 %v1253
    %v4082 = vunpack.c.l.b16 %v1254
    %v4083 = vunpack.c.h.b16 %v1254
    %v4084 = vunpack.c.l.b16 %v1255
    %v4085 = vunpack.c.h.b16 %v1255
    %v4086 = vunpack.c.l.b16 %v1256
    %v4087 = vunpack.c.h.b16 %v1256
    %v4088 = vunpack.c.l.b16 %v1257
    %v4089 = vunpack.c.h.b16 %v1257
    %v4090 = vunpack.c.l.b16 %v1258
    %v4091 = vunpack.c.h.b16 %v1258
    %v4092 = vunpack.c.l.b16 %v1259
    %v4093 = vunpack.c.h.b16 %v1259
    %v4094 = vunpack.c.l.b16 %v1260
    %v4095 = vunpack.c.h.b16 %v1260
    %v4096 = vunpack.c.l.b16 %v1261
    %v4097 = vunpack.c.h.b16 %v1261
    %v4098 = vunpack.c.l.b16 %v1262
    %v4099 = vunpack.c.h.b16 %v1262
    %v4100 = vunpack.c.l.b16 %v1263
    %v4101 = vunpack.c.h.b16 %v1263
    %v4102 = vunpack.c.l.b16 %v1264
    %v4103 = vunpack.c.h.b16 %v1264
    %v4104 = vunpack.c.l.b16 %v1265
    %v4105 = vunpack.c.h.b16 %v1265
    %v4106 = vunpack.c.l.b16 %v1266
    %v4107 = vunpack.c.h.b16 %v1266
    %v4108 = vunpack.c.l.b16 %v1267
    %v4109 = vunpack.c.h.b16 %v1267
    %v4110 = vpack.c.b16 %v2226, %v2222
    %v4111 = vpack.c.b16 %v2227, %v2223
    %v4112 = vpack.c.b16 %v2228, %v2224
    %v4113 = vpack.c.b16 %v2229, %v2225
    %v4114 = vpack.c.b16 %v2234, %v2230
    %v4115 = vpack.c.b16 %v2235, %v2231
    %v4116 = vpack.c.b16 %v2236, %v2232
    %v4117 = vpack.c.b16 %v2237, %v2233
    %v4118 = vpack.c.b16 %v2242, %v2238
    %v4119 = vpack.c.b16 %v2243, %v2239
    %v4120 = vpack.c.b16 %v2244, %v2240
    %v4121 = vpack.c.b16 %v2245, %v2241
    %v4122 = vpack.c.b16 %v2250, %v2246
    %v4123 = vpack.c.b16 %v2251, %v2247
    %v4124 = vpack.c.b16 %v2252, %v2248
    %v4125 = vpack.c.b16 %v2253, %v2249
    %v4126 = vpack.c.b16 %v2258, %v2254
    %v4127 = vpack.c.b16 %v2259, %v2255
    %v4128 = vpack.c.b16 %v2260, %v2256
    %v4129 = vpack.c.b16 %v2261, %v2257
    %v4130 = vpack.c.b16 %v2266, %v2262
    %v4131 = vpack.c.b16 %v2267, %v2263
    %v4132 = vpack.c.b16 %v2268, %v2264
    %v4133 = vpack.c.b16 %v2269, %v2265
    %v4134 = vpack.c.b16 %v2274, %v2270
    %v4135 = vpack.c.b16 %v2275, %v2271
    %v4136 = vpack.c.b16 %v2276, %v2272
    %v4137 = vpack.c.b16 %v2277, %v2273
    %v4138 = vpack.c.b16 %v2282, %v2278
    %v4139 = vpack.c.b16 %v2283, %v2279
    %v4140 = vpack.c.b16 %v2284, %v2280
    %v4141 = vpack.c.b16 %v2285, %v2281
    %v4142 = vpack.c.b16 %v2290, %v2286
    %v4143 = vpack.c.b16 %v2291, %v2287
    %v4144 = vpack.c.b16 %v2292, %v2288
    %v4145 = vpack.c.b16 %v2293, %v2289
    %v4146 = vpack.c.b16 %v2298, %v2294
    %v4147 = vpack.c.b16 %v2299, %v2295
    %v4148 = vpack.c.b16 %v2300, %v2296
    %v4149 = vpack.c.b16 %v2301, %v2297
    %v4150 = vpack.c.b16 %v2306, %v2302
    %v4151 = vpack.c.b16 %v2307, %v2303
    %v4152 = vpack.c.b16 %v2308, %v2304
    %v4153 = vpack.c.b16 %v2309, %v2305
    %v4154 = vpack.c.b16 %v2314, %v2310
    %v4155 = vpack.c.b16 %v2315, %v2311
    %v4156 = vpack.c.b16 %v2316, %v2312
    %v4157 = vpack.c.b16 %v2317, %v2313
    %v4158 = vpack.c.b16 %v2322, %v2318
    %v4159 = vpack.c.b16 %v2323, %v2319
    %v4160 = vpack.c.b16 %v2324, %v2320
    %v4161 = vpack.c.b16 %v2325, %v2321
    %v4162 = vpack.c.b16 %v2330, %v2326
    %v4163 = vpack.c.b16 %v2331, %v2327
    %v4164 = vpack.c.b16 %v2332, %v2328
    %v4165 = vpack.c.b16 %v2333, %v2329
    %v4166 = vpack.c.b16 %v2338, %v2334
    %v4167 = vpack.c.b16 %v2339, %v2335
    %v4168 = vpack.c.b16 %v2340, %v2336
    %v4169 = vpack.c.b16 %v2341, %v2337
    %v4170 = vpack.c.b16 %v2346, %v2342
    %v4171 = vpack.c.b16 %v2347, %v2343
    %v4172 = vpack.c.b16 %v2348, %v2344
    %v4173 = vpack.c.b16 %v2349, %v2345
    %v4174 = vpack.c.b16 %v2354, %v2350
    %v4175 = vpack.c.b16 %v2355, %v2351
    %v4176 = vpack.c.b16 %v2356, %v2352
    %v4177 = vpack.c.b16 %v2357, %v2353
    %v4178 = vpack.c.b16 %v2362, %v2358
    %v4179 = vpack.c.b16 %v2363, %v2359
    %v4180 = vpack.c.b16 %v2364, %v2360
    %v4181 = vpack.c.b16 %v2365, %v2361
    %v4182 = vpack.c.b16 %v2370, %v2366
    %v4183 = vpack.c.b16 %v2371, %v2367
    %v4184 = vpack.c.b16 %v2372, %v2368
    %v4185 = vpack.c.b16 %v2373, %v2369
    %v4186 = vpack.c.b16 %v2378, %v2374
    %v4187 = vpack.c.b16 %v2379, %v2375
    %v4188 = vpack.c.b16 %v2380, %v2376
    %v4189 = vpack.c.b16 %v2381, %v2377
    %v4190 = vpack.c.b16 %v2386, %v2382
    %v4191 = vpack.c.b16 %v2387, %v2383
    %v4192 = vpack.c.b16 %v2388, %v2384
    %v4193 = vpack.c.b16 %v2389, %v2385
    %v4194 = vpack.c.b16 %v2394, %v2390
    %v4195 = vpack.c.b16 %v2395, %v2391
    %v4196 = vpack.c.b16 %v2396, %v2392
    %v4197 = vpack.c.b16 %v2397, %v2393
    %v4198 = vpack.c.b16 %v2402, %v2398
    %v4199 = vpack.c.b16 %v2403, %v2399
    %v4200 = vpack.c.b16 %v2404, %v2400
    %v4201 = vpack.c.b16 %v2405, %v2401
    %v4202 = vpack.c.b16 %v2410, %v2406
    %v4203 = vpack.c.b16 %v2411, %v2407
    %v4204 = vpack.c.b16 %v2412, %v2408
    %v4205 = vpack.c.b16 %v2413, %v2409
    %v4206 = vpack.c.b16 %v2418, %v2414
    %v4207 = vpack.c.b16 %v2419, %v2415
    %v4208 = vpack.c.b16 %v2420, %v2416
    %v4209 = vpack.c.b16 %v2421, %v2417
    %v4210 = vpack.c.b16 %v2426, %v2422
    %v4211 = vpack.c.b16 %v2427, %v2423
    %v4212 = vpack.c.b16 %v2428, %v2424
    %v4213 = vpack.c.b16 %v2429, %v2425
    %v4214 = vpack.c.b16 %v2434, %v2430
    %v4215 = vpack.c.b16 %v2435, %v2431
    %v4216 = vpack.c.b16 %v2436, %v2432
    %v4217 = vpack.c.b16 %v2437, %v2433
    %v4218 = vpack.c.b16 %v2442, %v2438
    %v4219 = vpack.c.b16 %v2443, %v2439
    %v4220 = vpack.c.b16 %v2444, %v2440
    %v4221 = vpack.c.b16 %v2445, %v2441
    %v4222 = vpack.c.b16 %v2450, %v2446
    %v4223 = vpack.c.b16 %v2451, %v2447
    %v4224 = vpack.c.b16 %v2452, %v2448
    %v4225 = vpack.c.b16 %v2453, %v2449
    %v4226 = vpack.c.b16 %v2458, %v2454
    %v4227 = vpack.c.b16 %v2459, %v2455
    %v4228 = vpack.c.b16 %v2460, %v2456
    %v4229 = vpack.c.b16 %v2461, %v2457
    %v4230 = vpack.c.b16 %v2466, %v2462
    %v4231 = vpack.c.b16 %v2467, %v2463
    %v4232 = vpack.c.b16 %v2468, %v2464
    %v4233 = vpack.c.b16 %v2469, %v2465
    %v4234 = vpack.c.b16 %v2474, %v2470
    %v4235 = vpack.c.b16 %v2475, %v2471
    %v4236 = vpack.c.b16 %v2476, %v2472
    %v4237 = vpack.c.b16 %v2477, %v2473
    %v4238 = vpack.c.b16 %v2482, %v2478
    %v4239 = vpack.c.b16 %v2483, %v2479
    %v4240 = vpack.c.b16 %v2484, %v2480
    %v4241 = vpack.c.b16 %v2485, %v2481
    %v4242 = vpack.c.b16 %v2490, %v2486
    %v4243 = vpack.c.b16 %v2491, %v2487
    %v4244 = vpack.c.b16 %v2492, %v2488
    %v4245 = vpack.c.b16 %v2493, %v2489
    %v4246 = vpack.c.b16 %v2498, %v2494
    %v4247 = vpack.c.b16 %v2499, %v2495
    %v4248 = vpack.c.b16 %v2500, %v2496
    %v4249 = vpack.c.b16 %v2501, %v2497
    %v4250 = vpack.c.b16 %v2506, %v2502
    %v4251 = vpack.c.b16 %v2507, %v2503
    %v4252 = vpack.c.b16 %v2508, %v2504
    %v4253 = vpack.c.b16 %v2509, %v2505
    %v4254 = vpack.c.b16 %v2514, %v2510
    %v4255 = vpack.c.b16 %v2515, %v2511
    %v4256 = vpack.c.b16 %v2516, %v2512
    %v4257 = vpack.c.b16 %v2517, %v2513
    %v4258 = vpack.c.b16 %v2522, %v2518
    %v4259 = vpack.c.b16 %v2523, %v2519
    %v4260 = vpack.c.b16 %v2524, %v2520
    %v4261 = vpack.c.b16 %v2525, %v2521
    %v4262 = vpack.c.b16 %v2530, %v2526
    %v4263 = vpack.c.b16 %v2531, %v2527
    %v4264 = vpack.c.b16 %v2532, %v2528
    %v4265 = vpack.c.b16 %v2533, %v2529
    %v4266 = vpack.c.b16 %v2538, %v2534
    %v4267 = vpack.c.b16 %v2539, %v2535
    %v4268 = vpack.c.b16 %v2540, %v2536
    %v4269 = vpack.c.b16 %v2541, %v2537
    %v4270 = vpack.c.b16 %v2546, %v2542
    %v4271 = vpack.c.b16 %v2547, %v2543
    %v4272 = vpack.c.b16 %v2548, %v2544
    %v4273 = vpack.c.b16 %v2549, %v2545
    %v4274 = vpack.c.b16 %v2554, %v2550
    %v4275 = vpack.c.b16 %v2555, %v2551
    %v4276 = vpack.c.b16 %v2556, %v2552
    %v4277 = vpack.c.b16 %v2557, %v2553
    %v4278 = vpack.c.b16 %v2562, %v2558
    %v4279 = vpack.c.b16 %v2563, %v2559
    %v4280 = vpack.c.b16 %v2564, %v2560
    %v4281 = vpack.c.b16 %v2565, %v2561
    %v4282 = vpack.c.b16 %v2570, %v2566
    %v4283 = vpack.c.b16 %v2571, %v2567
    %v4284 = vpack.c.b16 %v2572, %v2568
    %v4285 = vpack.c.b16 %v2573, %v2569
    %v4286 = vpack.c.b16 %v2578, %v2574
    %v4287 = vpack.c.b16 %v2579, %v2575
    %v4288 = vpack.c.b16 %v2580, %v2576
    %v4289 = vpack.c.b16 %v2581, %v2577
    %v4290 = vpack.c.b16 %v2586, %v2582
    %v4291 = vpack.c.b16 %v2587, %v2583
    %v4292 = vpack.c.b16 %v2588, %v2584
    %v4293 = vpack.c.b16 %v2589, %v2585
    %v4294 = vpack.c.b16 %v2594, %v2590
    %v4295 = vpack.c.b16 %v2595, %v2591
    %v4296 = vpack.c.b16 %v2596, %v2592
    %v4297 = vpack.c.b16 %v2597, %v2593
    %v4298 = vpack.c.b16 %v2602, %v2598
    %v4299 = vpack.c.b16 %v2603, %v2599
    %v4300 = vpack.c.b16 %v2604, %v2600
    %v4301 = vpack.c.b16 %v2605, %v2601
    %v4302 = vpack.c.b16 %v2610, %v2606
    %v4303 = vpack.c.b16 %v2611, %v2607
    %v4304 = vpack.c.b16 %v2612, %v2608
    %v4305 = vpack.c.b16 %v2613, %v2609
    %v4306 = vpack.c.b16 %v2618, %v2614
    %v4307 = vpack.c.b16 %v2619, %v2615
    %v4308 = vpack.c.b16 %v2620, %v2616
    %v4309 = vpack.c.b16 %v2621, %v2617
    %v4310 = vpack.c.b16 %v2626, %v2622
    %v4311 = vpack.c.b16 %v2627, %v2623
    %v4312 = vpack.c.b16 %v2628, %v2624
    %v4313 = vpack.c.b16 %v2629, %v2625
    %v4314 = vpack.c.b16 %v2634, %v2630
    %v4315 = vpack.c.b16 %v2635, %v2631
    %v4316 = vpack.c.b16 %v2636, %v2632
    %v4317 = vpack.c.b16 %v2637, %v2633
    %v4318 = vpack.c.b16 %v2642, %v2638
    %v4319 = vpack.c.b16 %v2643, %v2639
    %v4320 = vpack.c.b16 %v2644, %v2640
    %v4321 = vpack.c.b16 %v2645, %v2641
    %v4322 = vpack.c.b16 %v2650, %v2646
    %v4323 = vpack.c.b16 %v2651, %v2647
    %v4324 = vpack.c.b16 %v2652, %v2648
    %v4325 = vpack.c.b16 %v2653, %v2649
    %v4326 = vpack.c.b16 %v2658, %v2654
    %v4327 = vpack.c.b16 %v2659, %v2655
    %v4328 = vpack.c.b16 %v2660, %v2656
    %v4329 = vpack.c.b16 %v2661, %v2657
    %v4330 = vpack.c.b16 %v2666, %v2662
    %v4331 = vpack.c.b16 %v2667, %v2663
    %v4332 = vpack.c.b16 %v2668, %v2664
    %v4333 = vpack.c.b16 %v2669, %v2665
    %v4334 = vpack.c.b16 %v2674, %v2670
    %v4335 = vpack.c.b16 %v2675, %v2671
    %v4336 = vpack.c.b16 %v2676, %v2672
    %v4337 = vpack.c.b16 %v2677, %v2673
    %v4338 = vpack.c.b16 %v2682, %v2678
    %v4339 = vpack.c.b16 %v2683, %v2679
    %v4340 = vpack.c.b16 %v2684, %v2680
    %v4341 = vpack.c.b16 %v2685, %v2681
    %v4342 = vpack.c.b16 %v2690, %v2686
    %v4343 = vpack.c.b16 %v2691, %v2687
    %v4344 = vpack.c.b16 %v2692, %v2688
    %v4345 = vpack.c.b16 %v2693, %v2689
    %v4346 = vpack.c.b16 %v2698, %v2694
    %v4347 = vpack.c.b16 %v2699, %v2695
    %v4348 = vpack.c.b16 %v2700, %v2696
    %v4349 = vpack.c.b16 %v2701, %v2697
    %v4350 = vpack.c.b16 %v2706, %v2702
    %v4351 = vpack.c.b16 %v2707, %v2703
    %v4352 = vpack.c.b16 %v2708, %v2704
    %v4353 = vpack.c.b16 %v2709, %v2705
    %v4354 = vpack.c.b16 %v2714, %v2710
    %v4355 = vpack.c.b16 %v2715, %v2711
    %v4356 = vpack.c.b16 %v2716, %v2712
    %v4357 = vpack.c.b16 %v2717, %v2713
    %v4358 = vpack.c.b16 %v2722, %v2718
    %v4359 = vpack.c.b16 %v2723, %v2719
    %v4360 = vpack.c.b16 %v2724, %v2720
    %v4361 = vpack.c.b16 %v2725, %v2721
    %v4362 = vpack.c.b16 %v2730, %v2726
    %v4363 = vpack.c.b16 %v2731, %v2727
    %v4364 = vpack.c.b16 %v2732, %v2728
    %v4365 = vpack.c.b16 %v2733, %v2729
    %v4366 = vpack.c.b16 %v2738, %v2734
    %v4367 = vpack.c.b16 %v2739, %v2735
    %v4368 = vpack.c.b16 %v2740, %v2736
    %v4369 = vpack.c.b16 %v2741, %v2737
    %v4370 = vpack.c.b16 %v2746, %v2742
    %v4371 = vpack.c.b16 %v2747, %v2743
    %v4372 = vpack.c.b16 %v2748, %v2744
    %v4373 = vpack.c.b16 %v2749, %v2745
    %v4374 = vpack.c.b16 %v2754, %v2750
    %v4375 = vpack.c.b16 %v2755, %v2751
    %v4376 = vpack.c.b16 %v2756, %v2752
    %v4377 = vpack.c.b16 %v2757, %v2753
    %v4378 = vpack.c.b16 %v2762, %v2758
    %v4379 = vpack.c.b16 %v2763, %v2759
    %v4380 = vpack.c.b16 %v2764, %v2760
    %v4381 = vpack.c.b16 %v2765, %v2761
    %v4382 = vpack.c.b16 %v2770, %v2766
    %v4383 = vpack.c.b16 %v2771, %v2767
    %v4384 = vpack.c.b16 %v2772, %v2768
    %v4385 = vpack.c.b16 %v2773, %v2769
    %v4386 = vpack.c.b16 %v2778, %v2774
    %v4387 = vpack.c.b16 %v2779, %v2775
    %v4388 = vpack.c.b16 %v2780, %v2776
    %v4389 = vpack.c.b16 %v2781, %v2777
    %v4390 = vpack.c.b16 %v2786, %v2782
    %v4391 = vpack.c.b16 %v2787, %v2783
    %v4392 = vpack.c.b16 %v2788, %v2784
    %v4393 = vpack.c.b16 %v2789, %v2785
    %v4394 = vpack.c.b16 %v2794, %v2790
    %v4395 = vpack.c.b16 %v2795, %v2791
    %v4396 = vpack.c.b16 %v2796, %v2792
    %v4397 = vpack.c.b16 %v2797, %v2793
    %v4398 = vpack.c.b16 %v2802, %v2798
    %v4399 = vpack.c.b16 %v2803, %v2799
    %v4400 = vpack.c.b16 %v2804, %v2800
    %v4401 = vpack.c.b16 %v2805, %v2801
    %v4402 = vpack.c.b16 %v2810, %v2806
    %v4403 = vpack.c.b16 %v2811, %v2807
    %v4404 = vpack.c.b16 %v2812, %v2808
    %v4405 = vpack.c.b16 %v2813, %v2809
    %v4406 = vpack.c.b16 %v2818, %v2814
    %v4407 = vpack.c.b16 %v2819, %v2815
    %v4408 = vpack.c.b16 %v2820, %v2816
    %v4409 = vpack.c.b16 %v2821, %v2817
    %v4410 = vpack.c.b16 %v2826, %v2822
    %v4411 = vpack.c.b16 %v2827, %v2823
    %v4412 = vpack.c.b16 %v2828, %v2824
    %v4413 = vpack.c.b16 %v2829, %v2825
    %v4414 = vpack.c.b16 %v2834, %v2830
    %v4415 = vpack.c.b16 %v2835, %v2831
    %v4416 = vpack.c.b16 %v2836, %v2832
    %v4417 = vpack.c.b16 %v2837, %v2833
    %v4418 = vpack.c.b16 %v2842, %v2838
    %v4419 = vpack.c.b16 %v2843, %v2839
    %v4420 = vpack.c.b16 %v2844, %v2840
    %v4421 = vpack.c.b16 %v2845, %v2841
    %v4422 = vpack.c.b16 %v2850, %v2846
    %v4423 = vpack.c.b16 %v2851, %v2847
    %v4424 = vpack.c.b16 %v2852, %v2848
    %v4425 = vpack.c.b16 %v2853, %v2849
    %v4426 = vpack.c.b16 %v2858, %v2854
    %v4427 = vpack.c.b16 %v2859, %v2855
    %v4428 = vpack.c.b16 %v2860, %v2856
    %v4429 = vpack.c.b16 %v2861, %v2857
    %v4430 = vpack.c.b16 %v2866, %v2862
    %v4431 = vpack.c.b16 %v2867, %v2863
    %v4432 = vpack.c.b16 %v2868, %v2864
    %v4433 = vpack.c.b16 %v2869, %v2865
    %v4434 = vpack.c.b16 %v2874, %v2870
    %v4435 = vpack.c.b16 %v2875, %v2871
    %v4436 = vpack.c.b16 %v2876, %v2872
    %v4437 = vpack.c.b16 %v2877, %v2873
    %v4438 = vpack.c.b16 %v2882, %v2878
    %v4439 = vpack.c.b16 %v2883, %v2879
    %v4440 = vpack.c.b16 %v2884, %v2880
    %v4441 = vpack.c.b16 %v2885, %v2881
    %v4442 = vpack.c.b16 %v2890, %v2886
    %v4443 = vpack.c.b16 %v2891, %v2887
    %v4444 = vpack.c.b16 %v2892, %v2888
    %v4445 = vpack.c.b16 %v2893, %v2889
    %v4446 = vpack.c.b16 %v2898, %v2894
    %v4447 = vpack.c.b16 %v2899, %v2895
    %v4448 = vpack.c.b16 %v2900, %v2896
    %v4449 = vpack.c.b16 %v2901, %v2897
    %v4450 = vpack.c.b16 %v2906, %v2902
    %v4451 = vpack.c.b16 %v2907, %v2903
    %v4452 = vpack.c.b16 %v2908, %v2904
    %v4453 = vpack.c.b16 %v2909, %v2905
    %v4454 = vpack.c.b16 %v2914, %v2910
    %v4455 = vpack.c.b16 %v2915, %v2911
    %v4456 = vpack.c.b16 %v2916, %v2912
    %v4457 = vpack.c.b16 %v2917, %v2913
    %v4458 = vpack.c.b16 %v2922, %v2918
    %v4459 = vpack.c.b16 %v2923, %v2919
    %v4460 = vpack.c.b16 %v2924, %v2920
    %v4461 = vpack.c.b16 %v2925, %v2921
    %v4462 = vpack.c.b16 %v2930, %v2926
    %v4463 = vpack.c.b16 %v2931, %v2927
    %v4464 = vpack.c.b16 %v2932, %v2928
    %v4465 = vpack.c.b16 %v2933, %v2929
    %v4466 = vpack.c.b16 %v2938, %v2934
    %v4467 = vpack.c.b16 %v2939, %v2935
    %v4468 = vpack.c.b16 %v2940, %v2936
    %v4469 = vpack.c.b16 %v2941, %v2937
    %v4470 = vpack.c.b16 %v2946, %v2942
    %v4471 = vpack.c.b16 %v2947, %v2943
    %v4472 = vpack.c.b16 %v2948, %v2944
    %v4473 = vpack.c.b16 %v2949, %v2945
    %v4474 = vpack.c.b16 %v2954, %v2950
    %v4475 = vpack.c.b16 %v2955, %v2951
    %v4476 = vpack.c.b16 %v2956, %v2952
    %v4477 = vpack.c.b16 %v2957, %v2953
    %v4478 = vpack.c.b16 %v2962, %v2958
    %v4479 = vpack.c.b16 %v2963, %v2959
    %v4480 = vpack.c.b16 %v2964, %v2960
    %v4481 = vpack.c.b16 %v2965, %v2961
    %v4482 = vpack.c.b16 %v2970, %v2966
    %v4483 = vpack.c.b16 %v2971, %v2967
    %v4484 = vpack.c.b16 %v2972, %v2968
    %v4485 = vpack.c.b16 %v2973, %v2969
    %v4486 = vpack.c.b16 %v2978, %v2974
    %v4487 = vpack.c.b16 %v2979, %v2975
    %v4488 = vpack.c.b16 %v2980, %v2976
    %v4489 = vpack.c.b16 %v2981, %v2977
    %v4490 = vpack.c.b16 %v2986, %v2982
    %v4491 = vpack.c.b16 %v2987, %v2983
    %v4492 = vpack.c.b16 %v2988, %v2984
    %v4493 = vpack.c.b16 %v2989, %v2985
    %v4494 = vpack.c.b16 %v2994, %v2990
    %v4495 = vpack.c.b16 %v2995, %v2991
    %v4496 = vpack.c.b16 %v2996, %v2992
    %v4497 = vpack.c.b16 %v2997, %v2993
    %v4498 = vpack.c.b16 %v3002, %v2998
    %v4499 = vpack.c.b16 %v3003, %v2999
    %v4500 = vpack.c.b16 %v3004, %v3000
    %v4501 = vpack.c.b16 %v3005, %v3001
    %v4502 = vpack.c.b16 %v3010, %v3006
    %v4503 = vpack.c.b16 %v3011, %v3007
    %v4504 = vpack.c.b16 %v3012, %v3008
    %v4505 = vpack.c.b16 %v3013, %v3009
    %v4506 = vpack.c.b16 %v3018, %v3014
    %v4507 = vpack.c.b16 %v3019, %v3015
    %v4508 = vpack.c.b16 %v3020, %v3016
    %v4509 = vpack.c.b16 %v3021, %v3017
    %v4510 = vpack.c.b16 %v3026, %v3022
    %v4511 = vpack.c.b16 %v3027, %v3023
    %v4512 = vpack.c.b16 %v3028, %v3024
    %v4513 = vpack.c.b16 %v3029, %v3025
    %v4514 = vpack.c.b16 %v3034, %v3030
    %v4515 = vpack.c.b16 %v3035, %v3031
    %v4516 = vpack.c.b16 %v3036, %v3032
    %v4517 = vpack.c.b16 %v3037, %v3033
    %v4518 = vpack.c.b16 %v3042, %v3038
    %v4519 = vpack.c.b16 %v3043, %v3039
    %v4520 = vpack.c.b16 %v3044, %v3040
    %v4521 = vpack.c.b16 %v3045, %v3041
    %v4522 = vpack.c.b16 %v3050, %v3046
    %v4523 = vpack.c.b16 %v3051, %v3047
    %v4524 = vpack.c.b16 %v3052, %v3048
    %v4525 = vpack.c.b16 %v3053, %v3049
    %v4526 = vpack.c.b16 %v3058, %v3054
    %v4527 = vpack.c.b16 %v3059, %v3055
    %v4528 = vpack.c.b16 %v3060, %v3056
    %v4529 = vpack.c.b16 %v3061, %v3057
    %v4530 = vpack.c.b16 %v3066, %v3062
    %v4531 = vpack.c.b16 %v3067, %v3063
    %v4532 = vpack.c.b16 %v3068, %v3064
    %v4533 = vpack.c.b16 %v3069, %v3065
    %v4534 = vpack.c.b16 %v3074, %v3070
    %v4535 = vpack.c.b16 %v3075, %v3071
    %v4536 = vpack.c.b16 %v3076, %v3072
    %v4537 = vpack.c.b16 %v3077, %v3073
    %v4538 = vpack.c.b16 %v3082, %v3078
    %v4539 = vpack.c.b16 %v3083, %v3079
    %v4540 = vpack.c.b16 %v3084, %v3080
    %v4541 = vpack.c.b16 %v3085, %v3081
    %v4542 = vpack.c.b16 %v3090, %v3086
    %v4543 = vpack.c.b16 %v3091, %v3087
    %v4544 = vpack.c.b16 %v3092, %v3088
    %v4545 = vpack.c.b16 %v3093, %v3089
    %v4546 = vpack.c.b16 %v3098, %v3094
    %v4547 = vpack.c.b16 %v3099, %v3095
    %v4548 = vpack.c.b16 %v3100, %v3096
    %v4549 = vpack.c.b16 %v3101, %v3097
    %v4550 = vpack.c.b16 %v3106, %v3102
    %v4551 = vpack.c.b16 %v3107, %v3103
    %v4552 = vpack.c.b16 %v3108, %v3104
    %v4553 = vpack.c.b16 %v3109, %v3105
    %v4554 = vpack.c.b16 %v3114, %v3110
    %v4555 = vpack.c.b16 %v3115, %v3111
    %v4556 = vpack.c.b16 %v3116, %v3112
    %v4557 = vpack.c.b16 %v3117, %v3113
    %v4558 = vpack.c.b16 %v3122, %v3118
    %v4559 = vpack.c.b16 %v3123, %v3119
    %v4560 = vpack.c.b16 %v3124, %v3120
    %v4561 = vpack.c.b16 %v3125, %v3121
    %v4562 = vpack.c.b16 %v3130, %v3126
    %v4563 = vpack.c.b16 %v3131, %v3127
    %v4564 = vpack.c.b16 %v3132, %v3128
    %v4565 = vpack.c.b16 %v3133, %v3129
    %v4566 = vpack.c.b16 %v3138, %v3134
    %v4567 = vpack.c.b16 %v3139, %v3135
    %v4568 = vpack.c.b16 %v3140, %v3136
    %v4569 = vpack.c.b16 %v3141, %v3137
    %v4570 = vpack.c.b16 %v3146, %v3142
    %v4571 = vpack.c.b16 %v3147, %v3143
    %v4572 = vpack.c.b16 %v3148, %v3144
    %v4573 = vpack.c.b16 %v3149, %v3145
    %v4574 = vpack.c.b16 %v3154, %v3150
    %v4575 = vpack.c.b16 %v3155, %v3151
    %v4576 = vpack.c.b16 %v3156, %v3152
    %v4577 = vpack.c.b16 %v3157, %v3153
    %v4578 = vpack.c.b16 %v3162, %v3158
    %v4579 = vpack.c.b16 %v3163, %v3159
    %v4580 = vpack.c.b16 %v3164, %v3160
    %v4581 = vpack.c.b16 %v3165, %v3161
    %v4582 = vpack.c.b16 %v3170, %v3166
    %v4583 = vpack.c.b16 %v3171, %v3167
    %v4584 = vpack.c.b16 %v3172, %v3168
    %v4585 = vpack.c.b16 %v3173, %v3169
    %v4586 = vpack.c.b16 %v3178, %v3174
    %v4587 = vpack.c.b16 %v3179, %v3175
    %v4588 = vpack.c.b16 %v3180, %v3176
    %v4589 = vpack.c.b16 %v3181, %v3177
    %v4590 = vpack.c.b16 %v3186, %v3182
    %v4591 = vpack.c.b16 %v3187, %v3183
    %v4592 = vpack.c.b16 %v3188, %v3184
    %v4593 = vpack.c.b16 %v3189, %v3185
    %v4594 = vpack.c.b16 %v3194, %v3190
    %v4595 = vpack.c.b16 %v3195, %v3191
    %v4596 = vpack.c.b16 %v3196, %v3192
    %v4597 = vpack.c.b16 %v3197, %v3193
    %v4598 = vpack.c.b16 %v3202, %v3198
    %v4599 = vpack.c.b16 %v3203, %v3199
    %v4600 = vpack.c.b16 %v3204, %v3200
    %v4601 = vpack.c.b16 %v3205, %v3201
    %v4602 = vpack.c.b16 %v3210, %v3206
    %v4603 = vpack.c.b16 %v3211, %v3207
    %v4604 = vpack.c.b16 %v3212, %v3208
    %v4605 = vpack.c.b16 %v3213, %v3209
    %v4606 = vpack.c.b16 %v3218, %v3214
    %v4607 = vpack.c.b16 %v3219, %v3215
    %v4608 = vpack.c.b16 %v3220, %v3216
    %v4609 = vpack.c.b16 %v3221, %v3217
    %v4610 = vpack.c.b16 %v3226, %v3222
    %v4611 = vpack.c.b16 %v3227, %v3223
    %v4612 = vpack.c.b16 %v3228, %v3224
    %v4613 = vpack.c.b16 %v3229, %v3225
    %v4614 = vpack.c.b16 %v3234, %v3230
    %v4615 = vpack.c.b16 %v3235, %v3231
    %v4616 = vpack.c.b16 %v3236, %v3232
    %v4617 = vpack.c.b16 %v3237, %v3233
    %v4618 = vpack.c.b16 %v3242, %v3238
    %v4619 = vpack.c.b16 %v3243, %v3239
    %v4620 = vpack.c.b16 %v3244, %v3240
    %v4621 = vpack.c.b16 %v3245, %v3241
    %v4622 = vpack.c.b16 %v3250, %v3246
    %v4623 = vpack.c.b16 %v3251, %v3247
    %v4624 = vpack.c.b16 %v3252, %v3248
    %v4625 = vpack.c.b16 %v3253, %v3249
    %v4626 = vpack.c.b16 %v3258, %v3254
    %v4627 = vpack.c.b16 %v3259, %v3255
    %v4628 = vpack.c.b16 %v3260, %v3256
    %v4629 = vpack.c.b16 %v3261, %v3257
    %v4630 = vpack.c.b16 %v3266, %v3262
    %v4631 = vpack.c.b16 %v3267, %v3263
    %v4632 = vpack.c.b16 %v3268, %v3264
    %v4633 = vpack.c.b16 %v3269, %v3265
    %v4634 = vpack.c.b16 %v3274, %v3270
    %v4635 = vpack.c.b16 %v3275, %v3271
    %v4636 = vpack.c.b16 %v3276, %v3272
    %v4637 = vpack.c.b16 %v3277, %v3273
    %v4638 = vpack.c.b16 %v3282, %v3278
    %v4639 = vpack.c.b16 %v3283, %v3279
    %v4640 = vpack.c.b16 %v3284, %v3280
    %v4641 = vpack.c.b16 %v3285, %v3281
    %v4642 = vpack.c.b16 %v3290, %v3286
    %v4643 = vpack.c.b16 %v3291, %v3287
    %v4644 = vpack.c.b16 %v3292, %v3288
    %v4645 = vpack.c.b16 %v3293, %v3289
    %v4646 = vpack.c.b16 %v3298, %v3294
    %v4647 = vpack.c.b16 %v3299, %v3295
    %v4648 = vpack.c.b16 %v3300, %v3296
    %v4649 = vpack.c.b16 %v3301, %v3297
    %v4650 = vpack.c.b16 %v3306, %v3302
    %v4651 = vpack.c.b16 %v3307, %v3303
    %v4652 = vpack.c.b16 %v3308, %v3304
    %v4653 = vpack.c.b16 %v3309, %v3305
    %v4654 = vpack.c.b16 %v3314, %v3310
    %v4655 = vpack.c.b16 %v3315, %v3311
    %v4656 = vpack.c.b16 %v3316, %v3312
    %v4657 = vpack.c.b16 %v3317, %v3313
    %v4658 = vpack.c.b16 %v3322, %v3318
    %v4659 = vpack.c.b16 %v3323, %v3319
    %v4660 = vpack.c.b16 %v3324, %v3320
    %v4661 = vpack.c.b16 %v3325, %v3321
    %v4662 = vpack.c.b16 %v3330, %v3326
    %v4663 = vpack.c.b16 %v3331, %v3327
    %v4664 = vpack.c.b16 %v3332, %v3328
    %v4665 = vpack.c.b16 %v3333, %v3329
    %v4666 = vpack.c.b16 %v3338, %v3334
    %v4667 = vpack.c.b16 %v3339, %v3335
    %v4668 = vpack.c.b16 %v3340, %v3336
    %v4669 = vpack.c.b16 %v3341, %v3337
    %v4670 = vpack.c.b16 %v3346, %v3342
    %v4671 = vpack.c.b16 %v3347, %v3343
    %v4672 = vpack.c.b16 %v3348, %v3344
    %v4673 = vpack.c.b16 %v3349, %v3345
    %v4674 = vpack.c.b16 %v3354, %v3350
    %v4675 = vpack.c.b16 %v3355, %v3351
    %v4676 = vpack.c.b16 %v3356, %v3352
    %v4677 = vpack.c.b16 %v3357, %v3353
    %v4678 = vpack.c.b16 %v3362, %v3358
    %v4679 = vpack.c.b16 %v3363, %v3359
    %v4680 = vpack.c.b16 %v3364, %v3360
    %v4681 = vpack.c.b16 %v3365, %v3361
    %v4682 = vpack.c.b16 %v3370, %v3366
    %v4683 = vpack.c.b16 %v3371, %v3367
    %v4684 = vpack.c.b16 %v3372, %v3368
    %v4685 = vpack.c.b16 %v3373, %v3369
    %v4686 = vpack.c.b16 %v3378, %v3374
    %v4687 = vpack.c.b16 %v3379, %v3375
    %v4688 = vpack.c.b16 %v3380, %v3376
    %v4689 = vpack.c.b16 %v3381, %v3377
    %v4690 = vpack.c.b16 %v3386, %v3382
    %v4691 = vpack.c.b16 %v3387, %v3383
    %v4692 = vpack.c.b16 %v3388, %v3384
    %v4693 = vpack.c.b16 %v3389, %v3385
    %v4694 = vpack.c.b16 %v3394, %v3390
    %v4695 = vpack.c.b16 %v3395, %v3391
    %v4696 = vpack.c.b16 %v3396, %v3392
    %v4697 = vpack.c.b16 %v3397, %v3393
    %v4698 = vpack.c.b16 %v3402, %v3398
    %v4699 = vpack.c.b16 %v3403, %v3399
    %v4700 = vpack.c.b16 %v3404, %v3400
    %v4701 = vpack.c.b16 %v3405, %v3401
    %v4702 = vpack.c.b16 %v3410, %v3406
    %v4703 = vpack.c.b16 %v3411, %v3407
    %v4704 = vpack.c.b16 %v3412, %v3408
    %v4705 = vpack.c.b16 %v3413, %v3409
    %v4706 = vpack.c.b16 %v3418, %v3414
    %v4707 = vpack.c.b16 %v3419, %v3415
    %v4708 = vpack.c.b16 %v3420, %v3416
    %v4709 = vpack.c.b16 %v3421, %v3417
    %v4710 = vpack.c.b16 %v3426, %v3422
    %v4711 = vpack.c.b16 %v3427, %v3423
    %v4712 = vpack.c.b16 %v3428, %v3424
    %v4713 = vpack.c.b16 %v3429, %v3425
    %v4714 = vpack.c.b16 %v3434, %v3430
    %v4715 = vpack.c.b16 %v3435, %v3431
    %v4716 = vpack.c.b16 %v3436, %v3432
    %v4717 = vpack.c.b16 %v3437, %v3433
    %v4718 = vpack.c.b16 %v3442, %v3438
    %v4719 = vpack.c.b16 %v3443, %v3439
    %v4720 = vpack.c.b16 %v3444, %v3440
    %v4721 = vpack.c.b16 %v3445, %v3441
    %v4722 = vpack.c.b16 %v3450, %v3446
    %v4723 = vpack.c.b16 %v3451, %v3447
    %v4724 = vpack.c.b16 %v3452, %v3448
    %v4725 = vpack.c.b16 %v3453, %v3449
    %v4726 = vpack.c.b16 %v3458, %v3454
    %v4727 = vpack.c.b16 %v3459, %v3455
    %v4728 = vpack.c.b16 %v3460, %v3456
    %v4729 = vpack.c.b16 %v3461, %v3457
    %v4730 = vpack.c.b16 %v3466, %v3462
    %v4731 = vpack.c.b16 %v3467, %v3463
    %v4732 = vpack.c.b16 %v3468, %v3464
    %v4733 = vpack.c.b16 %v3469, %v3465
    %v4734 = vpack.c.b16 %v3474, %v3470
    %v4735 = vpack.c.b16 %v3475, %v3471
    %v4736 = vpack.c.b16 %v3476, %v3472
    %v4737 = vpack.c.b16 %v3477, %v3473
    %v4738 = vpack.c.b16 %v3482, %v3478
    %v4739 = vpack.c.b16 %v3483, %v3479
    %v4740 = vpack.c.b16 %v3484, %v3480
    %v4741 = vpack.c.b16 %v3485, %v3481
    %v4742 = vpack.c.b16 %v3490, %v3486
    %v4743 = vpack.c.b16 %v3491, %v3487
    %v4744 = vpack.c.b16 %v3492, %v3488
    %v4745 = vpack.c.b16 %v3493, %v3489
    %v4746 = vpack.c.b16 %v3498, %v3494
    %v4747 = vpack.c.b16 %v3499, %v3495
    %v4748 = vpack.c.b16 %v3500, %v3496
    %v4749 = vpack.c.b16 %v3501, %v3497
    %v4750 = vpack.c.b16 %v3506, %v3502
    %v4751 = vpack.c.b16 %v3507, %v3503
    %v4752 = vpack.c.b16 %v3508, %v3504
    %v4753 = vpack.c.b16 %v3509, %v3505
    %v4754 = vpack.c.b16 %v3514, %v3510
    %v4755 = vpack.c.b16 %v3515, %v3511
    %v4756 = vpack.c.b16 %v3516, %v3512
    %v4757 = vpack.c.b16 %v3517, %v3513
    %v4758 = vpack.c.b16 %v3522, %v3518
    %v4759 = vpack.c.b16 %v3523, %v3519
    %v4760 = vpack.c.b16 %v3524, %v3520
    %v4761 = vpack.c.b16 %v3525, %v3521
    %v4762 = vpack.c.b16 %v3530, %v3526
    %v4763 = vpack.c.b16 %v3531, %v3527
    %v4764 = vpack.c.b16 %v3532, %v3528
    %v4765 = vpack.c.b16 %v3533, %v3529
    %v4766 = vpack.c.b16 %v3538, %v3534
    %v4767 = vpack.c.b16 %v3539, %v3535
    %v4768 = vpack.c.b16 %v3540, %v3536
    %v4769 = vpack.c.b16 %v3541, %v3537
    %v4770 = vpack.c.b16 %v3546, %v3542
    %v4771 = vpack.c.b16 %v3547, %v3543
    %v4772 = vpack.c.b16 %v3548, %v3544
    %v4773 = vpack.c.b16 %v3549, %v3545
    %v4774 = vpack.c.b16 %v3554, %v3550
    %v4775 = vpack.c.b16 %v3555, %v3551
    %v4776 = vpack.c.b16 %v3556, %v3552
    %v4777 = vpack.c.b16 %v3557, %v3553
    %v4778 = vpack.c.b16 %v3562, %v3558
    %v4779 = vpack.c.b16 %v3563, %v3559
    %v4780 = vpack.c.b16 %v3564, %v3560
    %v4781 = vpack.c.b16 %v3565, %v3561
    %v4782 = vpack.c.b16 %v3570, %v3566
    %v4783 = vpack.c.b16 %v3571, %v3567
    %v4784 = vpack.c.b16 %v3572, %v3568
    %v4785 = vpack.c.b16 %v3573, %v3569
    %v4786 = vpack.c.b16 %v3578, %v3574
    %v4787 = vpack.c.b16 %v3579, %v3575
    %v4788 = vpack.c.b16 %v3580, %v3576
    %v4789 = vpack.c.b16 %v3581, %v3577
    %v4790 = vpack.c.b16 %v3586, %v3582
    %v4791 = vpack.c.b16 %v3587, %v3583
    %v4792 = vpack.c.b16 %v3588, %v3584
    %v4793 = vpack.c.b16 %v3589, %v3585
    %v4794 = vpack.c.b16 %v3594, %v3590
    %v4795 = vpack.c.b16 %v3595, %v3591
    %v4796 = vpack.c.b16 %v3596, %v3592
    %v4797 = vpack.c.b16 %v3597, %v3593
    %v4798 = vpack.c.b16 %v3602, %v3598
    %v4799 = vpack.c.b16 %v3603, %v3599
    %v4800 = vpack.c.b16 %v3604, %v3600
    %v4801 = vpack.c.b16 %v3605, %v3601
    %v4802 = vpack.c.b16 %v3610, %v3606
    %v4803 = vpack.c.b16 %v3611, %v3607
    %v4804 = vpack.c.b16 %v3612, %v3608
    %v4805 = vpack.c.b16 %v3613, %v3609
    %v4806 = vpack.c.b16 %v3618, %v3614
    %v4807 = vpack.c.b16 %v3619, %v3615
    %v4808 = vpack.c.b16 %v3620, %v3616
    %v4809 = vpack.c.b16 %v3621, %v3617
    %v4810 = vpack.c.b16 %v3626, %v3622
    %v4811 = vpack.c.b16 %v3627, %v3623
    %v4812 = vpack.c.b16 %v3628, %v3624
    %v4813 = vpack.c.b16 %v3629, %v3625
    %v4814 = vpack.c.b16 %v3634, %v3630
    %v4815 = vpack.c.b16 %v3635, %v3631
    %v4816 = vpack.c.b16 %v3636, %v3632
    %v4817 = vpack.c.b16 %v3637, %v3633
    %v4818 = vpack.c.b16 %v3642, %v3638
    %v4819 = vpack.c.b16 %v3643, %v3639
    %v4820 = vpack.c.b16 %v3644, %v3640
    %v4821 = vpack.c.b16 %v3645, %v3641
    %v4822 = vpack.c.b16 %v3650, %v3646
    %v4823 = vpack.c.b16 %v3651, %v3647
    %v4824 = vpack.c.b16 %v3652, %v3648
    %v4825 = vpack.c.b16 %v3653, %v3649
    %v4826 = vpack.c.b16 %v3658, %v3654
    %v4827 = vpack.c.b16 %v3659, %v3655
    %v4828 = vpack.c.b16 %v3660, %v3656
    %v4829 = vpack.c.b16 %v3661, %v3657
    %v4830 = vpack.c.b16 %v3666, %v3662
    %v4831 = vpack.c.b16 %v3667, %v3663
    %v4832 = vpack.c.b16 %v3668, %v3664
    %v4833 = vpack.c.b16 %v3669, %v3665
    %v4834 = vpack.c.b16 %v3674, %v3670
    %v4835 = vpack.c.b16 %v3675, %v3671
    %v4836 = vpack.c.b16 %v3676, %v3672
    %v4837 = vpack.c.b16 %v3677, %v3673
    %v4838 = vpack.c.b16 %v3682, %v3678
    %v4839 = vpack.c.b16 %v3683, %v3679
    %v4840 = vpack.c.b16 %v3684, %v3680
    %v4841 = vpack.c.b16 %v3685, %v3681
    %v4842 = vpack.c.b16 %v3690, %v3686
    %v4843 = vpack.c.b16 %v3691, %v3687
    %v4844 = vpack.c.b16 %v3692, %v3688
    %v4845 = vpack.c.b16 %v3693, %v3689
    %v4846 = vpack.c.b16 %v3698, %v3694
    %v4847 = vpack.c.b16 %v3699, %v3695
    %v4848 = vpack.c.b16 %v3700, %v3696
    %v4849 = vpack.c.b16 %v3701, %v3697
    %v4850 = vpack.c.b16 %v3706, %v3702
    %v4851 = vpack.c.b16 %v3707, %v3703
    %v4852 = vpack.c.b16 %v3708, %v3704
    %v4853 = vpack.c.b16 %v3709, %v3705
    %v4854 = vpack.c.b16 %v3714, %v3710
    %v4855 = vpack.c.b16 %v3715, %v3711
    %v4856 = vpack.c.b16 %v3716, %v3712
    %v4857 = vpack.c.b16 %v3717, %v3713
    %v4858 = vpack.c.b16 %v3722, %v3718
    %v4859 = vpack.c.b16 %v3723, %v3719
    %v4860 = vpack.c.b16 %v3724, %v3720
    %v4861 = vpack.c.b16 %v3725, %v3721
    %v4862 = vpack.c.b16 %v3730, %v3726
    %v4863 = vpack.c.b16 %v3731, %v3727
    %v4864 = vpack.c.b16 %v3732, %v3728
    %v4865 = vpack.c.b16 %v3733, %v3729
    %v4866 = vpack.c.b16 %v3738, %v3734
    %v4867 = vpack.c.b16 %v3739, %v3735
    %v4868 = vpack.c.b16 %v3740, %v3736
    %v4869 = vpack.c.b16 %v3741, %v3737
    %v4870 = vpack.c.b16 %v3746, %v3742
    %v4871 = vpack.c.b16 %v3747, %v3743
    %v4872 = vpack.c.b16 %v3748, %v3744
    %v4873 = vpack.c.b16 %v3749, %v3745
    %v4874 = vpack.c.b16 %v3754, %v3750
    %v4875 = vpack.c.b16 %v3755, %v3751
    %v4876 = vpack.c.b16 %v3756, %v3752
    %v4877 = vpack.c.b16 %v3757, %v3753
    %v4878 = vpack.c.b16 %v3762, %v3758
    %v4879 = vpack.c.b16 %v3763, %v3759
    %v4880 = vpack.c.b16 %v3764, %v3760
    %v4881 = vpack.c.b16 %v3765, %v3761
    %v4882 = vpack.c.b16 %v3770, %v3766
    %v4883 = vpack.c.b16 %v3771, %v3767
    %v4884 = vpack.c.b16 %v3772, %v3768
    %v4885 = vpack.c.b16 %v3773, %v3769
    %v4886 = vpack.c.b16 %v3778, %v3774
    %v4887 = vpack.c.b16 %v3779, %v3775
    %v4888 = vpack.c.b16 %v3780, %v3776
    %v4889 = vpack.c.b16 %v3781, %v3777
    %v4890 = vpack.c.b16 %v3786, %v3782
    %v4891 = vpack.c.b16 %v3787, %v3783
    %v4892 = vpack.c.b16 %v3788, %v3784
    %v4893 = vpack.c.b16 %v3789, %v3785
    %v4894 = vpack.c.b16 %v3794, %v3790
    %v4895 = vpack.c.b16 %v3795, %v3791
    %v4896 = vpack.c.b16 %v3796, %v3792
    %v4897 = vpack.c.b16 %v3797, %v3793
    %v4898 = vpack.c.b16 %v3802, %v3798
    %v4899 = vpack.c.b16 %v3803, %v3799
    %v4900 = vpack.c.b16 %v3804, %v3800
    %v4901 = vpack.c.b16 %v3805, %v3801
    %v4902 = vpack.c.b16 %v3810, %v3806
    %v4903 = vpack.c.b16 %v3811, %v3807
    %v4904 = vpack.c.b16 %v3812, %v3808
    %v4905 = vpack.c.b16 %v3813, %v3809
    %v4906 = vpack.c.b16 %v3818, %v3814
    %v4907 = vpack.c.b16 %v3819, %v3815
    %v4908 = vpack.c.b16 %v3820, %v3816
    %v4909 = vpack.c.b16 %v3821, %v3817
    %v4910 = vpack.c.b16 %v3826, %v3822
    %v4911 = vpack.c.b16 %v3827, %v3823
    %v4912 = vpack.c.b16 %v3828, %v3824
    %v4913 = vpack.c.b16 %v3829, %v3825
    %v4914 = vpack.c.b16 %v3834, %v3830
    %v4915 = vpack.c.b16 %v3835, %v3831
    %v4916 = vpack.c.b16 %v3836, %v3832
    %v4917 = vpack.c.b16 %v3837, %v3833
    %v4918 = vpack.c.b16 %v3842, %v3838
    %v4919 = vpack.c.b16 %v3843, %v3839
    %v4920 = vpack.c.b16 %v3844, %v3840
    %v4921 = vpack.c.b16 %v3845, %v3841
    %v4922 = vpack.c.b16 %v3850, %v3846
    %v4923 = vpack.c.b16 %v3851, %v3847
    %v4924 = vpack.c.b16 %v3852, %v3848
    %v4925 = vpack.c.b16 %v3853, %v3849
    %v4926 = vpack.c.b16 %v3858, %v3854
    %v4927 = vpack.c.b16 %v3859, %v3855
    %v4928 = vpack.c.b16 %v3860, %v3856
    %v4929 = vpack.c.b16 %v3861, %v3857
    %v4930 = vpack.c.b16 %v3866, %v3862
    %v4931 = vpack.c.b16 %v3867, %v3863
    %v4932 = vpack.c.b16 %v3868, %v3864
    %v4933 = vpack.c.b16 %v3869, %v3865
    %v4934 = vpack.c.b16 %v3874, %v3870
    %v4935 = vpack.c.b16 %v3875, %v3871
    %v4936 = vpack.c.b16 %v3876, %v3872
    %v4937 = vpack.c.b16 %v3877, %v3873
    %v4938 = vpack.c.b16 %v3882, %v3878
    %v4939 = vpack.c.b16 %v3883, %v3879
    %v4940 = vpack.c.b16 %v3884, %v3880
    %v4941 = vpack.c.b16 %v3885, %v3881
    %v4942 = vpack.c.b16 %v3890, %v3886
    %v4943 = vpack.c.b16 %v3891, %v3887
    %v4944 = vpack.c.b16 %v3892, %v3888
    %v4945 = vpack.c.b16 %v3893, %v3889
    %v4946 = vpack.c.b16 %v3898, %v3894
    %v4947 = vpack.c.b16 %v3899, %v3895
    %v4948 = vpack.c.b16 %v3900, %v3896
    %v4949 = vpack.c.b16 %v3901, %v3897
    %v4950 = vpack.c.b16 %v3906, %v3902
    %v4951 = vpack.c.b16 %v3907, %v3903
    %v4952 = vpack.c.b16 %v3908, %v3904
    %v4953 = vpack.c.b16 %v3909, %v3905
    %v4954 = vpack.c.b16 %v3914, %v3910
    %v4955 = vpack.c.b16 %v3915, %v3911
    %v4956 = vpack.c.b16 %v3916, %v3912
    %v4957 = vpack.c.b16 %v3917, %v3913
    %v4958 = vpack.c.b16 %v3922, %v3918
    %v4959 = vpack.c.b16 %v3923, %v3919
    %v4960 = vpack.c.b16 %v3924, %v3920
    %v4961 = vpack.c.b16 %v3925, %v3921
    %v4962 = vpack.c.b16 %v3930, %v3926
    %v4963 = vpack.c.b16 %v3931, %v3927
    %v4964 = vpack.c.b16 %v3932, %v3928
    %v4965 = vpack.c.b16 %v3933, %v3929
    %v4966 = vpack.c.b16 %v3938, %v3934
    %v4967 = vpack.c.b16 %v3939, %v3935
    %v4968 = vpack.c.b16 %v3940, %v3936
    %v4969 = vpack.c.b16 %v3941, %v3937
    %v4970 = vpack.c.b16 %v3946, %v3942
    %v4971 = vpack.c.b16 %v3947, %v3943
    %v4972 = vpack.c.b16 %v3948, %v3944
    %v4973 = vpack.c.b16 %v3949, %v3945
    %v4974 = vpack.c.b16 %v3954, %v3950
    %v4975 = vpack.c.b16 %v3955, %v3951
    %v4976 = vpack.c.b16 %v3956, %v3952
    %v4977 = vpack.c.b16 %v3957, %v3953
    %v4978 = vpack.c.b16 %v3962, %v3958
    %v4979 = vpack.c.b16 %v3963, %v3959
    %v4980 = vpack.c.b16 %v3964, %v3960
    %v4981 = vpack.c.b16 %v3965, %v3961
    %v4982 = vpack.c.b16 %v3970, %v3966
    %v4983 = vpack.c.b16 %v3971, %v3967
    %v4984 = vpack.c.b16 %v3972, %v3968
    %v4985 = vpack.c.b16 %v3973, %v3969
    %v4986 = vpack.c.b16 %v3978, %v3974
    %v4987 = vpack.c.b16 %v3979, %v3975
    %v4988 = vpack.c.b16 %v3980, %v3976
    %v4989 = vpack.c.b16 %v3981, %v3977
    %v4990 = vpack.c.b16 %v3986, %v3982
    %v4991 = vpack.c.b16 %v3987, %v3983
    %v4992 = vpack.c.b16 %v3988, %v3984
    %v4993 = vpack.c.b16 %v3989, %v3985
    %v4994 = vpack.c.b16 %v3994, %v3990
    %v4995 = vpack.c.b16 %v3995, %v3991
    %v4996 = vpack.c.b16 %v3996, %v3992
    %v4997 = vpack.c.b16 %v3997, %v3993
    %v4998 = vpack.c.b16 %v4002, %v3998
    %v4999 = vpack.c.b16 %v4003, %v3999
    %v5000 = vpack.c.b16 %v4004, %v4000
    %v5001 = vpack.c.b16 %v4005, %v4001
    %v5002 = vpack.c.b16 %v4010, %v4006
    %v5003 = vpack.c.b16 %v4011, %v4007
    %v5004 = vpack.c.b16 %v4012, %v4008
    %v5005 = vpack.c.b16 %v4013, %v4009
    %v5006 = vpack.c.b16 %v4018, %v4014
    %v5007 = vpack.c.b16 %v4019, %v4015
    %v5008 = vpack.c.b16 %v4020, %v4016
    %v5009 = vpack.c.b16 %v4021, %v4017
    %v5010 = vpack.c.b16 %v4026, %v4022
    %v5011 = vpack.c.b16 %v4027, %v4023
    %v5012 = vpack.c.b16 %v4028, %v4024
    %v5013 = vpack.c.b16 %v4029, %v4025
    %v5014 = vpack.c.b16 %v4034, %v4030
    %v5015 = vpack.c.b16 %v4035, %v4031
    %v5016 = vpack.c.b16 %v4036, %v4032
    %v5017 = vpack.c.b16 %v4037, %v4033
    %v5018 = vpack.c.b16 %v4042, %v4038
    %v5019 = vpack.c.b16 %v4043, %v4039
    %v5020 = vpack.c.b16 %v4044, %v4040
    %v5021 = vpack.c.b16 %v4045, %v4041
    %v5022 = vpack.c.b16 %v4050, %v4046
    %v5023 = vpack.c.b16 %v4051, %v4047
    %v5024 = vpack.c.b16 %v4052, %v4048
    %v5025 = vpack.c.b16 %v4053, %v4049
    %v5026 = vpack.c.b16 %v4058, %v4054
    %v5027 = vpack.c.b16 %v4059, %v4055
    %v5028 = vpack.c.b16 %v4060, %v4056
    %v5029 = vpack.c.b16 %v4061, %v4057
    %v5030 = vpack.c.b16 %v4066, %v4062
    %v5031 = vpack.c.b16 %v4067, %v4063
    %v5032 = vpack.c.b16 %v4068, %v4064
    %v5033 = vpack.c.b16 %v4069, %v4065
    %v5034 = vpack.c.b16 %v4074, %v4070
    %v5035 = vpack.c.b16 %v4075, %v4071
    %v5036 = vpack.c.b16 %v4076, %v4072
    %v5037 = vpack.c.b16 %v4077, %v4073
    %v5038 = vpack.c.b16 %v4082, %v4078
    %v5039 = vpack.c.b16 %v4083, %v4079
    %v5040 = vpack.c.b16 %v4084, %v4080
    %v5041 = vpack.c.b16 %v4085, %v4081
    %v5042 = vpack.c.b16 %v4090, %v4086
    %v5043 = vpack.c.b16 %v4091, %v4087
    %v5044 = vpack.c.b16 %v4092, %v4088
    %v5045 = vpack.c.b16 %v4093, %v4089
    %v5046 = vpack.c.b16 %v4098, %v4094
    %v5047 = vpack.c.b16 %v4099, %v4095
    %v5048 = vpack.c.b16 %v4100, %v4096
    %v5049 = vpack.c.b16 %v4101, %v4097
    %v5050 = vpack.c.b16 %v4106, %v4102
    %v5051 = vpack.c.b16 %v4107, %v4103
    %v5052 = vpack.c.b16 %v4108, %v4104
    %v5053 = vpack.c.b16 %v4109, %v4105
    %vm5998 = vcmask 523264
    %v6000 = vsel %vm5998, %v323, 0
    %6002 = vmatpush.bf16.msra.mxu0 %v4138
    %6003 = vmatpush.bf16.msra.mxu0 %v4134
    %6004 = vmatpush.bf16.msra.mxu0 %v4130
    %6005 = vmatpush.bf16.msra.mxu0 %v4126
    %6006 = vmatpush.bf16.msra.mxu0 %v4122
    %6007 = vmatpush.bf16.msra.mxu0 %v4118
    %6008 = vmatpush.bf16.msra.mxu0 %v4114
    %6009 = vmatpush.bf16.msra.mxu0 %v4110
    %6010 = vmatmul.bf16.gmra.mxu0 %v294
    %v6011 = vpop.f32.mrf.mxu0
    %v6012 = vadd.f32 %v1270, %v6011
    %v6013 = vpop.f32.mrf.mxu0
    %6014 = vdwg.mxu0
    %6015 = vmatpush.bf16.msra.mxu0 %v4170
    %6016 = vmatpush.bf16.msra.mxu0 %v4166
    %6017 = vmatpush.bf16.msra.mxu0 %v4162
    %6018 = vmatpush.bf16.msra.mxu0 %v4158
    %6019 = vmatpush.bf16.msra.mxu0 %v4154
    %6020 = vmatpush.bf16.msra.mxu0 %v4150
    %6021 = vmatpush.bf16.msra.mxu0 %v4146
    %6022 = vmatpush.bf16.msra.mxu0 %v4142
    %6023 = vmatmul.bf16.gmra.mxu0 %v295
    %v6024 = vpop.f32.mrf.mxu0
    %v6025 = vadd.f32 %v6012, %v6024
    %v6026 = vpop.f32.mrf.mxu0
    %6027 = vdwg.mxu0
    %6028 = vmatpush.bf16.msra.mxu0 %v4202
    %6029 = vmatpush.bf16.msra.mxu0 %v4198
    %6030 = vmatpush.bf16.msra.mxu0 %v4194
    %6031 = vmatpush.bf16.msra.mxu0 %v4190
    %6032 = vmatpush.bf16.msra.mxu0 %v4186
    %6033 = vmatpush.bf16.msra.mxu0 %v4182
    %6034 = vmatpush.bf16.msra.mxu0 %v4178
    %6035 = vmatpush.bf16.msra.mxu0 %v4174
    %6036 = vmatmul.bf16.gmra.mxu0 %v296
    %v6037 = vpop.f32.mrf.mxu0
    %v6038 = vadd.f32 %v6025, %v6037
    %v6039 = vpop.f32.mrf.mxu0
    %6040 = vdwg.mxu0
    %6041 = vmatpush.bf16.msra.mxu0 %v4234
    %6042 = vmatpush.bf16.msra.mxu0 %v4230
    %6043 = vmatpush.bf16.msra.mxu0 %v4226
    %6044 = vmatpush.bf16.msra.mxu0 %v4222
    %6045 = vmatpush.bf16.msra.mxu0 %v4218
    %6046 = vmatpush.bf16.msra.mxu0 %v4214
    %6047 = vmatpush.bf16.msra.mxu0 %v4210
    %6048 = vmatpush.bf16.msra.mxu0 %v4206
    %6049 = vmatmul.bf16.gmra.mxu0 %v297
    %v6050 = vpop.f32.mrf.mxu0
    %v6051 = vadd.f32 %v6038, %v6050
    %v6052 = vpop.f32.mrf.mxu0
    %6053 = vdwg.mxu0
    %6054 = vmatpush.bf16.msra.mxu0 %v4266
    %6055 = vmatpush.bf16.msra.mxu0 %v4262
    %6056 = vmatpush.bf16.msra.mxu0 %v4258
    %6057 = vmatpush.bf16.msra.mxu0 %v4254
    %6058 = vmatpush.bf16.msra.mxu0 %v4250
    %6059 = vmatpush.bf16.msra.mxu0 %v4246
    %6060 = vmatpush.bf16.msra.mxu0 %v4242
    %6061 = vmatpush.bf16.msra.mxu0 %v4238
    %6062 = vmatmul.bf16.gmra.mxu0 %v298
    %v6063 = vpop.f32.mrf.mxu0
    %v6064 = vadd.f32 %v6051, %v6063
    %v6065 = vpop.f32.mrf.mxu0
    %6066 = vdwg.mxu0
    %6067 = vmatpush.bf16.msra.mxu0 %v4298
    %6068 = vmatpush.bf16.msra.mxu0 %v4294
    %6069 = vmatpush.bf16.msra.mxu0 %v4290
    %6070 = vmatpush.bf16.msra.mxu0 %v4286
    %6071 = vmatpush.bf16.msra.mxu0 %v4282
    %6072 = vmatpush.bf16.msra.mxu0 %v4278
    %6073 = vmatpush.bf16.msra.mxu0 %v4274
    %6074 = vmatpush.bf16.msra.mxu0 %v4270
    %6075 = vmatmul.bf16.gmra.mxu0 %v299
    %v6076 = vpop.f32.mrf.mxu0
    %v6077 = vadd.f32 %v6064, %v6076
    %v6078 = vpop.f32.mrf.mxu0
    %6079 = vdwg.mxu0
    %6080 = vmatpush.bf16.msra.mxu0 %v4330
    %6081 = vmatpush.bf16.msra.mxu0 %v4326
    %6082 = vmatpush.bf16.msra.mxu0 %v4322
    %6083 = vmatpush.bf16.msra.mxu0 %v4318
    %6084 = vmatpush.bf16.msra.mxu0 %v4314
    %6085 = vmatpush.bf16.msra.mxu0 %v4310
    %6086 = vmatpush.bf16.msra.mxu0 %v4306
    %6087 = vmatpush.bf16.msra.mxu0 %v4302
    %6088 = vmatmul.bf16.gmra.mxu0 %v300
    %v6089 = vpop.f32.mrf.mxu0
    %v6090 = vadd.f32 %v6077, %v6089
    %v6091 = vpop.f32.mrf.mxu0
    %6092 = vdwg.mxu0
    %6093 = vmatpush.bf16.msra.mxu0 %v4362
    %6094 = vmatpush.bf16.msra.mxu0 %v4358
    %6095 = vmatpush.bf16.msra.mxu0 %v4354
    %6096 = vmatpush.bf16.msra.mxu0 %v4350
    %6097 = vmatpush.bf16.msra.mxu0 %v4346
    %6098 = vmatpush.bf16.msra.mxu0 %v4342
    %6099 = vmatpush.bf16.msra.mxu0 %v4338
    %6100 = vmatpush.bf16.msra.mxu0 %v4334
    %6101 = vmatmul.bf16.gmra.mxu0 %v301
    %v6102 = vpop.f32.mrf.mxu0
    %v6103 = vadd.f32 %v6090, %v6102
    %v6104 = vpop.f32.mrf.mxu0
    %6105 = vdwg.mxu0
    %6106 = vmatpush.bf16.msra.mxu0 %v4394
    %6107 = vmatpush.bf16.msra.mxu0 %v4390
    %6108 = vmatpush.bf16.msra.mxu0 %v4386
    %6109 = vmatpush.bf16.msra.mxu0 %v4382
    %6110 = vmatpush.bf16.msra.mxu0 %v4378
    %6111 = vmatpush.bf16.msra.mxu0 %v4374
    %6112 = vmatpush.bf16.msra.mxu0 %v4370
    %6113 = vmatpush.bf16.msra.mxu0 %v4366
    %6114 = vmatmul.bf16.gmra.mxu0 %v302
    %v6115 = vpop.f32.mrf.mxu0
    %v6116 = vadd.f32 %v6103, %v6115
    %v6117 = vpop.f32.mrf.mxu0
    %6118 = vdwg.mxu0
    %6119 = vmatpush.bf16.msra.mxu0 %v4426
    %6120 = vmatpush.bf16.msra.mxu0 %v4422
    %6121 = vmatpush.bf16.msra.mxu0 %v4418
    %6122 = vmatpush.bf16.msra.mxu0 %v4414
    %6123 = vmatpush.bf16.msra.mxu0 %v4410
    %6124 = vmatpush.bf16.msra.mxu0 %v4406
    %6125 = vmatpush.bf16.msra.mxu0 %v4402
    %6126 = vmatpush.bf16.msra.mxu0 %v4398
    %6127 = vmatmul.bf16.gmra.mxu0 %v303
    %v6128 = vpop.f32.mrf.mxu0
    %v6129 = vadd.f32 %v6116, %v6128
    %v6130 = vpop.f32.mrf.mxu0
    %6131 = vdwg.mxu0
    %6132 = vmatpush.bf16.msra.mxu0 %v4458
    %6133 = vmatpush.bf16.msra.mxu0 %v4454
    %6134 = vmatpush.bf16.msra.mxu0 %v4450
    %6135 = vmatpush.bf16.msra.mxu0 %v4446
    %6136 = vmatpush.bf16.msra.mxu0 %v4442
    %6137 = vmatpush.bf16.msra.mxu0 %v4438
    %6138 = vmatpush.bf16.msra.mxu0 %v4434
    %6139 = vmatpush.bf16.msra.mxu0 %v4430
    %6140 = vmatmul.bf16.gmra.mxu0 %v304
    %v6141 = vpop.f32.mrf.mxu0
    %v6142 = vadd.f32 %v6129, %v6141
    %v6143 = vpop.f32.mrf.mxu0
    %6144 = vdwg.mxu0
    %6145 = vmatpush.bf16.msra.mxu0 %v4490
    %6146 = vmatpush.bf16.msra.mxu0 %v4486
    %6147 = vmatpush.bf16.msra.mxu0 %v4482
    %6148 = vmatpush.bf16.msra.mxu0 %v4478
    %6149 = vmatpush.bf16.msra.mxu0 %v4474
    %6150 = vmatpush.bf16.msra.mxu0 %v4470
    %6151 = vmatpush.bf16.msra.mxu0 %v4466
    %6152 = vmatpush.bf16.msra.mxu0 %v4462
    %6153 = vmatmul.bf16.gmra.mxu0 %v305
    %v6154 = vpop.f32.mrf.mxu0
    %v6155 = vadd.f32 %v6142, %v6154
    %v6156 = vpop.f32.mrf.mxu0
    %6157 = vdwg.mxu0
    %6158 = vmatpush.bf16.msra.mxu0 %v4522
    %6159 = vmatpush.bf16.msra.mxu0 %v4518
    %6160 = vmatpush.bf16.msra.mxu0 %v4514
    %6161 = vmatpush.bf16.msra.mxu0 %v4510
    %6162 = vmatpush.bf16.msra.mxu0 %v4506
    %6163 = vmatpush.bf16.msra.mxu0 %v4502
    %6164 = vmatpush.bf16.msra.mxu0 %v4498
    %6165 = vmatpush.bf16.msra.mxu0 %v4494
    %6166 = vmatmul.bf16.gmra.mxu0 %v306
    %v6167 = vpop.f32.mrf.mxu0
    %v6168 = vadd.f32 %v6155, %v6167
    %v6169 = vpop.f32.mrf.mxu0
    %6170 = vdwg.mxu0
    %6171 = vmatpush.bf16.msra.mxu0 %v4554
    %6172 = vmatpush.bf16.msra.mxu0 %v4550
    %6173 = vmatpush.bf16.msra.mxu0 %v4546
    %6174 = vmatpush.bf16.msra.mxu0 %v4542
    %6175 = vmatpush.bf16.msra.mxu0 %v4538
    %6176 = vmatpush.bf16.msra.mxu0 %v4534
    %6177 = vmatpush.bf16.msra.mxu0 %v4530
    %6178 = vmatpush.bf16.msra.mxu0 %v4526
    %6179 = vmatmul.bf16.gmra.mxu0 %v307
    %v6180 = vpop.f32.mrf.mxu0
    %v6181 = vadd.f32 %v6168, %v6180
    %v6182 = vpop.f32.mrf.mxu0
    %6183 = vdwg.mxu0
    %6184 = vmatpush.bf16.msra.mxu0 %v4586
    %6185 = vmatpush.bf16.msra.mxu0 %v4582
    %6186 = vmatpush.bf16.msra.mxu0 %v4578
    %6187 = vmatpush.bf16.msra.mxu0 %v4574
    %6188 = vmatpush.bf16.msra.mxu0 %v4570
    %6189 = vmatpush.bf16.msra.mxu0 %v4566
    %6190 = vmatpush.bf16.msra.mxu0 %v4562
    %6191 = vmatpush.bf16.msra.mxu0 %v4558
    %6192 = vmatmul.bf16.gmra.mxu0 %v308
    %v6193 = vpop.f32.mrf.mxu0
    %v6194 = vadd.f32 %v6181, %v6193
    %v6195 = vpop.f32.mrf.mxu0
    %6196 = vdwg.mxu0
    %6197 = vmatpush.bf16.msra.mxu0 %v4618
    %6198 = vmatpush.bf16.msra.mxu0 %v4614
    %6199 = vmatpush.bf16.msra.mxu0 %v4610
    %6200 = vmatpush.bf16.msra.mxu0 %v4606
    %6201 = vmatpush.bf16.msra.mxu0 %v4602
    %6202 = vmatpush.bf16.msra.mxu0 %v4598
    %6203 = vmatpush.bf16.msra.mxu0 %v4594
    %6204 = vmatpush.bf16.msra.mxu0 %v4590
    %6205 = vmatmul.bf16.gmra.mxu0 %v309
    %v6206 = vpop.f32.mrf.mxu0
    %v6207 = vadd.f32 %v6194, %v6206
    %v6208 = vpop.f32.mrf.mxu0
    %6209 = vdwg.mxu0
    %6210 = vmatpush.bf16.msra.mxu0 %v4650
    %6211 = vmatpush.bf16.msra.mxu0 %v4646
    %6212 = vmatpush.bf16.msra.mxu0 %v4642
    %6213 = vmatpush.bf16.msra.mxu0 %v4638
    %6214 = vmatpush.bf16.msra.mxu0 %v4634
    %6215 = vmatpush.bf16.msra.mxu0 %v4630
    %6216 = vmatpush.bf16.msra.mxu0 %v4626
    %6217 = vmatpush.bf16.msra.mxu0 %v4622
    %6218 = vmatmul.bf16.gmra.mxu0 %v310
    %v6219 = vpop.f32.mrf.mxu0
    %v6220 = vadd.f32 %v6207, %v6219
    %v6221 = vpop.f32.mrf.mxu0
    %6222 = vdwg.mxu0
    %6223 = vmatpush.bf16.msra.mxu0 %v4682
    %6224 = vmatpush.bf16.msra.mxu0 %v4678
    %6225 = vmatpush.bf16.msra.mxu0 %v4674
    %6226 = vmatpush.bf16.msra.mxu0 %v4670
    %6227 = vmatpush.bf16.msra.mxu0 %v4666
    %6228 = vmatpush.bf16.msra.mxu0 %v4662
    %6229 = vmatpush.bf16.msra.mxu0 %v4658
    %6230 = vmatpush.bf16.msra.mxu0 %v4654
    %6231 = vmatmul.bf16.gmra.mxu0 %v311
    %v6232 = vpop.f32.mrf.mxu0
    %v6233 = vadd.f32 %v6220, %v6232
    %v6234 = vpop.f32.mrf.mxu0
    %6235 = vdwg.mxu0
    %6236 = vmatpush.bf16.msra.mxu0 %v4714
    %6237 = vmatpush.bf16.msra.mxu0 %v4710
    %6238 = vmatpush.bf16.msra.mxu0 %v4706
    %6239 = vmatpush.bf16.msra.mxu0 %v4702
    %6240 = vmatpush.bf16.msra.mxu0 %v4698
    %6241 = vmatpush.bf16.msra.mxu0 %v4694
    %6242 = vmatpush.bf16.msra.mxu0 %v4690
    %6243 = vmatpush.bf16.msra.mxu0 %v4686
    %6244 = vmatmul.bf16.gmra.mxu0 %v312
    %v6245 = vpop.f32.mrf.mxu0
    %v6246 = vadd.f32 %v6233, %v6245
    %v6247 = vpop.f32.mrf.mxu0
    %6248 = vdwg.mxu0
    %6249 = vmatpush.bf16.msra.mxu0 %v4746
    %6250 = vmatpush.bf16.msra.mxu0 %v4742
    %6251 = vmatpush.bf16.msra.mxu0 %v4738
    %6252 = vmatpush.bf16.msra.mxu0 %v4734
    %6253 = vmatpush.bf16.msra.mxu0 %v4730
    %6254 = vmatpush.bf16.msra.mxu0 %v4726
    %6255 = vmatpush.bf16.msra.mxu0 %v4722
    %6256 = vmatpush.bf16.msra.mxu0 %v4718
    %6257 = vmatmul.bf16.gmra.mxu0 %v313
    %v6258 = vpop.f32.mrf.mxu0
    %v6259 = vadd.f32 %v6246, %v6258
    %v6260 = vpop.f32.mrf.mxu0
    %6261 = vdwg.mxu0
    %6262 = vmatpush.bf16.msra.mxu0 %v4778
    %6263 = vmatpush.bf16.msra.mxu0 %v4774
    %6264 = vmatpush.bf16.msra.mxu0 %v4770
    %6265 = vmatpush.bf16.msra.mxu0 %v4766
    %6266 = vmatpush.bf16.msra.mxu0 %v4762
    %6267 = vmatpush.bf16.msra.mxu0 %v4758
    %6268 = vmatpush.bf16.msra.mxu0 %v4754
    %6269 = vmatpush.bf16.msra.mxu0 %v4750
    %6270 = vmatmul.bf16.gmra.mxu0 %v314
    %v6271 = vpop.f32.mrf.mxu0
    %v6272 = vadd.f32 %v6259, %v6271
    %v6273 = vpop.f32.mrf.mxu0
    %6274 = vdwg.mxu0
    %6275 = vmatpush.bf16.msra.mxu0 %v4810
    %6276 = vmatpush.bf16.msra.mxu0 %v4806
    %6277 = vmatpush.bf16.msra.mxu0 %v4802
    %6278 = vmatpush.bf16.msra.mxu0 %v4798
    %6279 = vmatpush.bf16.msra.mxu0 %v4794
    %6280 = vmatpush.bf16.msra.mxu0 %v4790
    %6281 = vmatpush.bf16.msra.mxu0 %v4786
    %6282 = vmatpush.bf16.msra.mxu0 %v4782
    %6283 = vmatmul.bf16.gmra.mxu0 %v315
    %v6284 = vpop.f32.mrf.mxu0
    %v6285 = vadd.f32 %v6272, %v6284
    %v6286 = vpop.f32.mrf.mxu0
    %6287 = vdwg.mxu0
    %6288 = vmatpush.bf16.msra.mxu0 %v4842
    %6289 = vmatpush.bf16.msra.mxu0 %v4838
    %6290 = vmatpush.bf16.msra.mxu0 %v4834
    %6291 = vmatpush.bf16.msra.mxu0 %v4830
    %6292 = vmatpush.bf16.msra.mxu0 %v4826
    %6293 = vmatpush.bf16.msra.mxu0 %v4822
    %6294 = vmatpush.bf16.msra.mxu0 %v4818
    %6295 = vmatpush.bf16.msra.mxu0 %v4814
    %6296 = vmatmul.bf16.gmra.mxu0 %v316
    %v6297 = vpop.f32.mrf.mxu0
    %v6298 = vadd.f32 %v6285, %v6297
    %v6299 = vpop.f32.mrf.mxu0
    %6300 = vdwg.mxu0
    %6301 = vmatpush.bf16.msra.mxu0 %v4874
    %6302 = vmatpush.bf16.msra.mxu0 %v4870
    %6303 = vmatpush.bf16.msra.mxu0 %v4866
    %6304 = vmatpush.bf16.msra.mxu0 %v4862
    %6305 = vmatpush.bf16.msra.mxu0 %v4858
    %6306 = vmatpush.bf16.msra.mxu0 %v4854
    %6307 = vmatpush.bf16.msra.mxu0 %v4850
    %6308 = vmatpush.bf16.msra.mxu0 %v4846
    %6309 = vmatmul.bf16.gmra.mxu0 %v317
    %v6310 = vpop.f32.mrf.mxu0
    %v6311 = vadd.f32 %v6298, %v6310
    %v6312 = vpop.f32.mrf.mxu0
    %6313 = vdwg.mxu0
    %6314 = vmatpush.bf16.msra.mxu0 %v4906
    %6315 = vmatpush.bf16.msra.mxu0 %v4902
    %6316 = vmatpush.bf16.msra.mxu0 %v4898
    %6317 = vmatpush.bf16.msra.mxu0 %v4894
    %6318 = vmatpush.bf16.msra.mxu0 %v4890
    %6319 = vmatpush.bf16.msra.mxu0 %v4886
    %6320 = vmatpush.bf16.msra.mxu0 %v4882
    %6321 = vmatpush.bf16.msra.mxu0 %v4878
    %6322 = vmatmul.bf16.gmra.mxu0 %v318
    %v6323 = vpop.f32.mrf.mxu0
    %v6324 = vadd.f32 %v6311, %v6323
    %v6325 = vpop.f32.mrf.mxu0
    %6326 = vdwg.mxu0
    %6327 = vmatpush.bf16.msra.mxu0 %v4938
    %6328 = vmatpush.bf16.msra.mxu0 %v4934
    %6329 = vmatpush.bf16.msra.mxu0 %v4930
    %6330 = vmatpush.bf16.msra.mxu0 %v4926
    %6331 = vmatpush.bf16.msra.mxu0 %v4922
    %6332 = vmatpush.bf16.msra.mxu0 %v4918
    %6333 = vmatpush.bf16.msra.mxu0 %v4914
    %6334 = vmatpush.bf16.msra.mxu0 %v4910
    %6335 = vmatmul.bf16.gmra.mxu0 %v319
    %v6336 = vpop.f32.mrf.mxu0
    %v6337 = vadd.f32 %v6324, %v6336
    %v6338 = vpop.f32.mrf.mxu0
    %6339 = vdwg.mxu0
    %6340 = vmatpush.bf16.msra.mxu0 %v4970
    %6341 = vmatpush.bf16.msra.mxu0 %v4966
    %6342 = vmatpush.bf16.msra.mxu0 %v4962
    %6343 = vmatpush.bf16.msra.mxu0 %v4958
    %6344 = vmatpush.bf16.msra.mxu0 %v4954
    %6345 = vmatpush.bf16.msra.mxu0 %v4950
    %6346 = vmatpush.bf16.msra.mxu0 %v4946
    %6347 = vmatpush.bf16.msra.mxu0 %v4942
    %6348 = vmatmul.bf16.gmra.mxu0 %v320
    %v6349 = vpop.f32.mrf.mxu0
    %v6350 = vadd.f32 %v6337, %v6349
    %v6351 = vpop.f32.mrf.mxu0
    %6352 = vdwg.mxu0
    %6353 = vmatpush.bf16.msra.mxu0 %v5002
    %6354 = vmatpush.bf16.msra.mxu0 %v4998
    %6355 = vmatpush.bf16.msra.mxu0 %v4994
    %6356 = vmatpush.bf16.msra.mxu0 %v4990
    %6357 = vmatpush.bf16.msra.mxu0 %v4986
    %6358 = vmatpush.bf16.msra.mxu0 %v4982
    %6359 = vmatpush.bf16.msra.mxu0 %v4978
    %6360 = vmatpush.bf16.msra.mxu0 %v4974
    %6361 = vmatmul.bf16.gmra.mxu0 %v321
    %v6362 = vpop.f32.mrf.mxu0
    %v6363 = vadd.f32 %v6350, %v6362
    %v6364 = vpop.f32.mrf.mxu0
    %6365 = vdwg.mxu0
    %6366 = vmatpush.bf16.msra.mxu0 %v5034
    %6367 = vmatpush.bf16.msra.mxu0 %v5030
    %6368 = vmatpush.bf16.msra.mxu0 %v5026
    %6369 = vmatpush.bf16.msra.mxu0 %v5022
    %6370 = vmatpush.bf16.msra.mxu0 %v5018
    %6371 = vmatpush.bf16.msra.mxu0 %v5014
    %6372 = vmatpush.bf16.msra.mxu0 %v5010
    %6373 = vmatpush.bf16.msra.mxu0 %v5006
    %6374 = vmatmul.bf16.gmra.mxu0 %v322
    %v6375 = vpop.f32.mrf.mxu0
    %v6376 = vadd.f32 %v6363, %v6375
    %v6377 = vpop.f32.mrf.mxu0
    %6378 = vdwg.mxu0
    %6379 = vmatpush.bf16.msra.mxu0 0
    %6380 = vmatpush.bf16.msra.mxu0 0
    %6381 = vmatpush.bf16.msra.mxu0 0
    %6382 = vmatpush.bf16.msra.mxu0 0
    %6383 = vmatpush.bf16.msra.mxu0 %v5050
    %6384 = vmatpush.bf16.msra.mxu0 %v5046
    %6385 = vmatpush.bf16.msra.mxu0 %v5042
    %6386 = vmatpush.bf16.msra.mxu0 %v5038
    %6387 = vmatmul.bf16.gmra.mxu0 %v6000
    %v6388 = vpop.f32.mrf.mxu0
    %v6389 = vadd.f32 %v6376, %v6388
    %v6390 = vpop.f32.mrf.mxu0
    %6391 = vdwg.mxu0
    %6392 = vmatpush.bf16.msra.mxu0 %v4139
    %6393 = vmatpush.bf16.msra.mxu0 %v4135
    %6394 = vmatpush.bf16.msra.mxu0 %v4131
    %6395 = vmatpush.bf16.msra.mxu0 %v4127
    %6396 = vmatpush.bf16.msra.mxu0 %v4123
    %6397 = vmatpush.bf16.msra.mxu0 %v4119
    %6398 = vmatpush.bf16.msra.mxu0 %v4115
    %6399 = vmatpush.bf16.msra.mxu0 %v4111
    %6400 = vmatmul.bf16.gmra.mxu0 %v294
    %v6401 = vpop.f32.mrf.mxu0
    %v6402 = vadd.f32 %v1271, %v6401
    %v6403 = vpop.f32.mrf.mxu0
    %6404 = vdwg.mxu0
    %6405 = vmatpush.bf16.msra.mxu0 %v4171
    %6406 = vmatpush.bf16.msra.mxu0 %v4167
    %6407 = vmatpush.bf16.msra.mxu0 %v4163
    %6408 = vmatpush.bf16.msra.mxu0 %v4159
    %6409 = vmatpush.bf16.msra.mxu0 %v4155
    %6410 = vmatpush.bf16.msra.mxu0 %v4151
    %6411 = vmatpush.bf16.msra.mxu0 %v4147
    %6412 = vmatpush.bf16.msra.mxu0 %v4143
    %6413 = vmatmul.bf16.gmra.mxu0 %v295
    %v6414 = vpop.f32.mrf.mxu0
    %v6415 = vadd.f32 %v6402, %v6414
    %v6416 = vpop.f32.mrf.mxu0
    %6417 = vdwg.mxu0
    %6418 = vmatpush.bf16.msra.mxu0 %v4203
    %6419 = vmatpush.bf16.msra.mxu0 %v4199
    %6420 = vmatpush.bf16.msra.mxu0 %v4195
    %6421 = vmatpush.bf16.msra.mxu0 %v4191
    %6422 = vmatpush.bf16.msra.mxu0 %v4187
    %6423 = vmatpush.bf16.msra.mxu0 %v4183
    %6424 = vmatpush.bf16.msra.mxu0 %v4179
    %6425 = vmatpush.bf16.msra.mxu0 %v4175
    %6426 = vmatmul.bf16.gmra.mxu0 %v296
    %v6427 = vpop.f32.mrf.mxu0
    %v6428 = vadd.f32 %v6415, %v6427
    %v6429 = vpop.f32.mrf.mxu0
    %6430 = vdwg.mxu0
    %6431 = vmatpush.bf16.msra.mxu0 %v4235
    %6432 = vmatpush.bf16.msra.mxu0 %v4231
    %6433 = vmatpush.bf16.msra.mxu0 %v4227
    %6434 = vmatpush.bf16.msra.mxu0 %v4223
    %6435 = vmatpush.bf16.msra.mxu0 %v4219
    %6436 = vmatpush.bf16.msra.mxu0 %v4215
    %6437 = vmatpush.bf16.msra.mxu0 %v4211
    %6438 = vmatpush.bf16.msra.mxu0 %v4207
    %6439 = vmatmul.bf16.gmra.mxu0 %v297
    %v6440 = vpop.f32.mrf.mxu0
    %v6441 = vadd.f32 %v6428, %v6440
    %v6442 = vpop.f32.mrf.mxu0
    %6443 = vdwg.mxu0
    %6444 = vmatpush.bf16.msra.mxu0 %v4267
    %6445 = vmatpush.bf16.msra.mxu0 %v4263
    %6446 = vmatpush.bf16.msra.mxu0 %v4259
    %6447 = vmatpush.bf16.msra.mxu0 %v4255
    %6448 = vmatpush.bf16.msra.mxu0 %v4251
    %6449 = vmatpush.bf16.msra.mxu0 %v4247
    %6450 = vmatpush.bf16.msra.mxu0 %v4243
    %6451 = vmatpush.bf16.msra.mxu0 %v4239
    %6452 = vmatmul.bf16.gmra.mxu0 %v298
    %v6453 = vpop.f32.mrf.mxu0
    %v6454 = vadd.f32 %v6441, %v6453
    %v6455 = vpop.f32.mrf.mxu0
    %6456 = vdwg.mxu0
    %6457 = vmatpush.bf16.msra.mxu0 %v4299
    %6458 = vmatpush.bf16.msra.mxu0 %v4295
    %6459 = vmatpush.bf16.msra.mxu0 %v4291
    %6460 = vmatpush.bf16.msra.mxu0 %v4287
    %6461 = vmatpush.bf16.msra.mxu0 %v4283
    %6462 = vmatpush.bf16.msra.mxu0 %v4279
    %6463 = vmatpush.bf16.msra.mxu0 %v4275
    %6464 = vmatpush.bf16.msra.mxu0 %v4271
    %6465 = vmatmul.bf16.gmra.mxu0 %v299
    %v6466 = vpop.f32.mrf.mxu0
    %v6467 = vadd.f32 %v6454, %v6466
    %v6468 = vpop.f32.mrf.mxu0
    %6469 = vdwg.mxu0
    %6470 = vmatpush.bf16.msra.mxu0 %v4331
    %6471 = vmatpush.bf16.msra.mxu0 %v4327
    %6472 = vmatpush.bf16.msra.mxu0 %v4323
    %6473 = vmatpush.bf16.msra.mxu0 %v4319
    %6474 = vmatpush.bf16.msra.mxu0 %v4315
    %6475 = vmatpush.bf16.msra.mxu0 %v4311
    %6476 = vmatpush.bf16.msra.mxu0 %v4307
    %6477 = vmatpush.bf16.msra.mxu0 %v4303
    %6478 = vmatmul.bf16.gmra.mxu0 %v300
    %v6479 = vpop.f32.mrf.mxu0
    %v6480 = vadd.f32 %v6467, %v6479
    %v6481 = vpop.f32.mrf.mxu0
    %6482 = vdwg.mxu0
    %6483 = vmatpush.bf16.msra.mxu0 %v4363
    %6484 = vmatpush.bf16.msra.mxu0 %v4359
    %6485 = vmatpush.bf16.msra.mxu0 %v4355
    %6486 = vmatpush.bf16.msra.mxu0 %v4351
    %6487 = vmatpush.bf16.msra.mxu0 %v4347
    %6488 = vmatpush.bf16.msra.mxu0 %v4343
    %6489 = vmatpush.bf16.msra.mxu0 %v4339
    %6490 = vmatpush.bf16.msra.mxu0 %v4335
    %6491 = vmatmul.bf16.gmra.mxu0 %v301
    %v6492 = vpop.f32.mrf.mxu0
    %v6493 = vadd.f32 %v6480, %v6492
    %v6494 = vpop.f32.mrf.mxu0
    %6495 = vdwg.mxu0
    %6496 = vmatpush.bf16.msra.mxu0 %v4395
    %6497 = vmatpush.bf16.msra.mxu0 %v4391
    %6498 = vmatpush.bf16.msra.mxu0 %v4387
    %6499 = vmatpush.bf16.msra.mxu0 %v4383
    %6500 = vmatpush.bf16.msra.mxu0 %v4379
    %6501 = vmatpush.bf16.msra.mxu0 %v4375
    %6502 = vmatpush.bf16.msra.mxu0 %v4371
    %6503 = vmatpush.bf16.msra.mxu0 %v4367
    %6504 = vmatmul.bf16.gmra.mxu0 %v302
    %v6505 = vpop.f32.mrf.mxu0
    %v6506 = vadd.f32 %v6493, %v6505
    %v6507 = vpop.f32.mrf.mxu0
    %6508 = vdwg.mxu0
    %6509 = vmatpush.bf16.msra.mxu0 %v4427
    %6510 = vmatpush.bf16.msra.mxu0 %v4423
    %6511 = vmatpush.bf16.msra.mxu0 %v4419
    %6512 = vmatpush.bf16.msra.mxu0 %v4415
    %6513 = vmatpush.bf16.msra.mxu0 %v4411
    %6514 = vmatpush.bf16.msra.mxu0 %v4407
    %6515 = vmatpush.bf16.msra.mxu0 %v4403
    %6516 = vmatpush.bf16.msra.mxu0 %v4399
    %6517 = vmatmul.bf16.gmra.mxu0 %v303
    %v6518 = vpop.f32.mrf.mxu0
    %v6519 = vadd.f32 %v6506, %v6518
    %v6520 = vpop.f32.mrf.mxu0
    %6521 = vdwg.mxu0
    %6522 = vmatpush.bf16.msra.mxu0 %v4459
    %6523 = vmatpush.bf16.msra.mxu0 %v4455
    %6524 = vmatpush.bf16.msra.mxu0 %v4451
    %6525 = vmatpush.bf16.msra.mxu0 %v4447
    %6526 = vmatpush.bf16.msra.mxu0 %v4443
    %6527 = vmatpush.bf16.msra.mxu0 %v4439
    %6528 = vmatpush.bf16.msra.mxu0 %v4435
    %6529 = vmatpush.bf16.msra.mxu0 %v4431
    %6530 = vmatmul.bf16.gmra.mxu0 %v304
    %v6531 = vpop.f32.mrf.mxu0
    %v6532 = vadd.f32 %v6519, %v6531
    %v6533 = vpop.f32.mrf.mxu0
    %6534 = vdwg.mxu0
    %6535 = vmatpush.bf16.msra.mxu0 %v4491
    %6536 = vmatpush.bf16.msra.mxu0 %v4487
    %6537 = vmatpush.bf16.msra.mxu0 %v4483
    %6538 = vmatpush.bf16.msra.mxu0 %v4479
    %6539 = vmatpush.bf16.msra.mxu0 %v4475
    %6540 = vmatpush.bf16.msra.mxu0 %v4471
    %6541 = vmatpush.bf16.msra.mxu0 %v4467
    %6542 = vmatpush.bf16.msra.mxu0 %v4463
    %6543 = vmatmul.bf16.gmra.mxu0 %v305
    %v6544 = vpop.f32.mrf.mxu0
    %v6545 = vadd.f32 %v6532, %v6544
    %v6546 = vpop.f32.mrf.mxu0
    %6547 = vdwg.mxu0
    %6548 = vmatpush.bf16.msra.mxu0 %v4523
    %6549 = vmatpush.bf16.msra.mxu0 %v4519
    %6550 = vmatpush.bf16.msra.mxu0 %v4515
    %6551 = vmatpush.bf16.msra.mxu0 %v4511
    %6552 = vmatpush.bf16.msra.mxu0 %v4507
    %6553 = vmatpush.bf16.msra.mxu0 %v4503
    %6554 = vmatpush.bf16.msra.mxu0 %v4499
    %6555 = vmatpush.bf16.msra.mxu0 %v4495
    %6556 = vmatmul.bf16.gmra.mxu0 %v306
    %v6557 = vpop.f32.mrf.mxu0
    %v6558 = vadd.f32 %v6545, %v6557
    %v6559 = vpop.f32.mrf.mxu0
    %6560 = vdwg.mxu0
    %6561 = vmatpush.bf16.msra.mxu0 %v4555
    %6562 = vmatpush.bf16.msra.mxu0 %v4551
    %6563 = vmatpush.bf16.msra.mxu0 %v4547
    %6564 = vmatpush.bf16.msra.mxu0 %v4543
    %6565 = vmatpush.bf16.msra.mxu0 %v4539
    %6566 = vmatpush.bf16.msra.mxu0 %v4535
    %6567 = vmatpush.bf16.msra.mxu0 %v4531
    %6568 = vmatpush.bf16.msra.mxu0 %v4527
    %6569 = vmatmul.bf16.gmra.mxu0 %v307
    %v6570 = vpop.f32.mrf.mxu0
    %v6571 = vadd.f32 %v6558, %v6570
    %v6572 = vpop.f32.mrf.mxu0
    %6573 = vdwg.mxu0
    %6574 = vmatpush.bf16.msra.mxu0 %v4587
    %6575 = vmatpush.bf16.msra.mxu0 %v4583
    %6576 = vmatpush.bf16.msra.mxu0 %v4579
    %6577 = vmatpush.bf16.msra.mxu0 %v4575
    %6578 = vmatpush.bf16.msra.mxu0 %v4571
    %6579 = vmatpush.bf16.msra.mxu0 %v4567
    %6580 = vmatpush.bf16.msra.mxu0 %v4563
    %6581 = vmatpush.bf16.msra.mxu0 %v4559
    %6582 = vmatmul.bf16.gmra.mxu0 %v308
    %v6583 = vpop.f32.mrf.mxu0
    %v6584 = vadd.f32 %v6571, %v6583
    %v6585 = vpop.f32.mrf.mxu0
    %6586 = vdwg.mxu0
    %6587 = vmatpush.bf16.msra.mxu0 %v4619
    %6588 = vmatpush.bf16.msra.mxu0 %v4615
    %6589 = vmatpush.bf16.msra.mxu0 %v4611
    %6590 = vmatpush.bf16.msra.mxu0 %v4607
    %6591 = vmatpush.bf16.msra.mxu0 %v4603
    %6592 = vmatpush.bf16.msra.mxu0 %v4599
    %6593 = vmatpush.bf16.msra.mxu0 %v4595
    %6594 = vmatpush.bf16.msra.mxu0 %v4591
    %6595 = vmatmul.bf16.gmra.mxu0 %v309
    %v6596 = vpop.f32.mrf.mxu0
    %v6597 = vadd.f32 %v6584, %v6596
    %v6598 = vpop.f32.mrf.mxu0
    %6599 = vdwg.mxu0
    %6600 = vmatpush.bf16.msra.mxu0 %v4651
    %6601 = vmatpush.bf16.msra.mxu0 %v4647
    %6602 = vmatpush.bf16.msra.mxu0 %v4643
    %6603 = vmatpush.bf16.msra.mxu0 %v4639
    %6604 = vmatpush.bf16.msra.mxu0 %v4635
    %6605 = vmatpush.bf16.msra.mxu0 %v4631
    %6606 = vmatpush.bf16.msra.mxu0 %v4627
    %6607 = vmatpush.bf16.msra.mxu0 %v4623
    %6608 = vmatmul.bf16.gmra.mxu0 %v310
    %v6609 = vpop.f32.mrf.mxu0
    %v6610 = vadd.f32 %v6597, %v6609
    %v6611 = vpop.f32.mrf.mxu0
    %6612 = vdwg.mxu0
    %6613 = vmatpush.bf16.msra.mxu0 %v4683
    %6614 = vmatpush.bf16.msra.mxu0 %v4679
    %6615 = vmatpush.bf16.msra.mxu0 %v4675
    %6616 = vmatpush.bf16.msra.mxu0 %v4671
    %6617 = vmatpush.bf16.msra.mxu0 %v4667
    %6618 = vmatpush.bf16.msra.mxu0 %v4663
    %6619 = vmatpush.bf16.msra.mxu0 %v4659
    %6620 = vmatpush.bf16.msra.mxu0 %v4655
    %6621 = vmatmul.bf16.gmra.mxu0 %v311
    %v6622 = vpop.f32.mrf.mxu0
    %v6623 = vadd.f32 %v6610, %v6622
    %v6624 = vpop.f32.mrf.mxu0
    %6625 = vdwg.mxu0
    %6626 = vmatpush.bf16.msra.mxu0 %v4715
    %6627 = vmatpush.bf16.msra.mxu0 %v4711
    %6628 = vmatpush.bf16.msra.mxu0 %v4707
    %6629 = vmatpush.bf16.msra.mxu0 %v4703
    %6630 = vmatpush.bf16.msra.mxu0 %v4699
    %6631 = vmatpush.bf16.msra.mxu0 %v4695
    %6632 = vmatpush.bf16.msra.mxu0 %v4691
    %6633 = vmatpush.bf16.msra.mxu0 %v4687
    %6634 = vmatmul.bf16.gmra.mxu0 %v312
    %v6635 = vpop.f32.mrf.mxu0
    %v6636 = vadd.f32 %v6623, %v6635
    %v6637 = vpop.f32.mrf.mxu0
    %6638 = vdwg.mxu0
    %6639 = vmatpush.bf16.msra.mxu0 %v4747
    %6640 = vmatpush.bf16.msra.mxu0 %v4743
    %6641 = vmatpush.bf16.msra.mxu0 %v4739
    %6642 = vmatpush.bf16.msra.mxu0 %v4735
    %6643 = vmatpush.bf16.msra.mxu0 %v4731
    %6644 = vmatpush.bf16.msra.mxu0 %v4727
    %6645 = vmatpush.bf16.msra.mxu0 %v4723
    %6646 = vmatpush.bf16.msra.mxu0 %v4719
    %6647 = vmatmul.bf16.gmra.mxu0 %v313
    %v6648 = vpop.f32.mrf.mxu0
    %v6649 = vadd.f32 %v6636, %v6648
    %v6650 = vpop.f32.mrf.mxu0
    %6651 = vdwg.mxu0
    %6652 = vmatpush.bf16.msra.mxu0 %v4779
    %6653 = vmatpush.bf16.msra.mxu0 %v4775
    %6654 = vmatpush.bf16.msra.mxu0 %v4771
    %6655 = vmatpush.bf16.msra.mxu0 %v4767
    %6656 = vmatpush.bf16.msra.mxu0 %v4763
    %6657 = vmatpush.bf16.msra.mxu0 %v4759
    %6658 = vmatpush.bf16.msra.mxu0 %v4755
    %6659 = vmatpush.bf16.msra.mxu0 %v4751
    %6660 = vmatmul.bf16.gmra.mxu0 %v314
    %v6661 = vpop.f32.mrf.mxu0
    %v6662 = vadd.f32 %v6649, %v6661
    %v6663 = vpop.f32.mrf.mxu0
    %6664 = vdwg.mxu0
    %6665 = vmatpush.bf16.msra.mxu0 %v4811
    %6666 = vmatpush.bf16.msra.mxu0 %v4807
    %6667 = vmatpush.bf16.msra.mxu0 %v4803
    %6668 = vmatpush.bf16.msra.mxu0 %v4799
    %6669 = vmatpush.bf16.msra.mxu0 %v4795
    %6670 = vmatpush.bf16.msra.mxu0 %v4791
    %6671 = vmatpush.bf16.msra.mxu0 %v4787
    %6672 = vmatpush.bf16.msra.mxu0 %v4783
    %6673 = vmatmul.bf16.gmra.mxu0 %v315
    %v6674 = vpop.f32.mrf.mxu0
    %v6675 = vadd.f32 %v6662, %v6674
    %v6676 = vpop.f32.mrf.mxu0
    %6677 = vdwg.mxu0
    %6678 = vmatpush.bf16.msra.mxu0 %v4843
    %6679 = vmatpush.bf16.msra.mxu0 %v4839
    %6680 = vmatpush.bf16.msra.mxu0 %v4835
    %6681 = vmatpush.bf16.msra.mxu0 %v4831
    %6682 = vmatpush.bf16.msra.mxu0 %v4827
    %6683 = vmatpush.bf16.msra.mxu0 %v4823
    %6684 = vmatpush.bf16.msra.mxu0 %v4819
    %6685 = vmatpush.bf16.msra.mxu0 %v4815
    %6686 = vmatmul.bf16.gmra.mxu0 %v316
    %v6687 = vpop.f32.mrf.mxu0
    %v6688 = vadd.f32 %v6675, %v6687
    %v6689 = vpop.f32.mrf.mxu0
    %6690 = vdwg.mxu0
    %6691 = vmatpush.bf16.msra.mxu0 %v4875
    %6692 = vmatpush.bf16.msra.mxu0 %v4871
    %6693 = vmatpush.bf16.msra.mxu0 %v4867
    %6694 = vmatpush.bf16.msra.mxu0 %v4863
    %6695 = vmatpush.bf16.msra.mxu0 %v4859
    %6696 = vmatpush.bf16.msra.mxu0 %v4855
    %6697 = vmatpush.bf16.msra.mxu0 %v4851
    %6698 = vmatpush.bf16.msra.mxu0 %v4847
    %6699 = vmatmul.bf16.gmra.mxu0 %v317
    %v6700 = vpop.f32.mrf.mxu0
    %v6701 = vadd.f32 %v6688, %v6700
    %v6702 = vpop.f32.mrf.mxu0
    %6703 = vdwg.mxu0
    %6704 = vmatpush.bf16.msra.mxu0 %v4907
    %6705 = vmatpush.bf16.msra.mxu0 %v4903
    %6706 = vmatpush.bf16.msra.mxu0 %v4899
    %6707 = vmatpush.bf16.msra.mxu0 %v4895
    %6708 = vmatpush.bf16.msra.mxu0 %v4891
    %6709 = vmatpush.bf16.msra.mxu0 %v4887
    %6710 = vmatpush.bf16.msra.mxu0 %v4883
    %6711 = vmatpush.bf16.msra.mxu0 %v4879
    %6712 = vmatmul.bf16.gmra.mxu0 %v318
    %v6713 = vpop.f32.mrf.mxu0
    %v6714 = vadd.f32 %v6701, %v6713
    %v6715 = vpop.f32.mrf.mxu0
    %6716 = vdwg.mxu0
    %6717 = vmatpush.bf16.msra.mxu0 %v4939
    %6718 = vmatpush.bf16.msra.mxu0 %v4935
    %6719 = vmatpush.bf16.msra.mxu0 %v4931
    %6720 = vmatpush.bf16.msra.mxu0 %v4927
    %6721 = vmatpush.bf16.msra.mxu0 %v4923
    %6722 = vmatpush.bf16.msra.mxu0 %v4919
    %6723 = vmatpush.bf16.msra.mxu0 %v4915
    %6724 = vmatpush.bf16.msra.mxu0 %v4911
    %6725 = vmatmul.bf16.gmra.mxu0 %v319
    %v6726 = vpop.f32.mrf.mxu0
    %v6727 = vadd.f32 %v6714, %v6726
    %v6728 = vpop.f32.mrf.mxu0
    %6729 = vdwg.mxu0
    %6730 = vmatpush.bf16.msra.mxu0 %v4971
    %6731 = vmatpush.bf16.msra.mxu0 %v4967
    %6732 = vmatpush.bf16.msra.mxu0 %v4963
    %6733 = vmatpush.bf16.msra.mxu0 %v4959
    %6734 = vmatpush.bf16.msra.mxu0 %v4955
    %6735 = vmatpush.bf16.msra.mxu0 %v4951
    %6736 = vmatpush.bf16.msra.mxu0 %v4947
    %6737 = vmatpush.bf16.msra.mxu0 %v4943
    %6738 = vmatmul.bf16.gmra.mxu0 %v320
    %v6739 = vpop.f32.mrf.mxu0
    %v6740 = vadd.f32 %v6727, %v6739
    %v6741 = vpop.f32.mrf.mxu0
    %6742 = vdwg.mxu0
    %6743 = vmatpush.bf16.msra.mxu0 %v5003
    %6744 = vmatpush.bf16.msra.mxu0 %v4999
    %6745 = vmatpush.bf16.msra.mxu0 %v4995
    %6746 = vmatpush.bf16.msra.mxu0 %v4991
    %6747 = vmatpush.bf16.msra.mxu0 %v4987
    %6748 = vmatpush.bf16.msra.mxu0 %v4983
    %6749 = vmatpush.bf16.msra.mxu0 %v4979
    %6750 = vmatpush.bf16.msra.mxu0 %v4975
    %6751 = vmatmul.bf16.gmra.mxu0 %v321
    %v6752 = vpop.f32.mrf.mxu0
    %v6753 = vadd.f32 %v6740, %v6752
    %v6754 = vpop.f32.mrf.mxu0
    %6755 = vdwg.mxu0
    %6756 = vmatpush.bf16.msra.mxu0 %v5035
    %6757 = vmatpush.bf16.msra.mxu0 %v5031
    %6758 = vmatpush.bf16.msra.mxu0 %v5027
    %6759 = vmatpush.bf16.msra.mxu0 %v5023
    %6760 = vmatpush.bf16.msra.mxu0 %v5019
    %6761 = vmatpush.bf16.msra.mxu0 %v5015
    %6762 = vmatpush.bf16.msra.mxu0 %v5011
    %6763 = vmatpush.bf16.msra.mxu0 %v5007
    %6764 = vmatmul.bf16.gmra.mxu0 %v322
    %v6765 = vpop.f32.mrf.mxu0
    %v6766 = vadd.f32 %v6753, %v6765
    %v6767 = vpop.f32.mrf.mxu0
    %6768 = vdwg.mxu0
    %6769 = vmatpush.bf16.msra.mxu0 0
    %6770 = vmatpush.bf16.msra.mxu0 0
    %6771 = vmatpush.bf16.msra.mxu0 0
    %6772 = vmatpush.bf16.msra.mxu0 0
    %6773 = vmatpush.bf16.msra.mxu0 %v5051
    %6774 = vmatpush.bf16.msra.mxu0 %v5047
    %6775 = vmatpush.bf16.msra.mxu0 %v5043
    %6776 = vmatpush.bf16.msra.mxu0 %v5039
    %6777 = vmatmul.bf16.gmra.mxu0 %v6000
    %v6778 = vpop.f32.mrf.mxu0
    %v6779 = vadd.f32 %v6766, %v6778
    %v6780 = vpop.f32.mrf.mxu0
    %6781 = vdwg.mxu0
    %6782 = vmatpush.bf16.msra.mxu0 %v4140
    %6783 = vmatpush.bf16.msra.mxu0 %v4136
    %6784 = vmatpush.bf16.msra.mxu0 %v4132
    %6785 = vmatpush.bf16.msra.mxu0 %v4128
    %6786 = vmatpush.bf16.msra.mxu0 %v4124
    %6787 = vmatpush.bf16.msra.mxu0 %v4120
    %6788 = vmatpush.bf16.msra.mxu0 %v4116
    %6789 = vmatpush.bf16.msra.mxu0 %v4112
    %6790 = vmatmul.bf16.gmra.mxu0 %v294
    %v6791 = vpop.f32.mrf.mxu0
    %v6792 = vadd.f32 %v1272, %v6791
    %v6793 = vpop.f32.mrf.mxu0
    %6794 = vdwg.mxu0
    %6795 = vmatpush.bf16.msra.mxu0 %v4172
    %6796 = vmatpush.bf16.msra.mxu0 %v4168
    %6797 = vmatpush.bf16.msra.mxu0 %v4164
    %6798 = vmatpush.bf16.msra.mxu0 %v4160
    %6799 = vmatpush.bf16.msra.mxu0 %v4156
    %6800 = vmatpush.bf16.msra.mxu0 %v4152
    %6801 = vmatpush.bf16.msra.mxu0 %v4148
    %6802 = vmatpush.bf16.msra.mxu0 %v4144
    %6803 = vmatmul.bf16.gmra.mxu0 %v295
    %v6804 = vpop.f32.mrf.mxu0
    %v6805 = vadd.f32 %v6792, %v6804
    %v6806 = vpop.f32.mrf.mxu0
    %6807 = vdwg.mxu0
    %6808 = vmatpush.bf16.msra.mxu0 %v4204
    %6809 = vmatpush.bf16.msra.mxu0 %v4200
    %6810 = vmatpush.bf16.msra.mxu0 %v4196
    %6811 = vmatpush.bf16.msra.mxu0 %v4192
    %6812 = vmatpush.bf16.msra.mxu0 %v4188
    %6813 = vmatpush.bf16.msra.mxu0 %v4184
    %6814 = vmatpush.bf16.msra.mxu0 %v4180
    %6815 = vmatpush.bf16.msra.mxu0 %v4176
    %6816 = vmatmul.bf16.gmra.mxu0 %v296
    %v6817 = vpop.f32.mrf.mxu0
    %v6818 = vadd.f32 %v6805, %v6817
    %v6819 = vpop.f32.mrf.mxu0
    %6820 = vdwg.mxu0
    %6821 = vmatpush.bf16.msra.mxu0 %v4236
    %6822 = vmatpush.bf16.msra.mxu0 %v4232
    %6823 = vmatpush.bf16.msra.mxu0 %v4228
    %6824 = vmatpush.bf16.msra.mxu0 %v4224
    %6825 = vmatpush.bf16.msra.mxu0 %v4220
    %6826 = vmatpush.bf16.msra.mxu0 %v4216
    %6827 = vmatpush.bf16.msra.mxu0 %v4212
    %6828 = vmatpush.bf16.msra.mxu0 %v4208
    %6829 = vmatmul.bf16.gmra.mxu0 %v297
    %v6830 = vpop.f32.mrf.mxu0
    %v6831 = vadd.f32 %v6818, %v6830
    %v6832 = vpop.f32.mrf.mxu0
    %6833 = vdwg.mxu0
    %6834 = vmatpush.bf16.msra.mxu0 %v4268
    %6835 = vmatpush.bf16.msra.mxu0 %v4264
    %6836 = vmatpush.bf16.msra.mxu0 %v4260
    %6837 = vmatpush.bf16.msra.mxu0 %v4256
    %6838 = vmatpush.bf16.msra.mxu0 %v4252
    %6839 = vmatpush.bf16.msra.mxu0 %v4248
    %6840 = vmatpush.bf16.msra.mxu0 %v4244
    %6841 = vmatpush.bf16.msra.mxu0 %v4240
    %6842 = vmatmul.bf16.gmra.mxu0 %v298
    %v6843 = vpop.f32.mrf.mxu0
    %v6844 = vadd.f32 %v6831, %v6843
    %v6845 = vpop.f32.mrf.mxu0
    %6846 = vdwg.mxu0
    %6847 = vmatpush.bf16.msra.mxu0 %v4300
    %6848 = vmatpush.bf16.msra.mxu0 %v4296
    %6849 = vmatpush.bf16.msra.mxu0 %v4292
    %6850 = vmatpush.bf16.msra.mxu0 %v4288
    %6851 = vmatpush.bf16.msra.mxu0 %v4284
    %6852 = vmatpush.bf16.msra.mxu0 %v4280
    %6853 = vmatpush.bf16.msra.mxu0 %v4276
    %6854 = vmatpush.bf16.msra.mxu0 %v4272
    %6855 = vmatmul.bf16.gmra.mxu0 %v299
    %v6856 = vpop.f32.mrf.mxu0
    %v6857 = vadd.f32 %v6844, %v6856
    %v6858 = vpop.f32.mrf.mxu0
    %6859 = vdwg.mxu0
    %6860 = vmatpush.bf16.msra.mxu0 %v4332
    %6861 = vmatpush.bf16.msra.mxu0 %v4328
    %6862 = vmatpush.bf16.msra.mxu0 %v4324
    %6863 = vmatpush.bf16.msra.mxu0 %v4320
    %6864 = vmatpush.bf16.msra.mxu0 %v4316
    %6865 = vmatpush.bf16.msra.mxu0 %v4312
    %6866 = vmatpush.bf16.msra.mxu0 %v4308
    %6867 = vmatpush.bf16.msra.mxu0 %v4304
    %6868 = vmatmul.bf16.gmra.mxu0 %v300
    %v6869 = vpop.f32.mrf.mxu0
    %v6870 = vadd.f32 %v6857, %v6869
    %v6871 = vpop.f32.mrf.mxu0
    %6872 = vdwg.mxu0
    %6873 = vmatpush.bf16.msra.mxu0 %v4364
    %6874 = vmatpush.bf16.msra.mxu0 %v4360
    %6875 = vmatpush.bf16.msra.mxu0 %v4356
    %6876 = vmatpush.bf16.msra.mxu0 %v4352
    %6877 = vmatpush.bf16.msra.mxu0 %v4348
    %6878 = vmatpush.bf16.msra.mxu0 %v4344
    %6879 = vmatpush.bf16.msra.mxu0 %v4340
    %6880 = vmatpush.bf16.msra.mxu0 %v4336
    %6881 = vmatmul.bf16.gmra.mxu0 %v301
    %v6882 = vpop.f32.mrf.mxu0
    %v6883 = vadd.f32 %v6870, %v6882
    %v6884 = vpop.f32.mrf.mxu0
    %6885 = vdwg.mxu0
    %6886 = vmatpush.bf16.msra.mxu0 %v4396
    %6887 = vmatpush.bf16.msra.mxu0 %v4392
    %6888 = vmatpush.bf16.msra.mxu0 %v4388
    %6889 = vmatpush.bf16.msra.mxu0 %v4384
    %6890 = vmatpush.bf16.msra.mxu0 %v4380
    %6891 = vmatpush.bf16.msra.mxu0 %v4376
    %6892 = vmatpush.bf16.msra.mxu0 %v4372
    %6893 = vmatpush.bf16.msra.mxu0 %v4368
    %6894 = vmatmul.bf16.gmra.mxu0 %v302
    %v6895 = vpop.f32.mrf.mxu0
    %v6896 = vadd.f32 %v6883, %v6895
    %v6897 = vpop.f32.mrf.mxu0
    %6898 = vdwg.mxu0
    %6899 = vmatpush.bf16.msra.mxu0 %v4428
    %6900 = vmatpush.bf16.msra.mxu0 %v4424
    %6901 = vmatpush.bf16.msra.mxu0 %v4420
    %6902 = vmatpush.bf16.msra.mxu0 %v4416
    %6903 = vmatpush.bf16.msra.mxu0 %v4412
    %6904 = vmatpush.bf16.msra.mxu0 %v4408
    %6905 = vmatpush.bf16.msra.mxu0 %v4404
    %6906 = vmatpush.bf16.msra.mxu0 %v4400
    %6907 = vmatmul.bf16.gmra.mxu0 %v303
    %v6908 = vpop.f32.mrf.mxu0
    %v6909 = vadd.f32 %v6896, %v6908
    %v6910 = vpop.f32.mrf.mxu0
    %6911 = vdwg.mxu0
    %6912 = vmatpush.bf16.msra.mxu0 %v4460
    %6913 = vmatpush.bf16.msra.mxu0 %v4456
    %6914 = vmatpush.bf16.msra.mxu0 %v4452
    %6915 = vmatpush.bf16.msra.mxu0 %v4448
    %6916 = vmatpush.bf16.msra.mxu0 %v4444
    %6917 = vmatpush.bf16.msra.mxu0 %v4440
    %6918 = vmatpush.bf16.msra.mxu0 %v4436
    %6919 = vmatpush.bf16.msra.mxu0 %v4432
    %6920 = vmatmul.bf16.gmra.mxu0 %v304
    %v6921 = vpop.f32.mrf.mxu0
    %v6922 = vadd.f32 %v6909, %v6921
    %v6923 = vpop.f32.mrf.mxu0
    %6924 = vdwg.mxu0
    %6925 = vmatpush.bf16.msra.mxu0 %v4492
    %6926 = vmatpush.bf16.msra.mxu0 %v4488
    %6927 = vmatpush.bf16.msra.mxu0 %v4484
    %6928 = vmatpush.bf16.msra.mxu0 %v4480
    %6929 = vmatpush.bf16.msra.mxu0 %v4476
    %6930 = vmatpush.bf16.msra.mxu0 %v4472
    %6931 = vmatpush.bf16.msra.mxu0 %v4468
    %6932 = vmatpush.bf16.msra.mxu0 %v4464
    %6933 = vmatmul.bf16.gmra.mxu0 %v305
    %v6934 = vpop.f32.mrf.mxu0
    %v6935 = vadd.f32 %v6922, %v6934
    %v6936 = vpop.f32.mrf.mxu0
    %6937 = vdwg.mxu0
    %6938 = vmatpush.bf16.msra.mxu0 %v4524
    %6939 = vmatpush.bf16.msra.mxu0 %v4520
    %6940 = vmatpush.bf16.msra.mxu0 %v4516
    %6941 = vmatpush.bf16.msra.mxu0 %v4512
    %6942 = vmatpush.bf16.msra.mxu0 %v4508
    %6943 = vmatpush.bf16.msra.mxu0 %v4504
    %6944 = vmatpush.bf16.msra.mxu0 %v4500
    %6945 = vmatpush.bf16.msra.mxu0 %v4496
    %6946 = vmatmul.bf16.gmra.mxu0 %v306
    %v6947 = vpop.f32.mrf.mxu0
    %v6948 = vadd.f32 %v6935, %v6947
    %v6949 = vpop.f32.mrf.mxu0
    %6950 = vdwg.mxu0
    %6951 = vmatpush.bf16.msra.mxu0 %v4556
    %6952 = vmatpush.bf16.msra.mxu0 %v4552
    %6953 = vmatpush.bf16.msra.mxu0 %v4548
    %6954 = vmatpush.bf16.msra.mxu0 %v4544
    %6955 = vmatpush.bf16.msra.mxu0 %v4540
    %6956 = vmatpush.bf16.msra.mxu0 %v4536
    %6957 = vmatpush.bf16.msra.mxu0 %v4532
    %6958 = vmatpush.bf16.msra.mxu0 %v4528
    %6959 = vmatmul.bf16.gmra.mxu0 %v307
    %v6960 = vpop.f32.mrf.mxu0
    %v6961 = vadd.f32 %v6948, %v6960
    %v6962 = vpop.f32.mrf.mxu0
    %6963 = vdwg.mxu0
    %6964 = vmatpush.bf16.msra.mxu0 %v4588
    %6965 = vmatpush.bf16.msra.mxu0 %v4584
    %6966 = vmatpush.bf16.msra.mxu0 %v4580
    %6967 = vmatpush.bf16.msra.mxu0 %v4576
    %6968 = vmatpush.bf16.msra.mxu0 %v4572
    %6969 = vmatpush.bf16.msra.mxu0 %v4568
    %6970 = vmatpush.bf16.msra.mxu0 %v4564
    %6971 = vmatpush.bf16.msra.mxu0 %v4560
    %6972 = vmatmul.bf16.gmra.mxu0 %v308
    %v6973 = vpop.f32.mrf.mxu0
    %v6974 = vadd.f32 %v6961, %v6973
    %v6975 = vpop.f32.mrf.mxu0
    %6976 = vdwg.mxu0
    %6977 = vmatpush.bf16.msra.mxu0 %v4620
    %6978 = vmatpush.bf16.msra.mxu0 %v4616
    %6979 = vmatpush.bf16.msra.mxu0 %v4612
    %6980 = vmatpush.bf16.msra.mxu0 %v4608
    %6981 = vmatpush.bf16.msra.mxu0 %v4604
    %6982 = vmatpush.bf16.msra.mxu0 %v4600
    %6983 = vmatpush.bf16.msra.mxu0 %v4596
    %6984 = vmatpush.bf16.msra.mxu0 %v4592
    %6985 = vmatmul.bf16.gmra.mxu0 %v309
    %v6986 = vpop.f32.mrf.mxu0
    %v6987 = vadd.f32 %v6974, %v6986
    %v6988 = vpop.f32.mrf.mxu0
    %6989 = vdwg.mxu0
    %6990 = vmatpush.bf16.msra.mxu0 %v4652
    %6991 = vmatpush.bf16.msra.mxu0 %v4648
    %6992 = vmatpush.bf16.msra.mxu0 %v4644
    %6993 = vmatpush.bf16.msra.mxu0 %v4640
    %6994 = vmatpush.bf16.msra.mxu0 %v4636
    %6995 = vmatpush.bf16.msra.mxu0 %v4632
    %6996 = vmatpush.bf16.msra.mxu0 %v4628
    %6997 = vmatpush.bf16.msra.mxu0 %v4624
    %6998 = vmatmul.bf16.gmra.mxu0 %v310
    %v6999 = vpop.f32.mrf.mxu0
    %v7000 = vadd.f32 %v6987, %v6999
    %v7001 = vpop.f32.mrf.mxu0
    %7002 = vdwg.mxu0
    %7003 = vmatpush.bf16.msra.mxu0 %v4684
    %7004 = vmatpush.bf16.msra.mxu0 %v4680
    %7005 = vmatpush.bf16.msra.mxu0 %v4676
    %7006 = vmatpush.bf16.msra.mxu0 %v4672
    %7007 = vmatpush.bf16.msra.mxu0 %v4668
    %7008 = vmatpush.bf16.msra.mxu0 %v4664
    %7009 = vmatpush.bf16.msra.mxu0 %v4660
    %7010 = vmatpush.bf16.msra.mxu0 %v4656
    %7011 = vmatmul.bf16.gmra.mxu0 %v311
    %v7012 = vpop.f32.mrf.mxu0
    %v7013 = vadd.f32 %v7000, %v7012
    %v7014 = vpop.f32.mrf.mxu0
    %7015 = vdwg.mxu0
    %7016 = vmatpush.bf16.msra.mxu0 %v4716
    %7017 = vmatpush.bf16.msra.mxu0 %v4712
    %7018 = vmatpush.bf16.msra.mxu0 %v4708
    %7019 = vmatpush.bf16.msra.mxu0 %v4704
    %7020 = vmatpush.bf16.msra.mxu0 %v4700
    %7021 = vmatpush.bf16.msra.mxu0 %v4696
    %7022 = vmatpush.bf16.msra.mxu0 %v4692
    %7023 = vmatpush.bf16.msra.mxu0 %v4688
    %7024 = vmatmul.bf16.gmra.mxu0 %v312
    %v7025 = vpop.f32.mrf.mxu0
    %v7026 = vadd.f32 %v7013, %v7025
    %v7027 = vpop.f32.mrf.mxu0
    %7028 = vdwg.mxu0
    %7029 = vmatpush.bf16.msra.mxu0 %v4748
    %7030 = vmatpush.bf16.msra.mxu0 %v4744
    %7031 = vmatpush.bf16.msra.mxu0 %v4740
    %7032 = vmatpush.bf16.msra.mxu0 %v4736
    %7033 = vmatpush.bf16.msra.mxu0 %v4732
    %7034 = vmatpush.bf16.msra.mxu0 %v4728
    %7035 = vmatpush.bf16.msra.mxu0 %v4724
    %7036 = vmatpush.bf16.msra.mxu0 %v4720
    %7037 = vmatmul.bf16.gmra.mxu0 %v313
    %v7038 = vpop.f32.mrf.mxu0
    %v7039 = vadd.f32 %v7026, %v7038
    %v7040 = vpop.f32.mrf.mxu0
    %7041 = vdwg.mxu0
    %7042 = vmatpush.bf16.msra.mxu0 %v4780
    %7043 = vmatpush.bf16.msra.mxu0 %v4776
    %7044 = vmatpush.bf16.msra.mxu0 %v4772
    %7045 = vmatpush.bf16.msra.mxu0 %v4768
    %7046 = vmatpush.bf16.msra.mxu0 %v4764
    %7047 = vmatpush.bf16.msra.mxu0 %v4760
    %7048 = vmatpush.bf16.msra.mxu0 %v4756
    %7049 = vmatpush.bf16.msra.mxu0 %v4752
    %7050 = vmatmul.bf16.gmra.mxu0 %v314
    %v7051 = vpop.f32.mrf.mxu0
    %v7052 = vadd.f32 %v7039, %v7051
    %v7053 = vpop.f32.mrf.mxu0
    %7054 = vdwg.mxu0
    %7055 = vmatpush.bf16.msra.mxu0 %v4812
    %7056 = vmatpush.bf16.msra.mxu0 %v4808
    %7057 = vmatpush.bf16.msra.mxu0 %v4804
    %7058 = vmatpush.bf16.msra.mxu0 %v4800
    %7059 = vmatpush.bf16.msra.mxu0 %v4796
    %7060 = vmatpush.bf16.msra.mxu0 %v4792
    %7061 = vmatpush.bf16.msra.mxu0 %v4788
    %7062 = vmatpush.bf16.msra.mxu0 %v4784
    %7063 = vmatmul.bf16.gmra.mxu0 %v315
    %v7064 = vpop.f32.mrf.mxu0
    %v7065 = vadd.f32 %v7052, %v7064
    %v7066 = vpop.f32.mrf.mxu0
    %7067 = vdwg.mxu0
    %7068 = vmatpush.bf16.msra.mxu0 %v4844
    %7069 = vmatpush.bf16.msra.mxu0 %v4840
    %7070 = vmatpush.bf16.msra.mxu0 %v4836
    %7071 = vmatpush.bf16.msra.mxu0 %v4832
    %7072 = vmatpush.bf16.msra.mxu0 %v4828
    %7073 = vmatpush.bf16.msra.mxu0 %v4824
    %7074 = vmatpush.bf16.msra.mxu0 %v4820
    %7075 = vmatpush.bf16.msra.mxu0 %v4816
    %7076 = vmatmul.bf16.gmra.mxu0 %v316
    %v7077 = vpop.f32.mrf.mxu0
    %v7078 = vadd.f32 %v7065, %v7077
    %v7079 = vpop.f32.mrf.mxu0
    %7080 = vdwg.mxu0
    %7081 = vmatpush.bf16.msra.mxu0 %v4876
    %7082 = vmatpush.bf16.msra.mxu0 %v4872
    %7083 = vmatpush.bf16.msra.mxu0 %v4868
    %7084 = vmatpush.bf16.msra.mxu0 %v4864
    %7085 = vmatpush.bf16.msra.mxu0 %v4860
    %7086 = vmatpush.bf16.msra.mxu0 %v4856
    %7087 = vmatpush.bf16.msra.mxu0 %v4852
    %7088 = vmatpush.bf16.msra.mxu0 %v4848
    %7089 = vmatmul.bf16.gmra.mxu0 %v317
    %v7090 = vpop.f32.mrf.mxu0
    %v7091 = vadd.f32 %v7078, %v7090
    %v7092 = vpop.f32.mrf.mxu0
    %7093 = vdwg.mxu0
    %7094 = vmatpush.bf16.msra.mxu0 %v4908
    %7095 = vmatpush.bf16.msra.mxu0 %v4904
    %7096 = vmatpush.bf16.msra.mxu0 %v4900
    %7097 = vmatpush.bf16.msra.mxu0 %v4896
    %7098 = vmatpush.bf16.msra.mxu0 %v4892
    %7099 = vmatpush.bf16.msra.mxu0 %v4888
    %7100 = vmatpush.bf16.msra.mxu0 %v4884
    %7101 = vmatpush.bf16.msra.mxu0 %v4880
    %7102 = vmatmul.bf16.gmra.mxu0 %v318
    %v7103 = vpop.f32.mrf.mxu0
    %v7104 = vadd.f32 %v7091, %v7103
    %v7105 = vpop.f32.mrf.mxu0
    %7106 = vdwg.mxu0
    %7107 = vmatpush.bf16.msra.mxu0 %v4940
    %7108 = vmatpush.bf16.msra.mxu0 %v4936
    %7109 = vmatpush.bf16.msra.mxu0 %v4932
    %7110 = vmatpush.bf16.msra.mxu0 %v4928
    %7111 = vmatpush.bf16.msra.mxu0 %v4924
    %7112 = vmatpush.bf16.msra.mxu0 %v4920
    %7113 = vmatpush.bf16.msra.mxu0 %v4916
    %7114 = vmatpush.bf16.msra.mxu0 %v4912
    %7115 = vmatmul.bf16.gmra.mxu0 %v319
    %v7116 = vpop.f32.mrf.mxu0
    %v7117 = vadd.f32 %v7104, %v7116
    %v7118 = vpop.f32.mrf.mxu0
    %7119 = vdwg.mxu0
    %7120 = vmatpush.bf16.msra.mxu0 %v4972
    %7121 = vmatpush.bf16.msra.mxu0 %v4968
    %7122 = vmatpush.bf16.msra.mxu0 %v4964
    %7123 = vmatpush.bf16.msra.mxu0 %v4960
    %7124 = vmatpush.bf16.msra.mxu0 %v4956
    %7125 = vmatpush.bf16.msra.mxu0 %v4952
    %7126 = vmatpush.bf16.msra.mxu0 %v4948
    %7127 = vmatpush.bf16.msra.mxu0 %v4944
    %7128 = vmatmul.bf16.gmra.mxu0 %v320
    %v7129 = vpop.f32.mrf.mxu0
    %v7130 = vadd.f32 %v7117, %v7129
    %v7131 = vpop.f32.mrf.mxu0
    %7132 = vdwg.mxu0
    %7133 = vmatpush.bf16.msra.mxu0 %v5004
    %7134 = vmatpush.bf16.msra.mxu0 %v5000
    %7135 = vmatpush.bf16.msra.mxu0 %v4996
    %7136 = vmatpush.bf16.msra.mxu0 %v4992
    %7137 = vmatpush.bf16.msra.mxu0 %v4988
    %7138 = vmatpush.bf16.msra.mxu0 %v4984
    %7139 = vmatpush.bf16.msra.mxu0 %v4980
    %7140 = vmatpush.bf16.msra.mxu0 %v4976
    %7141 = vmatmul.bf16.gmra.mxu0 %v321
    %v7142 = vpop.f32.mrf.mxu0
    %v7143 = vadd.f32 %v7130, %v7142
    %v7144 = vpop.f32.mrf.mxu0
    %7145 = vdwg.mxu0
    %7146 = vmatpush.bf16.msra.mxu0 %v5036
    %7147 = vmatpush.bf16.msra.mxu0 %v5032
    %7148 = vmatpush.bf16.msra.mxu0 %v5028
    %7149 = vmatpush.bf16.msra.mxu0 %v5024
    %7150 = vmatpush.bf16.msra.mxu0 %v5020
    %7151 = vmatpush.bf16.msra.mxu0 %v5016
    %7152 = vmatpush.bf16.msra.mxu0 %v5012
    %7153 = vmatpush.bf16.msra.mxu0 %v5008
    %7154 = vmatmul.bf16.gmra.mxu0 %v322
    %v7155 = vpop.f32.mrf.mxu0
    %v7156 = vadd.f32 %v7143, %v7155
    %v7157 = vpop.f32.mrf.mxu0
    %7158 = vdwg.mxu0
    %7159 = vmatpush.bf16.msra.mxu0 0
    %7160 = vmatpush.bf16.msra.mxu0 0
    %7161 = vmatpush.bf16.msra.mxu0 0
    %7162 = vmatpush.bf16.msra.mxu0 0
    %7163 = vmatpush.bf16.msra.mxu0 %v5052
    %7164 = vmatpush.bf16.msra.mxu0 %v5048
    %7165 = vmatpush.bf16.msra.mxu0 %v5044
    %7166 = vmatpush.bf16.msra.mxu0 %v5040
    %7167 = vmatmul.bf16.gmra.mxu0 %v6000
    %v7168 = vpop.f32.mrf.mxu0
    %v7169 = vadd.f32 %v7156, %v7168
    %v7170 = vpop.f32.mrf.mxu0
    %7171 = vdwg.mxu0
    %7172 = vmatpush.bf16.msra.mxu0 %v4141
    %7173 = vmatpush.bf16.msra.mxu0 %v4137
    %7174 = vmatpush.bf16.msra.mxu0 %v4133
    %7175 = vmatpush.bf16.msra.mxu0 %v4129
    %7176 = vmatpush.bf16.msra.mxu0 %v4125
    %7177 = vmatpush.bf16.msra.mxu0 %v4121
    %7178 = vmatpush.bf16.msra.mxu0 %v4117
    %7179 = vmatpush.bf16.msra.mxu0 %v4113
    %7180 = vmatmul.bf16.gmra.mxu0 %v294
    %v7181 = vpop.f32.mrf.mxu0
    %v7182 = vadd.f32 %v1273, %v7181
    %v7183 = vpop.f32.mrf.mxu0
    %7184 = vdwg.mxu0
    %7185 = vmatpush.bf16.msra.mxu0 %v4173
    %7186 = vmatpush.bf16.msra.mxu0 %v4169
    %7187 = vmatpush.bf16.msra.mxu0 %v4165
    %7188 = vmatpush.bf16.msra.mxu0 %v4161
    %7189 = vmatpush.bf16.msra.mxu0 %v4157
    %7190 = vmatpush.bf16.msra.mxu0 %v4153
    %7191 = vmatpush.bf16.msra.mxu0 %v4149
    %7192 = vmatpush.bf16.msra.mxu0 %v4145
    %7193 = vmatmul.bf16.gmra.mxu0 %v295
    %v7194 = vpop.f32.mrf.mxu0
    %v7195 = vadd.f32 %v7182, %v7194
    %v7196 = vpop.f32.mrf.mxu0
    %7197 = vdwg.mxu0
    %7198 = vmatpush.bf16.msra.mxu0 %v4205
    %7199 = vmatpush.bf16.msra.mxu0 %v4201
    %7200 = vmatpush.bf16.msra.mxu0 %v4197
    %7201 = vmatpush.bf16.msra.mxu0 %v4193
    %7202 = vmatpush.bf16.msra.mxu0 %v4189
    %7203 = vmatpush.bf16.msra.mxu0 %v4185
    %7204 = vmatpush.bf16.msra.mxu0 %v4181
    %7205 = vmatpush.bf16.msra.mxu0 %v4177
    %7206 = vmatmul.bf16.gmra.mxu0 %v296
    %v7207 = vpop.f32.mrf.mxu0
    %v7208 = vadd.f32 %v7195, %v7207
    %v7209 = vpop.f32.mrf.mxu0
    %7210 = vdwg.mxu0
    %7211 = vmatpush.bf16.msra.mxu0 %v4237
    %7212 = vmatpush.bf16.msra.mxu0 %v4233
    %7213 = vmatpush.bf16.msra.mxu0 %v4229
    %7214 = vmatpush.bf16.msra.mxu0 %v4225
    %7215 = vmatpush.bf16.msra.mxu0 %v4221
    %7216 = vmatpush.bf16.msra.mxu0 %v4217
    %7217 = vmatpush.bf16.msra.mxu0 %v4213
    %7218 = vmatpush.bf16.msra.mxu0 %v4209
    %7219 = vmatmul.bf16.gmra.mxu0 %v297
    %v7220 = vpop.f32.mrf.mxu0
    %v7221 = vadd.f32 %v7208, %v7220
    %v7222 = vpop.f32.mrf.mxu0
    %7223 = vdwg.mxu0
    %7224 = vmatpush.bf16.msra.mxu0 %v4269
    %7225 = vmatpush.bf16.msra.mxu0 %v4265
    %7226 = vmatpush.bf16.msra.mxu0 %v4261
    %7227 = vmatpush.bf16.msra.mxu0 %v4257
    %7228 = vmatpush.bf16.msra.mxu0 %v4253
    %7229 = vmatpush.bf16.msra.mxu0 %v4249
    %7230 = vmatpush.bf16.msra.mxu0 %v4245
    %7231 = vmatpush.bf16.msra.mxu0 %v4241
    %7232 = vmatmul.bf16.gmra.mxu0 %v298
    %v7233 = vpop.f32.mrf.mxu0
    %v7234 = vadd.f32 %v7221, %v7233
    %v7235 = vpop.f32.mrf.mxu0
    %7236 = vdwg.mxu0
    %7237 = vmatpush.bf16.msra.mxu0 %v4301
    %7238 = vmatpush.bf16.msra.mxu0 %v4297
    %7239 = vmatpush.bf16.msra.mxu0 %v4293
    %7240 = vmatpush.bf16.msra.mxu0 %v4289
    %7241 = vmatpush.bf16.msra.mxu0 %v4285
    %7242 = vmatpush.bf16.msra.mxu0 %v4281
    %7243 = vmatpush.bf16.msra.mxu0 %v4277
    %7244 = vmatpush.bf16.msra.mxu0 %v4273
    %7245 = vmatmul.bf16.gmra.mxu0 %v299
    %v7246 = vpop.f32.mrf.mxu0
    %v7247 = vadd.f32 %v7234, %v7246
    %v7248 = vpop.f32.mrf.mxu0
    %7249 = vdwg.mxu0
    %7250 = vmatpush.bf16.msra.mxu0 %v4333
    %7251 = vmatpush.bf16.msra.mxu0 %v4329
    %7252 = vmatpush.bf16.msra.mxu0 %v4325
    %7253 = vmatpush.bf16.msra.mxu0 %v4321
    %7254 = vmatpush.bf16.msra.mxu0 %v4317
    %7255 = vmatpush.bf16.msra.mxu0 %v4313
    %7256 = vmatpush.bf16.msra.mxu0 %v4309
    %7257 = vmatpush.bf16.msra.mxu0 %v4305
    %7258 = vmatmul.bf16.gmra.mxu0 %v300
    %v7259 = vpop.f32.mrf.mxu0
    %v7260 = vadd.f32 %v7247, %v7259
    %v7261 = vpop.f32.mrf.mxu0
    %7262 = vdwg.mxu0
    %7263 = vmatpush.bf16.msra.mxu0 %v4365
    %7264 = vmatpush.bf16.msra.mxu0 %v4361
    %7265 = vmatpush.bf16.msra.mxu0 %v4357
    %7266 = vmatpush.bf16.msra.mxu0 %v4353
    %7267 = vmatpush.bf16.msra.mxu0 %v4349
    %7268 = vmatpush.bf16.msra.mxu0 %v4345
    %7269 = vmatpush.bf16.msra.mxu0 %v4341
    %7270 = vmatpush.bf16.msra.mxu0 %v4337
    %7271 = vmatmul.bf16.gmra.mxu0 %v301
    %v7272 = vpop.f32.mrf.mxu0
    %v7273 = vadd.f32 %v7260, %v7272
    %v7274 = vpop.f32.mrf.mxu0
    %7275 = vdwg.mxu0
    %7276 = vmatpush.bf16.msra.mxu0 %v4397
    %7277 = vmatpush.bf16.msra.mxu0 %v4393
    %7278 = vmatpush.bf16.msra.mxu0 %v4389
    %7279 = vmatpush.bf16.msra.mxu0 %v4385
    %7280 = vmatpush.bf16.msra.mxu0 %v4381
    %7281 = vmatpush.bf16.msra.mxu0 %v4377
    %7282 = vmatpush.bf16.msra.mxu0 %v4373
    %7283 = vmatpush.bf16.msra.mxu0 %v4369
    %7284 = vmatmul.bf16.gmra.mxu0 %v302
    %v7285 = vpop.f32.mrf.mxu0
    %v7286 = vadd.f32 %v7273, %v7285
    %v7287 = vpop.f32.mrf.mxu0
    %7288 = vdwg.mxu0
    %7289 = vmatpush.bf16.msra.mxu0 %v4429
    %7290 = vmatpush.bf16.msra.mxu0 %v4425
    %7291 = vmatpush.bf16.msra.mxu0 %v4421
    %7292 = vmatpush.bf16.msra.mxu0 %v4417
    %7293 = vmatpush.bf16.msra.mxu0 %v4413
    %7294 = vmatpush.bf16.msra.mxu0 %v4409
    %7295 = vmatpush.bf16.msra.mxu0 %v4405
    %7296 = vmatpush.bf16.msra.mxu0 %v4401
    %7297 = vmatmul.bf16.gmra.mxu0 %v303
    %v7298 = vpop.f32.mrf.mxu0
    %v7299 = vadd.f32 %v7286, %v7298
    %v7300 = vpop.f32.mrf.mxu0
    %7301 = vdwg.mxu0
    %7302 = vmatpush.bf16.msra.mxu0 %v4461
    %7303 = vmatpush.bf16.msra.mxu0 %v4457
    %7304 = vmatpush.bf16.msra.mxu0 %v4453
    %7305 = vmatpush.bf16.msra.mxu0 %v4449
    %7306 = vmatpush.bf16.msra.mxu0 %v4445
    %7307 = vmatpush.bf16.msra.mxu0 %v4441
    %7308 = vmatpush.bf16.msra.mxu0 %v4437
    %7309 = vmatpush.bf16.msra.mxu0 %v4433
    %7310 = vmatmul.bf16.gmra.mxu0 %v304
    %v7311 = vpop.f32.mrf.mxu0
    %v7312 = vadd.f32 %v7299, %v7311
    %v7313 = vpop.f32.mrf.mxu0
    %7314 = vdwg.mxu0
    %7315 = vmatpush.bf16.msra.mxu0 %v4493
    %7316 = vmatpush.bf16.msra.mxu0 %v4489
    %7317 = vmatpush.bf16.msra.mxu0 %v4485
    %7318 = vmatpush.bf16.msra.mxu0 %v4481
    %7319 = vmatpush.bf16.msra.mxu0 %v4477
    %7320 = vmatpush.bf16.msra.mxu0 %v4473
    %7321 = vmatpush.bf16.msra.mxu0 %v4469
    %7322 = vmatpush.bf16.msra.mxu0 %v4465
    %7323 = vmatmul.bf16.gmra.mxu0 %v305
    %v7324 = vpop.f32.mrf.mxu0
    %v7325 = vadd.f32 %v7312, %v7324
    %v7326 = vpop.f32.mrf.mxu0
    %7327 = vdwg.mxu0
    %7328 = vmatpush.bf16.msra.mxu0 %v4525
    %7329 = vmatpush.bf16.msra.mxu0 %v4521
    %7330 = vmatpush.bf16.msra.mxu0 %v4517
    %7331 = vmatpush.bf16.msra.mxu0 %v4513
    %7332 = vmatpush.bf16.msra.mxu0 %v4509
    %7333 = vmatpush.bf16.msra.mxu0 %v4505
    %7334 = vmatpush.bf16.msra.mxu0 %v4501
    %7335 = vmatpush.bf16.msra.mxu0 %v4497
    %7336 = vmatmul.bf16.gmra.mxu0 %v306
    %v7337 = vpop.f32.mrf.mxu0
    %v7338 = vadd.f32 %v7325, %v7337
    %v7339 = vpop.f32.mrf.mxu0
    %7340 = vdwg.mxu0
    %7341 = vmatpush.bf16.msra.mxu0 %v4557
    %7342 = vmatpush.bf16.msra.mxu0 %v4553
    %7343 = vmatpush.bf16.msra.mxu0 %v4549
    %7344 = vmatpush.bf16.msra.mxu0 %v4545
    %7345 = vmatpush.bf16.msra.mxu0 %v4541
    %7346 = vmatpush.bf16.msra.mxu0 %v4537
    %7347 = vmatpush.bf16.msra.mxu0 %v4533
    %7348 = vmatpush.bf16.msra.mxu0 %v4529
    %7349 = vmatmul.bf16.gmra.mxu0 %v307
    %v7350 = vpop.f32.mrf.mxu0
    %v7351 = vadd.f32 %v7338, %v7350
    %v7352 = vpop.f32.mrf.mxu0
    %7353 = vdwg.mxu0
    %7354 = vmatpush.bf16.msra.mxu0 %v4589
    %7355 = vmatpush.bf16.msra.mxu0 %v4585
    %7356 = vmatpush.bf16.msra.mxu0 %v4581
    %7357 = vmatpush.bf16.msra.mxu0 %v4577
    %7358 = vmatpush.bf16.msra.mxu0 %v4573
    %7359 = vmatpush.bf16.msra.mxu0 %v4569
    %7360 = vmatpush.bf16.msra.mxu0 %v4565
    %7361 = vmatpush.bf16.msra.mxu0 %v4561
    %7362 = vmatmul.bf16.gmra.mxu0 %v308
    %v7363 = vpop.f32.mrf.mxu0
    %v7364 = vadd.f32 %v7351, %v7363
    %v7365 = vpop.f32.mrf.mxu0
    %7366 = vdwg.mxu0
    %7367 = vmatpush.bf16.msra.mxu0 %v4621
    %7368 = vmatpush.bf16.msra.mxu0 %v4617
    %7369 = vmatpush.bf16.msra.mxu0 %v4613
    %7370 = vmatpush.bf16.msra.mxu0 %v4609
    %7371 = vmatpush.bf16.msra.mxu0 %v4605
    %7372 = vmatpush.bf16.msra.mxu0 %v4601
    %7373 = vmatpush.bf16.msra.mxu0 %v4597
    %7374 = vmatpush.bf16.msra.mxu0 %v4593
    %7375 = vmatmul.bf16.gmra.mxu0 %v309
    %v7376 = vpop.f32.mrf.mxu0
    %v7377 = vadd.f32 %v7364, %v7376
    %v7378 = vpop.f32.mrf.mxu0
    %7379 = vdwg.mxu0
    %7380 = vmatpush.bf16.msra.mxu0 %v4653
    %7381 = vmatpush.bf16.msra.mxu0 %v4649
    %7382 = vmatpush.bf16.msra.mxu0 %v4645
    %7383 = vmatpush.bf16.msra.mxu0 %v4641
    %7384 = vmatpush.bf16.msra.mxu0 %v4637
    %7385 = vmatpush.bf16.msra.mxu0 %v4633
    %7386 = vmatpush.bf16.msra.mxu0 %v4629
    %7387 = vmatpush.bf16.msra.mxu0 %v4625
    %7388 = vmatmul.bf16.gmra.mxu0 %v310
    %v7389 = vpop.f32.mrf.mxu0
    %v7390 = vadd.f32 %v7377, %v7389
    %v7391 = vpop.f32.mrf.mxu0
    %7392 = vdwg.mxu0
    %7393 = vmatpush.bf16.msra.mxu0 %v4685
    %7394 = vmatpush.bf16.msra.mxu0 %v4681
    %7395 = vmatpush.bf16.msra.mxu0 %v4677
    %7396 = vmatpush.bf16.msra.mxu0 %v4673
    %7397 = vmatpush.bf16.msra.mxu0 %v4669
    %7398 = vmatpush.bf16.msra.mxu0 %v4665
    %7399 = vmatpush.bf16.msra.mxu0 %v4661
    %7400 = vmatpush.bf16.msra.mxu0 %v4657
    %7401 = vmatmul.bf16.gmra.mxu0 %v311
    %v7402 = vpop.f32.mrf.mxu0
    %v7403 = vadd.f32 %v7390, %v7402
    %v7404 = vpop.f32.mrf.mxu0
    %7405 = vdwg.mxu0
    %7406 = vmatpush.bf16.msra.mxu0 %v4717
    %7407 = vmatpush.bf16.msra.mxu0 %v4713
    %7408 = vmatpush.bf16.msra.mxu0 %v4709
    %7409 = vmatpush.bf16.msra.mxu0 %v4705
    %7410 = vmatpush.bf16.msra.mxu0 %v4701
    %7411 = vmatpush.bf16.msra.mxu0 %v4697
    %7412 = vmatpush.bf16.msra.mxu0 %v4693
    %7413 = vmatpush.bf16.msra.mxu0 %v4689
    %7414 = vmatmul.bf16.gmra.mxu0 %v312
    %v7415 = vpop.f32.mrf.mxu0
    %v7416 = vadd.f32 %v7403, %v7415
    %v7417 = vpop.f32.mrf.mxu0
    %7418 = vdwg.mxu0
    %7419 = vmatpush.bf16.msra.mxu0 %v4749
    %7420 = vmatpush.bf16.msra.mxu0 %v4745
    %7421 = vmatpush.bf16.msra.mxu0 %v4741
    %7422 = vmatpush.bf16.msra.mxu0 %v4737
    %7423 = vmatpush.bf16.msra.mxu0 %v4733
    %7424 = vmatpush.bf16.msra.mxu0 %v4729
    %7425 = vmatpush.bf16.msra.mxu0 %v4725
    %7426 = vmatpush.bf16.msra.mxu0 %v4721
    %7427 = vmatmul.bf16.gmra.mxu0 %v313
    %v7428 = vpop.f32.mrf.mxu0
    %v7429 = vadd.f32 %v7416, %v7428
    %v7430 = vpop.f32.mrf.mxu0
    %7431 = vdwg.mxu0
    %7432 = vmatpush.bf16.msra.mxu0 %v4781
    %7433 = vmatpush.bf16.msra.mxu0 %v4777
    %7434 = vmatpush.bf16.msra.mxu0 %v4773
    %7435 = vmatpush.bf16.msra.mxu0 %v4769
    %7436 = vmatpush.bf16.msra.mxu0 %v4765
    %7437 = vmatpush.bf16.msra.mxu0 %v4761
    %7438 = vmatpush.bf16.msra.mxu0 %v4757
    %7439 = vmatpush.bf16.msra.mxu0 %v4753
    %7440 = vmatmul.bf16.gmra.mxu0 %v314
    %v7441 = vpop.f32.mrf.mxu0
    %v7442 = vadd.f32 %v7429, %v7441
    %v7443 = vpop.f32.mrf.mxu0
    %7444 = vdwg.mxu0
    %7445 = vmatpush.bf16.msra.mxu0 %v4813
    %7446 = vmatpush.bf16.msra.mxu0 %v4809
    %7447 = vmatpush.bf16.msra.mxu0 %v4805
    %7448 = vmatpush.bf16.msra.mxu0 %v4801
    %7449 = vmatpush.bf16.msra.mxu0 %v4797
    %7450 = vmatpush.bf16.msra.mxu0 %v4793
    %7451 = vmatpush.bf16.msra.mxu0 %v4789
    %7452 = vmatpush.bf16.msra.mxu0 %v4785
    %7453 = vmatmul.bf16.gmra.mxu0 %v315
    %v7454 = vpop.f32.mrf.mxu0
    %v7455 = vadd.f32 %v7442, %v7454
    %v7456 = vpop.f32.mrf.mxu0
    %7457 = vdwg.mxu0
    %7458 = vmatpush.bf16.msra.mxu0 %v4845
    %7459 = vmatpush.bf16.msra.mxu0 %v4841
    %7460 = vmatpush.bf16.msra.mxu0 %v4837
    %7461 = vmatpush.bf16.msra.mxu0 %v4833
    %7462 = vmatpush.bf16.msra.mxu0 %v4829
    %7463 = vmatpush.bf16.msra.mxu0 %v4825
    %7464 = vmatpush.bf16.msra.mxu0 %v4821
    %7465 = vmatpush.bf16.msra.mxu0 %v4817
    %7466 = vmatmul.bf16.gmra.mxu0 %v316
    %v7467 = vpop.f32.mrf.mxu0
    %v7468 = vadd.f32 %v7455, %v7467
    %v7469 = vpop.f32.mrf.mxu0
    %7470 = vdwg.mxu0
    %7471 = vmatpush.bf16.msra.mxu0 %v4877
    %7472 = vmatpush.bf16.msra.mxu0 %v4873
    %7473 = vmatpush.bf16.msra.mxu0 %v4869
    %7474 = vmatpush.bf16.msra.mxu0 %v4865
    %7475 = vmatpush.bf16.msra.mxu0 %v4861
    %7476 = vmatpush.bf16.msra.mxu0 %v4857
    %7477 = vmatpush.bf16.msra.mxu0 %v4853
    %7478 = vmatpush.bf16.msra.mxu0 %v4849
    %7479 = vmatmul.bf16.gmra.mxu0 %v317
    %v7480 = vpop.f32.mrf.mxu0
    %v7481 = vadd.f32 %v7468, %v7480
    %v7482 = vpop.f32.mrf.mxu0
    %7483 = vdwg.mxu0
    %7484 = vmatpush.bf16.msra.mxu0 %v4909
    %7485 = vmatpush.bf16.msra.mxu0 %v4905
    %7486 = vmatpush.bf16.msra.mxu0 %v4901
    %7487 = vmatpush.bf16.msra.mxu0 %v4897
    %7488 = vmatpush.bf16.msra.mxu0 %v4893
    %7489 = vmatpush.bf16.msra.mxu0 %v4889
    %7490 = vmatpush.bf16.msra.mxu0 %v4885
    %7491 = vmatpush.bf16.msra.mxu0 %v4881
    %7492 = vmatmul.bf16.gmra.mxu0 %v318
    %v7493 = vpop.f32.mrf.mxu0
    %v7494 = vadd.f32 %v7481, %v7493
    %v7495 = vpop.f32.mrf.mxu0
    %7496 = vdwg.mxu0
    %7497 = vmatpush.bf16.msra.mxu0 %v4941
    %7498 = vmatpush.bf16.msra.mxu0 %v4937
    %7499 = vmatpush.bf16.msra.mxu0 %v4933
    %7500 = vmatpush.bf16.msra.mxu0 %v4929
    %7501 = vmatpush.bf16.msra.mxu0 %v4925
    %7502 = vmatpush.bf16.msra.mxu0 %v4921
    %7503 = vmatpush.bf16.msra.mxu0 %v4917
    %7504 = vmatpush.bf16.msra.mxu0 %v4913
    %7505 = vmatmul.bf16.gmra.mxu0 %v319
    %v7506 = vpop.f32.mrf.mxu0
    %v7507 = vadd.f32 %v7494, %v7506
    %v7508 = vpop.f32.mrf.mxu0
    %7509 = vdwg.mxu0
    %7510 = vmatpush.bf16.msra.mxu0 %v4973
    %7511 = vmatpush.bf16.msra.mxu0 %v4969
    %7512 = vmatpush.bf16.msra.mxu0 %v4965
    %7513 = vmatpush.bf16.msra.mxu0 %v4961
    %7514 = vmatpush.bf16.msra.mxu0 %v4957
    %7515 = vmatpush.bf16.msra.mxu0 %v4953
    %7516 = vmatpush.bf16.msra.mxu0 %v4949
    %7517 = vmatpush.bf16.msra.mxu0 %v4945
    %7518 = vmatmul.bf16.gmra.mxu0 %v320
    %v7519 = vpop.f32.mrf.mxu0
    %v7520 = vadd.f32 %v7507, %v7519
    %v7521 = vpop.f32.mrf.mxu0
    %7522 = vdwg.mxu0
    %7523 = vmatpush.bf16.msra.mxu0 %v5005
    %7524 = vmatpush.bf16.msra.mxu0 %v5001
    %7525 = vmatpush.bf16.msra.mxu0 %v4997
    %7526 = vmatpush.bf16.msra.mxu0 %v4993
    %7527 = vmatpush.bf16.msra.mxu0 %v4989
    %7528 = vmatpush.bf16.msra.mxu0 %v4985
    %7529 = vmatpush.bf16.msra.mxu0 %v4981
    %7530 = vmatpush.bf16.msra.mxu0 %v4977
    %7531 = vmatmul.bf16.gmra.mxu0 %v321
    %v7532 = vpop.f32.mrf.mxu0
    %v7533 = vadd.f32 %v7520, %v7532
    %v7534 = vpop.f32.mrf.mxu0
    %7535 = vdwg.mxu0
    %7536 = vmatpush.bf16.msra.mxu0 %v5037
    %7537 = vmatpush.bf16.msra.mxu0 %v5033
    %7538 = vmatpush.bf16.msra.mxu0 %v5029
    %7539 = vmatpush.bf16.msra.mxu0 %v5025
    %7540 = vmatpush.bf16.msra.mxu0 %v5021
    %7541 = vmatpush.bf16.msra.mxu0 %v5017
    %7542 = vmatpush.bf16.msra.mxu0 %v5013
    %7543 = vmatpush.bf16.msra.mxu0 %v5009
    %7544 = vmatmul.bf16.gmra.mxu0 %v322
    %v7545 = vpop.f32.mrf.mxu0
    %v7546 = vadd.f32 %v7533, %v7545
    %v7547 = vpop.f32.mrf.mxu0
    %7548 = vdwg.mxu0
    %7549 = vmatpush.bf16.msra.mxu0 0
    %7550 = vmatpush.bf16.msra.mxu0 0
    %7551 = vmatpush.bf16.msra.mxu0 0
    %7552 = vmatpush.bf16.msra.mxu0 0
    %7553 = vmatpush.bf16.msra.mxu0 %v5053
    %7554 = vmatpush.bf16.msra.mxu0 %v5049
    %7555 = vmatpush.bf16.msra.mxu0 %v5045
    %7556 = vmatpush.bf16.msra.mxu0 %v5041
    %7557 = vmatmul.bf16.gmra.mxu0 %v6000
    %v7558 = vpop.f32.mrf.mxu0
    %v7559 = vadd.f32 %v7546, %v7558
    %v7560 = vpop.f32.mrf.mxu0
    %7561 = vdwg.mxu0
    %v7562 = vmax.f32 %v6389, 0.0
    %v7563 = vmax.f32 %v6779, 0.0
    %v7564 = vmax.f32 %v7169, 0.0
    %v7565 = vmax.f32 %v7559, 0.0
    %v7566 = vld [vmem:[#allocation11] sm:$0xff]
    %v7567 = vld [vmem:[#allocation11 + $0x8] sm:$0xff]
    %v7568 = vld [vmem:[#allocation11 + $0x10] sm:$0xff]
    %v7569 = vld [vmem:[#allocation11 + $0x18] sm:$0xff]
    %v7570 = vld [vmem:[#allocation11 + $0x20] sm:$0xff]
    %v7571 = vld [vmem:[#allocation11 + $0x28] sm:$0xff]
    %v7572 = vld [vmem:[#allocation11 + $0x30] sm:$0xff]
    %v7573 = vld [vmem:[#allocation11 + $0x38] sm:$0xff]
    %v7574 = vld [vmem:[#allocation11 + $0x40] sm:$0xff]
    %v7575 = vld [vmem:[#allocation11 + $0x48] sm:$0xff]
    %v7576 = vld [vmem:[#allocation11 + $0x50] sm:$0xff]
    %v7577 = vld [vmem:[#allocation11 + $0x58] sm:$0xff]
    %v7578 = vld [vmem:[#allocation11 + $0x60] sm:$0xff]
    %v7579 = vld [vmem:[#allocation11 + $0x68] sm:$0xff]
    %v7580 = vld [vmem:[#allocation11 + $0x70] sm:$0xff]
    %v7581 = vld [vmem:[#allocation11 + $0x78] sm:$0xff]
    %v7582 = vld [vmem:[#allocation11 + $0x80] sm:$0xff]
    %v7583 = vld [vmem:[#allocation11 + $0x88] sm:$0xff]
    %v7584 = vld [vmem:[#allocation11 + $0x90] sm:$0xff]
    %v7585 = vld [vmem:[#allocation11 + $0x98] sm:$0xff]
    %v7586 = vld [vmem:[#allocation11 + $0xa0] sm:$0xff]
    %v7587 = vld [vmem:[#allocation11 + $0xa8] sm:$0xff]
    %v7588 = vld [vmem:[#allocation11 + $0xb0] sm:$0xff]
    %v7589 = vld [vmem:[#allocation11 + $0xb8] sm:$0xff]
    %v7590 = vld [vmem:[#allocation11 + $0xc0] sm:$0xff]
    %v7591 = vld [vmem:[#allocation11 + $0xc8] sm:$0xff]
    %v7592 = vld [vmem:[#allocation11 + $0xd0] sm:$0xff]
    %v7593 = vld [vmem:[#allocation11 + $0xd8] sm:$0xff]
    %v7594 = vld [vmem:[#allocation11 + $0xe0] sm:$0xff]
    %v7595 = vld [vmem:[#allocation11 + $0xe8] sm:$0xff]
    %v7596 = vld [vmem:[#allocation11 + $0xf0] sm:$0xff]
    %v7597 = vld [vmem:[#allocation11 + $0xf8] sm:$0xff]
    %v7598 = vld [vmem:[#allocation11 + $0x100] sm:$0xff]
    %v7599 = vld [vmem:[#allocation11 + $0x108] sm:$0xff]
    %v7600 = vld [vmem:[#allocation11 + $0x110] sm:$0xff]
    %v7601 = vld [vmem:[#allocation11 + $0x118] sm:$0xff]
    %v7602 = vld [vmem:[#allocation11 + $0x120] sm:$0xff]
    %v7603 = vld [vmem:[#allocation11 + $0x128] sm:$0xff]
    %v7604 = vld [vmem:[#allocation11 + $0x130] sm:$0xff]
    %v7605 = vld [vmem:[#allocation11 + $0x138] sm:$0xff]
    %v7606 = vld [vmem:[#allocation11 + $0x140] sm:$0xff]
    %v7607 = vld [vmem:[#allocation11 + $0x148] sm:$0xff]
    %v7608 = vld [vmem:[#allocation11 + $0x150] sm:$0xff]
    %v7609 = vld [vmem:[#allocation11 + $0x158] sm:$0xff]
    %v7610 = vld [vmem:[#allocation11 + $0x160] sm:$0xff]
    %v7611 = vld [vmem:[#allocation11 + $0x168] sm:$0xff]
    %v7612 = vld [vmem:[#allocation11 + $0x170] sm:$0xff]
    %v7613 = vld [vmem:[#allocation11 + $0x178] sm:$0xff]
    %v7614 = vld [vmem:[#allocation11 + $0x180] sm:$0xff]
    %v7615 = vld [vmem:[#allocation11 + $0x188] sm:$0xff]
    %v7616 = vld [vmem:[#allocation11 + $0x190] sm:$0xff]
    %v7617 = vld [vmem:[#allocation11 + $0x198] sm:$0xff]
    %v7618 = vld [vmem:[#allocation11 + $0x1a0] sm:$0xff]
    %v7619 = vld [vmem:[#allocation11 + $0x1a8] sm:$0xff]
    %v7620 = vld [vmem:[#allocation11 + $0x1b0] sm:$0xff]
    %v7621 = vld [vmem:[#allocation11 + $0x1b8] sm:$0xff]
    %v7622 = vld [vmem:[#allocation11 + $0x1c0] sm:$0xff]
    %v7623 = vld [vmem:[#allocation11 + $0x1c8] sm:$0xff]
    %v7624 = vld [vmem:[#allocation11 + $0x1d0] sm:$0xff]
    %v7625 = vld [vmem:[#allocation11 + $0x1d8] sm:$0xff]
    %v7626 = vld [vmem:[#allocation11 + $0x1e0] sm:$0xff]
    %v7627 = vld [vmem:[#allocation11 + $0x1e8] sm:$0xff]
    %v7628 = vld [vmem:[#allocation11 + $0x1f0] sm:$0xff]
    %v7629 = vld [vmem:[#allocation11 + $0x1f8] sm:$0xff]
    %v7630 = vld [vmem:[#allocation11 + $0x200] sm:$0xff]
    %v7631 = vld [vmem:[#allocation11 + $0x208] sm:$0xff]
    %v7632 = vld [vmem:[#allocation11 + $0x210] sm:$0xff]
    %v7633 = vld [vmem:[#allocation11 + $0x218] sm:$0xff]
    %v7634 = vld [vmem:[#allocation11 + $0x220] sm:$0xff]
    %v7635 = vld [vmem:[#allocation11 + $0x228] sm:$0xff]
    %v7636 = vld [vmem:[#allocation11 + $0x230] sm:$0xff]
    %v7637 = vld [vmem:[#allocation11 + $0x238] sm:$0xff]
    %v7638 = vld [vmem:[#allocation11 + $0x240] sm:$0xff]
    %v7639 = vld [vmem:[#allocation11 + $0x248] sm:$0xff]
    %v7640 = vld [vmem:[#allocation11 + $0x250] sm:$0xff]
    %v7641 = vld [vmem:[#allocation11 + $0x258] sm:$0xff]
    %v7642 = vld [vmem:[#allocation11 + $0x260] sm:$0xff]
    %v7643 = vld [vmem:[#allocation11 + $0x268] sm:$0xff]
    %v7644 = vld [vmem:[#allocation11 + $0x270] sm:$0xff]
    %v7645 = vld [vmem:[#allocation11 + $0x278] sm:$0xff]
    %v7646 = vld [vmem:[#allocation11 + $0x280] sm:$0xff]
    %v7647 = vld [vmem:[#allocation11 + $0x288] sm:$0xff]
    %v7648 = vld [vmem:[#allocation11 + $0x290] sm:$0xff]
    %v7649 = vld [vmem:[#allocation11 + $0x298] sm:$0xff]
    %v7650 = vld [vmem:[#allocation11 + $0x2a0] sm:$0xff]
    %v7651 = vld [vmem:[#allocation11 + $0x2a8] sm:$0xff]
    %v7652 = vld [vmem:[#allocation11 + $0x2b0] sm:$0xff]
    %v7653 = vld [vmem:[#allocation11 + $0x2b8] sm:$0xff]
    %v7654 = vld [vmem:[#allocation11 + $0x2c0] sm:$0xff]
    %v7655 = vld [vmem:[#allocation11 + $0x2c8] sm:$0xff]
    %v7656 = vld [vmem:[#allocation11 + $0x2d0] sm:$0xff]
    %v7657 = vld [vmem:[#allocation11 + $0x2d8] sm:$0xff]
    %v7658 = vld [vmem:[#allocation11 + $0x2e0] sm:$0xff]
    %v7659 = vld [vmem:[#allocation11 + $0x2e8] sm:$0xff]
    %v7660 = vld [vmem:[#allocation11 + $0x2f0] sm:$0xff]
    %v7661 = vld [vmem:[#allocation11 + $0x2f8] sm:$0xff]
    %v7662 = vld [vmem:[#allocation11 + $0x300] sm:$0xff]
    %v7663 = vld [vmem:[#allocation11 + $0x308] sm:$0xff]
    %v7664 = vld [vmem:[#allocation11 + $0x310] sm:$0xff]
    %v7665 = vld [vmem:[#allocation11 + $0x318] sm:$0xff]
    %v7666 = vld [vmem:[#allocation11 + $0x320] sm:$0xff]
    %v7667 = vld [vmem:[#allocation11 + $0x328] sm:$0xff]
    %v7668 = vld [vmem:[#allocation11 + $0x330] sm:$0xff]
    %v7669 = vld [vmem:[#allocation11 + $0x338] sm:$0xff]
    %v7670 = vld [vmem:[#allocation11 + $0x340] sm:$0xff]
    %v7671 = vld [vmem:[#allocation11 + $0x348] sm:$0xff]
    %v7672 = vld [vmem:[#allocation11 + $0x350] sm:$0xff]
    %v7673 = vld [vmem:[#allocation11 + $0x358] sm:$0xff]
    %v7674 = vld [vmem:[#allocation11 + $0x360] sm:$0xff]
    %v7675 = vld [vmem:[#allocation11 + $0x368] sm:$0xff]
    %v7676 = vld [vmem:[#allocation11 + $0x370] sm:$0xff]
    %v7677 = vld [vmem:[#allocation11 + $0x378] sm:$0xff]
    %v7678 = vld [vmem:[#allocation11 + $0x380] sm:$0xff]
    %v7679 = vld [vmem:[#allocation11 + $0x388] sm:$0xff]
    %v7680 = vld [vmem:[#allocation11 + $0x390] sm:$0xff]
    %v7681 = vld [vmem:[#allocation11 + $0x398] sm:$0xff]
    %v7682 = vld [vmem:[#allocation11 + $0x3a0] sm:$0xff]
    %v7683 = vld [vmem:[#allocation11 + $0x3a8] sm:$0xff]
    %v7684 = vld [vmem:[#allocation11 + $0x3b0] sm:$0xff]
    %v7685 = vld [vmem:[#allocation11 + $0x3b8] sm:$0xff]
    %v7686 = vld [vmem:[#allocation11 + $0x3c0] sm:$0xff]
    %v7687 = vld [vmem:[#allocation11 + $0x3c8] sm:$0xff]
    %v7688 = vld [vmem:[#allocation11 + $0x3d0] sm:$0xff]
    %v7689 = vld [vmem:[#allocation11 + $0x3d8] sm:$0xff]
    %v7690 = vld [vmem:[#allocation11 + $0x3e0] sm:$0xff]
    %v7691 = vld [vmem:[#allocation11 + $0x3e8] sm:$0xff]
    %v7692 = vld [vmem:[#allocation11 + $0x3f0] sm:$0xff]
    %v7693 = vld [vmem:[#allocation11 + $0x3f8] sm:$0xff]
    %v7694 = vld [vmem:[%s1] sm:$0x3]
    %v7695 = vld [vmem:[#allocation12] sm:$0xff]
    %7697 = vst [vmem:[#allocation1] ss:$2 sm:$0xff] %v7695
    %v7698 = vld.sshfl [vmem:[#allocation1] sm:$0xff pattern:$0x75316420]
    %v7699 = vld.sshfl [vmem:[#allocation1 + $0x8] sm:$0xff pattern:$0x75316420]
    %vm7700 = vcmask 31744
    %v7702 = vsel %vm7700, %v7694, 0
    %vm7704 = vcmask 1043456
    %v7705 = vsel %vm7704, %v7698, 0
    %v7707 = vsel %vm7704, %v7699, 0
    %7709 = vmatpush.msra.mxu0 0.0
    %7710 = vmatpush.msra.mxu0 0.0
    %7711 = vmatpush.msra.mxu0 0.0
    %7712 = vmatpush.msra.mxu0 0.0
    %7713 = vmatpush.msra.mxu0 0.0
    %7714 = vmatpush.msra.mxu0 0.0
    %7715 = vmatpush.msra.mxu0 0.0
    %7716 = vmatpush.msra.mxu0 0.0
    %7717 = vmatpush.msra.mxu0 0.0
    %7718 = vmatpush.msra.mxu0 0.0
    %7719 = vmatpush.msra.mxu0 0.0
    %7720 = vmatpush.msra.mxu0 0.0
    %7721 = vmatpush.msra.mxu0 0.0
    %7722 = vmatpush.msra.mxu0 0.0
    %7723 = vmatpush.msra.mxu0 0.0
    %7724 = vmatpush.msra.mxu0 %v7705
    %7725 = vmatmul.f32.gmra.mxu0 %v7702
    %v7726 = vpop.f32.mrf.mxu0
    %v7727 = vadd.f32 0.0, %v7726
    %7728 = vdwg.mxu0
    %7729 = vmatpush.msra.mxu0 0.0
    %7730 = vmatpush.msra.mxu0 0.0
    %7731 = vmatpush.msra.mxu0 0.0
    %7732 = vmatpush.msra.mxu0 0.0
    %7733 = vmatpush.msra.mxu0 0.0
    %7734 = vmatpush.msra.mxu0 0.0
    %7735 = vmatpush.msra.mxu0 0.0
    %7736 = vmatpush.msra.mxu0 0.0
    %7737 = vmatpush.msra.mxu0 0.0
    %7738 = vmatpush.msra.mxu0 0.0
    %7739 = vmatpush.msra.mxu0 0.0
    %7740 = vmatpush.msra.mxu0 0.0
    %7741 = vmatpush.msra.mxu0 0.0
    %7742 = vmatpush.msra.mxu0 0.0
    %7743 = vmatpush.msra.mxu0 0.0
    %7744 = vmatpush.msra.mxu0 %v7707
    %7745 = vmatmul.f32.gmra.mxu0 %v7702
    %v7746 = vpop.f32.mrf.mxu0
    %v7747 = vadd.f32 0.0, %v7746
    %7748 = vdwg.mxu0
    %7749 = vmatpush.msra.mxu0 %v7596
    %7750 = vmatpush.msra.mxu0 %v7594
    %7751 = vmatpush.msra.mxu0 %v7592
    %7752 = vmatpush.msra.mxu0 %v7590
    %7753 = vmatpush.msra.mxu0 %v7588
    %7754 = vmatpush.msra.mxu0 %v7586
    %7755 = vmatpush.msra.mxu0 %v7584
    %7756 = vmatpush.msra.mxu0 %v7582
    %7757 = vmatpush.msra.mxu0 %v7580
    %7758 = vmatpush.msra.mxu0 %v7578
    %7759 = vmatpush.msra.mxu0 %v7576
    %7760 = vmatpush.msra.mxu0 %v7574
    %7761 = vmatpush.msra.mxu0 %v7572
    %7762 = vmatpush.msra.mxu0 %v7570
    %7763 = vmatpush.msra.mxu0 %v7568
    %7764 = vmatpush.msra.mxu0 %v7566
    %7765 = vmatmul.f32.gmra.mxu0 %v7562
    %v7766 = vpop.f32.mrf.mxu0
    %v7767 = vadd.f32 %v7727, %v7766
    %7768 = vdwg.mxu0
    %7769 = vmatpush.msra.mxu0 %v7628
    %7770 = vmatpush.msra.mxu0 %v7626
    %7771 = vmatpush.msra.mxu0 %v7624
    %7772 = vmatpush.msra.mxu0 %v7622
    %7773 = vmatpush.msra.mxu0 %v7620
    %7774 = vmatpush.msra.mxu0 %v7618
    %7775 = vmatpush.msra.mxu0 %v7616
    %7776 = vmatpush.msra.mxu0 %v7614
    %7777 = vmatpush.msra.mxu0 %v7612
    %7778 = vmatpush.msra.mxu0 %v7610
    %7779 = vmatpush.msra.mxu0 %v7608
    %7780 = vmatpush.msra.mxu0 %v7606
    %7781 = vmatpush.msra.mxu0 %v7604
    %7782 = vmatpush.msra.mxu0 %v7602
    %7783 = vmatpush.msra.mxu0 %v7600
    %7784 = vmatpush.msra.mxu0 %v7598
    %7785 = vmatmul.f32.gmra.mxu0 %v7563
    %v7786 = vpop.f32.mrf.mxu0
    %v7787 = vadd.f32 %v7767, %v7786
    %7788 = vdwg.mxu0
    %7789 = vmatpush.msra.mxu0 %v7660
    %7790 = vmatpush.msra.mxu0 %v7658
    %7791 = vmatpush.msra.mxu0 %v7656
    %7792 = vmatpush.msra.mxu0 %v7654
    %7793 = vmatpush.msra.mxu0 %v7652
    %7794 = vmatpush.msra.mxu0 %v7650
    %7795 = vmatpush.msra.mxu0 %v7648
    %7796 = vmatpush.msra.mxu0 %v7646
    %7797 = vmatpush.msra.mxu0 %v7644
    %7798 = vmatpush.msra.mxu0 %v7642
    %7799 = vmatpush.msra.mxu0 %v7640
    %7800 = vmatpush.msra.mxu0 %v7638
    %7801 = vmatpush.msra.mxu0 %v7636
    %7802 = vmatpush.msra.mxu0 %v7634
    %7803 = vmatpush.msra.mxu0 %v7632
    %7804 = vmatpush.msra.mxu0 %v7630
    %7805 = vmatmul.f32.gmra.mxu0 %v7564
    %v7806 = vpop.f32.mrf.mxu0
    %v7807 = vadd.f32 %v7787, %v7806
    %7808 = vdwg.mxu0
    %7809 = vmatpush.msra.mxu0 %v7692
    %7810 = vmatpush.msra.mxu0 %v7690
    %7811 = vmatpush.msra.mxu0 %v7688
    %7812 = vmatpush.msra.mxu0 %v7686
    %7813 = vmatpush.msra.mxu0 %v7684
    %7814 = vmatpush.msra.mxu0 %v7682
    %7815 = vmatpush.msra.mxu0 %v7680
    %7816 = vmatpush.msra.mxu0 %v7678
    %7817 = vmatpush.msra.mxu0 %v7676
    %7818 = vmatpush.msra.mxu0 %v7674
    %7819 = vmatpush.msra.mxu0 %v7672
    %7820 = vmatpush.msra.mxu0 %v7670
    %7821 = vmatpush.msra.mxu0 %v7668
    %7822 = vmatpush.msra.mxu0 %v7666
    %7823 = vmatpush.msra.mxu0 %v7664
    %7824 = vmatpush.msra.mxu0 %v7662
    %7825 = vmatmul.f32.gmra.mxu0 %v7565
    %v7826 = vpop.f32.mrf.mxu0
    %v7827 = vadd.f32 %v7807, %v7826
    %7828 = vdwg.mxu0
    %7829 = vmatpush.msra.mxu0 %v7597
    %7830 = vmatpush.msra.mxu0 %v7595
    %7831 = vmatpush.msra.mxu0 %v7593
    %7832 = vmatpush.msra.mxu0 %v7591
    %7833 = vmatpush.msra.mxu0 %v7589
    %7834 = vmatpush.msra.mxu0 %v7587
    %7835 = vmatpush.msra.mxu0 %v7585
    %7836 = vmatpush.msra.mxu0 %v7583
    %7837 = vmatpush.msra.mxu0 %v7581
    %7838 = vmatpush.msra.mxu0 %v7579
    %7839 = vmatpush.msra.mxu0 %v7577
    %7840 = vmatpush.msra.mxu0 %v7575
    %7841 = vmatpush.msra.mxu0 %v7573
    %7842 = vmatpush.msra.mxu0 %v7571
    %7843 = vmatpush.msra.mxu0 %v7569
    %7844 = vmatpush.msra.mxu0 %v7567
    %7845 = vmatmul.f32.gmra.mxu0 %v7562
    %v7846 = vpop.f32.mrf.mxu0
    %v7847 = vadd.f32 %v7747, %v7846
    %7848 = vdwg.mxu0
    %7849 = vmatpush.msra.mxu0 %v7629
    %7850 = vmatpush.msra.mxu0 %v7627
    %7851 = vmatpush.msra.mxu0 %v7625
    %7852 = vmatpush.msra.mxu0 %v7623
    %7853 = vmatpush.msra.mxu0 %v7621
    %7854 = vmatpush.msra.mxu0 %v7619
    %7855 = vmatpush.msra.mxu0 %v7617
    %7856 = vmatpush.msra.mxu0 %v7615
    %7857 = vmatpush.msra.mxu0 %v7613
    %7858 = vmatpush.msra.mxu0 %v7611
    %7859 = vmatpush.msra.mxu0 %v7609
    %7860 = vmatpush.msra.mxu0 %v7607
    %7861 = vmatpush.msra.mxu0 %v7605
    %7862 = vmatpush.msra.mxu0 %v7603
    %7863 = vmatpush.msra.mxu0 %v7601
    %7864 = vmatpush.msra.mxu0 %v7599
    %7865 = vmatmul.f32.gmra.mxu0 %v7563
    %v7866 = vpop.f32.mrf.mxu0
    %v7867 = vadd.f32 %v7847, %v7866
    %7868 = vdwg.mxu0
    %7869 = vmatpush.msra.mxu0 %v7661
    %7870 = vmatpush.msra.mxu0 %v7659
    %7871 = vmatpush.msra.mxu0 %v7657
    %7872 = vmatpush.msra.mxu0 %v7655
    %7873 = vmatpush.msra.mxu0 %v7653
    %7874 = vmatpush.msra.mxu0 %v7651
    %7875 = vmatpush.msra.mxu0 %v7649
    %7876 = vmatpush.msra.mxu0 %v7647
    %7877 = vmatpush.msra.mxu0 %v7645
    %7878 = vmatpush.msra.mxu0 %v7643
    %7879 = vmatpush.msra.mxu0 %v7641
    %7880 = vmatpush.msra.mxu0 %v7639
    %7881 = vmatpush.msra.mxu0 %v7637
    %7882 = vmatpush.msra.mxu0 %v7635
    %7883 = vmatpush.msra.mxu0 %v7633
    %7884 = vmatpush.msra.mxu0 %v7631
    %7885 = vmatmul.f32.gmra.mxu0 %v7564
    %v7886 = vpop.f32.mrf.mxu0
    %v7887 = vadd.f32 %v7867, %v7886
    %7888 = vdwg.mxu0
    %7889 = vmatpush.msra.mxu0 %v7693
    %7890 = vmatpush.msra.mxu0 %v7691
    %7891 = vmatpush.msra.mxu0 %v7689
    %7892 = vmatpush.msra.mxu0 %v7687
    %7893 = vmatpush.msra.mxu0 %v7685
    %7894 = vmatpush.msra.mxu0 %v7683
    %7895 = vmatpush.msra.mxu0 %v7681
    %7896 = vmatpush.msra.mxu0 %v7679
    %7897 = vmatpush.msra.mxu0 %v7677
    %7898 = vmatpush.msra.mxu0 %v7675
    %7899 = vmatpush.msra.mxu0 %v7673
    %7900 = vmatpush.msra.mxu0 %v7671
    %7901 = vmatpush.msra.mxu0 %v7669
    %7902 = vmatpush.msra.mxu0 %v7667
    %7903 = vmatpush.msra.mxu0 %v7665
    %7904 = vmatpush.msra.mxu0 %v7663
    %7905 = vmatmul.f32.gmra.mxu0 %v7565
    %v7906 = vpop.f32.mrf.mxu0
    %v7907 = vadd.f32 %v7887, %v7906
    %7908 = vdwg.mxu0
    %v7909 = vld [vmem:[#allocation14] sm:$0x3]
    %v7911 = vperm.slane %v7909, 0
    %v7912 = vperm.slane %v7909, 1
    %v7915 = vadd.f32 %v7827, %v7911
    %v7916 = vadd.f32 %v7907, %v7912
    %v7917 = vmax.f32 %v7915, 0.0
    %v7918 = vmax.f32 %v7916, 0.0
    %v7919 = vld [vmem:[#allocation15] sm:$0xff]
    %v7920 = vld [vmem:[#allocation15 + $0x8] sm:$0xff]
    %v7921 = vld [vmem:[#allocation15 + $0x10] sm:$0xff]
    %v7922 = vld [vmem:[#allocation15 + $0x18] sm:$0xff]
    %v7923 = vld [vmem:[#allocation15 + $0x20] sm:$0xff]
    %v7924 = vld [vmem:[#allocation15 + $0x28] sm:$0xff]
    %v7925 = vld [vmem:[#allocation15 + $0x30] sm:$0xff]
    %v7926 = vld [vmem:[#allocation15 + $0x38] sm:$0xff]
    %v7927 = vld [vmem:[#allocation15 + $0x40] sm:$0xff]
    %v7928 = vld [vmem:[#allocation15 + $0x48] sm:$0xff]
    %v7929 = vld [vmem:[#allocation15 + $0x50] sm:$0xff]
    %v7930 = vld [vmem:[#allocation15 + $0x58] sm:$0xff]
    %v7931 = vld [vmem:[#allocation15 + $0x60] sm:$0xff]
    %v7932 = vld [vmem:[#allocation15 + $0x68] sm:$0xff]
    %v7933 = vld [vmem:[#allocation15 + $0x70] sm:$0xff]
    %v7934 = vld [vmem:[#allocation15 + $0x78] sm:$0xff]
    %v7935 = vld [vmem:[#allocation15 + $0x80] sm:$0xff]
    %v7936 = vld [vmem:[#allocation15 + $0x88] sm:$0xff]
    %v7937 = vld [vmem:[#allocation15 + $0x90] sm:$0xff]
    %v7938 = vld [vmem:[#allocation15 + $0x98] sm:$0xff]
    %v7939 = vld [vmem:[#allocation15 + $0xa0] sm:$0xff]
    %v7940 = vld [vmem:[#allocation15 + $0xa8] sm:$0xff]
    %v7941 = vld [vmem:[#allocation15 + $0xb0] sm:$0xff]
    %v7942 = vld [vmem:[#allocation15 + $0xb8] sm:$0xff]
    %v7943 = vld [vmem:[#allocation15 + $0xc0] sm:$0xff]
    %v7944 = vld [vmem:[#allocation15 + $0xc8] sm:$0xff]
    %v7945 = vld [vmem:[#allocation15 + $0xd0] sm:$0xff]
    %v7946 = vld [vmem:[#allocation15 + $0xd8] sm:$0xff]
    %v7947 = vld [vmem:[#allocation15 + $0xe0] sm:$0xff]
    %v7948 = vld [vmem:[#allocation15 + $0xe8] sm:$0xff]
    %v7949 = vld [vmem:[#allocation15 + $0xf0] sm:$0xff]
    %v7950 = vld [vmem:[#allocation15 + $0xf8] sm:$0xff]
    %v7951 = vld [vmem:[#allocation17] sm:$0x1]
    %v7953 = vperm.slane %v7951, 0
    %7955 = vmatpush.msra.mxu0 %v7934
    %7956 = vmatpush.msra.mxu0 %v7933
    %7957 = vmatpush.msra.mxu0 %v7932
    %7958 = vmatpush.msra.mxu0 %v7931
    %7959 = vmatpush.msra.mxu0 %v7930
    %7960 = vmatpush.msra.mxu0 %v7929
    %7961 = vmatpush.msra.mxu0 %v7928
    %7962 = vmatpush.msra.mxu0 %v7927
    %7963 = vmatpush.msra.mxu0 %v7926
    %7964 = vmatpush.msra.mxu0 %v7925
    %7965 = vmatpush.msra.mxu0 %v7924
    %7966 = vmatpush.msra.mxu0 %v7923
    %7967 = vmatpush.msra.mxu0 %v7922
    %7968 = vmatpush.msra.mxu0 %v7921
    %7969 = vmatpush.msra.mxu0 %v7920
    %7970 = vmatpush.msra.mxu0 %v7919
    %7971 = vmatmul.f32.gmra.mxu0 %v7917
    %v7972 = vpop.f32.mrf.mxu0
    %v7973 = vadd.f32 %v7953, %v7972
    %7974 = vdwg.mxu0
    %7975 = vmatpush.msra.mxu0 %v7950
    %7976 = vmatpush.msra.mxu0 %v7949
    %7977 = vmatpush.msra.mxu0 %v7948
    %7978 = vmatpush.msra.mxu0 %v7947
    %7979 = vmatpush.msra.mxu0 %v7946
    %7980 = vmatpush.msra.mxu0 %v7945
    %7981 = vmatpush.msra.mxu0 %v7944
    %7982 = vmatpush.msra.mxu0 %v7943
    %7983 = vmatpush.msra.mxu0 %v7942
    %7984 = vmatpush.msra.mxu0 %v7941
    %7985 = vmatpush.msra.mxu0 %v7940
    %7986 = vmatpush.msra.mxu0 %v7939
    %7987 = vmatpush.msra.mxu0 %v7938
    %7988 = vmatpush.msra.mxu0 %v7937
    %7989 = vmatpush.msra.mxu0 %v7936
    %7990 = vmatpush.msra.mxu0 %v7935
    %7991 = vmatmul.f32.gmra.mxu0 %v7918
    %v7992 = vpop.f32.mrf.mxu0
    %v7993 = vadd.f32 %v7973, %v7992
    %7994 = vdwg.mxu0
    %v7995 = vmax.f32 %v7993, 0.0
    %v7996 = vld [vmem:[#allocation18] sm:$0xff]
    %v7997 = vld [vmem:[#allocation18 + $0x8] sm:$0xff]
    %v7998 = vld [vmem:[#allocation18 + $0x10] sm:$0xff]
    %v7999 = vld [vmem:[#allocation18 + $0x18] sm:$0xff]
    %v8000 = vld [vmem:[#allocation18 + $0x20] sm:$0xff]
    %v8001 = vld [vmem:[#allocation18 + $0x28] sm:$0xff]
    %v8002 = vld [vmem:[#allocation18 + $0x30] sm:$0xff]
    %v8003 = vld [vmem:[#allocation18 + $0x38] sm:$0xff]
    %v8004 = vld [vmem:[#allocation18 + $0x40] sm:$0xff]
    %v8005 = vld [vmem:[#allocation18 + $0x48] sm:$0xff]
    %v8006 = vld [vmem:[#allocation18 + $0x50] sm:$0xff]
    %v8007 = vld [vmem:[#allocation18 + $0x58] sm:$0xff]
    %v8008 = vld [vmem:[#allocation18 + $0x60] sm:$0xff]
    %v8009 = vld [vmem:[#allocation18 + $0x68] sm:$0xff]
    %v8010 = vld [vmem:[#allocation18 + $0x70] sm:$0xff]
    %v8011 = vld [vmem:[#allocation18 + $0x78] sm:$0xff]
    %v8012 = vld [vmem:[#allocation18 + $0x80] sm:$0xff]
    %v8013 = vld [vmem:[#allocation18 + $0x88] sm:$0xff]
    %v8014 = vld [vmem:[#allocation18 + $0x90] sm:$0xff]
    %v8015 = vld [vmem:[#allocation18 + $0x98] sm:$0xff]
    %v8016 = vld [vmem:[#allocation18 + $0xa0] sm:$0xff]
    %v8017 = vld [vmem:[#allocation18 + $0xa8] sm:$0xff]
    %v8018 = vld [vmem:[#allocation18 + $0xb0] sm:$0xff]
    %v8019 = vld [vmem:[#allocation18 + $0xb8] sm:$0xff]
    %v8020 = vld [vmem:[#allocation18 + $0xc0] sm:$0xff]
    %v8021 = vld [vmem:[#allocation18 + $0xc8] sm:$0xff]
    %v8022 = vld [vmem:[#allocation18 + $0xd0] sm:$0xff]
    %v8023 = vld [vmem:[#allocation18 + $0xd8] sm:$0xff]
    %v8024 = vld [vmem:[#allocation18 + $0xe0] sm:$0xff]
    %v8025 = vld [vmem:[#allocation18 + $0xe8] sm:$0xff]
    %v8026 = vld [vmem:[#allocation18 + $0xf0] sm:$0xff]
    %v8027 = vld [vmem:[#allocation18 + $0xf8] sm:$0xff]
    %v8028 = vld [vmem:[#allocation18 + $0x100] sm:$0xff]
    %v8029 = vld [vmem:[#allocation18 + $0x108] sm:$0xff]
    %v8030 = vld [vmem:[#allocation18 + $0x110] sm:$0xff]
    %v8031 = vld [vmem:[#allocation18 + $0x118] sm:$0xff]
    %v8032 = vld [vmem:[#allocation18 + $0x120] sm:$0xff]
    %v8033 = vld [vmem:[#allocation18 + $0x128] sm:$0xff]
    %v8034 = vld [vmem:[#allocation18 + $0x130] sm:$0xff]
    %v8035 = vld [vmem:[#allocation18 + $0x138] sm:$0xff]
    %v8036 = vld [vmem:[#allocation18 + $0x140] sm:$0xff]
    %v8037 = vld [vmem:[#allocation18 + $0x148] sm:$0xff]
    %v8038 = vld [vmem:[#allocation18 + $0x150] sm:$0xff]
    %v8039 = vld [vmem:[#allocation18 + $0x158] sm:$0xff]
    %v8040 = vld [vmem:[#allocation18 + $0x160] sm:$0xff]
    %v8041 = vld [vmem:[#allocation18 + $0x168] sm:$0xff]
    %v8042 = vld [vmem:[#allocation18 + $0x170] sm:$0xff]
    %v8043 = vld [vmem:[#allocation18 + $0x178] sm:$0xff]
    %v8044 = vld [vmem:[#allocation18 + $0x180] sm:$0xff]
    %v8045 = vld [vmem:[#allocation18 + $0x188] sm:$0xff]
    %v8046 = vld [vmem:[#allocation18 + $0x190] sm:$0xff]
    %v8047 = vld [vmem:[#allocation18 + $0x198] sm:$0xff]
    %v8048 = vld [vmem:[#allocation18 + $0x1a0] sm:$0xff]
    %v8049 = vld [vmem:[#allocation18 + $0x1a8] sm:$0xff]
    %v8050 = vld [vmem:[#allocation18 + $0x1b0] sm:$0xff]
    %v8051 = vld [vmem:[#allocation18 + $0x1b8] sm:$0xff]
    %v8052 = vld [vmem:[#allocation18 + $0x1c0] sm:$0xff]
    %v8053 = vld [vmem:[#allocation18 + $0x1c8] sm:$0xff]
    %v8054 = vld [vmem:[#allocation18 + $0x1d0] sm:$0xff]
    %v8055 = vld [vmem:[#allocation18 + $0x1d8] sm:$0xff]
    %v8056 = vld [vmem:[#allocation18 + $0x1e0] sm:$0xff]
    %v8057 = vld [vmem:[#allocation18 + $0x1e8] sm:$0xff]
    %v8058 = vld [vmem:[#allocation18 + $0x1f0] sm:$0xff]
    %v8059 = vld [vmem:[#allocation18 + $0x1f8] sm:$0xff]
    %v8060 = vld [vmem:[#allocation21] sm:$0xf]
    %v8062 = vperm.slane %v8060, 0
    %v8063 = vperm.slane %v8060, 1
    %v8064 = vperm.slane %v8060, 2
    %v8065 = vperm.slane %v8060, 3
    %8070 = vmatpush.msra.mxu0 %v8056
    %8071 = vmatpush.msra.mxu0 %v8052
    %8072 = vmatpush.msra.mxu0 %v8048
    %8073 = vmatpush.msra.mxu0 %v8044
    %8074 = vmatpush.msra.mxu0 %v8040
    %8075 = vmatpush.msra.mxu0 %v8036
    %8076 = vmatpush.msra.mxu0 %v8032
    %8077 = vmatpush.msra.mxu0 %v8028
    %8078 = vmatpush.msra.mxu0 %v8024
    %8079 = vmatpush.msra.mxu0 %v8020
    %8080 = vmatpush.msra.mxu0 %v8016
    %8081 = vmatpush.msra.mxu0 %v8012
    %8082 = vmatpush.msra.mxu0 %v8008
    %8083 = vmatpush.msra.mxu0 %v8004
    %8084 = vmatpush.msra.mxu0 %v8000
    %8085 = vmatpush.msra.mxu0 %v7996
    %8086 = vmatmul.f32.gmra.mxu0 %v7995
    %v8087 = vpop.f32.mrf.mxu0
    %v8088 = vadd.f32 %v8062, %v8087
    %8089 = vdwg.mxu0
    %8090 = vmatpush.msra.mxu0 %v8057
    %8091 = vmatpush.msra.mxu0 %v8053
    %8092 = vmatpush.msra.mxu0 %v8049
    %8093 = vmatpush.msra.mxu0 %v8045
    %8094 = vmatpush.msra.mxu0 %v8041
    %8095 = vmatpush.msra.mxu0 %v8037
    %8096 = vmatpush.msra.mxu0 %v8033
    %8097 = vmatpush.msra.mxu0 %v8029
    %8098 = vmatpush.msra.mxu0 %v8025
    %8099 = vmatpush.msra.mxu0 %v8021
    %8100 = vmatpush.msra.mxu0 %v8017
    %8101 = vmatpush.msra.mxu0 %v8013
    %8102 = vmatpush.msra.mxu0 %v8009
    %8103 = vmatpush.msra.mxu0 %v8005
    %8104 = vmatpush.msra.mxu0 %v8001
    %8105 = vmatpush.msra.mxu0 %v7997
    %8106 = vmatmul.f32.gmra.mxu0 %v7995
    %v8107 = vpop.f32.mrf.mxu0
    %v8108 = vadd.f32 %v8063, %v8107
    %8109 = vdwg.mxu0
    %8110 = vmatpush.msra.mxu0 %v8058
    %8111 = vmatpush.msra.mxu0 %v8054
    %8112 = vmatpush.msra.mxu0 %v8050
    %8113 = vmatpush.msra.mxu0 %v8046
    %8114 = vmatpush.msra.mxu0 %v8042
    %8115 = vmatpush.msra.mxu0 %v8038
    %8116 = vmatpush.msra.mxu0 %v8034
    %8117 = vmatpush.msra.mxu0 %v8030
    %8118 = vmatpush.msra.mxu0 %v8026
    %8119 = vmatpush.msra.mxu0 %v8022
    %8120 = vmatpush.msra.mxu0 %v8018
    %8121 = vmatpush.msra.mxu0 %v8014
    %8122 = vmatpush.msra.mxu0 %v8010
    %8123 = vmatpush.msra.mxu0 %v8006
    %8124 = vmatpush.msra.mxu0 %v8002
    %8125 = vmatpush.msra.mxu0 %v7998
    %8126 = vmatmul.f32.gmra.mxu0 %v7995
    %v8127 = vpop.f32.mrf.mxu0
    %v8128 = vadd.f32 %v8064, %v8127
    %8129 = vdwg.mxu0
    %8130 = vmatpush.msra.mxu0 %v8059
    %8131 = vmatpush.msra.mxu0 %v8055
    %8132 = vmatpush.msra.mxu0 %v8051
    %8133 = vmatpush.msra.mxu0 %v8047
    %8134 = vmatpush.msra.mxu0 %v8043
    %8135 = vmatpush.msra.mxu0 %v8039
    %8136 = vmatpush.msra.mxu0 %v8035
    %8137 = vmatpush.msra.mxu0 %v8031
    %8138 = vmatpush.msra.mxu0 %v8027
    %8139 = vmatpush.msra.mxu0 %v8023
    %8140 = vmatpush.msra.mxu0 %v8019
    %8141 = vmatpush.msra.mxu0 %v8015
    %8142 = vmatpush.msra.mxu0 %v8011
    %8143 = vmatpush.msra.mxu0 %v8007
    %8144 = vmatpush.msra.mxu0 %v8003
    %8145 = vmatpush.msra.mxu0 %v7999
    %8146 = vmatmul.f32.gmra.mxu0 %v7995
    %v8147 = vpop.f32.mrf.mxu0
    %v8148 = vadd.f32 %v8065, %v8147
    %8149 = vdwg.mxu0
    %v8154 = vrot.slane %v8108, 6
    %v8155 = vrot.slane %v8128, 4
    %v8156 = vrot.slane %v8148, 2
    %vm8157 = vcmask 1041408
    %v8158 = vsel %vm8157, %v8088, %v8154
    %vm8159 = vcmask 1045508
    %v8160 = vsel %vm8159, %v8155, %v8156
    %v8161 = vsel %vm7704, %v8158, %v8160
    %8163 = vst [vmem:[#allocation2] sm:$0xff] %v8161
    %8164 = vst [vmem:[#allocation3] sm:$0x1] 0.0
    %8165 = vst [vmem:[#allocation4] sm:$0x1] 0.0
    loop: start=0, step=1, limit=2
    $region102: #{critic_forward_pallas.3} parent=1 // loop_pre_header
      _
    $region103: #{critic_forward_pallas.3} parent=1 // loop_header
      %s8167 = sphi 0, %s8171
      %p8168 = scmp.ge.s32.totalorder %s8167, 2
    $region104: #{critic_forward_pallas.3} parent=1 // loop_header_branch
      %8170 = sbr.rel (%p8168) target = $region108
    $region105: #{critic_forward_pallas.3} parent=1 // loop_body
      %s8172 = sshra.s32 %s8167, 1
      %s8173 = sand.u32 %s8167, 1
      %s8174 = sshra.s32 %s8167, 1
      %s8175 = sand.u32 %s8167, 1
      %s8176 = smul.u32 %s8172, 4
      %s8177 = smul.u32 %s8176, 2
      %s8178 = sadd.s32 %s8177, %s8175
      %s8179 = scalar_lea.vmem [#allocation2], %s8178
      %v8180 = vld [vmem:[%s8179] ss:$2 sm:$0xf]
      %v8181 = vld [vmem:[#allocation3] sm:$0x1]
      %v8182 = vld [vmem:[#allocation20] sm:$0xff]
      %v8183 = vld [vmem:[#allocation20 + $0x8] sm:$0xff]
      %v8184 = vld [vmem:[#allocation20 + $0x10] sm:$0xff]
      %v8185 = vld [vmem:[#allocation20 + $0x18] sm:$0xff]
      %v8186 = vld [vmem:[#allocation20 + $0x20] sm:$0xff]
      %v8187 = vld [vmem:[#allocation20 + $0x28] sm:$0xff]
      %v8188 = vld [vmem:[#allocation20 + $0x30] sm:$0xff]
      %v8189 = vld [vmem:[#allocation20 + $0x38] sm:$0xff]
      %v8190 = vld [vmem:[#allocation20 + $0x40] sm:$0xff]
      %v8191 = vld [vmem:[#allocation20 + $0x48] sm:$0xff]
      %v8192 = vld [vmem:[#allocation20 + $0x50] sm:$0xff]
      %v8193 = vld [vmem:[#allocation20 + $0x58] sm:$0xff]
      %v8194 = vld [vmem:[#allocation20 + $0x60] sm:$0xff]
      %v8195 = vld [vmem:[#allocation20 + $0x68] sm:$0xff]
      %v8196 = vld [vmem:[#allocation20 + $0x70] sm:$0xff]
      %v8197 = vld [vmem:[#allocation20 + $0x78] sm:$0xff]
      %v8198 = vld [vmem:[#allocation20 + $0x80] sm:$0xff]
      %v8199 = vld [vmem:[#allocation20 + $0x88] sm:$0xff]
      %v8200 = vld [vmem:[#allocation20 + $0x90] sm:$0xff]
      %v8201 = vld [vmem:[#allocation20 + $0x98] sm:$0xff]
      %v8202 = vld [vmem:[#allocation20 + $0xa0] sm:$0xff]
      %v8203 = vld [vmem:[#allocation20 + $0xa8] sm:$0xff]
      %v8204 = vld [vmem:[#allocation20 + $0xb0] sm:$0xff]
      %v8205 = vld [vmem:[#allocation20 + $0xb8] sm:$0xff]
      %v8206 = vld [vmem:[#allocation20 + $0xc0] sm:$0xff]
      %v8207 = vld [vmem:[#allocation20 + $0xc8] sm:$0xff]
      %v8208 = vld [vmem:[#allocation20 + $0xd0] sm:$0xff]
      %v8209 = vld [vmem:[#allocation20 + $0xd8] sm:$0xff]
      %v8210 = vld [vmem:[#allocation20 + $0xe0] sm:$0xff]
      %v8211 = vld [vmem:[#allocation20 + $0xe8] sm:$0xff]
      %v8212 = vld [vmem:[#allocation20 + $0xf0] sm:$0xff]
      %v8213 = vld [vmem:[#allocation20 + $0xf8] sm:$0xff]
      %v8214 = vld [vmem:[#allocation20 + $0x100] sm:$0xff]
      %v8215 = vld [vmem:[#allocation20 + $0x108] sm:$0xff]
      %v8216 = vld [vmem:[#allocation20 + $0x110] sm:$0xff]
      %v8217 = vld [vmem:[#allocation20 + $0x118] sm:$0xff]
      %v8218 = vld [vmem:[#allocation20 + $0x120] sm:$0xff]
      %v8219 = vld [vmem:[#allocation20 + $0x128] sm:$0xff]
      %v8220 = vld [vmem:[#allocation20 + $0x130] sm:$0xff]
      %v8221 = vld [vmem:[#allocation20 + $0x138] sm:$0xff]
      %v8222 = vld [vmem:[#allocation20 + $0x140] sm:$0xff]
      %v8223 = vld [vmem:[#allocation20 + $0x148] sm:$0xff]
      %v8224 = vld [vmem:[#allocation20 + $0x150] sm:$0xff]
      %v8225 = vld [vmem:[#allocation20 + $0x158] sm:$0xff]
      %v8226 = vld [vmem:[#allocation20 + $0x160] sm:$0xff]
      %v8227 = vld [vmem:[#allocation20 + $0x168] sm:$0xff]
      %v8228 = vld [vmem:[#allocation20 + $0x170] sm:$0xff]
      %v8229 = vld [vmem:[#allocation20 + $0x178] sm:$0xff]
      %v8230 = vld [vmem:[#allocation20 + $0x180] sm:$0xff]
      %v8231 = vld [vmem:[#allocation20 + $0x188] sm:$0xff]
      %v8232 = vld [vmem:[#allocation20 + $0x190] sm:$0xff]
      %v8233 = vld [vmem:[#allocation20 + $0x198] sm:$0xff]
      %v8234 = vld [vmem:[#allocation20 + $0x1a0] sm:$0xff]
      %v8235 = vld [vmem:[#allocation20 + $0x1a8] sm:$0xff]
      %v8236 = vld [vmem:[#allocation20 + $0x1b0] sm:$0xff]
      %v8237 = vld [vmem:[#allocation20 + $0x1b8] sm:$0xff]
      %v8238 = vld [vmem:[#allocation20 + $0x1c0] sm:$0xff]
      %v8239 = vld [vmem:[#allocation20 + $0x1c8] sm:$0xff]
      %v8240 = vld [vmem:[#allocation20 + $0x1d0] sm:$0xff]
      %v8241 = vld [vmem:[#allocation20 + $0x1d8] sm:$0xff]
      %v8242 = vld [vmem:[#allocation20 + $0x1e0] sm:$0xff]
      %v8243 = vld [vmem:[#allocation20 + $0x1e8] sm:$0xff]
      %v8244 = vld [vmem:[#allocation20 + $0x1f0] sm:$0xff]
      %v8245 = vld [vmem:[#allocation20 + $0x1f8] sm:$0xff]
      %8246 = vmatpush.msra.mxu0 %v8242
      %8247 = vmatpush.msra.mxu0 %v8238
      %8248 = vmatpush.msra.mxu0 %v8234
      %8249 = vmatpush.msra.mxu0 %v8230
      %8250 = vmatpush.msra.mxu0 %v8226
      %8251 = vmatpush.msra.mxu0 %v8222
      %8252 = vmatpush.msra.mxu0 %v8218
      %8253 = vmatpush.msra.mxu0 %v8214
      %8254 = vmatpush.msra.mxu0 %v8210
      %8255 = vmatpush.msra.mxu0 %v8206
      %8256 = vmatpush.msra.mxu0 %v8202
      %8257 = vmatpush.msra.mxu0 %v8198
      %8258 = vmatpush.msra.mxu0 %v8194
      %8259 = vmatpush.msra.mxu0 %v8190
      %8260 = vmatpush.msra.mxu0 %v8186
      %8261 = vmatpush.msra.mxu0 %v8182
      %8262 = vmatmul.f32.gmra.mxu0 %v8181
      %v8263 = vpop.f32.mrf.mxu0
      %v8264 = vadd.f32 0.0, %v8263
      %8265 = vdwg.mxu0
      %8266 = vmatpush.msra.mxu0 %v8243
      %8267 = vmatpush.msra.mxu0 %v8239
      %8268 = vmatpush.msra.mxu0 %v8235
      %8269 = vmatpush.msra.mxu0 %v8231
      %8270 = vmatpush.msra.mxu0 %v8227
      %8271 = vmatpush.msra.mxu0 %v8223
      %8272 = vmatpush.msra.mxu0 %v8219
      %8273 = vmatpush.msra.mxu0 %v8215
      %8274 = vmatpush.msra.mxu0 %v8211
      %8275 = vmatpush.msra.mxu0 %v8207
      %8276 = vmatpush.msra.mxu0 %v8203
      %8277 = vmatpush.msra.mxu0 %v8199
      %8278 = vmatpush.msra.mxu0 %v8195
      %8279 = vmatpush.msra.mxu0 %v8191
      %8280 = vmatpush.msra.mxu0 %v8187
      %8281 = vmatpush.msra.mxu0 %v8183
      %8282 = vmatmul.f32.gmra.mxu0 %v8181
      %v8283 = vpop.f32.mrf.mxu0
      %v8284 = vadd.f32 0.0, %v8283
      %8285 = vdwg.mxu0
      %8286 = vmatpush.msra.mxu0 %v8244
      %8287 = vmatpush.msra.mxu0 %v8240
      %8288 = vmatpush.msra.mxu0 %v8236
      %8289 = vmatpush.msra.mxu0 %v8232
      %8290 = vmatpush.msra.mxu0 %v8228
      %8291 = vmatpush.msra.mxu0 %v8224
      %8292 = vmatpush.msra.mxu0 %v8220
      %8293 = vmatpush.msra.mxu0 %v8216
      %8294 = vmatpush.msra.mxu0 %v8212
      %8295 = vmatpush.msra.mxu0 %v8208
      %8296 = vmatpush.msra.mxu0 %v8204
      %8297 = vmatpush.msra.mxu0 %v8200
      %8298 = vmatpush.msra.mxu0 %v8196
      %8299 = vmatpush.msra.mxu0 %v8192
      %8300 = vmatpush.msra.mxu0 %v8188
      %8301 = vmatpush.msra.mxu0 %v8184
      %8302 = vmatmul.f32.gmra.mxu0 %v8181
      %v8303 = vpop.f32.mrf.mxu0
      %v8304 = vadd.f32 0.0, %v8303
      %8305 = vdwg.mxu0
      %8306 = vmatpush.msra.mxu0 %v8245
      %8307 = vmatpush.msra.mxu0 %v8241
      %8308 = vmatpush.msra.mxu0 %v8237
      %8309 = vmatpush.msra.mxu0 %v8233
      %8310 = vmatpush.msra.mxu0 %v8229
      %8311 = vmatpush.msra.mxu0 %v8225
      %8312 = vmatpush.msra.mxu0 %v8221
      %8313 = vmatpush.msra.mxu0 %v8217
      %8314 = vmatpush.msra.mxu0 %v8213
      %8315 = vmatpush.msra.mxu0 %v8209
      %8316 = vmatpush.msra.mxu0 %v8205
      %8317 = vmatpush.msra.mxu0 %v8201
      %8318 = vmatpush.msra.mxu0 %v8197
      %8319 = vmatpush.msra.mxu0 %v8193
      %8320 = vmatpush.msra.mxu0 %v8189
      %8321 = vmatpush.msra.mxu0 %v8185
      %8322 = vmatmul.f32.gmra.mxu0 %v8181
      %v8323 = vpop.f32.mrf.mxu0
      %v8324 = vadd.f32 0.0, %v8323
      %8325 = vdwg.mxu0
      %v8330 = vrot.slane %v8284, 7
      %v8331 = vrot.slane %v8304, 6
      %v8332 = vrot.slane %v8324, 5
      %vm8333 = vcmask 1040384
      %v8334 = vsel %vm8333, %v8264, %v8330
      %vm8335 = vcmask 1042434
      %v8336 = vsel %vm8335, %v8331, %v8332
      %v8337 = vsel %vm8157, %v8334, %v8336
      %v8339 = vadd.f32 %v8180, %v8337
      %v8340 = vxor.u32 %v8339, 2147483648
      %v8341 = vmul.f32 %v8340, 1.442695
      %v8342 = vpow.pop %v8341
      %v8343 = vadd.f32 %v8342, 1.0
      %v8344 = vrcp.pop %v8343
      %v8345 = vmul.f32 %v8343, %v8344
      %v8346 = vsub.f32 1.0, %v8345
      %v8347 = vmul.f32 %v8344, %v8346
      %v8348 = vadd.f32 %v8344, %v8347
      %vm8349 = vweird.f32 %v8343
      %vm8350 = vweird.f32 %v8344
      %vm8351 = vmor %vm8349, %vm8350
      %v8352 = vsel %vm8351, %v8344, %v8348
      %v8353 = vand.u32 2147483647, %v8343
      %vm8354 = vcmp.eq.f32.partialorder %v8353, 8.507059e+37
      %v8355 = vand.u32 %v8343, 2147483648
      %v8356 = vor.u32 1.1754944e-38, %v8355
      %v8357 = vsel %vm8354, %v8356, %v8352
      %v8358 = vmul.f32 1.0, %v8357
      %v8360 = vrot.slane %v8339, 1
      %v8362 = vxor.u32 %v8360, 2147483648
      %v8363 = vmul.f32 %v8362, 1.442695
      %v8364 = vpow.pop %v8363
      %v8365 = vadd.f32 %v8364, 1.0
      %v8366 = vrcp.pop %v8365
      %v8367 = vmul.f32 %v8365, %v8366
      %v8368 = vsub.f32 1.0, %v8367
      %v8369 = vmul.f32 %v8366, %v8368
      %v8370 = vadd.f32 %v8366, %v8369
      %vm8371 = vweird.f32 %v8365
      %vm8372 = vweird.f32 %v8366
      %vm8373 = vmor %vm8371, %vm8372
      %v8374 = vsel %vm8373, %v8366, %v8370
      %v8375 = vand.u32 2147483647, %v8365
      %vm8376 = vcmp.eq.f32.partialorder %v8375, 8.507059e+37
      %v8377 = vand.u32 %v8365, 2147483648
      %v8378 = vor.u32 1.1754944e-38, %v8377
      %v8379 = vsel %vm8376, %v8378, %v8374
      %v8380 = vmul.f32 1.0, %v8379
      %v8381 = vrot.slane %v8339, 2
      %v8383 = vtanh.pop %v8381
      %v8384 = vrot.slane %v8339, 3
      %v8386 = vxor.u32 %v8384, 2147483648
      %v8387 = vmul.f32 %v8386, 1.442695
      %v8388 = vpow.pop %v8387
      %v8389 = vadd.f32 %v8388, 1.0
      %v8390 = vrcp.pop %v8389
      %v8391 = vmul.f32 %v8389, %v8390
      %v8392 = vsub.f32 1.0, %v8391
      %v8393 = vmul.f32 %v8390, %v8392
      %v8394 = vadd.f32 %v8390, %v8393
      %vm8395 = vweird.f32 %v8389
      %vm8396 = vweird.f32 %v8390
      %vm8397 = vmor %vm8395, %vm8396
      %v8398 = vsel %vm8397, %v8390, %v8394
      %v8399 = vand.u32 2147483647, %v8389
      %vm8400 = vcmp.eq.f32.partialorder %v8399, 8.507059e+37
      %v8401 = vand.u32 %v8389, 2147483648
      %v8402 = vor.u32 1.1754944e-38, %v8401
      %v8403 = vsel %vm8400, %v8402, %v8398
      %v8404 = vmul.f32 1.0, %v8403
      %v8405 = vld [vmem:[#allocation4] sm:$0x1]
      %v8406 = vmul.f32 %v8380, %v8405
      %v8407 = vmul.f32 %v8358, %v8383
      %v8408 = vadd.f32 %v8406, %v8407
      %v8409 = vtanh.pop %v8408
      %v8410 = vmul.f32 %v8404, %v8409
      %8411 = vst [vmem:[#allocation4] sm:$0x1] %v8408
      %8412 = vst [vmem:[#allocation3] sm:$0x1] %v8410
      %s8413 = scalar_lea.vmem [#allocation5], %s8167
      %8414 = vst [vmem:[%s8413] sm:$0x1] %v8410
    $region106: #{critic_forward_pallas.3} parent=1 // loop_footer
      %s8171 = sadd.s32 1, %s8167
    $region107: #{critic_forward_pallas.3} parent=1 // loop_footer_branch
      %8166 = sbr.rel target = $region103
    $region108: #{critic_forward_pallas.3} parent=1 // loop_exit
      _
    %v8415 = vld [vmem:[#allocation5] sm:$0x3]
    %v8416 = vld [vmem:[#allocation23] sm:$0x1]
    %v8418 = vperm.slane %v8416, 0
    %v8420 = vmul.f32 %v8415, %v8418
    %v8421 = vsel %vm8157, %v8420, 0.0
    %8422 = vadd.xlane.f32.xlu0 %v8421
    %v8423 = vpop.xlane.xlu0 %8422
    %v8424 = vld [vmem:[#allocation6] sm:$0x1]
    %v8426 = vperm.slane %v8424, 0
    %v8428 = vadd.f32 %v8423, %v8426
    %vm8429 = vcmask 1024
    %8430 = vst.msk [vmem:[%s14] sm:$0x3] %vm8429, %v8428
    // Predicated region
    $region109: #{critic_forward_pallas.3} parent=1 // pred_check
      _
    $region110: #{critic_forward_pallas.3} parent=1 // pred_check_branch
      %8432 = sbr.rel (0) target = $region112
    $region111: #{critic_forward_pallas.3} parent=1 // pred_region
      _
    $region112: #{critic_forward_pallas.3} parent=1 // pred_fallthru
      _
    // Predicated region
    $region113: #{critic_forward_pallas.3} parent=1 // pred_check
      _
    $region114: #{critic_forward_pallas.3} parent=1 // pred_check_branch
      %8434 = sbr.rel (0) target = $region116
    $region115: #{critic_forward_pallas.3} parent=1 // pred_region
      _
    $region116: #{critic_forward_pallas.3} parent=1 // pred_fallthru
      _
    %8435 = vsyncpa [#allocation8], 1
    %8436 = vsyncpa [#allocation10], 1
    %8437 = vsyncpa [#allocation13], 1
    %8438 = vsyncpa [#allocation16], 1
    %8439 = vsyncpa [#allocation19], 1
    %8440 = vsyncpa [#allocation22], 1

</llo_original>
